<compile_context>
chip_gen: v7x
topology: tpu7x:2x2x1
jax: 0.10.0
libtpu: 0.0.40
codegen_flags: <defaults>
</compile_context>

<pallas_src>
import numpy as np
import jax
import jax.numpy as jnp
from jax.experimental import pallas as pl
from jax.experimental.pallas import tpu as pltpu

# ------------- static geometry implied by fc1 = Linear(9216, 128) -> 1x28x28 input
H = W = 28                    # input spatial size
H1 = W1 = 26                  # conv1 'valid' output
H2 = W2 = 24                  # conv2 'valid' output
HP = WP = 12                  # after 2x2 / stride-2 max pool
C1, C2 = 32, 64               # conv channel counts
L1 = (H1 - 1) * W + W1        # 726: stride-W slab length of conv1 output
L2 = (H2 - 1) * W + W2        # 668: stride-W slab length of conv2 output
NSEL = 2 * (HP - 1) * W + 2 * (WP - 1) + 1   # 639: rows needed by the pool gather
FLAT = C2 * HP * WP           # 9216


def _build_pool_gather():
    """(639, 144) 0/1 gather: row 2*hp*W + 2*wp -> flattened pool position hp*12+wp."""
    g = np.zeros((NSEL, HP * WP), np.float32)
    for hp in range(HP):
        for wp in range(WP):
            g[2 * hp * W + 2 * wp, hp * WP + wp] = 1.0
    return g


_POOL_GATHER = _build_pool_gather()


# ----------------------------- Pallas kernels -----------------------------

def _conv_stack_kernel(x_ref, w1_ref, b1_ref, w2_ref, b2_ref, sel_ref,
                       o_ref, col1_s, col2_s, y2_s):
    # x_ref block: (B, 784) f32 -- B flattened 28x28 samples per grid step.
    B = x_ref.shape[0]
    for b in range(B):                                   # static unroll over the block
        xb = x_ref[pl.ds(b, 1), :]                       # (1, 784) f32

        # ---- conv1 (1->32, 3x3, valid): im2col slab written once, ONE matmul.
        for k in range(9):
            off = (k // 3) * W + (k % 3)
            col1_s[pl.ds(k, 1), :] = xb[:, off:off + L1]           # (1, 726)
        y1 = jnp.dot(w1_ref[...], col1_s[...],
                     preferred_element_type=jnp.float32)           # (32, 726) f32
        y1 = jnp.maximum(y1 + b1_ref[...], 0.0).astype(jnp.bfloat16)

        # ---- conv2 (32->64, 3x3, valid): virtual im2col -> ONE K=288 bf16 MXU dot.
        for k in range(9):
            off = (k // 3) * W + (k % 3)
            col2_s[pl.ds(k * C1, C1), :] = y1[:, off:off + L2]     # (32, 668) bf16
        y2 = jnp.dot(w2_ref[...], col2_s[...],
                     preferred_element_type=jnp.float32)           # (64, 668) f32
        y2_s[...] = jnp.maximum(y2 + b2_ref[...], 0.0).astype(jnp.bfloat16)

        # ---- 2x2/2 max-pool: two shifted VPU maxes + one small 0/1 gather matmul.
        #      m[i] = max(y2[i], y2[i+1]); v[p] = max(m[p], m[p+W]) so
        #      v[2hp*W + 2wp] is exactly the 2x2 window max; sel picks & re-orders
        #      those 144 positions into torch.flatten(NCHW) layout.
        m = jnp.maximum(y2_s[:, 0:L2 - 1], y2_s[:, 1:L2])          # (64, 667)
        v = jnp.maximum(m[:, 0:NSEL], m[:, W:W + NSEL])            # (64, 639)
        pooled = jnp.dot(v, sel_ref[...],
                         preferred_element_type=jnp.float32)       # (64, 144)
        o_ref[pl.ds(b, 1), :, :] = pooled.astype(jnp.bfloat16).reshape(1, C2, HP * WP)


def _fc_tail_kernel(x_ref, w1_ref, b1_ref, w2_ref, b2_ref, o_ref):
    # fc1 + ReLU + fc2 + log_softmax fused; bf16 MXU inputs, f32 accumulation.
    h = jnp.dot(x_ref[...], w1_ref[...], preferred_element_type=jnp.float32)
    h = jnp.maximum(h + b1_ref[...], 0.0)                          # (tm, 128) f32
    logits = jnp.dot(h.astype(jnp.bfloat16), w2_ref[...],
                     preferred_element_type=jnp.float32) + b2_ref[...]
    zmax = jnp.max(logits, axis=-1, keepdims=True)
    z = logits - zmax
    lse = jnp.log(jnp.sum(jnp.exp(z), axis=-1, keepdims=True))
    o_ref[...] = z - lse


# ----------------------------- pallas_call wrappers -----------------------------

_CPARAMS = pltpu.CompilerParams(
    dimension_semantics=("parallel",),
    vmem_limit_bytes=32 * 1024 * 1024,     # safe on v5e/v6e/v7x; usage is a few MB
)


def conv_stack(x_flat, prep, block_b):
    """x_flat: (N, 784) f32 -> (N, 64, 144) bf16 pooled activations (NCHW-flatten order)."""
    N = x_flat.shape[0]
    return pl.pallas_call(
        _conv_stack_kernel,
        out_shape=jax.ShapeDtypeStruct((N, C2, HP * WP), jnp.bfloat16),
        grid_spec=pltpu.PrefetchScalarGridSpec(
            num_scalar_prefetch=0,
            grid=(pl.cdiv(N, block_b),),
            in_specs=[
                pl.BlockSpec((block_b, H * W), lambda i: (i, 0)),
                pl.BlockSpec((C1, 9), lambda i: (0, 0)),
                pl.BlockSpec((C1, 1), lambda i: (0, 0)),
                pl.BlockSpec((C2, 9 * C1), lambda i: (0, 0)),
                pl.BlockSpec((C2, 1), lambda i: (0, 0)),
                pl.BlockSpec((NSEL, HP * WP), lambda i: (0, 0)),
            ],
            out_specs=pl.BlockSpec((block_b, C2, HP * WP), lambda i: (i, 0, 0)),
            scratch_shapes=[
                pltpu.VMEM((9, L1), jnp.float32),         # conv1 im2col slab
                pltpu.VMEM((9 * C1, L2), jnp.bfloat16),   # conv2 im2col slab (K=288)
                pltpu.VMEM((C2, L2), jnp.bfloat16),       # conv2 activations
            ],
        ),
        compiler_params=_CPARAMS,
    )(x_flat, prep["w1"], prep["b1"], prep["w2"], prep["b2"], prep["pool_sel"])


def fc_tail(flat, prep):
    """flat: (N, 9216) bf16 -> (N, 10) f32 log-probs."""
    N = flat.shape[0]
    tm = N if N < 128 else 128     # 128 keeps v7x happy; v5e/v6e could use 256
    return pl.pallas_call(
        _fc_tail_kernel,
        out_shape=jax.ShapeDtypeStruct((N, 10), jnp.float32),
        grid_spec=pltpu.PrefetchScalarGridSpec(
            num_scalar_prefetch=0,
            grid=(pl.cdiv(N, tm),),
            in_specs=[
                pl.BlockSpec((tm, FLAT), lambda i: (i, 0)),
                pl.BlockSpec((FLAT, 128), lambda i: (0, 0)),
                pl.BlockSpec((1, 128), lambda i: (0, 0)),
                pl.BlockSpec((128, 10), lambda i: (0, 0)),
                pl.BlockSpec((1, 10), lambda i: (0, 0)),
            ],
            out_specs=pl.BlockSpec((tm, 10), lambda i: (i, 0)),
        ),
        compiler_params=_CPARAMS,
    )(flat, prep["fc1_w"], prep["fc1_b"], prep["fc2_w"], prep["fc2_b"])


# ----------------------------- params & forward -----------------------------

def init_params(key):
    ks = jax.random.split(key, 8)
    s = 0.05
    return {
        "conv1_w": s * jax.random.normal(ks[0], (32, 1, 3, 3), jnp.float32),
        "conv1_b": s * jax.random.normal(ks[1], (32,), jnp.float32),
        "conv2_w": s * jax.random.normal(ks[2], (64, 32, 3, 3), jnp.float32),
        "conv2_b": s * jax.random.normal(ks[3], (64,), jnp.float32),
        "fc1_w": s * jax.random.normal(ks[4], (128, 9216), jnp.float32),
        "fc1_b": s * jax.random.normal(ks[5], (128,), jnp.float32),
        "fc2_w": s * jax.random.normal(ks[6], (10, 128), jnp.float32),
        "fc2_b": s * jax.random.normal(ks[7], (10,), jnp.float32),
    }


def prepare_params(params):
    """One-time re-layout + bf16 cast of PyTorch-layout params (off the hot path)."""
    return {
        # conv1 weight (32,1,3,3) -> (32, 9), column k = dy*3+dx (kept f32; tiny)
        "w1": params["conv1_w"].reshape(C1, 9),
        "b1": params["conv1_b"].reshape(C1, 1),
        # conv2 weight (64,32,3,3) -> (64, 288) bf16, column = (dy*3+dx)*32 + cin
        "w2": jnp.transpose(params["conv2_w"], (0, 2, 3, 1)).reshape(C2, 9 * C1)
                 .astype(jnp.bfloat16),
        "b2": params["conv2_b"].reshape(C2, 1),
        # FC weights pre-transposed and pre-cast once
        "fc1_w": jnp.transpose(params["fc1_w"]).astype(jnp.bfloat16),   # (9216, 128)
        "fc1_b": params["fc1_b"].reshape(1, 128),
        "fc2_w": jnp.transpose(params["fc2_w"]).astype(jnp.bfloat16),   # (128, 10)
        "fc2_b": params["fc2_b"].reshape(1, 10),
        "pool_sel": jnp.asarray(_POOL_GATHER).astype(jnp.bfloat16),     # (639, 144)
    }


def net_forward(prep, x_nchw):
    N = x_nchw.shape[0]
    block_b = 8 if N >= 8 else N              # B samples per conv grid step
    x_flat = x_nchw.reshape(N, H * W)         # free metadata reshape (NCHW row-major)
    conv_out = conv_stack(x_flat, prep, block_b)   # (N, 64, 144) bf16
    flat = conv_out.reshape(N, FLAT)          # free; matches torch.flatten(x, 1)
    return fc_tail(flat, prep)                # (N, 10) f32 log-probs
    # TODO(synk): training-mode Dropout2d/Dropout (RNG masking) not implemented.


# ------------------- pure-JAX reference (for validation) -------------------

def reference_forward(params, x):
    dn = ("NCHW", "OIHW", "NCHW")
    hp = jax.lax.Precision.HIGHEST
    y = jax.lax.conv_general_dilated(x, params["conv1_w"], (1, 1), "VALID",
                                     dimension_numbers=dn, precision=hp)
    y = jax.nn.relu(y + params["conv1_b"][None, :, None, None])
    y = jax.lax.conv_general_dilated(y, params["conv2_w"], (1, 1), "VALID",
                                     dimension_numbers=dn, precision=hp)
    y = jax.nn.relu(y + params["conv2_b"][None, :, None, None])
    y = jax.lax.reduce_window(y, -jnp.inf, jax.lax.max,
                              (1, 1, 2, 2), (1, 1, 2, 2), "VALID")
    flat = y.reshape(y.shape[0], -1)
    h = jax.nn.relu(jnp.dot(flat, params["fc1_w"].T, precision=hp) + params["fc1_b"])
    logits = jnp.dot(h, params["fc2_w"].T, precision=hp) + params["fc2_b"]
    return jax.nn.log_softmax(logits, axis=-1)


if __name__ == "__main__":
    key = jax.random.PRNGKey(0)
    k_param, k_x = jax.random.split(key)
    params = init_params(k_param)
    prep = prepare_params(params)             # one-time weight re-layout / bf16 cast

    # Input must be 1x28x28 so the flattened feature size equals 9216.
    x = jax.random.normal(k_x, (2, 1, H, W), jnp.float32)

    fwd = jax.jit(net_forward)
    out = jax.block_until_ready(fwd(prep, x))

    assert out.shape == (2, 10)
    # log_softmax rows must exp-sum to 1
    assert bool(jnp.all(jnp.abs(jnp.sum(jnp.exp(out), axis=1) - 1.0) < 1e-4))
    # cross-check against a pure-JAX/XLA f32 reference (bf16 MXU tolerance)
    ref = reference_forward(params, x)
    max_diff = float(jnp.max(jnp.abs(out - ref)))
    assert max_diff < 5e-2, max_diff
    print("KERNEL_OK")
</pallas_src>

<mosaic_0001>
module attributes {stable_mosaic.version = 11 : i64} {
  func.func @_conv_stack_kernel(%arg0: i32, %arg1: memref<2x784xf32, #tpu.memory_space<vmem>>, %arg2: memref<32x9xf32, #tpu.memory_space<vmem>>, %arg3: memref<32x1xf32, #tpu.memory_space<vmem>>, %arg4: memref<64x288xbf16, #tpu.memory_space<vmem>>, %arg5: memref<64x1xf32, #tpu.memory_space<vmem>>, %arg6: memref<639x144xbf16, #tpu.memory_space<vmem>>, %arg7: memref<2x64x144xbf16, #tpu.memory_space<vmem>>, %arg8: memref<9x726xf32, #tpu.memory_space<vmem>>, %arg9: memref<288x668xbf16, #tpu.memory_space<vmem>>, %arg10: memref<64x668xbf16, #tpu.memory_space<vmem>>) attributes {dimension_semantics = [#tpu.dimension_semantics<parallel>], iteration_bounds = array<i64: 1>, scalar_prefetch = 0 : i64, scratch_operands = 3 : i64, tpu.core_type = #tpu.core_type<tc>, window_params = [{transform_indices = @transform_0, window_bounds = array<i64: 2, 784>}, {pipeline_mode = #tpu.pipeline_mode<synchronous>, transform_indices = @transform_1, window_bounds = array<i64: 32, 9>}, {pipeline_mode = #tpu.pipeline_mode<synchronous>, transform_indices = @transform_2, window_bounds = array<i64: 32, 1>}, {pipeline_mode = #tpu.pipeline_mode<synchronous>, transform_indices = @transform_3, window_bounds = array<i64: 64, 288>}, {pipeline_mode = #tpu.pipeline_mode<synchronous>, transform_indices = @transform_4, window_bounds = array<i64: 64, 1>}, {pipeline_mode = #tpu.pipeline_mode<synchronous>, transform_indices = @transform_5, window_bounds = array<i64: 639, 144>}, {transform_indices = @transform_6, window_bounds = array<i64: 2, 64, 144>}]} {
    %c0 = arith.constant 0 : index
    %c0_0 = arith.constant 0 : index
    %0 = vector.load %arg1[%c0, %c0_0] : memref<2x784xf32, #tpu.memory_space<vmem>>, vector<1x784xf32>
    %1 = vector.extract_strided_slice %0 {offsets = [0, 0], sizes = [1, 726], strides = [1, 1]} : vector<1x784xf32> to vector<1x726xf32>
    %c0_1 = arith.constant 0 : index
    %c0_2 = arith.constant 0 : index
    %2 = vector.load %arg8[%c0_1, %c0_2] : memref<9x726xf32, #tpu.memory_space<vmem>>, vector<1x726xf32>
    tpu.vector_store %arg8[%c0_1, %c0_2], %1 {strides = array<i32>} : memref<9x726xf32, #tpu.memory_space<vmem>>, vector<1x726xf32>,
    %3 = vector.extract_strided_slice %0 {offsets = [0, 1], sizes = [1, 726], strides = [1, 1]} : vector<1x784xf32> to vector<1x726xf32>
    %c1 = arith.constant 1 : index
    %c0_3 = arith.constant 0 : index
    %4 = vector.load %arg8[%c1, %c0_3] : memref<9x726xf32, #tpu.memory_space<vmem>>, vector<1x726xf32>
    tpu.vector_store %arg8[%c1, %c0_3], %3 {strides = array<i32>} : memref<9x726xf32, #tpu.memory_space<vmem>>, vector<1x726xf32>,
    %5 = vector.extract_strided_slice %0 {offsets = [0, 2], sizes = [1, 726], strides = [1, 1]} : vector<1x784xf32> to vector<1x726xf32>
    %c2 = arith.constant 2 : index
    %c0_4 = arith.constant 0 : index
    %6 = vector.load %arg8[%c2, %c0_4] : memref<9x726xf32, #tpu.memory_space<vmem>>, vector<1x726xf32>
    tpu.vector_store %arg8[%c2, %c0_4], %5 {strides = array<i32>} : memref<9x726xf32, #tpu.memory_space<vmem>>, vector<1x726xf32>,
    %7 = vector.extract_strided_slice %0 {offsets = [0, 28], sizes = [1, 726], strides = [1, 1]} : vector<1x784xf32> to vector<1x726xf32>
    %c3 = arith.constant 3 : index
    %c0_5 = arith.constant 0 : index
    %8 = vector.load %arg8[%c3, %c0_5] : memref<9x726xf32, #tpu.memory_space<vmem>>, vector<1x726xf32>
    tpu.vector_store %arg8[%c3, %c0_5], %7 {strides = array<i32>} : memref<9x726xf32, #tpu.memory_space<vmem>>, vector<1x726xf32>,
    %9 = vector.extract_strided_slice %0 {offsets = [0, 29], sizes = [1, 726], strides = [1, 1]} : vector<1x784xf32> to vector<1x726xf32>
    %c4 = arith.constant 4 : index
    %c0_6 = arith.constant 0 : index
    %10 = vector.load %arg8[%c4, %c0_6] : memref<9x726xf32, #tpu.memory_space<vmem>>, vector<1x726xf32>
    tpu.vector_store %arg8[%c4, %c0_6], %9 {strides = array<i32>} : memref<9x726xf32, #tpu.memory_space<vmem>>, vector<1x726xf32>,
    %11 = vector.extract_strided_slice %0 {offsets = [0, 30], sizes = [1, 726], strides = [1, 1]} : vector<1x784xf32> to vector<1x726xf32>
    %c5 = arith.constant 5 : index
    %c0_7 = arith.constant 0 : index
    %12 = vector.load %arg8[%c5, %c0_7] : memref<9x726xf32, #tpu.memory_space<vmem>>, vector<1x726xf32>
    tpu.vector_store %arg8[%c5, %c0_7], %11 {strides = array<i32>} : memref<9x726xf32, #tpu.memory_space<vmem>>, vector<1x726xf32>,
    %13 = vector.extract_strided_slice %0 {offsets = [0, 56], sizes = [1, 726], strides = [1, 1]} : vector<1x784xf32> to vector<1x726xf32>
    %c6 = arith.constant 6 : index
    %c0_8 = arith.constant 0 : index
    %14 = vector.load %arg8[%c6, %c0_8] : memref<9x726xf32, #tpu.memory_space<vmem>>, vector<1x726xf32>
    tpu.vector_store %arg8[%c6, %c0_8], %13 {strides = array<i32>} : memref<9x726xf32, #tpu.memory_space<vmem>>, vector<1x726xf32>,
    %15 = vector.extract_strided_slice %0 {offsets = [0, 57], sizes = [1, 726], strides = [1, 1]} : vector<1x784xf32> to vector<1x726xf32>
    %c7 = arith.constant 7 : index
    %c0_9 = arith.constant 0 : index
    %16 = vector.load %arg8[%c7, %c0_9] : memref<9x726xf32, #tpu.memory_space<vmem>>, vector<1x726xf32>
    tpu.vector_store %arg8[%c7, %c0_9], %15 {strides = array<i32>} : memref<9x726xf32, #tpu.memory_space<vmem>>, vector<1x726xf32>,
    %17 = vector.extract_strided_slice %0 {offsets = [0, 58], sizes = [1, 726], strides = [1, 1]} : vector<1x784xf32> to vector<1x726xf32>
    %c8 = arith.constant 8 : index
    %c0_10 = arith.constant 0 : index
    %18 = vector.load %arg8[%c8, %c0_10] : memref<9x726xf32, #tpu.memory_space<vmem>>, vector<1x726xf32>
    tpu.vector_store %arg8[%c8, %c0_10], %17 {strides = array<i32>} : memref<9x726xf32, #tpu.memory_space<vmem>>, vector<1x726xf32>,
    %c0_11 = arith.constant 0 : index
    %c0_12 = arith.constant 0 : index
    %19 = vector.load %arg2[%c0_11, %c0_12] : memref<32x9xf32, #tpu.memory_space<vmem>>, vector<32x9xf32>
    %c0_13 = arith.constant 0 : index
    %c0_14 = arith.constant 0 : index
    %20 = vector.load %arg8[%c0_13, %c0_14] : memref<9x726xf32, #tpu.memory_space<vmem>>, vector<9x726xf32>
    %cst = arith.constant dense<0.000000e+00> : vector<32x726xf32>
    %21 = tpu.matmul %19, %20, %cst {dimension_numbers = #tpu.dot_dimension_numbers<[1], [0], [0], [1], [0, 0, 1, 1], [], []>} : vector<32x9xf32>, vector<9x726xf32>, vector<32x726xf32> -> vector<32x726xf32>
    %c0_15 = arith.constant 0 : index
    %c0_16 = arith.constant 0 : index
    %22 = vector.load %arg3[%c0_15, %c0_16] : memref<32x1xf32, #tpu.memory_space<vmem>>, vector<32x1xf32>
    %23 = vector.broadcast %22 : vector<32x1xf32> to vector<32x726xf32>
    %24 = arith.addf %21, %23 : vector<32x726xf32>
    %cst_17 = arith.constant 0.000000e+00 : f32
    %25 = vector.broadcast %cst_17 : f32 to vector<32x726xf32>
    %26 = arith.maximumf %24, %25 : vector<32x726xf32>
    %27 = arith.truncf %26 : vector<32x726xf32> to vector<32x726xbf16>
    %28 = vector.extract_strided_slice %27 {offsets = [0, 0], sizes = [32, 668], strides = [1, 1]} : vector<32x726xbf16> to vector<32x668xbf16>
    %c0_18 = arith.constant 0 : index
    %c0_19 = arith.constant 0 : index
    %29 = vector.load %arg9[%c0_18, %c0_19] : memref<288x668xbf16, #tpu.memory_space<vmem>>, vector<32x668xbf16>
    tpu.vector_store %arg9[%c0_18, %c0_19], %28 {strides = array<i32>} : memref<288x668xbf16, #tpu.memory_space<vmem>>, vector<32x668xbf16>,
    %30 = vector.extract_strided_slice %27 {offsets = [0, 1], sizes = [32, 668], strides = [1, 1]} : vector<32x726xbf16> to vector<32x668xbf16>
    %c32 = arith.constant 32 : index
    %c0_20 = arith.constant 0 : index
    %31 = vector.load %arg9[%c32, %c0_20] : memref<288x668xbf16, #tpu.memory_space<vmem>>, vector<32x668xbf16>
    tpu.vector_store %arg9[%c32, %c0_20], %30 {strides = array<i32>} : memref<288x668xbf16, #tpu.memory_space<vmem>>, vector<32x668xbf16>,
    %32 = vector.extract_strided_slice %27 {offsets = [0, 2], sizes = [32, 668], strides = [1, 1]} : vector<32x726xbf16> to vector<32x668xbf16>
    %c64 = arith.constant 64 : index
    %c0_21 = arith.constant 0 : index
    %33 = vector.load %arg9[%c64, %c0_21] : memref<288x668xbf16, #tpu.memory_space<vmem>>, vector<32x668xbf16>
    tpu.vector_store %arg9[%c64, %c0_21], %32 {strides = array<i32>} : memref<288x668xbf16, #tpu.memory_space<vmem>>, vector<32x668xbf16>,
    %34 = vector.extract_strided_slice %27 {offsets = [0, 28], sizes = [32, 668], strides = [1, 1]} : vector<32x726xbf16> to vector<32x668xbf16>
    %c96 = arith.constant 96 : index
    %c0_22 = arith.constant 0 : index
    %35 = vector.load %arg9[%c96, %c0_22] : memref<288x668xbf16, #tpu.memory_space<vmem>>, vector<32x668xbf16>
    tpu.vector_store %arg9[%c96, %c0_22], %34 {strides = array<i32>} : memref<288x668xbf16, #tpu.memory_space<vmem>>, vector<32x668xbf16>,
    %36 = vector.extract_strided_slice %27 {offsets = [0, 29], sizes = [32, 668], strides = [1, 1]} : vector<32x726xbf16> to vector<32x668xbf16>
    %c128 = arith.constant 128 : index
    %c0_23 = arith.constant 0 : index
    %37 = vector.load %arg9[%c128, %c0_23] : memref<288x668xbf16, #tpu.memory_space<vmem>>, vector<32x668xbf16>
    tpu.vector_store %arg9[%c128, %c0_23], %36 {strides = array<i32>} : memref<288x668xbf16, #tpu.memory_space<vmem>>, vector<32x668xbf16>,
    %38 = vector.extract_strided_slice %27 {offsets = [0, 30], sizes = [32, 668], strides = [1, 1]} : vector<32x726xbf16> to vector<32x668xbf16>
    %c160 = arith.constant 160 : index
    %c0_24 = arith.constant 0 : index
    %39 = vector.load %arg9[%c160, %c0_24] : memref<288x668xbf16, #tpu.memory_space<vmem>>, vector<32x668xbf16>
    tpu.vector_store %arg9[%c160, %c0_24], %38 {strides = array<i32>} : memref<288x668xbf16, #tpu.memory_space<vmem>>, vector<32x668xbf16>,
    %40 = vector.extract_strided_slice %27 {offsets = [0, 56], sizes = [32, 668], strides = [1, 1]} : vector<32x726xbf16> to vector<32x668xbf16>
    %c192 = arith.constant 192 : index
    %c0_25 = arith.constant 0 : index
    %41 = vector.load %arg9[%c192, %c0_25] : memref<288x668xbf16, #tpu.memory_space<vmem>>, vector<32x668xbf16>
    tpu.vector_store %arg9[%c192, %c0_25], %40 {strides = array<i32>} : memref<288x668xbf16, #tpu.memory_space<vmem>>, vector<32x668xbf16>,
    %42 = vector.extract_strided_slice %27 {offsets = [0, 57], sizes = [32, 668], strides = [1, 1]} : vector<32x726xbf16> to vector<32x668xbf16>
    %c224 = arith.constant 224 : index
    %c0_26 = arith.constant 0 : index
    %43 = vector.load %arg9[%c224, %c0_26] : memref<288x668xbf16, #tpu.memory_space<vmem>>, vector<32x668xbf16>
    tpu.vector_store %arg9[%c224, %c0_26], %42 {strides = array<i32>} : memref<288x668xbf16, #tpu.memory_space<vmem>>, vector<32x668xbf16>,
    %44 = vector.extract_strided_slice %27 {offsets = [0, 58], sizes = [32, 668], strides = [1, 1]} : vector<32x726xbf16> to vector<32x668xbf16>
    %c256 = arith.constant 256 : index
    %c0_27 = arith.constant 0 : index
    %45 = vector.load %arg9[%c256, %c0_27] : memref<288x668xbf16, #tpu.memory_space<vmem>>, vector<32x668xbf16>
    tpu.vector_store %arg9[%c256, %c0_27], %44 {strides = array<i32>} : memref<288x668xbf16, #tpu.memory_space<vmem>>, vector<32x668xbf16>,
    %c0_28 = arith.constant 0 : index
    %c0_29 = arith.constant 0 : index
    %46 = vector.load %arg4[%c0_28, %c0_29] : memref<64x288xbf16, #tpu.memory_space<vmem>>, vector<64x288xbf16>
    %c0_30 = arith.constant 0 : index
    %c0_31 = arith.constant 0 : index
    %47 = vector.load %arg9[%c0_30, %c0_31] : memref<288x668xbf16, #tpu.memory_space<vmem>>, vector<288x668xbf16>
    %cst_32 = arith.constant dense<0.000000e+00> : vector<64x668xf32>
    %48 = tpu.matmul %46, %47, %cst_32 {dimension_numbers = #tpu.dot_dimension_numbers<[1], [0], [0], [1], [0, 0, 1, 1], [], []>} : vector<64x288xbf16>, vector<288x668xbf16>, vector<64x668xf32> -> vector<64x668xf32>
    %c0_33 = arith.constant 0 : index
    %c0_34 = arith.constant 0 : index
    %49 = vector.load %arg5[%c0_33, %c0_34] : memref<64x1xf32, #tpu.memory_space<vmem>>, vector<64x1xf32>
    %50 = vector.broadcast %49 : vector<64x1xf32> to vector<64x668xf32>
    %51 = arith.addf %48, %50 : vector<64x668xf32>
    %cst_35 = arith.constant 0.000000e+00 : f32
    %52 = vector.broadcast %cst_35 : f32 to vector<64x668xf32>
    %53 = arith.maximumf %51, %52 : vector<64x668xf32>
    %54 = arith.truncf %53 : vector<64x668xf32> to vector<64x668xbf16>
    %c0_36 = arith.constant 0 : index
    %c0_37 = arith.constant 0 : index
    %55 = vector.load %arg10[%c0_36, %c0_37] : memref<64x668xbf16, #tpu.memory_space<vmem>>, vector<64x668xbf16>
    tpu.vector_store %arg10[%c0_36, %c0_37], %54 {strides = array<i32>} : memref<64x668xbf16, #tpu.memory_space<vmem>>, vector<64x668xbf16>,
    %c0_38 = arith.constant 0 : index
    %c0_39 = arith.constant 0 : index
    %56 = vector.load %arg10[%c0_38, %c0_39] : memref<64x668xbf16, #tpu.memory_space<vmem>>, vector<64x667xbf16>
    %c0_40 = arith.constant 0 : index
    %c1_41 = arith.constant 1 : index
    %57 = vector.load %arg10[%c0_40, %c1_41] : memref<64x668xbf16, #tpu.memory_space<vmem>>, vector<64x667xbf16>
    %58 = arith.maximumf %56, %57 : vector<64x667xbf16>
    %59 = vector.extract_strided_slice %58 {offsets = [0, 0], sizes = [64, 639], strides = [1, 1]} : vector<64x667xbf16> to vector<64x639xbf16>
    %60 = vector.extract_strided_slice %58 {offsets = [0, 28], sizes = [64, 639], strides = [1, 1]} : vector<64x667xbf16> to vector<64x639xbf16>
    %61 = arith.maximumf %59, %60 : vector<64x639xbf16>
    %c0_42 = arith.constant 0 : index
    %c0_43 = arith.constant 0 : index
    %62 = vector.load %arg6[%c0_42, %c0_43] : memref<639x144xbf16, #tpu.memory_space<vmem>>, vector<639x144xbf16>
    %cst_44 = arith.constant dense<0.000000e+00> : vector<64x144xf32>
    %63 = tpu.matmul %61, %62, %cst_44 {dimension_numbers = #tpu.dot_dimension_numbers<[1], [0], [0], [1], [0, 0, 1, 1], [], []>} : vector<64x639xbf16>, vector<639x144xbf16>, vector<64x144xf32> -> vector<64x144xf32>
    %64 = arith.truncf %63 : vector<64x144xf32> to vector<64x144xbf16>
    %65 = vector.shape_cast %64 : vector<64x144xbf16> to vector<1x64x144xbf16>
    %c0_45 = arith.constant 0 : index
    %c0_46 = arith.constant 0 : index
    %c0_47 = arith.constant 0 : index
    %66 = vector.load %arg7[%c0_45, %c0_46, %c0_47] : memref<2x64x144xbf16, #tpu.memory_space<vmem>>, vector<1x64x144xbf16>
    tpu.vector_store %arg7[%c0_45, %c0_46, %c0_47], %65 {strides = array<i32>} : memref<2x64x144xbf16, #tpu.memory_space<vmem>>, vector<1x64x144xbf16>,
    %c1_48 = arith.constant 1 : index
    %c0_49 = arith.constant 0 : index
    %67 = vector.load %arg1[%c1_48, %c0_49] : memref<2x784xf32, #tpu.memory_space<vmem>>, vector<1x784xf32>
    %68 = vector.extract_strided_slice %67 {offsets = [0, 0], sizes = [1, 726], strides = [1, 1]} : vector<1x784xf32> to vector<1x726xf32>
    %c0_50 = arith.constant 0 : index
    %c0_51 = arith.constant 0 : index
    %69 = vector.load %arg8[%c0_50, %c0_51] : memref<9x726xf32, #tpu.memory_space<vmem>>, vector<1x726xf32>
    tpu.vector_store %arg8[%c0_50, %c0_51], %68 {strides = array<i32>} : memref<9x726xf32, #tpu.memory_space<vmem>>, vector<1x726xf32>,
    %70 = vector.extract_strided_slice %67 {offsets = [0, 1], sizes = [1, 726], strides = [1, 1]} : vector<1x784xf32> to vector<1x726xf32>
    %c1_52 = arith.constant 1 : index
    %c0_53 = arith.constant 0 : index
    %71 = vector.load %arg8[%c1_52, %c0_53] : memref<9x726xf32, #tpu.memory_space<vmem>>, vector<1x726xf32>
    tpu.vector_store %arg8[%c1_52, %c0_53], %70 {strides = array<i32>} : memref<9x726xf32, #tpu.memory_space<vmem>>, vector<1x726xf32>,
    %72 = vector.extract_strided_slice %67 {offsets = [0, 2], sizes = [1, 726], strides = [1, 1]} : vector<1x784xf32> to vector<1x726xf32>
    %c2_54 = arith.constant 2 : index
    %c0_55 = arith.constant 0 : index
    %73 = vector.load %arg8[%c2_54, %c0_55] : memref<9x726xf32, #tpu.memory_space<vmem>>, vector<1x726xf32>
    tpu.vector_store %arg8[%c2_54, %c0_55], %72 {strides = array<i32>} : memref<9x726xf32, #tpu.memory_space<vmem>>, vector<1x726xf32>,
    %74 = vector.extract_strided_slice %67 {offsets = [0, 28], sizes = [1, 726], strides = [1, 1]} : vector<1x784xf32> to vector<1x726xf32>
    %c3_56 = arith.constant 3 : index
    %c0_57 = arith.constant 0 : index
    %75 = vector.load %arg8[%c3_56, %c0_57] : memref<9x726xf32, #tpu.memory_space<vmem>>, vector<1x726xf32>
    tpu.vector_store %arg8[%c3_56, %c0_57], %74 {strides = array<i32>} : memref<9x726xf32, #tpu.memory_space<vmem>>, vector<1x726xf32>,
    %76 = vector.extract_strided_slice %67 {offsets = [0, 29], sizes = [1, 726], strides = [1, 1]} : vector<1x784xf32> to vector<1x726xf32>
    %c4_58 = arith.constant 4 : index
    %c0_59 = arith.constant 0 : index
    %77 = vector.load %arg8[%c4_58, %c0_59] : memref<9x726xf32, #tpu.memory_space<vmem>>, vector<1x726xf32>
    tpu.vector_store %arg8[%c4_58, %c0_59], %76 {strides = array<i32>} : memref<9x726xf32, #tpu.memory_space<vmem>>, vector<1x726xf32>,
    %78 = vector.extract_strided_slice %67 {offsets = [0, 30], sizes = [1, 726], strides = [1, 1]} : vector<1x784xf32> to vector<1x726xf32>
    %c5_60 = arith.constant 5 : index
    %c0_61 = arith.constant 0 : index
    %79 = vector.load %arg8[%c5_60, %c0_61] : memref<9x726xf32, #tpu.memory_space<vmem>>, vector<1x726xf32>
    tpu.vector_store %arg8[%c5_60, %c0_61], %78 {strides = array<i32>} : memref<9x726xf32, #tpu.memory_space<vmem>>, vector<1x726xf32>,
    %80 = vector.extract_strided_slice %67 {offsets = [0, 56], sizes = [1, 726], strides = [1, 1]} : vector<1x784xf32> to vector<1x726xf32>
    %c6_62 = arith.constant 6 : index
    %c0_63 = arith.constant 0 : index
    %81 = vector.load %arg8[%c6_62, %c0_63] : memref<9x726xf32, #tpu.memory_space<vmem>>, vector<1x726xf32>
    tpu.vector_store %arg8[%c6_62, %c0_63], %80 {strides = array<i32>} : memref<9x726xf32, #tpu.memory_space<vmem>>, vector<1x726xf32>,
    %82 = vector.extract_strided_slice %67 {offsets = [0, 57], sizes = [1, 726], strides = [1, 1]} : vector<1x784xf32> to vector<1x726xf32>
    %c7_64 = arith.constant 7 : index
    %c0_65 = arith.constant 0 : index
    %83 = vector.load %arg8[%c7_64, %c0_65] : memref<9x726xf32, #tpu.memory_space<vmem>>, vector<1x726xf32>
    tpu.vector_store %arg8[%c7_64, %c0_65], %82 {strides = array<i32>} : memref<9x726xf32, #tpu.memory_space<vmem>>, vector<1x726xf32>,
    %84 = vector.extract_strided_slice %67 {offsets = [0, 58], sizes = [1, 726], strides = [1, 1]} : vector<1x784xf32> to vector<1x726xf32>
    %c8_66 = arith.constant 8 : index
    %c0_67 = arith.constant 0 : index
    %85 = vector.load %arg8[%c8_66, %c0_67] : memref<9x726xf32, #tpu.memory_space<vmem>>, vector<1x726xf32>
    tpu.vector_store %arg8[%c8_66, %c0_67], %84 {strides = array<i32>} : memref<9x726xf32, #tpu.memory_space<vmem>>, vector<1x726xf32>,
    %c0_68 = arith.constant 0 : index
    %c0_69 = arith.constant 0 : index
    %86 = vector.load %arg2[%c0_68, %c0_69] : memref<32x9xf32, #tpu.memory_space<vmem>>, vector<32x9xf32>
    %c0_70 = arith.constant 0 : index
    %c0_71 = arith.constant 0 : index
    %87 = vector.load %arg8[%c0_70, %c0_71] : memref<9x726xf32, #tpu.memory_space<vmem>>, vector<9x726xf32>
    %cst_72 = arith.constant dense<0.000000e+00> : vector<32x726xf32>
    %88 = tpu.matmul %86, %87, %cst_72 {dimension_numbers = #tpu.dot_dimension_numbers<[1], [0], [0], [1], [0, 0, 1, 1], [], []>} : vector<32x9xf32>, vector<9x726xf32>, vector<32x726xf32> -> vector<32x726xf32>
    %c0_73 = arith.constant 0 : index
    %c0_74 = arith.constant 0 : index
    %89 = vector.load %arg3[%c0_73, %c0_74] : memref<32x1xf32, #tpu.memory_space<vmem>>, vector<32x1xf32>
    %90 = vector.broadcast %89 : vector<32x1xf32> to vector<32x726xf32>
    %91 = arith.addf %88, %90 : vector<32x726xf32>
    %cst_75 = arith.constant 0.000000e+00 : f32
    %92 = vector.broadcast %cst_75 : f32 to vector<32x726xf32>
    %93 = arith.maximumf %91, %92 : vector<32x726xf32>
    %94 = arith.truncf %93 : vector<32x726xf32> to vector<32x726xbf16>
    %95 = vector.extract_strided_slice %94 {offsets = [0, 0], sizes = [32, 668], strides = [1, 1]} : vector<32x726xbf16> to vector<32x668xbf16>
    %c0_76 = arith.constant 0 : index
    %c0_77 = arith.constant 0 : index
    %96 = vector.load %arg9[%c0_76, %c0_77] : memref<288x668xbf16, #tpu.memory_space<vmem>>, vector<32x668xbf16>
    tpu.vector_store %arg9[%c0_76, %c0_77], %95 {strides = array<i32>} : memref<288x668xbf16, #tpu.memory_space<vmem>>, vector<32x668xbf16>,
    %97 = vector.extract_strided_slice %94 {offsets = [0, 1], sizes = [32, 668], strides = [1, 1]} : vector<32x726xbf16> to vector<32x668xbf16>
    %c32_78 = arith.constant 32 : index
    %c0_79 = arith.constant 0 : index
    %98 = vector.load %arg9[%c32_78, %c0_79] : memref<288x668xbf16, #tpu.memory_space<vmem>>, vector<32x668xbf16>
    tpu.vector_store %arg9[%c32_78, %c0_79], %97 {strides = array<i32>} : memref<288x668xbf16, #tpu.memory_space<vmem>>, vector<32x668xbf16>,
    %99 = vector.extract_strided_slice %94 {offsets = [0, 2], sizes = [32, 668], strides = [1, 1]} : vector<32x726xbf16> to vector<32x668xbf16>
    %c64_80 = arith.constant 64 : index
    %c0_81 = arith.constant 0 : index
    %100 = vector.load %arg9[%c64_80, %c0_81] : memref<288x668xbf16, #tpu.memory_space<vmem>>, vector<32x668xbf16>
    tpu.vector_store %arg9[%c64_80, %c0_81], %99 {strides = array<i32>} : memref<288x668xbf16, #tpu.memory_space<vmem>>, vector<32x668xbf16>,
    %101 = vector.extract_strided_slice %94 {offsets = [0, 28], sizes = [32, 668], strides = [1, 1]} : vector<32x726xbf16> to vector<32x668xbf16>
    %c96_82 = arith.constant 96 : index
    %c0_83 = arith.constant 0 : index
    %102 = vector.load %arg9[%c96_82, %c0_83] : memref<288x668xbf16, #tpu.memory_space<vmem>>, vector<32x668xbf16>
    tpu.vector_store %arg9[%c96_82, %c0_83], %101 {strides = array<i32>} : memref<288x668xbf16, #tpu.memory_space<vmem>>, vector<32x668xbf16>,
    %103 = vector.extract_strided_slice %94 {offsets = [0, 29], sizes = [32, 668], strides = [1, 1]} : vector<32x726xbf16> to vector<32x668xbf16>
    %c128_84 = arith.constant 128 : index
    %c0_85 = arith.constant 0 : index
    %104 = vector.load %arg9[%c128_84, %c0_85] : memref<288x668xbf16, #tpu.memory_space<vmem>>, vector<32x668xbf16>
    tpu.vector_store %arg9[%c128_84, %c0_85], %103 {strides = array<i32>} : memref<288x668xbf16, #tpu.memory_space<vmem>>, vector<32x668xbf16>,
    %105 = vector.extract_strided_slice %94 {offsets = [0, 30], sizes = [32, 668], strides = [1, 1]} : vector<32x726xbf16> to vector<32x668xbf16>
    %c160_86 = arith.constant 160 : index
    %c0_87 = arith.constant 0 : index
    %106 = vector.load %arg9[%c160_86, %c0_87] : memref<288x668xbf16, #tpu.memory_space<vmem>>, vector<32x668xbf16>
    tpu.vector_store %arg9[%c160_86, %c0_87], %105 {strides = array<i32>} : memref<288x668xbf16, #tpu.memory_space<vmem>>, vector<32x668xbf16>,
    %107 = vector.extract_strided_slice %94 {offsets = [0, 56], sizes = [32, 668], strides = [1, 1]} : vector<32x726xbf16> to vector<32x668xbf16>
    %c192_88 = arith.constant 192 : index
    %c0_89 = arith.constant 0 : index
    %108 = vector.load %arg9[%c192_88, %c0_89] : memref<288x668xbf16, #tpu.memory_space<vmem>>, vector<32x668xbf16>
    tpu.vector_store %arg9[%c192_88, %c0_89], %107 {strides = array<i32>} : memref<288x668xbf16, #tpu.memory_space<vmem>>, vector<32x668xbf16>,
    %109 = vector.extract_strided_slice %94 {offsets = [0, 57], sizes = [32, 668], strides = [1, 1]} : vector<32x726xbf16> to vector<32x668xbf16>
    %c224_90 = arith.constant 224 : index
    %c0_91 = arith.constant 0 : index
    %110 = vector.load %arg9[%c224_90, %c0_91] : memref<288x668xbf16, #tpu.memory_space<vmem>>, vector<32x668xbf16>
    tpu.vector_store %arg9[%c224_90, %c0_91], %109 {strides = array<i32>} : memref<288x668xbf16, #tpu.memory_space<vmem>>, vector<32x668xbf16>,
    %111 = vector.extract_strided_slice %94 {offsets = [0, 58], sizes = [32, 668], strides = [1, 1]} : vector<32x726xbf16> to vector<32x668xbf16>
    %c256_92 = arith.constant 256 : index
    %c0_93 = arith.constant 0 : index
    %112 = vector.load %arg9[%c256_92, %c0_93] : memref<288x668xbf16, #tpu.memory_space<vmem>>, vector<32x668xbf16>
    tpu.vector_store %arg9[%c256_92, %c0_93], %111 {strides = array<i32>} : memref<288x668xbf16, #tpu.memory_space<vmem>>, vector<32x668xbf16>,
    %c0_94 = arith.constant 0 : index
    %c0_95 = arith.constant 0 : index
    %113 = vector.load %arg4[%c0_94, %c0_95] : memref<64x288xbf16, #tpu.memory_space<vmem>>, vector<64x288xbf16>
    %c0_96 = arith.constant 0 : index
    %c0_97 = arith.constant 0 : index
    %114 = vector.load %arg9[%c0_96, %c0_97] : memref<288x668xbf16, #tpu.memory_space<vmem>>, vector<288x668xbf16>
    %cst_98 = arith.constant dense<0.000000e+00> : vector<64x668xf32>
    %115 = tpu.matmul %113, %114, %cst_98 {dimension_numbers = #tpu.dot_dimension_numbers<[1], [0], [0], [1], [0, 0, 1, 1], [], []>} : vector<64x288xbf16>, vector<288x668xbf16>, vector<64x668xf32> -> vector<64x668xf32>
    %c0_99 = arith.constant 0 : index
    %c0_100 = arith.constant 0 : index
    %116 = vector.load %arg5[%c0_99, %c0_100] : memref<64x1xf32, #tpu.memory_space<vmem>>, vector<64x1xf32>
    %117 = vector.broadcast %116 : vector<64x1xf32> to vector<64x668xf32>
    %118 = arith.addf %115, %117 : vector<64x668xf32>
    %cst_101 = arith.constant 0.000000e+00 : f32
    %119 = vector.broadcast %cst_101 : f32 to vector<64x668xf32>
    %120 = arith.maximumf %118, %119 : vector<64x668xf32>
    %121 = arith.truncf %120 : vector<64x668xf32> to vector<64x668xbf16>
    %c0_102 = arith.constant 0 : index
    %c0_103 = arith.constant 0 : index
    %122 = vector.load %arg10[%c0_102, %c0_103] : memref<64x668xbf16, #tpu.memory_space<vmem>>, vector<64x668xbf16>
    tpu.vector_store %arg10[%c0_102, %c0_103], %121 {strides = array<i32>} : memref<64x668xbf16, #tpu.memory_space<vmem>>, vector<64x668xbf16>,
    %c0_104 = arith.constant 0 : index
    %c0_105 = arith.constant 0 : index
    %123 = vector.load %arg10[%c0_104, %c0_105] : memref<64x668xbf16, #tpu.memory_space<vmem>>, vector<64x667xbf16>
    %c0_106 = arith.constant 0 : index
    %c1_107 = arith.constant 1 : index
    %124 = vector.load %arg10[%c0_106, %c1_107] : memref<64x668xbf16, #tpu.memory_space<vmem>>, vector<64x667xbf16>
    %125 = arith.maximumf %123, %124 : vector<64x667xbf16>
    %126 = vector.extract_strided_slice %125 {offsets = [0, 0], sizes = [64, 639], strides = [1, 1]} : vector<64x667xbf16> to vector<64x639xbf16>
    %127 = vector.extract_strided_slice %125 {offsets = [0, 28], sizes = [64, 639], strides = [1, 1]} : vector<64x667xbf16> to vector<64x639xbf16>
    %128 = arith.maximumf %126, %127 : vector<64x639xbf16>
    %c0_108 = arith.constant 0 : index
    %c0_109 = arith.constant 0 : index
    %129 = vector.load %arg6[%c0_108, %c0_109] : memref<639x144xbf16, #tpu.memory_space<vmem>>, vector<639x144xbf16>
    %cst_110 = arith.constant dense<0.000000e+00> : vector<64x144xf32>
    %130 = tpu.matmul %128, %129, %cst_110 {dimension_numbers = #tpu.dot_dimension_numbers<[1], [0], [0], [1], [0, 0, 1, 1], [], []>} : vector<64x639xbf16>, vector<639x144xbf16>, vector<64x144xf32> -> vector<64x144xf32>
    %131 = arith.truncf %130 : vector<64x144xf32> to vector<64x144xbf16>
    %132 = vector.shape_cast %131 : vector<64x144xbf16> to vector<1x64x144xbf16>
    %c1_111 = arith.constant 1 : index
    %c0_112 = arith.constant 0 : index
    %c0_113 = arith.constant 0 : index
    %133 = vector.load %arg7[%c1_111, %c0_112, %c0_113] : memref<2x64x144xbf16, #tpu.memory_space<vmem>>, vector<1x64x144xbf16>
    tpu.vector_store %arg7[%c1_111, %c0_112, %c0_113], %132 {strides = array<i32>} : memref<2x64x144xbf16, #tpu.memory_space<vmem>>, vector<1x64x144xbf16>,
    return
  }
  func.func @transform_0(%arg0: i32) -> (i32, i32) {
    %c0_i32 = arith.constant 0 : i32
    %c0_i32_0 = arith.constant 0 : i32
    return %arg0, %c0_i32 : i32, i32
  }
  func.func @transform_1(%arg0: i32) -> (i32, i32) {
    %c0_i32 = arith.constant 0 : i32
    %c0_i32_0 = arith.constant 0 : i32
    %c0_i32_1 = arith.constant 0 : i32
    return %c0_i32, %c0_i32_0 : i32, i32
  }
  func.func @transform_2(%arg0: i32) -> (i32, i32) {
    %c0_i32 = arith.constant 0 : i32
    %c0_i32_0 = arith.constant 0 : i32
    %c0_i32_1 = arith.constant 0 : i32
    return %c0_i32, %c0_i32_0 : i32, i32
  }
  func.func @transform_3(%arg0: i32) -> (i32, i32) {
    %c0_i32 = arith.constant 0 : i32
    %c0_i32_0 = arith.constant 0 : i32
    %c0_i32_1 = arith.constant 0 : i32
    return %c0_i32, %c0_i32_0 : i32, i32
  }
  func.func @transform_4(%arg0: i32) -> (i32, i32) {
    %c0_i32 = arith.constant 0 : i32
    %c0_i32_0 = arith.constant 0 : i32
    %c0_i32_1 = arith.constant 0 : i32
    return %c0_i32, %c0_i32_0 : i32, i32
  }
  func.func @transform_5(%arg0: i32) -> (i32, i32) {
    %c0_i32 = arith.constant 0 : i32
    %c0_i32_0 = arith.constant 0 : i32
    %c0_i32_1 = arith.constant 0 : i32
    return %c0_i32, %c0_i32_0 : i32, i32
  }
  func.func @transform_6(%arg0: i32) -> (i32, i32, i32) {
    %c0_i32 = arith.constant 0 : i32
    %c0_i32_0 = arith.constant 0 : i32
    %c0_i32_1 = arith.constant 0 : i32
    return %arg0, %c0_i32, %c0_i32_0 : i32, i32, i32
  }
}

module attributes {stable_mosaic.version = 11 : i64} {
  func.func @_fc_tail_kernel(%arg0: i32, %arg1: memref<2x9216xbf16, #tpu.memory_space<vmem>>, %arg2: memref<9216x128xbf16, #tpu.memory_space<vmem>>, %arg3: memref<1x128xf32, #tpu.memory_space<vmem>>, %arg4: memref<128x10xbf16, #tpu.memory_space<vmem>>, %arg5: memref<1x10xf32, #tpu.memory_space<vmem>>, %arg6: memref<2x10xf32, #tpu.memory_space<vmem>>) attributes {dimension_semantics = [#tpu.dimension_semantics<parallel>], iteration_bounds = array<i64: 1>, scalar_prefetch = 0 : i64, scratch_operands = 0 : i64, tpu.core_type = #tpu.core_type<tc>, window_params = [{transform_indices = @transform_0, window_bounds = array<i64: 2, 9216>}, {pipeline_mode = #tpu.pipeline_mode<synchronous>, transform_indices = @transform_1, window_bounds = array<i64: 9216, 128>}, {pipeline_mode = #tpu.pipeline_mode<synchronous>, transform_indices = @transform_2, window_bounds = array<i64: 1, 128>}, {pipeline_mode = #tpu.pipeline_mode<synchronous>, transform_indices = @transform_3, window_bounds = array<i64: 128, 10>}, {pipeline_mode = #tpu.pipeline_mode<synchronous>, transform_indices = @transform_4, window_bounds = array<i64: 1, 10>}, {transform_indices = @transform_5, window_bounds = array<i64: 2, 10>}]} {
    %c0 = arith.constant 0 : index
    %c0_0 = arith.constant 0 : index
    %0 = vector.load %arg1[%c0, %c0_0] : memref<2x9216xbf16, #tpu.memory_space<vmem>>, vector<2x9216xbf16>
    %c0_1 = arith.constant 0 : index
    %c0_2 = arith.constant 0 : index
    %1 = vector.load %arg2[%c0_1, %c0_2] : memref<9216x128xbf16, #tpu.memory_space<vmem>>, vector<9216x128xbf16>
    %cst = arith.constant dense<0.000000e+00> : vector<2x128xf32>
    %2 = tpu.matmul %0, %1, %cst {dimension_numbers = #tpu.dot_dimension_numbers<[1], [0], [0], [1], [0, 0, 1, 1], [], []>} : vector<2x9216xbf16>, vector<9216x128xbf16>, vector<2x128xf32> -> vector<2x128xf32>
    %c0_3 = arith.constant 0 : index
    %c0_4 = arith.constant 0 : index
    %3 = vector.load %arg3[%c0_3, %c0_4] : memref<1x128xf32, #tpu.memory_space<vmem>>, vector<1x128xf32>
    %4 = vector.broadcast %3 : vector<1x128xf32> to vector<2x128xf32>
    %5 = arith.addf %2, %4 : vector<2x128xf32>
    %cst_5 = arith.constant 0.000000e+00 : f32
    %6 = vector.broadcast %cst_5 : f32 to vector<2x128xf32>
    %7 = arith.maximumf %5, %6 : vector<2x128xf32>
    %8 = arith.truncf %7 : vector<2x128xf32> to vector<2x128xbf16>
    %c0_6 = arith.constant 0 : index
    %c0_7 = arith.constant 0 : index
    %9 = vector.load %arg4[%c0_6, %c0_7] : memref<128x10xbf16, #tpu.memory_space<vmem>>, vector<128x10xbf16>
    %cst_8 = arith.constant dense<0.000000e+00> : vector<2x10xf32>
    %10 = tpu.matmul %8, %9, %cst_8 {dimension_numbers = #tpu.dot_dimension_numbers<[1], [0], [0], [1], [0, 0, 1, 1], [], []>} : vector<2x128xbf16>, vector<128x10xbf16>, vector<2x10xf32> -> vector<2x10xf32>
    %c0_9 = arith.constant 0 : index
    %c0_10 = arith.constant 0 : index
    %11 = vector.load %arg5[%c0_9, %c0_10] : memref<1x10xf32, #tpu.memory_space<vmem>>, vector<1x10xf32>
    %12 = vector.broadcast %11 : vector<1x10xf32> to vector<2x10xf32>
    %13 = arith.addf %10, %12 : vector<2x10xf32>
    %cst_11 = arith.constant dense<0xFF800000> : vector<2xf32>
    %14 = vector.multi_reduction <maximumf>, %13, %cst_11 [1] : vector<2x10xf32> to vector<2xf32>
    %15 = vector.shape_cast %14 : vector<2xf32> to vector<2x1xf32>
    %16 = vector.broadcast %15 : vector<2x1xf32> to vector<2x10xf32>
    %17 = arith.subf %13, %16 : vector<2x10xf32>
    %18 = math.exp %17 : vector<2x10xf32>
    %cst_12 = arith.constant dense<0.000000e+00> : vector<2xf32>
    %19 = vector.multi_reduction <add>, %18, %cst_12 [1] : vector<2x10xf32> to vector<2xf32>
    %20 = vector.shape_cast %19 : vector<2xf32> to vector<2x1xf32>
    %21 = math.log %20 : vector<2x1xf32>
    %22 = vector.broadcast %21 : vector<2x1xf32> to vector<2x10xf32>
    %23 = arith.subf %17, %22 : vector<2x10xf32>
    %c0_13 = arith.constant 0 : index
    %c0_14 = arith.constant 0 : index
    %24 = vector.load %arg6[%c0_13, %c0_14] : memref<2x10xf32, #tpu.memory_space<vmem>>, vector<2x10xf32>
    tpu.vector_store %arg6[%c0_13, %c0_14], %23 {strides = array<i32>} : memref<2x10xf32, #tpu.memory_space<vmem>>, vector<2x10xf32>,
    return
  }
  func.func @transform_0(%arg0: i32) -> (i32, i32) {
    %c0_i32 = arith.constant 0 : i32
    %c0_i32_0 = arith.constant 0 : i32
    return %arg0, %c0_i32 : i32, i32
  }
  func.func @transform_1(%arg0: i32) -> (i32, i32) {
    %c0_i32 = arith.constant 0 : i32
    %c0_i32_0 = arith.constant 0 : i32
    %c0_i32_1 = arith.constant 0 : i32
    return %c0_i32, %c0_i32_0 : i32, i32
  }
  func.func @transform_2(%arg0: i32) -> (i32, i32) {
    %c0_i32 = arith.constant 0 : i32
    %c0_i32_0 = arith.constant 0 : i32
    %c0_i32_1 = arith.constant 0 : i32
    return %c0_i32, %c0_i32_0 : i32, i32
  }
  func.func @transform_3(%arg0: i32) -> (i32, i32) {
    %c0_i32 = arith.constant 0 : i32
    %c0_i32_0 = arith.constant 0 : i32
    %c0_i32_1 = arith.constant 0 : i32
    return %c0_i32, %c0_i32_0 : i32, i32
  }
  func.func @transform_4(%arg0: i32) -> (i32, i32) {
    %c0_i32 = arith.constant 0 : i32
    %c0_i32_0 = arith.constant 0 : i32
    %c0_i32_1 = arith.constant 0 : i32
    return %c0_i32, %c0_i32_0 : i32, i32
  }
  func.func @transform_5(%arg0: i32) -> (i32, i32) {
    %c0_i32 = arith.constant 0 : i32
    %c0_i32_0 = arith.constant 0 : i32
    return %arg0, %c0_i32 : i32, i32
  }
}

</mosaic_0001>

<llo_original>
// kernel: net_forward.3
$region0: #{net_forward.3}
  #allocation0 [shape = 'u32[]', space=smem, size = 0x4, offset = 0x4, fixed_abs, tag = 'smem constant byte address 0x4 - core index']
  #allocation1 [shape = 'u32[144,128]{1,0:T(1,128)}', space=vmem, size = 0x12000, scoped, tag = 'internal scratch']
  %s0 = inlined_call_operand.vmem [shape: bf16[2,9216], index: 0, kind: input, shape index: {}]
  %s1 = inlined_call_operand.hbm [shape: bf16[9216,128], index: 1, kind: input, shape index: {}]
  %s2 = inlined_call_operand.hbm [shape: f32[1,128], index: 2, kind: input, shape index: {}]
  %s3 = inlined_call_operand.vmem [shape: bf16[128,10], index: 3, kind: input, shape index: {}]
  %s4 = inlined_call_operand.hbm [shape: f32[1,10], index: 4, kind: input, shape index: {}]
  %s5 = inlined_call_operand.hbm [shape: f32[2,10], index: 5, kind: output, shape index: {}]
  %s6 = sld [smem:[#allocation0]]
  $region42: #{net_forward.3} parent=0
    _
  %s8 = ssub.s32 1, %s6
  %s9 = scalar_select 0, %s8, %s6
  $region1: #{net_forward.3} parent=0
    #allocation2 [shape = 'u8[2359296]{0}', space=vmem, size = 0x240000, scoped, tag = 'input window, operand 1, single buffered']
    #allocation3 [shape = 's32[1]{0}', space=sflag, size = 0x4, scoped, tag = 'scoped memory for net_forward.3']
    #allocation4 [shape = 's32[1]{0}', space=sflag, size = 0x4, scoped, tag = 'scoped memory for net_forward.3']
    #allocation5 [shape = 'u8[512]{0}', space=vmem, size = 0x400, scoped, tag = 'input window, operand 2, single buffered']
    #allocation6 [shape = 's32[1]{0}', space=sflag, size = 0x4, scoped, tag = 'scoped memory for net_forward.3']
    #allocation7 [shape = 'u8[512]{0}', space=vmem, size = 0x400, scoped, tag = 'input window, operand 4, single buffered']
    #allocation8 [shape = 'u8[1024]{0}', space=vmem, size = 0x400, scoped, tag = 'output window, operand 0, single buffered']
    %10 = vsyncpa [#allocation3], 0
    %11 = vsyncpa [#allocation6], 0
    %12 = vsyncpa [#allocation4], 0
    // Predicated region
    $region2: #{net_forward.3} parent=1 // pred_check
      _
    $region3: #{net_forward.3} parent=1 // pred_check_branch
      %14 = sbr.rel (0) target = $region5
    $region4: #{net_forward.3} parent=1 // pred_region
      _
    $region5: #{net_forward.3} parent=1 // pred_fallthru
      _
    // Predicated region
    $region6: #{net_forward.3} parent=1 // pred_check
      _
    $region7: #{net_forward.3} parent=1 // pred_check_branch
      %16 = sbr.rel (0) target = $region9
    $region8: #{net_forward.3} parent=1 // pred_region
      %s18 = ssub.s32 73728, 73728
      %19 = vsyncadd [#allocation3], %s18
      %s20 = sshll.u32 [#allocation2], 4
      %s21 = int_to_ptr.vmem [resolvable:$true] %s20
      %26 = dma.hbm_to_vmem [thread:$0]  %s1, 73728, %s21, [#allocation3], 64, 64, 4
    $region9: #{net_forward.3} parent=1 // pred_fallthru
      _
    // Predicated region
    $region10: #{net_forward.3} parent=1 // pred_check
      _
    $region11: #{net_forward.3} parent=1 // pred_check_branch
      %28 = sbr.rel (0) target = $region13
    $region12: #{net_forward.3} parent=1 // pred_region
      %s30 = ssub.s32 16, 16
      %31 = vsyncadd [#allocation6], %s30
      %s33 = sshll.u32 [#allocation5], 4
      %s34 = int_to_ptr.vmem [resolvable:$true] %s33
      %36 = dma.hbm_to_vmem [thread:$0]  %s2, 16, %s34, [#allocation6]
    $region13: #{net_forward.3} parent=1 // pred_fallthru
      _
    // Predicated region
    $region14: #{net_forward.3} parent=1 // pred_check
      _
    $region15: #{net_forward.3} parent=1 // pred_check_branch
      %38 = sbr.rel (0) target = $region17
    $region16: #{net_forward.3} parent=1 // pred_region
      _
    $region17: #{net_forward.3} parent=1 // pred_fallthru
      _
    // Predicated region
    $region18: #{net_forward.3} parent=1 // pred_check
      _
    $region19: #{net_forward.3} parent=1 // pred_check_branch
      %40 = sbr.rel (0) target = $region21
    $region20: #{net_forward.3} parent=1 // pred_region
      %s42 = ssub.s32 16, 16
      %43 = vsyncadd [#allocation6], %s42
      %s45 = sshll.u32 [#allocation7], 4
      %s46 = int_to_ptr.vmem [resolvable:$true] %s45
      %48 = dma.hbm_to_vmem [thread:$0]  %s4, 16, %s46, [#allocation6]
    $region21: #{net_forward.3} parent=1 // pred_fallthru
      _
    // Predicated region
    $region22: #{net_forward.3} parent=1 // pred_check
      _
    $region23: #{net_forward.3} parent=1 // pred_check_branch
      %50 = sbr.rel (0) target = $region25
    $region24: #{net_forward.3} parent=1 // pred_region
      %51 = dma.done [#allocation3], 73728
    $region25: #{net_forward.3} parent=1 // pred_fallthru
      _
    // Predicated region
    $region26: #{net_forward.3} parent=1 // pred_check
      _
    $region27: #{net_forward.3} parent=1 // pred_check_branch
      %53 = sbr.rel (0) target = $region29
    $region28: #{net_forward.3} parent=1 // pred_region
      %54 = dma.done [#allocation6], 16
    $region29: #{net_forward.3} parent=1 // pred_fallthru
      _
    // Predicated region
    $region30: #{net_forward.3} parent=1 // pred_check
      _
    $region31: #{net_forward.3} parent=1 // pred_check_branch
      %56 = sbr.rel (0) target = $region33
    $region32: #{net_forward.3} parent=1 // pred_region
      %57 = dma.done [#allocation6], 16
    $region33: #{net_forward.3} parent=1 // pred_fallthru
      _
    %v59 = vld [vmem:[%s0] sm:$0xff]
    %v60 = vld [vmem:[%s0 + $0x8] sm:$0xff]
    %v61 = vld [vmem:[%s0 + $0x10] sm:$0xff]
    %v62 = vld [vmem:[%s0 + $0x18] sm:$0xff]
    %v63 = vld [vmem:[%s0 + $0x20] sm:$0xff]
    %v64 = vld [vmem:[%s0 + $0x28] sm:$0xff]
    %v65 = vld [vmem:[%s0 + $0x30] sm:$0xff]
    %v66 = vld [vmem:[%s0 + $0x38] sm:$0xff]
    %v67 = vld [vmem:[%s0 + $0x40] sm:$0xff]
    %v68 = vld [vmem:[#allocation2] sm:$0xf]
    %v69 = vld [vmem:[#allocation2 + $0x4] sm:$0xf]
    %v70 = vld [vmem:[#allocation2 + $0x8] sm:$0xf]
    %v71 = vld [vmem:[#allocation2 + $0xc] sm:$0xf]
    %v72 = vld [vmem:[#allocation2 + $0x10] sm:$0xf]
    %v73 = vld [vmem:[#allocation2 + $0x14] sm:$0xf]
    %v74 = vld [vmem:[#allocation2 + $0x18] sm:$0xf]
    %v75 = vld [vmem:[#allocation2 + $0x1c] sm:$0xf]
    %v76 = vld [vmem:[#allocation2 + $0x20] sm:$0xf]
    %v77 = vld [vmem:[#allocation2 + $0x24] sm:$0xf]
    %v78 = vld [vmem:[#allocation2 + $0x28] sm:$0xf]
    %v79 = vld [vmem:[#allocation2 + $0x2c] sm:$0xf]
    %v80 = vld [vmem:[#allocation2 + $0x30] sm:$0xf]
    %v81 = vld [vmem:[#allocation2 + $0x34] sm:$0xf]
    %v82 = vld [vmem:[#allocation2 + $0x38] sm:$0xf]
    %v83 = vld [vmem:[#allocation2 + $0x3c] sm:$0xf]
    %v84 = vld [vmem:[#allocation2 + $0x40] sm:$0xf]
    %v85 = vld [vmem:[#allocation2 + $0x44] sm:$0xf]
    %v86 = vld [vmem:[#allocation2 + $0x48] sm:$0xf]
    %v87 = vld [vmem:[#allocation2 + $0x4c] sm:$0xf]
    %v88 = vld [vmem:[#allocation2 + $0x50] sm:$0xf]
    %v89 = vld [vmem:[#allocation2 + $0x54] sm:$0xf]
    %v90 = vld [vmem:[#allocation2 + $0x58] sm:$0xf]
    %v91 = vld [vmem:[#allocation2 + $0x5c] sm:$0xf]
    %v92 = vld [vmem:[#allocation2 + $0x60] sm:$0xf]
    %v93 = vld [vmem:[#allocation2 + $0x64] sm:$0xf]
    %v94 = vld [vmem:[#allocation2 + $0x68] sm:$0xf]
    %v95 = vld [vmem:[#allocation2 + $0x6c] sm:$0xf]
    %v96 = vld [vmem:[#allocation2 + $0x70] sm:$0xf]
    %v97 = vld [vmem:[#allocation2 + $0x74] sm:$0xf]
    %v98 = vld [vmem:[#allocation2 + $0x78] sm:$0xf]
    %v99 = vld [vmem:[#allocation2 + $0x7c] sm:$0xf]
    %v100 = vld [vmem:[#allocation2 + $0x80] sm:$0xf]
    %v101 = vld [vmem:[#allocation2 + $0x84] sm:$0xf]
    %v102 = vld [vmem:[#allocation2 + $0x88] sm:$0xf]
    %v103 = vld [vmem:[#allocation2 + $0x8c] sm:$0xf]
    %v104 = vld [vmem:[#allocation2 + $0x90] sm:$0xf]
    %v105 = vld [vmem:[#allocation2 + $0x94] sm:$0xf]
    %v106 = vld [vmem:[#allocation2 + $0x98] sm:$0xf]
    %v107 = vld [vmem:[#allocation2 + $0x9c] sm:$0xf]
    %v108 = vld [vmem:[#allocation2 + $0xa0] sm:$0xf]
    %v109 = vld [vmem:[#allocation2 + $0xa4] sm:$0xf]
    %v110 = vld [vmem:[#allocation2 + $0xa8] sm:$0xf]
    %v111 = vld [vmem:[#allocation2 + $0xac] sm:$0xf]
    %v112 = vld [vmem:[#allocation2 + $0xb0] sm:$0xf]
    %v113 = vld [vmem:[#allocation2 + $0xb4] sm:$0xf]
    %v114 = vld [vmem:[#allocation2 + $0xb8] sm:$0xf]
    %v115 = vld [vmem:[#allocation2 + $0xbc] sm:$0xf]
    %v116 = vld [vmem:[#allocation2 + $0xc0] sm:$0xf]
    %v117 = vld [vmem:[#allocation2 + $0xc4] sm:$0xf]
    %v118 = vld [vmem:[#allocation2 + $0xc8] sm:$0xf]
    %v119 = vld [vmem:[#allocation2 + $0xcc] sm:$0xf]
    %v120 = vld [vmem:[#allocation2 + $0xd0] sm:$0xf]
    %v121 = vld [vmem:[#allocation2 + $0xd4] sm:$0xf]
    %v122 = vld [vmem:[#allocation2 + $0xd8] sm:$0xf]
    %v123 = vld [vmem:[#allocation2 + $0xdc] sm:$0xf]
    %v124 = vld [vmem:[#allocation2 + $0xe0] sm:$0xf]
    %v125 = vld [vmem:[#allocation2 + $0xe4] sm:$0xf]
    %v126 = vld [vmem:[#allocation2 + $0xe8] sm:$0xf]
    %v127 = vld [vmem:[#allocation2 + $0xec] sm:$0xf]
    %v128 = vld [vmem:[#allocation2 + $0xf0] sm:$0xf]
    %v129 = vld [vmem:[#allocation2 + $0xf4] sm:$0xf]
    %v130 = vld [vmem:[#allocation2 + $0xf8] sm:$0xf]
    %v131 = vld [vmem:[#allocation2 + $0xfc] sm:$0xf]
    %v132 = vld [vmem:[#allocation2 + $0x100] sm:$0xf]
    %v133 = vld [vmem:[#allocation2 + $0x104] sm:$0xf]
    %v134 = vld [vmem:[#allocation2 + $0x108] sm:$0xf]
    %v135 = vld [vmem:[#allocation2 + $0x10c] sm:$0xf]
    %v136 = vld [vmem:[#allocation2 + $0x110] sm:$0xf]
    %v137 = vld [vmem:[#allocation2 + $0x114] sm:$0xf]
    %v138 = vld [vmem:[#allocation2 + $0x118] sm:$0xf]
    %v139 = vld [vmem:[#allocation2 + $0x11c] sm:$0xf]
    %v140 = vld [vmem:[#allocation2 + $0x120] sm:$0xf]
    %v141 = vld [vmem:[#allocation2 + $0x124] sm:$0xf]
    %v142 = vld [vmem:[#allocation2 + $0x128] sm:$0xf]
    %v143 = vld [vmem:[#allocation2 + $0x12c] sm:$0xf]
    %v144 = vld [vmem:[#allocation2 + $0x130] sm:$0xf]
    %v145 = vld [vmem:[#allocation2 + $0x134] sm:$0xf]
    %v146 = vld [vmem:[#allocation2 + $0x138] sm:$0xf]
    %v147 = vld [vmem:[#allocation2 + $0x13c] sm:$0xf]
    %v148 = vld [vmem:[#allocation2 + $0x140] sm:$0xf]
    %v149 = vld [vmem:[#allocation2 + $0x144] sm:$0xf]
    %v150 = vld [vmem:[#allocation2 + $0x148] sm:$0xf]
    %v151 = vld [vmem:[#allocation2 + $0x14c] sm:$0xf]
    %v152 = vld [vmem:[#allocation2 + $0x150] sm:$0xf]
    %v153 = vld [vmem:[#allocation2 + $0x154] sm:$0xf]
    %v154 = vld [vmem:[#allocation2 + $0x158] sm:$0xf]
    %v155 = vld [vmem:[#allocation2 + $0x15c] sm:$0xf]
    %v156 = vld [vmem:[#allocation2 + $0x160] sm:$0xf]
    %v157 = vld [vmem:[#allocation2 + $0x164] sm:$0xf]
    %v158 = vld [vmem:[#allocation2 + $0x168] sm:$0xf]
    %v159 = vld [vmem:[#allocation2 + $0x16c] sm:$0xf]
    %v160 = vld [vmem:[#allocation2 + $0x170] sm:$0xf]
    %v161 = vld [vmem:[#allocation2 + $0x174] sm:$0xf]
    %v162 = vld [vmem:[#allocation2 + $0x178] sm:$0xf]
    %v163 = vld [vmem:[#allocation2 + $0x17c] sm:$0xf]
    %v164 = vld [vmem:[#allocation2 + $0x180] sm:$0xf]
    %v165 = vld [vmem:[#allocation2 + $0x184] sm:$0xf]
    %v166 = vld [vmem:[#allocation2 + $0x188] sm:$0xf]
    %v167 = vld [vmem:[#allocation2 + $0x18c] sm:$0xf]
    %v168 = vld [vmem:[#allocation2 + $0x190] sm:$0xf]
    %v169 = vld [vmem:[#allocation2 + $0x194] sm:$0xf]
    %v170 = vld [vmem:[#allocation2 + $0x198] sm:$0xf]
    %v171 = vld [vmem:[#allocation2 + $0x19c] sm:$0xf]
    %v172 = vld [vmem:[#allocation2 + $0x1a0] sm:$0xf]
    %v173 = vld [vmem:[#allocation2 + $0x1a4] sm:$0xf]
    %v174 = vld [vmem:[#allocation2 + $0x1a8] sm:$0xf]
    %v175 = vld [vmem:[#allocation2 + $0x1ac] sm:$0xf]
    %v176 = vld [vmem:[#allocation2 + $0x1b0] sm:$0xf]
    %v177 = vld [vmem:[#allocation2 + $0x1b4] sm:$0xf]
    %v178 = vld [vmem:[#allocation2 + $0x1b8] sm:$0xf]
    %v179 = vld [vmem:[#allocation2 + $0x1bc] sm:$0xf]
    %v180 = vld [vmem:[#allocation2 + $0x1c0] sm:$0xf]
    %v181 = vld [vmem:[#allocation2 + $0x1c4] sm:$0xf]
    %v182 = vld [vmem:[#allocation2 + $0x1c8] sm:$0xf]
    %v183 = vld [vmem:[#allocation2 + $0x1cc] sm:$0xf]
    %v184 = vld [vmem:[#allocation2 + $0x1d0] sm:$0xf]
    %v185 = vld [vmem:[#allocation2 + $0x1d4] sm:$0xf]
    %v186 = vld [vmem:[#allocation2 + $0x1d8] sm:$0xf]
    %v187 = vld [vmem:[#allocation2 + $0x1dc] sm:$0xf]
    %v188 = vld [vmem:[#allocation2 + $0x1e0] sm:$0xf]
    %v189 = vld [vmem:[#allocation2 + $0x1e4] sm:$0xf]
    %v190 = vld [vmem:[#allocation2 + $0x1e8] sm:$0xf]
    %v191 = vld [vmem:[#allocation2 + $0x1ec] sm:$0xf]
    %v192 = vld [vmem:[#allocation2 + $0x1f0] sm:$0xf]
    %v193 = vld [vmem:[#allocation2 + $0x1f4] sm:$0xf]
    %v194 = vld [vmem:[#allocation2 + $0x1f8] sm:$0xf]
    %v195 = vld [vmem:[#allocation2 + $0x1fc] sm:$0xf]
    %v196 = vld [vmem:[#allocation2 + $0x200] sm:$0xf]
    %v197 = vld [vmem:[#allocation2 + $0x204] sm:$0xf]
    %v198 = vld [vmem:[#allocation2 + $0x208] sm:$0xf]
    %v199 = vld [vmem:[#allocation2 + $0x20c] sm:$0xf]
    %v200 = vld [vmem:[#allocation2 + $0x210] sm:$0xf]
    %v201 = vld [vmem:[#allocation2 + $0x214] sm:$0xf]
    %v202 = vld [vmem:[#allocation2 + $0x218] sm:$0xf]
    %v203 = vld [vmem:[#allocation2 + $0x21c] sm:$0xf]
    %v204 = vld [vmem:[#allocation2 + $0x220] sm:$0xf]
    %v205 = vld [vmem:[#allocation2 + $0x224] sm:$0xf]
    %v206 = vld [vmem:[#allocation2 + $0x228] sm:$0xf]
    %v207 = vld [vmem:[#allocation2 + $0x22c] sm:$0xf]
    %v208 = vld [vmem:[#allocation2 + $0x230] sm:$0xf]
    %v209 = vld [vmem:[#allocation2 + $0x234] sm:$0xf]
    %v210 = vld [vmem:[#allocation2 + $0x238] sm:$0xf]
    %v211 = vld [vmem:[#allocation2 + $0x23c] sm:$0xf]
    %v212 = vld [vmem:[#allocation2 + $0x240] sm:$0xf]
    %v213 = vld [vmem:[#allocation2 + $0x244] sm:$0xf]
    %v214 = vld [vmem:[#allocation2 + $0x248] sm:$0xf]
    %v215 = vld [vmem:[#allocation2 + $0x24c] sm:$0xf]
    %v216 = vld [vmem:[#allocation2 + $0x250] sm:$0xf]
    %v217 = vld [vmem:[#allocation2 + $0x254] sm:$0xf]
    %v218 = vld [vmem:[#allocation2 + $0x258] sm:$0xf]
    %v219 = vld [vmem:[#allocation2 + $0x25c] sm:$0xf]
    %v220 = vld [vmem:[#allocation2 + $0x260] sm:$0xf]
    %v221 = vld [vmem:[#allocation2 + $0x264] sm:$0xf]
    %v222 = vld [vmem:[#allocation2 + $0x268] sm:$0xf]
    %v223 = vld [vmem:[#allocation2 + $0x26c] sm:$0xf]
    %v224 = vld [vmem:[#allocation2 + $0x270] sm:$0xf]
    %v225 = vld [vmem:[#allocation2 + $0x274] sm:$0xf]
    %v226 = vld [vmem:[#allocation2 + $0x278] sm:$0xf]
    %v227 = vld [vmem:[#allocation2 + $0x27c] sm:$0xf]
    %v228 = vld [vmem:[#allocation2 + $0x280] sm:$0xf]
    %v229 = vld [vmem:[#allocation2 + $0x284] sm:$0xf]
    %v230 = vld [vmem:[#allocation2 + $0x288] sm:$0xf]
    %v231 = vld [vmem:[#allocation2 + $0x28c] sm:$0xf]
    %v232 = vld [vmem:[#allocation2 + $0x290] sm:$0xf]
    %v233 = vld [vmem:[#allocation2 + $0x294] sm:$0xf]
    %v234 = vld [vmem:[#allocation2 + $0x298] sm:$0xf]
    %v235 = vld [vmem:[#allocation2 + $0x29c] sm:$0xf]
    %v236 = vld [vmem:[#allocation2 + $0x2a0] sm:$0xf]
    %v237 = vld [vmem:[#allocation2 + $0x2a4] sm:$0xf]
    %v238 = vld [vmem:[#allocation2 + $0x2a8] sm:$0xf]
    %v239 = vld [vmem:[#allocation2 + $0x2ac] sm:$0xf]
    %v240 = vld [vmem:[#allocation2 + $0x2b0] sm:$0xf]
    %v241 = vld [vmem:[#allocation2 + $0x2b4] sm:$0xf]
    %v242 = vld [vmem:[#allocation2 + $0x2b8] sm:$0xf]
    %v243 = vld [vmem:[#allocation2 + $0x2bc] sm:$0xf]
    %v244 = vld [vmem:[#allocation2 + $0x2c0] sm:$0xf]
    %v245 = vld [vmem:[#allocation2 + $0x2c4] sm:$0xf]
    %v246 = vld [vmem:[#allocation2 + $0x2c8] sm:$0xf]
    %v247 = vld [vmem:[#allocation2 + $0x2cc] sm:$0xf]
    %v248 = vld [vmem:[#allocation2 + $0x2d0] sm:$0xf]
    %v249 = vld [vmem:[#allocation2 + $0x2d4] sm:$0xf]
    %v250 = vld [vmem:[#allocation2 + $0x2d8] sm:$0xf]
    %v251 = vld [vmem:[#allocation2 + $0x2dc] sm:$0xf]
    %v252 = vld [vmem:[#allocation2 + $0x2e0] sm:$0xf]
    %v253 = vld [vmem:[#allocation2 + $0x2e4] sm:$0xf]
    %v254 = vld [vmem:[#allocation2 + $0x2e8] sm:$0xf]
    %v255 = vld [vmem:[#allocation2 + $0x2ec] sm:$0xf]
    %v256 = vld [vmem:[#allocation2 + $0x2f0] sm:$0xf]
    %v257 = vld [vmem:[#allocation2 + $0x2f4] sm:$0xf]
    %v258 = vld [vmem:[#allocation2 + $0x2f8] sm:$0xf]
    %v259 = vld [vmem:[#allocation2 + $0x2fc] sm:$0xf]
    %v260 = vld [vmem:[#allocation2 + $0x300] sm:$0xf]
    %v261 = vld [vmem:[#allocation2 + $0x304] sm:$0xf]
    %v262 = vld [vmem:[#allocation2 + $0x308] sm:$0xf]
    %v263 = vld [vmem:[#allocation2 + $0x30c] sm:$0xf]
    %v264 = vld [vmem:[#allocation2 + $0x310] sm:$0xf]
    %v265 = vld [vmem:[#allocation2 + $0x314] sm:$0xf]
    %v266 = vld [vmem:[#allocation2 + $0x318] sm:$0xf]
    %v267 = vld [vmem:[#allocation2 + $0x31c] sm:$0xf]
    %v268 = vld [vmem:[#allocation2 + $0x320] sm:$0xf]
    %v269 = vld [vmem:[#allocation2 + $0x324] sm:$0xf]
    %v270 = vld [vmem:[#allocation2 + $0x328] sm:$0xf]
    %v271 = vld [vmem:[#allocation2 + $0x32c] sm:$0xf]
    %v272 = vld [vmem:[#allocation2 + $0x330] sm:$0xf]
    %v273 = vld [vmem:[#allocation2 + $0x334] sm:$0xf]
    %v274 = vld [vmem:[#allocation2 + $0x338] sm:$0xf]
    %v275 = vld [vmem:[#allocation2 + $0x33c] sm:$0xf]
    %v276 = vld [vmem:[#allocation2 + $0x340] sm:$0xf]
    %v277 = vld [vmem:[#allocation2 + $0x344] sm:$0xf]
    %v278 = vld [vmem:[#allocation2 + $0x348] sm:$0xf]
    %v279 = vld [vmem:[#allocation2 + $0x34c] sm:$0xf]
    %v280 = vld [vmem:[#allocation2 + $0x350] sm:$0xf]
    %v281 = vld [vmem:[#allocation2 + $0x354] sm:$0xf]
    %v282 = vld [vmem:[#allocation2 + $0x358] sm:$0xf]
    %v283 = vld [vmem:[#allocation2 + $0x35c] sm:$0xf]
    %v284 = vld [vmem:[#allocation2 + $0x360] sm:$0xf]
    %v285 = vld [vmem:[#allocation2 + $0x364] sm:$0xf]
    %v286 = vld [vmem:[#allocation2 + $0x368] sm:$0xf]
    %v287 = vld [vmem:[#allocation2 + $0x36c] sm:$0xf]
    %v288 = vld [vmem:[#allocation2 + $0x370] sm:$0xf]
    %v289 = vld [vmem:[#allocation2 + $0x374] sm:$0xf]
    %v290 = vld [vmem:[#allocation2 + $0x378] sm:$0xf]
    %v291 = vld [vmem:[#allocation2 + $0x37c] sm:$0xf]
    %v292 = vld [vmem:[#allocation2 + $0x380] sm:$0xf]
    %v293 = vld [vmem:[#allocation2 + $0x384] sm:$0xf]
    %v294 = vld [vmem:[#allocation2 + $0x388] sm:$0xf]
    %v295 = vld [vmem:[#allocation2 + $0x38c] sm:$0xf]
    %v296 = vld [vmem:[#allocation2 + $0x390] sm:$0xf]
    %v297 = vld [vmem:[#allocation2 + $0x394] sm:$0xf]
    %v298 = vld [vmem:[#allocation2 + $0x398] sm:$0xf]
    %v299 = vld [vmem:[#allocation2 + $0x39c] sm:$0xf]
    %v300 = vld [vmem:[#allocation2 + $0x3a0] sm:$0xf]
    %v301 = vld [vmem:[#allocation2 + $0x3a4] sm:$0xf]
    %v302 = vld [vmem:[#allocation2 + $0x3a8] sm:$0xf]
    %v303 = vld [vmem:[#allocation2 + $0x3ac] sm:$0xf]
    %v304 = vld [vmem:[#allocation2 + $0x3b0] sm:$0xf]
    %v305 = vld [vmem:[#allocation2 + $0x3b4] sm:$0xf]
    %v306 = vld [vmem:[#allocation2 + $0x3b8] sm:$0xf]
    %v307 = vld [vmem:[#allocation2 + $0x3bc] sm:$0xf]
    %v308 = vld [vmem:[#allocation2 + $0x3c0] sm:$0xf]
    %v309 = vld [vmem:[#allocation2 + $0x3c4] sm:$0xf]
    %v310 = vld [vmem:[#allocation2 + $0x3c8] sm:$0xf]
    %v311 = vld [vmem:[#allocation2 + $0x3cc] sm:$0xf]
    %v312 = vld [vmem:[#allocation2 + $0x3d0] sm:$0xf]
    %v313 = vld [vmem:[#allocation2 + $0x3d4] sm:$0xf]
    %v314 = vld [vmem:[#allocation2 + $0x3d8] sm:$0xf]
    %v315 = vld [vmem:[#allocation2 + $0x3dc] sm:$0xf]
    %v316 = vld [vmem:[#allocation2 + $0x3e0] sm:$0xf]
    %v317 = vld [vmem:[#allocation2 + $0x3e4] sm:$0xf]
    %v318 = vld [vmem:[#allocation2 + $0x3e8] sm:$0xf]
    %v319 = vld [vmem:[#allocation2 + $0x3ec] sm:$0xf]
    %v320 = vld [vmem:[#allocation2 + $0x3f0] sm:$0xf]
    %v321 = vld [vmem:[#allocation2 + $0x3f4] sm:$0xf]
    %v322 = vld [vmem:[#allocation2 + $0x3f8] sm:$0xf]
    %v323 = vld [vmem:[#allocation2 + $0x3fc] sm:$0xf]
    %v324 = vld [vmem:[#allocation2 + $0x400] sm:$0xf]
    %v325 = vld [vmem:[#allocation2 + $0x404] sm:$0xf]
    %v326 = vld [vmem:[#allocation2 + $0x408] sm:$0xf]
    %v327 = vld [vmem:[#allocation2 + $0x40c] sm:$0xf]
    %v328 = vld [vmem:[#allocation2 + $0x410] sm:$0xf]
    %v329 = vld [vmem:[#allocation2 + $0x414] sm:$0xf]
    %v330 = vld [vmem:[#allocation2 + $0x418] sm:$0xf]
    %v331 = vld [vmem:[#allocation2 + $0x41c] sm:$0xf]
    %v332 = vld [vmem:[#allocation2 + $0x420] sm:$0xf]
    %v333 = vld [vmem:[#allocation2 + $0x424] sm:$0xf]
    %v334 = vld [vmem:[#allocation2 + $0x428] sm:$0xf]
    %v335 = vld [vmem:[#allocation2 + $0x42c] sm:$0xf]
    %v336 = vld [vmem:[#allocation2 + $0x430] sm:$0xf]
    %v337 = vld [vmem:[#allocation2 + $0x434] sm:$0xf]
    %v338 = vld [vmem:[#allocation2 + $0x438] sm:$0xf]
    %v339 = vld [vmem:[#allocation2 + $0x43c] sm:$0xf]
    %v340 = vld [vmem:[#allocation2 + $0x440] sm:$0xf]
    %v341 = vld [vmem:[#allocation2 + $0x444] sm:$0xf]
    %v342 = vld [vmem:[#allocation2 + $0x448] sm:$0xf]
    %v343 = vld [vmem:[#allocation2 + $0x44c] sm:$0xf]
    %v344 = vld [vmem:[#allocation2 + $0x450] sm:$0xf]
    %v345 = vld [vmem:[#allocation2 + $0x454] sm:$0xf]
    %v346 = vld [vmem:[#allocation2 + $0x458] sm:$0xf]
    %v347 = vld [vmem:[#allocation2 + $0x45c] sm:$0xf]
    %v348 = vld [vmem:[#allocation2 + $0x460] sm:$0xf]
    %v349 = vld [vmem:[#allocation2 + $0x464] sm:$0xf]
    %v350 = vld [vmem:[#allocation2 + $0x468] sm:$0xf]
    %v351 = vld [vmem:[#allocation2 + $0x46c] sm:$0xf]
    %v352 = vld [vmem:[#allocation2 + $0x470] sm:$0xf]
    %v353 = vld [vmem:[#allocation2 + $0x474] sm:$0xf]
    %v354 = vld [vmem:[#allocation2 + $0x478] sm:$0xf]
    %v355 = vld [vmem:[#allocation2 + $0x47c] sm:$0xf]
    %v356 = vld [vmem:[#allocation2 + $0x480] sm:$0xf]
    %v357 = vld [vmem:[#allocation2 + $0x484] sm:$0xf]
    %v358 = vld [vmem:[#allocation2 + $0x488] sm:$0xf]
    %v359 = vld [vmem:[#allocation2 + $0x48c] sm:$0xf]
    %v360 = vld [vmem:[#allocation2 + $0x490] sm:$0xf]
    %v361 = vld [vmem:[#allocation2 + $0x494] sm:$0xf]
    %v362 = vld [vmem:[#allocation2 + $0x498] sm:$0xf]
    %v363 = vld [vmem:[#allocation2 + $0x49c] sm:$0xf]
    %v364 = vld [vmem:[#allocation2 + $0x4a0] sm:$0xf]
    %v365 = vld [vmem:[#allocation2 + $0x4a4] sm:$0xf]
    %v366 = vld [vmem:[#allocation2 + $0x4a8] sm:$0xf]
    %v367 = vld [vmem:[#allocation2 + $0x4ac] sm:$0xf]
    %v368 = vld [vmem:[#allocation2 + $0x4b0] sm:$0xf]
    %v369 = vld [vmem:[#allocation2 + $0x4b4] sm:$0xf]
    %v370 = vld [vmem:[#allocation2 + $0x4b8] sm:$0xf]
    %v371 = vld [vmem:[#allocation2 + $0x4bc] sm:$0xf]
    %v372 = vld [vmem:[#allocation2 + $0x4c0] sm:$0xf]
    %v373 = vld [vmem:[#allocation2 + $0x4c4] sm:$0xf]
    %v374 = vld [vmem:[#allocation2 + $0x4c8] sm:$0xf]
    %v375 = vld [vmem:[#allocation2 + $0x4cc] sm:$0xf]
    %v376 = vld [vmem:[#allocation2 + $0x4d0] sm:$0xf]
    %v377 = vld [vmem:[#allocation2 + $0x4d4] sm:$0xf]
    %v378 = vld [vmem:[#allocation2 + $0x4d8] sm:$0xf]
    %v379 = vld [vmem:[#allocation2 + $0x4dc] sm:$0xf]
    %v380 = vld [vmem:[#allocation2 + $0x4e0] sm:$0xf]
    %v381 = vld [vmem:[#allocation2 + $0x4e4] sm:$0xf]
    %v382 = vld [vmem:[#allocation2 + $0x4e8] sm:$0xf]
    %v383 = vld [vmem:[#allocation2 + $0x4ec] sm:$0xf]
    %v384 = vld [vmem:[#allocation2 + $0x4f0] sm:$0xf]
    %v385 = vld [vmem:[#allocation2 + $0x4f4] sm:$0xf]
    %v386 = vld [vmem:[#allocation2 + $0x4f8] sm:$0xf]
    %v387 = vld [vmem:[#allocation2 + $0x4fc] sm:$0xf]
    %v388 = vld [vmem:[#allocation2 + $0x500] sm:$0xf]
    %v389 = vld [vmem:[#allocation2 + $0x504] sm:$0xf]
    %v390 = vld [vmem:[#allocation2 + $0x508] sm:$0xf]
    %v391 = vld [vmem:[#allocation2 + $0x50c] sm:$0xf]
    %v392 = vld [vmem:[#allocation2 + $0x510] sm:$0xf]
    %v393 = vld [vmem:[#allocation2 + $0x514] sm:$0xf]
    %v394 = vld [vmem:[#allocation2 + $0x518] sm:$0xf]
    %v395 = vld [vmem:[#allocation2 + $0x51c] sm:$0xf]
    %v396 = vld [vmem:[#allocation2 + $0x520] sm:$0xf]
    %v397 = vld [vmem:[#allocation2 + $0x524] sm:$0xf]
    %v398 = vld [vmem:[#allocation2 + $0x528] sm:$0xf]
    %v399 = vld [vmem:[#allocation2 + $0x52c] sm:$0xf]
    %v400 = vld [vmem:[#allocation2 + $0x530] sm:$0xf]
    %v401 = vld [vmem:[#allocation2 + $0x534] sm:$0xf]
    %v402 = vld [vmem:[#allocation2 + $0x538] sm:$0xf]
    %v403 = vld [vmem:[#allocation2 + $0x53c] sm:$0xf]
    %v404 = vld [vmem:[#allocation2 + $0x540] sm:$0xf]
    %v405 = vld [vmem:[#allocation2 + $0x544] sm:$0xf]
    %v406 = vld [vmem:[#allocation2 + $0x548] sm:$0xf]
    %v407 = vld [vmem:[#allocation2 + $0x54c] sm:$0xf]
    %v408 = vld [vmem:[#allocation2 + $0x550] sm:$0xf]
    %v409 = vld [vmem:[#allocation2 + $0x554] sm:$0xf]
    %v410 = vld [vmem:[#allocation2 + $0x558] sm:$0xf]
    %v411 = vld [vmem:[#allocation2 + $0x55c] sm:$0xf]
    %v412 = vld [vmem:[#allocation2 + $0x560] sm:$0xf]
    %v413 = vld [vmem:[#allocation2 + $0x564] sm:$0xf]
    %v414 = vld [vmem:[#allocation2 + $0x568] sm:$0xf]
    %v415 = vld [vmem:[#allocation2 + $0x56c] sm:$0xf]
    %v416 = vld [vmem:[#allocation2 + $0x570] sm:$0xf]
    %v417 = vld [vmem:[#allocation2 + $0x574] sm:$0xf]
    %v418 = vld [vmem:[#allocation2 + $0x578] sm:$0xf]
    %v419 = vld [vmem:[#allocation2 + $0x57c] sm:$0xf]
    %v420 = vld [vmem:[#allocation2 + $0x580] sm:$0xf]
    %v421 = vld [vmem:[#allocation2 + $0x584] sm:$0xf]
    %v422 = vld [vmem:[#allocation2 + $0x588] sm:$0xf]
    %v423 = vld [vmem:[#allocation2 + $0x58c] sm:$0xf]
    %v424 = vld [vmem:[#allocation2 + $0x590] sm:$0xf]
    %v425 = vld [vmem:[#allocation2 + $0x594] sm:$0xf]
    %v426 = vld [vmem:[#allocation2 + $0x598] sm:$0xf]
    %v427 = vld [vmem:[#allocation2 + $0x59c] sm:$0xf]
    %v428 = vld [vmem:[#allocation2 + $0x5a0] sm:$0xf]
    %v429 = vld [vmem:[#allocation2 + $0x5a4] sm:$0xf]
    %v430 = vld [vmem:[#allocation2 + $0x5a8] sm:$0xf]
    %v431 = vld [vmem:[#allocation2 + $0x5ac] sm:$0xf]
    %v432 = vld [vmem:[#allocation2 + $0x5b0] sm:$0xf]
    %v433 = vld [vmem:[#allocation2 + $0x5b4] sm:$0xf]
    %v434 = vld [vmem:[#allocation2 + $0x5b8] sm:$0xf]
    %v435 = vld [vmem:[#allocation2 + $0x5bc] sm:$0xf]
    %v436 = vld [vmem:[#allocation2 + $0x5c0] sm:$0xf]
    %v437 = vld [vmem:[#allocation2 + $0x5c4] sm:$0xf]
    %v438 = vld [vmem:[#allocation2 + $0x5c8] sm:$0xf]
    %v439 = vld [vmem:[#allocation2 + $0x5cc] sm:$0xf]
    %v440 = vld [vmem:[#allocation2 + $0x5d0] sm:$0xf]
    %v441 = vld [vmem:[#allocation2 + $0x5d4] sm:$0xf]
    %v442 = vld [vmem:[#allocation2 + $0x5d8] sm:$0xf]
    %v443 = vld [vmem:[#allocation2 + $0x5dc] sm:$0xf]
    %v444 = vld [vmem:[#allocation2 + $0x5e0] sm:$0xf]
    %v445 = vld [vmem:[#allocation2 + $0x5e4] sm:$0xf]
    %v446 = vld [vmem:[#allocation2 + $0x5e8] sm:$0xf]
    %v447 = vld [vmem:[#allocation2 + $0x5ec] sm:$0xf]
    %v448 = vld [vmem:[#allocation2 + $0x5f0] sm:$0xf]
    %v449 = vld [vmem:[#allocation2 + $0x5f4] sm:$0xf]
    %v450 = vld [vmem:[#allocation2 + $0x5f8] sm:$0xf]
    %v451 = vld [vmem:[#allocation2 + $0x5fc] sm:$0xf]
    %v452 = vld [vmem:[#allocation2 + $0x600] sm:$0xf]
    %v453 = vld [vmem:[#allocation2 + $0x604] sm:$0xf]
    %v454 = vld [vmem:[#allocation2 + $0x608] sm:$0xf]
    %v455 = vld [vmem:[#allocation2 + $0x60c] sm:$0xf]
    %v456 = vld [vmem:[#allocation2 + $0x610] sm:$0xf]
    %v457 = vld [vmem:[#allocation2 + $0x614] sm:$0xf]
    %v458 = vld [vmem:[#allocation2 + $0x618] sm:$0xf]
    %v459 = vld [vmem:[#allocation2 + $0x61c] sm:$0xf]
    %v460 = vld [vmem:[#allocation2 + $0x620] sm:$0xf]
    %v461 = vld [vmem:[#allocation2 + $0x624] sm:$0xf]
    %v462 = vld [vmem:[#allocation2 + $0x628] sm:$0xf]
    %v463 = vld [vmem:[#allocation2 + $0x62c] sm:$0xf]
    %v464 = vld [vmem:[#allocation2 + $0x630] sm:$0xf]
    %v465 = vld [vmem:[#allocation2 + $0x634] sm:$0xf]
    %v466 = vld [vmem:[#allocation2 + $0x638] sm:$0xf]
    %v467 = vld [vmem:[#allocation2 + $0x63c] sm:$0xf]
    %v468 = vld [vmem:[#allocation2 + $0x640] sm:$0xf]
    %v469 = vld [vmem:[#allocation2 + $0x644] sm:$0xf]
    %v470 = vld [vmem:[#allocation2 + $0x648] sm:$0xf]
    %v471 = vld [vmem:[#allocation2 + $0x64c] sm:$0xf]
    %v472 = vld [vmem:[#allocation2 + $0x650] sm:$0xf]
    %v473 = vld [vmem:[#allocation2 + $0x654] sm:$0xf]
    %v474 = vld [vmem:[#allocation2 + $0x658] sm:$0xf]
    %v475 = vld [vmem:[#allocation2 + $0x65c] sm:$0xf]
    %v476 = vld [vmem:[#allocation2 + $0x660] sm:$0xf]
    %v477 = vld [vmem:[#allocation2 + $0x664] sm:$0xf]
    %v478 = vld [vmem:[#allocation2 + $0x668] sm:$0xf]
    %v479 = vld [vmem:[#allocation2 + $0x66c] sm:$0xf]
    %v480 = vld [vmem:[#allocation2 + $0x670] sm:$0xf]
    %v481 = vld [vmem:[#allocation2 + $0x674] sm:$0xf]
    %v482 = vld [vmem:[#allocation2 + $0x678] sm:$0xf]
    %v483 = vld [vmem:[#allocation2 + $0x67c] sm:$0xf]
    %v484 = vld [vmem:[#allocation2 + $0x680] sm:$0xf]
    %v485 = vld [vmem:[#allocation2 + $0x684] sm:$0xf]
    %v486 = vld [vmem:[#allocation2 + $0x688] sm:$0xf]
    %v487 = vld [vmem:[#allocation2 + $0x68c] sm:$0xf]
    %v488 = vld [vmem:[#allocation2 + $0x690] sm:$0xf]
    %v489 = vld [vmem:[#allocation2 + $0x694] sm:$0xf]
    %v490 = vld [vmem:[#allocation2 + $0x698] sm:$0xf]
    %v491 = vld [vmem:[#allocation2 + $0x69c] sm:$0xf]
    %v492 = vld [vmem:[#allocation2 + $0x6a0] sm:$0xf]
    %v493 = vld [vmem:[#allocation2 + $0x6a4] sm:$0xf]
    %v494 = vld [vmem:[#allocation2 + $0x6a8] sm:$0xf]
    %v495 = vld [vmem:[#allocation2 + $0x6ac] sm:$0xf]
    %v496 = vld [vmem:[#allocation2 + $0x6b0] sm:$0xf]
    %v497 = vld [vmem:[#allocation2 + $0x6b4] sm:$0xf]
    %v498 = vld [vmem:[#allocation2 + $0x6b8] sm:$0xf]
    %v499 = vld [vmem:[#allocation2 + $0x6bc] sm:$0xf]
    %v500 = vld [vmem:[#allocation2 + $0x6c0] sm:$0xf]
    %v501 = vld [vmem:[#allocation2 + $0x6c4] sm:$0xf]
    %v502 = vld [vmem:[#allocation2 + $0x6c8] sm:$0xf]
    %v503 = vld [vmem:[#allocation2 + $0x6cc] sm:$0xf]
    %v504 = vld [vmem:[#allocation2 + $0x6d0] sm:$0xf]
    %v505 = vld [vmem:[#allocation2 + $0x6d4] sm:$0xf]
    %v506 = vld [vmem:[#allocation2 + $0x6d8] sm:$0xf]
    %v507 = vld [vmem:[#allocation2 + $0x6dc] sm:$0xf]
    %v508 = vld [vmem:[#allocation2 + $0x6e0] sm:$0xf]
    %v509 = vld [vmem:[#allocation2 + $0x6e4] sm:$0xf]
    %v510 = vld [vmem:[#allocation2 + $0x6e8] sm:$0xf]
    %v511 = vld [vmem:[#allocation2 + $0x6ec] sm:$0xf]
    %v512 = vld [vmem:[#allocation2 + $0x6f0] sm:$0xf]
    %v513 = vld [vmem:[#allocation2 + $0x6f4] sm:$0xf]
    %v514 = vld [vmem:[#allocation2 + $0x6f8] sm:$0xf]
    %v515 = vld [vmem:[#allocation2 + $0x6fc] sm:$0xf]
    %v516 = vld [vmem:[#allocation2 + $0x700] sm:$0xf]
    %v517 = vld [vmem:[#allocation2 + $0x704] sm:$0xf]
    %v518 = vld [vmem:[#allocation2 + $0x708] sm:$0xf]
    %v519 = vld [vmem:[#allocation2 + $0x70c] sm:$0xf]
    %v520 = vld [vmem:[#allocation2 + $0x710] sm:$0xf]
    %v521 = vld [vmem:[#allocation2 + $0x714] sm:$0xf]
    %v522 = vld [vmem:[#allocation2 + $0x718] sm:$0xf]
    %v523 = vld [vmem:[#allocation2 + $0x71c] sm:$0xf]
    %v524 = vld [vmem:[#allocation2 + $0x720] sm:$0xf]
    %v525 = vld [vmem:[#allocation2 + $0x724] sm:$0xf]
    %v526 = vld [vmem:[#allocation2 + $0x728] sm:$0xf]
    %v527 = vld [vmem:[#allocation2 + $0x72c] sm:$0xf]
    %v528 = vld [vmem:[#allocation2 + $0x730] sm:$0xf]
    %v529 = vld [vmem:[#allocation2 + $0x734] sm:$0xf]
    %v530 = vld [vmem:[#allocation2 + $0x738] sm:$0xf]
    %v531 = vld [vmem:[#allocation2 + $0x73c] sm:$0xf]
    %v532 = vld [vmem:[#allocation2 + $0x740] sm:$0xf]
    %v533 = vld [vmem:[#allocation2 + $0x744] sm:$0xf]
    %v534 = vld [vmem:[#allocation2 + $0x748] sm:$0xf]
    %v535 = vld [vmem:[#allocation2 + $0x74c] sm:$0xf]
    %v536 = vld [vmem:[#allocation2 + $0x750] sm:$0xf]
    %v537 = vld [vmem:[#allocation2 + $0x754] sm:$0xf]
    %v538 = vld [vmem:[#allocation2 + $0x758] sm:$0xf]
    %v539 = vld [vmem:[#allocation2 + $0x75c] sm:$0xf]
    %v540 = vld [vmem:[#allocation2 + $0x760] sm:$0xf]
    %v541 = vld [vmem:[#allocation2 + $0x764] sm:$0xf]
    %v542 = vld [vmem:[#allocation2 + $0x768] sm:$0xf]
    %v543 = vld [vmem:[#allocation2 + $0x76c] sm:$0xf]
    %v544 = vld [vmem:[#allocation2 + $0x770] sm:$0xf]
    %v545 = vld [vmem:[#allocation2 + $0x774] sm:$0xf]
    %v546 = vld [vmem:[#allocation2 + $0x778] sm:$0xf]
    %v547 = vld [vmem:[#allocation2 + $0x77c] sm:$0xf]
    %v548 = vld [vmem:[#allocation2 + $0x780] sm:$0xf]
    %v549 = vld [vmem:[#allocation2 + $0x784] sm:$0xf]
    %v550 = vld [vmem:[#allocation2 + $0x788] sm:$0xf]
    %v551 = vld [vmem:[#allocation2 + $0x78c] sm:$0xf]
    %v552 = vld [vmem:[#allocation2 + $0x790] sm:$0xf]
    %v553 = vld [vmem:[#allocation2 + $0x794] sm:$0xf]
    %v554 = vld [vmem:[#allocation2 + $0x798] sm:$0xf]
    %v555 = vld [vmem:[#allocation2 + $0x79c] sm:$0xf]
    %v556 = vld [vmem:[#allocation2 + $0x7a0] sm:$0xf]
    %v557 = vld [vmem:[#allocation2 + $0x7a4] sm:$0xf]
    %v558 = vld [vmem:[#allocation2 + $0x7a8] sm:$0xf]
    %v559 = vld [vmem:[#allocation2 + $0x7ac] sm:$0xf]
    %v560 = vld [vmem:[#allocation2 + $0x7b0] sm:$0xf]
    %v561 = vld [vmem:[#allocation2 + $0x7b4] sm:$0xf]
    %v562 = vld [vmem:[#allocation2 + $0x7b8] sm:$0xf]
    %v563 = vld [vmem:[#allocation2 + $0x7bc] sm:$0xf]
    %v564 = vld [vmem:[#allocation2 + $0x7c0] sm:$0xf]
    %v565 = vld [vmem:[#allocation2 + $0x7c4] sm:$0xf]
    %v566 = vld [vmem:[#allocation2 + $0x7c8] sm:$0xf]
    %v567 = vld [vmem:[#allocation2 + $0x7cc] sm:$0xf]
    %v568 = vld [vmem:[#allocation2 + $0x7d0] sm:$0xf]
    %v569 = vld [vmem:[#allocation2 + $0x7d4] sm:$0xf]
    %v570 = vld [vmem:[#allocation2 + $0x7d8] sm:$0xf]
    %v571 = vld [vmem:[#allocation2 + $0x7dc] sm:$0xf]
    %v572 = vld [vmem:[#allocation2 + $0x7e0] sm:$0xf]
    %v573 = vld [vmem:[#allocation2 + $0x7e4] sm:$0xf]
    %v574 = vld [vmem:[#allocation2 + $0x7e8] sm:$0xf]
    %v575 = vld [vmem:[#allocation2 + $0x7ec] sm:$0xf]
    %v576 = vld [vmem:[#allocation2 + $0x7f0] sm:$0xf]
    %v577 = vld [vmem:[#allocation2 + $0x7f4] sm:$0xf]
    %v578 = vld [vmem:[#allocation2 + $0x7f8] sm:$0xf]
    %v579 = vld [vmem:[#allocation2 + $0x7fc] sm:$0xf]
    %v580 = vld [vmem:[#allocation2 + $0x800] sm:$0xf]
    %v581 = vld [vmem:[#allocation2 + $0x804] sm:$0xf]
    %v582 = vld [vmem:[#allocation2 + $0x808] sm:$0xf]
    %v583 = vld [vmem:[#allocation2 + $0x80c] sm:$0xf]
    %v584 = vld [vmem:[#allocation2 + $0x810] sm:$0xf]
    %v585 = vld [vmem:[#allocation2 + $0x814] sm:$0xf]
    %v586 = vld [vmem:[#allocation2 + $0x818] sm:$0xf]
    %v587 = vld [vmem:[#allocation2 + $0x81c] sm:$0xf]
    %v588 = vld [vmem:[#allocation2 + $0x820] sm:$0xf]
    %v589 = vld [vmem:[#allocation2 + $0x824] sm:$0xf]
    %v590 = vld [vmem:[#allocation2 + $0x828] sm:$0xf]
    %v591 = vld [vmem:[#allocation2 + $0x82c] sm:$0xf]
    %v592 = vld [vmem:[#allocation2 + $0x830] sm:$0xf]
    %v593 = vld [vmem:[#allocation2 + $0x834] sm:$0xf]
    %v594 = vld [vmem:[#allocation2 + $0x838] sm:$0xf]
    %v595 = vld [vmem:[#allocation2 + $0x83c] sm:$0xf]
    %v596 = vld [vmem:[#allocation2 + $0x840] sm:$0xf]
    %v597 = vld [vmem:[#allocation2 + $0x844] sm:$0xf]
    %v598 = vld [vmem:[#allocation2 + $0x848] sm:$0xf]
    %v599 = vld [vmem:[#allocation2 + $0x84c] sm:$0xf]
    %v600 = vld [vmem:[#allocation2 + $0x850] sm:$0xf]
    %v601 = vld [vmem:[#allocation2 + $0x854] sm:$0xf]
    %v602 = vld [vmem:[#allocation2 + $0x858] sm:$0xf]
    %v603 = vld [vmem:[#allocation2 + $0x85c] sm:$0xf]
    %v604 = vld [vmem:[#allocation2 + $0x860] sm:$0xf]
    %v605 = vld [vmem:[#allocation2 + $0x864] sm:$0xf]
    %v606 = vld [vmem:[#allocation2 + $0x868] sm:$0xf]
    %v607 = vld [vmem:[#allocation2 + $0x86c] sm:$0xf]
    %v608 = vld [vmem:[#allocation2 + $0x870] sm:$0xf]
    %v609 = vld [vmem:[#allocation2 + $0x874] sm:$0xf]
    %v610 = vld [vmem:[#allocation2 + $0x878] sm:$0xf]
    %v611 = vld [vmem:[#allocation2 + $0x87c] sm:$0xf]
    %v612 = vld [vmem:[#allocation2 + $0x880] sm:$0xf]
    %v613 = vld [vmem:[#allocation2 + $0x884] sm:$0xf]
    %v614 = vld [vmem:[#allocation2 + $0x888] sm:$0xf]
    %v615 = vld [vmem:[#allocation2 + $0x88c] sm:$0xf]
    %v616 = vld [vmem:[#allocation2 + $0x890] sm:$0xf]
    %v617 = vld [vmem:[#allocation2 + $0x894] sm:$0xf]
    %v618 = vld [vmem:[#allocation2 + $0x898] sm:$0xf]
    %v619 = vld [vmem:[#allocation2 + $0x89c] sm:$0xf]
    %v620 = vld [vmem:[#allocation2 + $0x8a0] sm:$0xf]
    %v621 = vld [vmem:[#allocation2 + $0x8a4] sm:$0xf]
    %v622 = vld [vmem:[#allocation2 + $0x8a8] sm:$0xf]
    %v623 = vld [vmem:[#allocation2 + $0x8ac] sm:$0xf]
    %v624 = vld [vmem:[#allocation2 + $0x8b0] sm:$0xf]
    %v625 = vld [vmem:[#allocation2 + $0x8b4] sm:$0xf]
    %v626 = vld [vmem:[#allocation2 + $0x8b8] sm:$0xf]
    %v627 = vld [vmem:[#allocation2 + $0x8bc] sm:$0xf]
    %v628 = vld [vmem:[#allocation2 + $0x8c0] sm:$0xf]
    %v629 = vld [vmem:[#allocation2 + $0x8c4] sm:$0xf]
    %v630 = vld [vmem:[#allocation2 + $0x8c8] sm:$0xf]
    %v631 = vld [vmem:[#allocation2 + $0x8cc] sm:$0xf]
    %v632 = vld [vmem:[#allocation2 + $0x8d0] sm:$0xf]
    %v633 = vld [vmem:[#allocation2 + $0x8d4] sm:$0xf]
    %v634 = vld [vmem:[#allocation2 + $0x8d8] sm:$0xf]
    %v635 = vld [vmem:[#allocation2 + $0x8dc] sm:$0xf]
    %v636 = vld [vmem:[#allocation2 + $0x8e0] sm:$0xf]
    %v637 = vld [vmem:[#allocation2 + $0x8e4] sm:$0xf]
    %v638 = vld [vmem:[#allocation2 + $0x8e8] sm:$0xf]
    %v639 = vld [vmem:[#allocation2 + $0x8ec] sm:$0xf]
    %v640 = vld [vmem:[#allocation2 + $0x8f0] sm:$0xf]
    %v641 = vld [vmem:[#allocation2 + $0x8f4] sm:$0xf]
    %v642 = vld [vmem:[#allocation2 + $0x8f8] sm:$0xf]
    %v643 = vld [vmem:[#allocation2 + $0x8fc] sm:$0xf]
    %v644 = vld [vmem:[#allocation2 + $0x900] sm:$0xf]
    %v645 = vld [vmem:[#allocation2 + $0x904] sm:$0xf]
    %v646 = vld [vmem:[#allocation2 + $0x908] sm:$0xf]
    %v647 = vld [vmem:[#allocation2 + $0x90c] sm:$0xf]
    %v648 = vld [vmem:[#allocation2 + $0x910] sm:$0xf]
    %v649 = vld [vmem:[#allocation2 + $0x914] sm:$0xf]
    %v650 = vld [vmem:[#allocation2 + $0x918] sm:$0xf]
    %v651 = vld [vmem:[#allocation2 + $0x91c] sm:$0xf]
    %v652 = vld [vmem:[#allocation2 + $0x920] sm:$0xf]
    %v653 = vld [vmem:[#allocation2 + $0x924] sm:$0xf]
    %v654 = vld [vmem:[#allocation2 + $0x928] sm:$0xf]
    %v655 = vld [vmem:[#allocation2 + $0x92c] sm:$0xf]
    %v656 = vld [vmem:[#allocation2 + $0x930] sm:$0xf]
    %v657 = vld [vmem:[#allocation2 + $0x934] sm:$0xf]
    %v658 = vld [vmem:[#allocation2 + $0x938] sm:$0xf]
    %v659 = vld [vmem:[#allocation2 + $0x93c] sm:$0xf]
    %v660 = vld [vmem:[#allocation2 + $0x940] sm:$0xf]
    %v661 = vld [vmem:[#allocation2 + $0x944] sm:$0xf]
    %v662 = vld [vmem:[#allocation2 + $0x948] sm:$0xf]
    %v663 = vld [vmem:[#allocation2 + $0x94c] sm:$0xf]
    %v664 = vld [vmem:[#allocation2 + $0x950] sm:$0xf]
    %v665 = vld [vmem:[#allocation2 + $0x954] sm:$0xf]
    %v666 = vld [vmem:[#allocation2 + $0x958] sm:$0xf]
    %v667 = vld [vmem:[#allocation2 + $0x95c] sm:$0xf]
    %v668 = vld [vmem:[#allocation2 + $0x960] sm:$0xf]
    %v669 = vld [vmem:[#allocation2 + $0x964] sm:$0xf]
    %v670 = vld [vmem:[#allocation2 + $0x968] sm:$0xf]
    %v671 = vld [vmem:[#allocation2 + $0x96c] sm:$0xf]
    %v672 = vld [vmem:[#allocation2 + $0x970] sm:$0xf]
    %v673 = vld [vmem:[#allocation2 + $0x974] sm:$0xf]
    %v674 = vld [vmem:[#allocation2 + $0x978] sm:$0xf]
    %v675 = vld [vmem:[#allocation2 + $0x97c] sm:$0xf]
    %v676 = vld [vmem:[#allocation2 + $0x980] sm:$0xf]
    %v677 = vld [vmem:[#allocation2 + $0x984] sm:$0xf]
    %v678 = vld [vmem:[#allocation2 + $0x988] sm:$0xf]
    %v679 = vld [vmem:[#allocation2 + $0x98c] sm:$0xf]
    %v680 = vld [vmem:[#allocation2 + $0x990] sm:$0xf]
    %v681 = vld [vmem:[#allocation2 + $0x994] sm:$0xf]
    %v682 = vld [vmem:[#allocation2 + $0x998] sm:$0xf]
    %v683 = vld [vmem:[#allocation2 + $0x99c] sm:$0xf]
    %v684 = vld [vmem:[#allocation2 + $0x9a0] sm:$0xf]
    %v685 = vld [vmem:[#allocation2 + $0x9a4] sm:$0xf]
    %v686 = vld [vmem:[#allocation2 + $0x9a8] sm:$0xf]
    %v687 = vld [vmem:[#allocation2 + $0x9ac] sm:$0xf]
    %v688 = vld [vmem:[#allocation2 + $0x9b0] sm:$0xf]
    %v689 = vld [vmem:[#allocation2 + $0x9b4] sm:$0xf]
    %v690 = vld [vmem:[#allocation2 + $0x9b8] sm:$0xf]
    %v691 = vld [vmem:[#allocation2 + $0x9bc] sm:$0xf]
    %v692 = vld [vmem:[#allocation2 + $0x9c0] sm:$0xf]
    %v693 = vld [vmem:[#allocation2 + $0x9c4] sm:$0xf]
    %v694 = vld [vmem:[#allocation2 + $0x9c8] sm:$0xf]
    %v695 = vld [vmem:[#allocation2 + $0x9cc] sm:$0xf]
    %v696 = vld [vmem:[#allocation2 + $0x9d0] sm:$0xf]
    %v697 = vld [vmem:[#allocation2 + $0x9d4] sm:$0xf]
    %v698 = vld [vmem:[#allocation2 + $0x9d8] sm:$0xf]
    %v699 = vld [vmem:[#allocation2 + $0x9dc] sm:$0xf]
    %v700 = vld [vmem:[#allocation2 + $0x9e0] sm:$0xf]
    %v701 = vld [vmem:[#allocation2 + $0x9e4] sm:$0xf]
    %v702 = vld [vmem:[#allocation2 + $0x9e8] sm:$0xf]
    %v703 = vld [vmem:[#allocation2 + $0x9ec] sm:$0xf]
    %v704 = vld [vmem:[#allocation2 + $0x9f0] sm:$0xf]
    %v705 = vld [vmem:[#allocation2 + $0x9f4] sm:$0xf]
    %v706 = vld [vmem:[#allocation2 + $0x9f8] sm:$0xf]
    %v707 = vld [vmem:[#allocation2 + $0x9fc] sm:$0xf]
    %v708 = vld [vmem:[#allocation2 + $0xa00] sm:$0xf]
    %v709 = vld [vmem:[#allocation2 + $0xa04] sm:$0xf]
    %v710 = vld [vmem:[#allocation2 + $0xa08] sm:$0xf]
    %v711 = vld [vmem:[#allocation2 + $0xa0c] sm:$0xf]
    %v712 = vld [vmem:[#allocation2 + $0xa10] sm:$0xf]
    %v713 = vld [vmem:[#allocation2 + $0xa14] sm:$0xf]
    %v714 = vld [vmem:[#allocation2 + $0xa18] sm:$0xf]
    %v715 = vld [vmem:[#allocation2 + $0xa1c] sm:$0xf]
    %v716 = vld [vmem:[#allocation2 + $0xa20] sm:$0xf]
    %v717 = vld [vmem:[#allocation2 + $0xa24] sm:$0xf]
    %v718 = vld [vmem:[#allocation2 + $0xa28] sm:$0xf]
    %v719 = vld [vmem:[#allocation2 + $0xa2c] sm:$0xf]
    %v720 = vld [vmem:[#allocation2 + $0xa30] sm:$0xf]
    %v721 = vld [vmem:[#allocation2 + $0xa34] sm:$0xf]
    %v722 = vld [vmem:[#allocation2 + $0xa38] sm:$0xf]
    %v723 = vld [vmem:[#allocation2 + $0xa3c] sm:$0xf]
    %v724 = vld [vmem:[#allocation2 + $0xa40] sm:$0xf]
    %v725 = vld [vmem:[#allocation2 + $0xa44] sm:$0xf]
    %v726 = vld [vmem:[#allocation2 + $0xa48] sm:$0xf]
    %v727 = vld [vmem:[#allocation2 + $0xa4c] sm:$0xf]
    %v728 = vld [vmem:[#allocation2 + $0xa50] sm:$0xf]
    %v729 = vld [vmem:[#allocation2 + $0xa54] sm:$0xf]
    %v730 = vld [vmem:[#allocation2 + $0xa58] sm:$0xf]
    %v731 = vld [vmem:[#allocation2 + $0xa5c] sm:$0xf]
    %v732 = vld [vmem:[#allocation2 + $0xa60] sm:$0xf]
    %v733 = vld [vmem:[#allocation2 + $0xa64] sm:$0xf]
    %v734 = vld [vmem:[#allocation2 + $0xa68] sm:$0xf]
    %v735 = vld [vmem:[#allocation2 + $0xa6c] sm:$0xf]
    %v736 = vld [vmem:[#allocation2 + $0xa70] sm:$0xf]
    %v737 = vld [vmem:[#allocation2 + $0xa74] sm:$0xf]
    %v738 = vld [vmem:[#allocation2 + $0xa78] sm:$0xf]
    %v739 = vld [vmem:[#allocation2 + $0xa7c] sm:$0xf]
    %v740 = vld [vmem:[#allocation2 + $0xa80] sm:$0xf]
    %v741 = vld [vmem:[#allocation2 + $0xa84] sm:$0xf]
    %v742 = vld [vmem:[#allocation2 + $0xa88] sm:$0xf]
    %v743 = vld [vmem:[#allocation2 + $0xa8c] sm:$0xf]
    %v744 = vld [vmem:[#allocation2 + $0xa90] sm:$0xf]
    %v745 = vld [vmem:[#allocation2 + $0xa94] sm:$0xf]
    %v746 = vld [vmem:[#allocation2 + $0xa98] sm:$0xf]
    %v747 = vld [vmem:[#allocation2 + $0xa9c] sm:$0xf]
    %v748 = vld [vmem:[#allocation2 + $0xaa0] sm:$0xf]
    %v749 = vld [vmem:[#allocation2 + $0xaa4] sm:$0xf]
    %v750 = vld [vmem:[#allocation2 + $0xaa8] sm:$0xf]
    %v751 = vld [vmem:[#allocation2 + $0xaac] sm:$0xf]
    %v752 = vld [vmem:[#allocation2 + $0xab0] sm:$0xf]
    %v753 = vld [vmem:[#allocation2 + $0xab4] sm:$0xf]
    %v754 = vld [vmem:[#allocation2 + $0xab8] sm:$0xf]
    %v755 = vld [vmem:[#allocation2 + $0xabc] sm:$0xf]
    %v756 = vld [vmem:[#allocation2 + $0xac0] sm:$0xf]
    %v757 = vld [vmem:[#allocation2 + $0xac4] sm:$0xf]
    %v758 = vld [vmem:[#allocation2 + $0xac8] sm:$0xf]
    %v759 = vld [vmem:[#allocation2 + $0xacc] sm:$0xf]
    %v760 = vld [vmem:[#allocation2 + $0xad0] sm:$0xf]
    %v761 = vld [vmem:[#allocation2 + $0xad4] sm:$0xf]
    %v762 = vld [vmem:[#allocation2 + $0xad8] sm:$0xf]
    %v763 = vld [vmem:[#allocation2 + $0xadc] sm:$0xf]
    %v764 = vld [vmem:[#allocation2 + $0xae0] sm:$0xf]
    %v765 = vld [vmem:[#allocation2 + $0xae4] sm:$0xf]
    %v766 = vld [vmem:[#allocation2 + $0xae8] sm:$0xf]
    %v767 = vld [vmem:[#allocation2 + $0xaec] sm:$0xf]
    %v768 = vld [vmem:[#allocation2 + $0xaf0] sm:$0xf]
    %v769 = vld [vmem:[#allocation2 + $0xaf4] sm:$0xf]
    %v770 = vld [vmem:[#allocation2 + $0xaf8] sm:$0xf]
    %v771 = vld [vmem:[#allocation2 + $0xafc] sm:$0xf]
    %v772 = vld [vmem:[#allocation2 + $0xb00] sm:$0xf]
    %v773 = vld [vmem:[#allocation2 + $0xb04] sm:$0xf]
    %v774 = vld [vmem:[#allocation2 + $0xb08] sm:$0xf]
    %v775 = vld [vmem:[#allocation2 + $0xb0c] sm:$0xf]
    %v776 = vld [vmem:[#allocation2 + $0xb10] sm:$0xf]
    %v777 = vld [vmem:[#allocation2 + $0xb14] sm:$0xf]
    %v778 = vld [vmem:[#allocation2 + $0xb18] sm:$0xf]
    %v779 = vld [vmem:[#allocation2 + $0xb1c] sm:$0xf]
    %v780 = vld [vmem:[#allocation2 + $0xb20] sm:$0xf]
    %v781 = vld [vmem:[#allocation2 + $0xb24] sm:$0xf]
    %v782 = vld [vmem:[#allocation2 + $0xb28] sm:$0xf]
    %v783 = vld [vmem:[#allocation2 + $0xb2c] sm:$0xf]
    %v784 = vld [vmem:[#allocation2 + $0xb30] sm:$0xf]
    %v785 = vld [vmem:[#allocation2 + $0xb34] sm:$0xf]
    %v786 = vld [vmem:[#allocation2 + $0xb38] sm:$0xf]
    %v787 = vld [vmem:[#allocation2 + $0xb3c] sm:$0xf]
    %v788 = vld [vmem:[#allocation2 + $0xb40] sm:$0xf]
    %v789 = vld [vmem:[#allocation2 + $0xb44] sm:$0xf]
    %v790 = vld [vmem:[#allocation2 + $0xb48] sm:$0xf]
    %v791 = vld [vmem:[#allocation2 + $0xb4c] sm:$0xf]
    %v792 = vld [vmem:[#allocation2 + $0xb50] sm:$0xf]
    %v793 = vld [vmem:[#allocation2 + $0xb54] sm:$0xf]
    %v794 = vld [vmem:[#allocation2 + $0xb58] sm:$0xf]
    %v795 = vld [vmem:[#allocation2 + $0xb5c] sm:$0xf]
    %v796 = vld [vmem:[#allocation2 + $0xb60] sm:$0xf]
    %v797 = vld [vmem:[#allocation2 + $0xb64] sm:$0xf]
    %v798 = vld [vmem:[#allocation2 + $0xb68] sm:$0xf]
    %v799 = vld [vmem:[#allocation2 + $0xb6c] sm:$0xf]
    %v800 = vld [vmem:[#allocation2 + $0xb70] sm:$0xf]
    %v801 = vld [vmem:[#allocation2 + $0xb74] sm:$0xf]
    %v802 = vld [vmem:[#allocation2 + $0xb78] sm:$0xf]
    %v803 = vld [vmem:[#allocation2 + $0xb7c] sm:$0xf]
    %v804 = vld [vmem:[#allocation2 + $0xb80] sm:$0xf]
    %v805 = vld [vmem:[#allocation2 + $0xb84] sm:$0xf]
    %v806 = vld [vmem:[#allocation2 + $0xb88] sm:$0xf]
    %v807 = vld [vmem:[#allocation2 + $0xb8c] sm:$0xf]
    %v808 = vld [vmem:[#allocation2 + $0xb90] sm:$0xf]
    %v809 = vld [vmem:[#allocation2 + $0xb94] sm:$0xf]
    %v810 = vld [vmem:[#allocation2 + $0xb98] sm:$0xf]
    %v811 = vld [vmem:[#allocation2 + $0xb9c] sm:$0xf]
    %v812 = vld [vmem:[#allocation2 + $0xba0] sm:$0xf]
    %v813 = vld [vmem:[#allocation2 + $0xba4] sm:$0xf]
    %v814 = vld [vmem:[#allocation2 + $0xba8] sm:$0xf]
    %v815 = vld [vmem:[#allocation2 + $0xbac] sm:$0xf]
    %v816 = vld [vmem:[#allocation2 + $0xbb0] sm:$0xf]
    %v817 = vld [vmem:[#allocation2 + $0xbb4] sm:$0xf]
    %v818 = vld [vmem:[#allocation2 + $0xbb8] sm:$0xf]
    %v819 = vld [vmem:[#allocation2 + $0xbbc] sm:$0xf]
    %v820 = vld [vmem:[#allocation2 + $0xbc0] sm:$0xf]
    %v821 = vld [vmem:[#allocation2 + $0xbc4] sm:$0xf]
    %v822 = vld [vmem:[#allocation2 + $0xbc8] sm:$0xf]
    %v823 = vld [vmem:[#allocation2 + $0xbcc] sm:$0xf]
    %v824 = vld [vmem:[#allocation2 + $0xbd0] sm:$0xf]
    %v825 = vld [vmem:[#allocation2 + $0xbd4] sm:$0xf]
    %v826 = vld [vmem:[#allocation2 + $0xbd8] sm:$0xf]
    %v827 = vld [vmem:[#allocation2 + $0xbdc] sm:$0xf]
    %v828 = vld [vmem:[#allocation2 + $0xbe0] sm:$0xf]
    %v829 = vld [vmem:[#allocation2 + $0xbe4] sm:$0xf]
    %v830 = vld [vmem:[#allocation2 + $0xbe8] sm:$0xf]
    %v831 = vld [vmem:[#allocation2 + $0xbec] sm:$0xf]
    %v832 = vld [vmem:[#allocation2 + $0xbf0] sm:$0xf]
    %v833 = vld [vmem:[#allocation2 + $0xbf4] sm:$0xf]
    %v834 = vld [vmem:[#allocation2 + $0xbf8] sm:$0xf]
    %v835 = vld [vmem:[#allocation2 + $0xbfc] sm:$0xf]
    %v836 = vld [vmem:[#allocation2 + $0xc00] sm:$0xf]
    %v837 = vld [vmem:[#allocation2 + $0xc04] sm:$0xf]
    %v838 = vld [vmem:[#allocation2 + $0xc08] sm:$0xf]
    %v839 = vld [vmem:[#allocation2 + $0xc0c] sm:$0xf]
    %v840 = vld [vmem:[#allocation2 + $0xc10] sm:$0xf]
    %v841 = vld [vmem:[#allocation2 + $0xc14] sm:$0xf]
    %v842 = vld [vmem:[#allocation2 + $0xc18] sm:$0xf]
    %v843 = vld [vmem:[#allocation2 + $0xc1c] sm:$0xf]
    %v844 = vld [vmem:[#allocation2 + $0xc20] sm:$0xf]
    %v845 = vld [vmem:[#allocation2 + $0xc24] sm:$0xf]
    %v846 = vld [vmem:[#allocation2 + $0xc28] sm:$0xf]
    %v847 = vld [vmem:[#allocation2 + $0xc2c] sm:$0xf]
    %v848 = vld [vmem:[#allocation2 + $0xc30] sm:$0xf]
    %v849 = vld [vmem:[#allocation2 + $0xc34] sm:$0xf]
    %v850 = vld [vmem:[#allocation2 + $0xc38] sm:$0xf]
    %v851 = vld [vmem:[#allocation2 + $0xc3c] sm:$0xf]
    %v852 = vld [vmem:[#allocation2 + $0xc40] sm:$0xf]
    %v853 = vld [vmem:[#allocation2 + $0xc44] sm:$0xf]
    %v854 = vld [vmem:[#allocation2 + $0xc48] sm:$0xf]
    %v855 = vld [vmem:[#allocation2 + $0xc4c] sm:$0xf]
    %v856 = vld [vmem:[#allocation2 + $0xc50] sm:$0xf]
    %v857 = vld [vmem:[#allocation2 + $0xc54] sm:$0xf]
    %v858 = vld [vmem:[#allocation2 + $0xc58] sm:$0xf]
    %v859 = vld [vmem:[#allocation2 + $0xc5c] sm:$0xf]
    %v860 = vld [vmem:[#allocation2 + $0xc60] sm:$0xf]
    %v861 = vld [vmem:[#allocation2 + $0xc64] sm:$0xf]
    %v862 = vld [vmem:[#allocation2 + $0xc68] sm:$0xf]
    %v863 = vld [vmem:[#allocation2 + $0xc6c] sm:$0xf]
    %v864 = vld [vmem:[#allocation2 + $0xc70] sm:$0xf]
    %v865 = vld [vmem:[#allocation2 + $0xc74] sm:$0xf]
    %v866 = vld [vmem:[#allocation2 + $0xc78] sm:$0xf]
    %v867 = vld [vmem:[#allocation2 + $0xc7c] sm:$0xf]
    %v868 = vld [vmem:[#allocation2 + $0xc80] sm:$0xf]
    %v869 = vld [vmem:[#allocation2 + $0xc84] sm:$0xf]
    %v870 = vld [vmem:[#allocation2 + $0xc88] sm:$0xf]
    %v871 = vld [vmem:[#allocation2 + $0xc8c] sm:$0xf]
    %v872 = vld [vmem:[#allocation2 + $0xc90] sm:$0xf]
    %v873 = vld [vmem:[#allocation2 + $0xc94] sm:$0xf]
    %v874 = vld [vmem:[#allocation2 + $0xc98] sm:$0xf]
    %v875 = vld [vmem:[#allocation2 + $0xc9c] sm:$0xf]
    %v876 = vld [vmem:[#allocation2 + $0xca0] sm:$0xf]
    %v877 = vld [vmem:[#allocation2 + $0xca4] sm:$0xf]
    %v878 = vld [vmem:[#allocation2 + $0xca8] sm:$0xf]
    %v879 = vld [vmem:[#allocation2 + $0xcac] sm:$0xf]
    %v880 = vld [vmem:[#allocation2 + $0xcb0] sm:$0xf]
    %v881 = vld [vmem:[#allocation2 + $0xcb4] sm:$0xf]
    %v882 = vld [vmem:[#allocation2 + $0xcb8] sm:$0xf]
    %v883 = vld [vmem:[#allocation2 + $0xcbc] sm:$0xf]
    %v884 = vld [vmem:[#allocation2 + $0xcc0] sm:$0xf]
    %v885 = vld [vmem:[#allocation2 + $0xcc4] sm:$0xf]
    %v886 = vld [vmem:[#allocation2 + $0xcc8] sm:$0xf]
    %v887 = vld [vmem:[#allocation2 + $0xccc] sm:$0xf]
    %v888 = vld [vmem:[#allocation2 + $0xcd0] sm:$0xf]
    %v889 = vld [vmem:[#allocation2 + $0xcd4] sm:$0xf]
    %v890 = vld [vmem:[#allocation2 + $0xcd8] sm:$0xf]
    %v891 = vld [vmem:[#allocation2 + $0xcdc] sm:$0xf]
    %v892 = vld [vmem:[#allocation2 + $0xce0] sm:$0xf]
    %v893 = vld [vmem:[#allocation2 + $0xce4] sm:$0xf]
    %v894 = vld [vmem:[#allocation2 + $0xce8] sm:$0xf]
    %v895 = vld [vmem:[#allocation2 + $0xcec] sm:$0xf]
    %v896 = vld [vmem:[#allocation2 + $0xcf0] sm:$0xf]
    %v897 = vld [vmem:[#allocation2 + $0xcf4] sm:$0xf]
    %v898 = vld [vmem:[#allocation2 + $0xcf8] sm:$0xf]
    %v899 = vld [vmem:[#allocation2 + $0xcfc] sm:$0xf]
    %v900 = vld [vmem:[#allocation2 + $0xd00] sm:$0xf]
    %v901 = vld [vmem:[#allocation2 + $0xd04] sm:$0xf]
    %v902 = vld [vmem:[#allocation2 + $0xd08] sm:$0xf]
    %v903 = vld [vmem:[#allocation2 + $0xd0c] sm:$0xf]
    %v904 = vld [vmem:[#allocation2 + $0xd10] sm:$0xf]
    %v905 = vld [vmem:[#allocation2 + $0xd14] sm:$0xf]
    %v906 = vld [vmem:[#allocation2 + $0xd18] sm:$0xf]
    %v907 = vld [vmem:[#allocation2 + $0xd1c] sm:$0xf]
    %v908 = vld [vmem:[#allocation2 + $0xd20] sm:$0xf]
    %v909 = vld [vmem:[#allocation2 + $0xd24] sm:$0xf]
    %v910 = vld [vmem:[#allocation2 + $0xd28] sm:$0xf]
    %v911 = vld [vmem:[#allocation2 + $0xd2c] sm:$0xf]
    %v912 = vld [vmem:[#allocation2 + $0xd30] sm:$0xf]
    %v913 = vld [vmem:[#allocation2 + $0xd34] sm:$0xf]
    %v914 = vld [vmem:[#allocation2 + $0xd38] sm:$0xf]
    %v915 = vld [vmem:[#allocation2 + $0xd3c] sm:$0xf]
    %v916 = vld [vmem:[#allocation2 + $0xd40] sm:$0xf]
    %v917 = vld [vmem:[#allocation2 + $0xd44] sm:$0xf]
    %v918 = vld [vmem:[#allocation2 + $0xd48] sm:$0xf]
    %v919 = vld [vmem:[#allocation2 + $0xd4c] sm:$0xf]
    %v920 = vld [vmem:[#allocation2 + $0xd50] sm:$0xf]
    %v921 = vld [vmem:[#allocation2 + $0xd54] sm:$0xf]
    %v922 = vld [vmem:[#allocation2 + $0xd58] sm:$0xf]
    %v923 = vld [vmem:[#allocation2 + $0xd5c] sm:$0xf]
    %v924 = vld [vmem:[#allocation2 + $0xd60] sm:$0xf]
    %v925 = vld [vmem:[#allocation2 + $0xd64] sm:$0xf]
    %v926 = vld [vmem:[#allocation2 + $0xd68] sm:$0xf]
    %v927 = vld [vmem:[#allocation2 + $0xd6c] sm:$0xf]
    %v928 = vld [vmem:[#allocation2 + $0xd70] sm:$0xf]
    %v929 = vld [vmem:[#allocation2 + $0xd74] sm:$0xf]
    %v930 = vld [vmem:[#allocation2 + $0xd78] sm:$0xf]
    %v931 = vld [vmem:[#allocation2 + $0xd7c] sm:$0xf]
    %v932 = vld [vmem:[#allocation2 + $0xd80] sm:$0xf]
    %v933 = vld [vmem:[#allocation2 + $0xd84] sm:$0xf]
    %v934 = vld [vmem:[#allocation2 + $0xd88] sm:$0xf]
    %v935 = vld [vmem:[#allocation2 + $0xd8c] sm:$0xf]
    %v936 = vld [vmem:[#allocation2 + $0xd90] sm:$0xf]
    %v937 = vld [vmem:[#allocation2 + $0xd94] sm:$0xf]
    %v938 = vld [vmem:[#allocation2 + $0xd98] sm:$0xf]
    %v939 = vld [vmem:[#allocation2 + $0xd9c] sm:$0xf]
    %v940 = vld [vmem:[#allocation2 + $0xda0] sm:$0xf]
    %v941 = vld [vmem:[#allocation2 + $0xda4] sm:$0xf]
    %v942 = vld [vmem:[#allocation2 + $0xda8] sm:$0xf]
    %v943 = vld [vmem:[#allocation2 + $0xdac] sm:$0xf]
    %v944 = vld [vmem:[#allocation2 + $0xdb0] sm:$0xf]
    %v945 = vld [vmem:[#allocation2 + $0xdb4] sm:$0xf]
    %v946 = vld [vmem:[#allocation2 + $0xdb8] sm:$0xf]
    %v947 = vld [vmem:[#allocation2 + $0xdbc] sm:$0xf]
    %v948 = vld [vmem:[#allocation2 + $0xdc0] sm:$0xf]
    %v949 = vld [vmem:[#allocation2 + $0xdc4] sm:$0xf]
    %v950 = vld [vmem:[#allocation2 + $0xdc8] sm:$0xf]
    %v951 = vld [vmem:[#allocation2 + $0xdcc] sm:$0xf]
    %v952 = vld [vmem:[#allocation2 + $0xdd0] sm:$0xf]
    %v953 = vld [vmem:[#allocation2 + $0xdd4] sm:$0xf]
    %v954 = vld [vmem:[#allocation2 + $0xdd8] sm:$0xf]
    %v955 = vld [vmem:[#allocation2 + $0xddc] sm:$0xf]
    %v956 = vld [vmem:[#allocation2 + $0xde0] sm:$0xf]
    %v957 = vld [vmem:[#allocation2 + $0xde4] sm:$0xf]
    %v958 = vld [vmem:[#allocation2 + $0xde8] sm:$0xf]
    %v959 = vld [vmem:[#allocation2 + $0xdec] sm:$0xf]
    %v960 = vld [vmem:[#allocation2 + $0xdf0] sm:$0xf]
    %v961 = vld [vmem:[#allocation2 + $0xdf4] sm:$0xf]
    %v962 = vld [vmem:[#allocation2 + $0xdf8] sm:$0xf]
    %v963 = vld [vmem:[#allocation2 + $0xdfc] sm:$0xf]
    %v964 = vld [vmem:[#allocation2 + $0xe00] sm:$0xf]
    %v965 = vld [vmem:[#allocation2 + $0xe04] sm:$0xf]
    %v966 = vld [vmem:[#allocation2 + $0xe08] sm:$0xf]
    %v967 = vld [vmem:[#allocation2 + $0xe0c] sm:$0xf]
    %v968 = vld [vmem:[#allocation2 + $0xe10] sm:$0xf]
    %v969 = vld [vmem:[#allocation2 + $0xe14] sm:$0xf]
    %v970 = vld [vmem:[#allocation2 + $0xe18] sm:$0xf]
    %v971 = vld [vmem:[#allocation2 + $0xe1c] sm:$0xf]
    %v972 = vld [vmem:[#allocation2 + $0xe20] sm:$0xf]
    %v973 = vld [vmem:[#allocation2 + $0xe24] sm:$0xf]
    %v974 = vld [vmem:[#allocation2 + $0xe28] sm:$0xf]
    %v975 = vld [vmem:[#allocation2 + $0xe2c] sm:$0xf]
    %v976 = vld [vmem:[#allocation2 + $0xe30] sm:$0xf]
    %v977 = vld [vmem:[#allocation2 + $0xe34] sm:$0xf]
    %v978 = vld [vmem:[#allocation2 + $0xe38] sm:$0xf]
    %v979 = vld [vmem:[#allocation2 + $0xe3c] sm:$0xf]
    %v980 = vld [vmem:[#allocation2 + $0xe40] sm:$0xf]
    %v981 = vld [vmem:[#allocation2 + $0xe44] sm:$0xf]
    %v982 = vld [vmem:[#allocation2 + $0xe48] sm:$0xf]
    %v983 = vld [vmem:[#allocation2 + $0xe4c] sm:$0xf]
    %v984 = vld [vmem:[#allocation2 + $0xe50] sm:$0xf]
    %v985 = vld [vmem:[#allocation2 + $0xe54] sm:$0xf]
    %v986 = vld [vmem:[#allocation2 + $0xe58] sm:$0xf]
    %v987 = vld [vmem:[#allocation2 + $0xe5c] sm:$0xf]
    %v988 = vld [vmem:[#allocation2 + $0xe60] sm:$0xf]
    %v989 = vld [vmem:[#allocation2 + $0xe64] sm:$0xf]
    %v990 = vld [vmem:[#allocation2 + $0xe68] sm:$0xf]
    %v991 = vld [vmem:[#allocation2 + $0xe6c] sm:$0xf]
    %v992 = vld [vmem:[#allocation2 + $0xe70] sm:$0xf]
    %v993 = vld [vmem:[#allocation2 + $0xe74] sm:$0xf]
    %v994 = vld [vmem:[#allocation2 + $0xe78] sm:$0xf]
    %v995 = vld [vmem:[#allocation2 + $0xe7c] sm:$0xf]
    %v996 = vld [vmem:[#allocation2 + $0xe80] sm:$0xf]
    %v997 = vld [vmem:[#allocation2 + $0xe84] sm:$0xf]
    %v998 = vld [vmem:[#allocation2 + $0xe88] sm:$0xf]
    %v999 = vld [vmem:[#allocation2 + $0xe8c] sm:$0xf]
    %v1000 = vld [vmem:[#allocation2 + $0xe90] sm:$0xf]
    %v1001 = vld [vmem:[#allocation2 + $0xe94] sm:$0xf]
    %v1002 = vld [vmem:[#allocation2 + $0xe98] sm:$0xf]
    %v1003 = vld [vmem:[#allocation2 + $0xe9c] sm:$0xf]
    %v1004 = vld [vmem:[#allocation2 + $0xea0] sm:$0xf]
    %v1005 = vld [vmem:[#allocation2 + $0xea4] sm:$0xf]
    %v1006 = vld [vmem:[#allocation2 + $0xea8] sm:$0xf]
    %v1007 = vld [vmem:[#allocation2 + $0xeac] sm:$0xf]
    %v1008 = vld [vmem:[#allocation2 + $0xeb0] sm:$0xf]
    %v1009 = vld [vmem:[#allocation2 + $0xeb4] sm:$0xf]
    %v1010 = vld [vmem:[#allocation2 + $0xeb8] sm:$0xf]
    %v1011 = vld [vmem:[#allocation2 + $0xebc] sm:$0xf]
    %v1012 = vld [vmem:[#allocation2 + $0xec0] sm:$0xf]
    %v1013 = vld [vmem:[#allocation2 + $0xec4] sm:$0xf]
    %v1014 = vld [vmem:[#allocation2 + $0xec8] sm:$0xf]
    %v1015 = vld [vmem:[#allocation2 + $0xecc] sm:$0xf]
    %v1016 = vld [vmem:[#allocation2 + $0xed0] sm:$0xf]
    %v1017 = vld [vmem:[#allocation2 + $0xed4] sm:$0xf]
    %v1018 = vld [vmem:[#allocation2 + $0xed8] sm:$0xf]
    %v1019 = vld [vmem:[#allocation2 + $0xedc] sm:$0xf]
    %v1020 = vld [vmem:[#allocation2 + $0xee0] sm:$0xf]
    %v1021 = vld [vmem:[#allocation2 + $0xee4] sm:$0xf]
    %v1022 = vld [vmem:[#allocation2 + $0xee8] sm:$0xf]
    %v1023 = vld [vmem:[#allocation2 + $0xeec] sm:$0xf]
    %v1024 = vld [vmem:[#allocation2 + $0xef0] sm:$0xf]
    %v1025 = vld [vmem:[#allocation2 + $0xef4] sm:$0xf]
    %v1026 = vld [vmem:[#allocation2 + $0xef8] sm:$0xf]
    %v1027 = vld [vmem:[#allocation2 + $0xefc] sm:$0xf]
    %v1028 = vld [vmem:[#allocation2 + $0xf00] sm:$0xf]
    %v1029 = vld [vmem:[#allocation2 + $0xf04] sm:$0xf]
    %v1030 = vld [vmem:[#allocation2 + $0xf08] sm:$0xf]
    %v1031 = vld [vmem:[#allocation2 + $0xf0c] sm:$0xf]
    %v1032 = vld [vmem:[#allocation2 + $0xf10] sm:$0xf]
    %v1033 = vld [vmem:[#allocation2 + $0xf14] sm:$0xf]
    %v1034 = vld [vmem:[#allocation2 + $0xf18] sm:$0xf]
    %v1035 = vld [vmem:[#allocation2 + $0xf1c] sm:$0xf]
    %v1036 = vld [vmem:[#allocation2 + $0xf20] sm:$0xf]
    %v1037 = vld [vmem:[#allocation2 + $0xf24] sm:$0xf]
    %v1038 = vld [vmem:[#allocation2 + $0xf28] sm:$0xf]
    %v1039 = vld [vmem:[#allocation2 + $0xf2c] sm:$0xf]
    %v1040 = vld [vmem:[#allocation2 + $0xf30] sm:$0xf]
    %v1041 = vld [vmem:[#allocation2 + $0xf34] sm:$0xf]
    %v1042 = vld [vmem:[#allocation2 + $0xf38] sm:$0xf]
    %v1043 = vld [vmem:[#allocation2 + $0xf3c] sm:$0xf]
    %v1044 = vld [vmem:[#allocation2 + $0xf40] sm:$0xf]
    %v1045 = vld [vmem:[#allocation2 + $0xf44] sm:$0xf]
    %v1046 = vld [vmem:[#allocation2 + $0xf48] sm:$0xf]
    %v1047 = vld [vmem:[#allocation2 + $0xf4c] sm:$0xf]
    %v1048 = vld [vmem:[#allocation2 + $0xf50] sm:$0xf]
    %v1049 = vld [vmem:[#allocation2 + $0xf54] sm:$0xf]
    %v1050 = vld [vmem:[#allocation2 + $0xf58] sm:$0xf]
    %v1051 = vld [vmem:[#allocation2 + $0xf5c] sm:$0xf]
    %v1052 = vld [vmem:[#allocation2 + $0xf60] sm:$0xf]
    %v1053 = vld [vmem:[#allocation2 + $0xf64] sm:$0xf]
    %v1054 = vld [vmem:[#allocation2 + $0xf68] sm:$0xf]
    %v1055 = vld [vmem:[#allocation2 + $0xf6c] sm:$0xf]
    %v1056 = vld [vmem:[#allocation2 + $0xf70] sm:$0xf]
    %v1057 = vld [vmem:[#allocation2 + $0xf74] sm:$0xf]
    %v1058 = vld [vmem:[#allocation2 + $0xf78] sm:$0xf]
    %v1059 = vld [vmem:[#allocation2 + $0xf7c] sm:$0xf]
    %v1060 = vld [vmem:[#allocation2 + $0xf80] sm:$0xf]
    %v1061 = vld [vmem:[#allocation2 + $0xf84] sm:$0xf]
    %v1062 = vld [vmem:[#allocation2 + $0xf88] sm:$0xf]
    %v1063 = vld [vmem:[#allocation2 + $0xf8c] sm:$0xf]
    %v1064 = vld [vmem:[#allocation2 + $0xf90] sm:$0xf]
    %v1065 = vld [vmem:[#allocation2 + $0xf94] sm:$0xf]
    %v1066 = vld [vmem:[#allocation2 + $0xf98] sm:$0xf]
    %v1067 = vld [vmem:[#allocation2 + $0xf9c] sm:$0xf]
    %v1068 = vld [vmem:[#allocation2 + $0xfa0] sm:$0xf]
    %v1069 = vld [vmem:[#allocation2 + $0xfa4] sm:$0xf]
    %v1070 = vld [vmem:[#allocation2 + $0xfa8] sm:$0xf]
    %v1071 = vld [vmem:[#allocation2 + $0xfac] sm:$0xf]
    %v1072 = vld [vmem:[#allocation2 + $0xfb0] sm:$0xf]
    %v1073 = vld [vmem:[#allocation2 + $0xfb4] sm:$0xf]
    %v1074 = vld [vmem:[#allocation2 + $0xfb8] sm:$0xf]
    %v1075 = vld [vmem:[#allocation2 + $0xfbc] sm:$0xf]
    %v1076 = vld [vmem:[#allocation2 + $0xfc0] sm:$0xf]
    %v1077 = vld [vmem:[#allocation2 + $0xfc4] sm:$0xf]
    %v1078 = vld [vmem:[#allocation2 + $0xfc8] sm:$0xf]
    %v1079 = vld [vmem:[#allocation2 + $0xfcc] sm:$0xf]
    %v1080 = vld [vmem:[#allocation2 + $0xfd0] sm:$0xf]
    %v1081 = vld [vmem:[#allocation2 + $0xfd4] sm:$0xf]
    %v1082 = vld [vmem:[#allocation2 + $0xfd8] sm:$0xf]
    %v1083 = vld [vmem:[#allocation2 + $0xfdc] sm:$0xf]
    %v1084 = vld [vmem:[#allocation2 + $0xfe0] sm:$0xf]
    %v1085 = vld [vmem:[#allocation2 + $0xfe4] sm:$0xf]
    %v1086 = vld [vmem:[#allocation2 + $0xfe8] sm:$0xf]
    %v1087 = vld [vmem:[#allocation2 + $0xfec] sm:$0xf]
    %v1088 = vld [vmem:[#allocation2 + $0xff0] sm:$0xf]
    %v1089 = vld [vmem:[#allocation2 + $0xff4] sm:$0xf]
    %v1090 = vld [vmem:[#allocation2 + $0xff8] sm:$0xf]
    %v1091 = vld [vmem:[#allocation2 + $0xffc] sm:$0xf]
    %v1092 = vld [vmem:[#allocation2 + $0x1000] sm:$0xf]
    %v1093 = vld [vmem:[#allocation2 + $0x1004] sm:$0xf]
    %v1094 = vld [vmem:[#allocation2 + $0x1008] sm:$0xf]
    %v1095 = vld [vmem:[#allocation2 + $0x100c] sm:$0xf]
    %v1096 = vld [vmem:[#allocation2 + $0x1010] sm:$0xf]
    %v1097 = vld [vmem:[#allocation2 + $0x1014] sm:$0xf]
    %v1098 = vld [vmem:[#allocation2 + $0x1018] sm:$0xf]
    %v1099 = vld [vmem:[#allocation2 + $0x101c] sm:$0xf]
    %v1100 = vld [vmem:[#allocation2 + $0x1020] sm:$0xf]
    %v1101 = vld [vmem:[#allocation2 + $0x1024] sm:$0xf]
    %v1102 = vld [vmem:[#allocation2 + $0x1028] sm:$0xf]
    %v1103 = vld [vmem:[#allocation2 + $0x102c] sm:$0xf]
    %v1104 = vld [vmem:[#allocation2 + $0x1030] sm:$0xf]
    %v1105 = vld [vmem:[#allocation2 + $0x1034] sm:$0xf]
    %v1106 = vld [vmem:[#allocation2 + $0x1038] sm:$0xf]
    %v1107 = vld [vmem:[#allocation2 + $0x103c] sm:$0xf]
    %v1108 = vld [vmem:[#allocation2 + $0x1040] sm:$0xf]
    %v1109 = vld [vmem:[#allocation2 + $0x1044] sm:$0xf]
    %v1110 = vld [vmem:[#allocation2 + $0x1048] sm:$0xf]
    %v1111 = vld [vmem:[#allocation2 + $0x104c] sm:$0xf]
    %v1112 = vld [vmem:[#allocation2 + $0x1050] sm:$0xf]
    %v1113 = vld [vmem:[#allocation2 + $0x1054] sm:$0xf]
    %v1114 = vld [vmem:[#allocation2 + $0x1058] sm:$0xf]
    %v1115 = vld [vmem:[#allocation2 + $0x105c] sm:$0xf]
    %v1116 = vld [vmem:[#allocation2 + $0x1060] sm:$0xf]
    %v1117 = vld [vmem:[#allocation2 + $0x1064] sm:$0xf]
    %v1118 = vld [vmem:[#allocation2 + $0x1068] sm:$0xf]
    %v1119 = vld [vmem:[#allocation2 + $0x106c] sm:$0xf]
    %v1120 = vld [vmem:[#allocation2 + $0x1070] sm:$0xf]
    %v1121 = vld [vmem:[#allocation2 + $0x1074] sm:$0xf]
    %v1122 = vld [vmem:[#allocation2 + $0x1078] sm:$0xf]
    %v1123 = vld [vmem:[#allocation2 + $0x107c] sm:$0xf]
    %v1124 = vld [vmem:[#allocation2 + $0x1080] sm:$0xf]
    %v1125 = vld [vmem:[#allocation2 + $0x1084] sm:$0xf]
    %v1126 = vld [vmem:[#allocation2 + $0x1088] sm:$0xf]
    %v1127 = vld [vmem:[#allocation2 + $0x108c] sm:$0xf]
    %v1128 = vld [vmem:[#allocation2 + $0x1090] sm:$0xf]
    %v1129 = vld [vmem:[#allocation2 + $0x1094] sm:$0xf]
    %v1130 = vld [vmem:[#allocation2 + $0x1098] sm:$0xf]
    %v1131 = vld [vmem:[#allocation2 + $0x109c] sm:$0xf]
    %v1132 = vld [vmem:[#allocation2 + $0x10a0] sm:$0xf]
    %v1133 = vld [vmem:[#allocation2 + $0x10a4] sm:$0xf]
    %v1134 = vld [vmem:[#allocation2 + $0x10a8] sm:$0xf]
    %v1135 = vld [vmem:[#allocation2 + $0x10ac] sm:$0xf]
    %v1136 = vld [vmem:[#allocation2 + $0x10b0] sm:$0xf]
    %v1137 = vld [vmem:[#allocation2 + $0x10b4] sm:$0xf]
    %v1138 = vld [vmem:[#allocation2 + $0x10b8] sm:$0xf]
    %v1139 = vld [vmem:[#allocation2 + $0x10bc] sm:$0xf]
    %v1140 = vld [vmem:[#allocation2 + $0x10c0] sm:$0xf]
    %v1141 = vld [vmem:[#allocation2 + $0x10c4] sm:$0xf]
    %v1142 = vld [vmem:[#allocation2 + $0x10c8] sm:$0xf]
    %v1143 = vld [vmem:[#allocation2 + $0x10cc] sm:$0xf]
    %v1144 = vld [vmem:[#allocation2 + $0x10d0] sm:$0xf]
    %v1145 = vld [vmem:[#allocation2 + $0x10d4] sm:$0xf]
    %v1146 = vld [vmem:[#allocation2 + $0x10d8] sm:$0xf]
    %v1147 = vld [vmem:[#allocation2 + $0x10dc] sm:$0xf]
    %v1148 = vld [vmem:[#allocation2 + $0x10e0] sm:$0xf]
    %v1149 = vld [vmem:[#allocation2 + $0x10e4] sm:$0xf]
    %v1150 = vld [vmem:[#allocation2 + $0x10e8] sm:$0xf]
    %v1151 = vld [vmem:[#allocation2 + $0x10ec] sm:$0xf]
    %v1152 = vld [vmem:[#allocation2 + $0x10f0] sm:$0xf]
    %v1153 = vld [vmem:[#allocation2 + $0x10f4] sm:$0xf]
    %v1154 = vld [vmem:[#allocation2 + $0x10f8] sm:$0xf]
    %v1155 = vld [vmem:[#allocation2 + $0x10fc] sm:$0xf]
    %v1156 = vld [vmem:[#allocation2 + $0x1100] sm:$0xf]
    %v1157 = vld [vmem:[#allocation2 + $0x1104] sm:$0xf]
    %v1158 = vld [vmem:[#allocation2 + $0x1108] sm:$0xf]
    %v1159 = vld [vmem:[#allocation2 + $0x110c] sm:$0xf]
    %v1160 = vld [vmem:[#allocation2 + $0x1110] sm:$0xf]
    %v1161 = vld [vmem:[#allocation2 + $0x1114] sm:$0xf]
    %v1162 = vld [vmem:[#allocation2 + $0x1118] sm:$0xf]
    %v1163 = vld [vmem:[#allocation2 + $0x111c] sm:$0xf]
    %v1164 = vld [vmem:[#allocation2 + $0x1120] sm:$0xf]
    %v1165 = vld [vmem:[#allocation2 + $0x1124] sm:$0xf]
    %v1166 = vld [vmem:[#allocation2 + $0x1128] sm:$0xf]
    %v1167 = vld [vmem:[#allocation2 + $0x112c] sm:$0xf]
    %v1168 = vld [vmem:[#allocation2 + $0x1130] sm:$0xf]
    %v1169 = vld [vmem:[#allocation2 + $0x1134] sm:$0xf]
    %v1170 = vld [vmem:[#allocation2 + $0x1138] sm:$0xf]
    %v1171 = vld [vmem:[#allocation2 + $0x113c] sm:$0xf]
    %v1172 = vld [vmem:[#allocation2 + $0x1140] sm:$0xf]
    %v1173 = vld [vmem:[#allocation2 + $0x1144] sm:$0xf]
    %v1174 = vld [vmem:[#allocation2 + $0x1148] sm:$0xf]
    %v1175 = vld [vmem:[#allocation2 + $0x114c] sm:$0xf]
    %v1176 = vld [vmem:[#allocation2 + $0x1150] sm:$0xf]
    %v1177 = vld [vmem:[#allocation2 + $0x1154] sm:$0xf]
    %v1178 = vld [vmem:[#allocation2 + $0x1158] sm:$0xf]
    %v1179 = vld [vmem:[#allocation2 + $0x115c] sm:$0xf]
    %v1180 = vld [vmem:[#allocation2 + $0x1160] sm:$0xf]
    %v1181 = vld [vmem:[#allocation2 + $0x1164] sm:$0xf]
    %v1182 = vld [vmem:[#allocation2 + $0x1168] sm:$0xf]
    %v1183 = vld [vmem:[#allocation2 + $0x116c] sm:$0xf]
    %v1184 = vld [vmem:[#allocation2 + $0x1170] sm:$0xf]
    %v1185 = vld [vmem:[#allocation2 + $0x1174] sm:$0xf]
    %v1186 = vld [vmem:[#allocation2 + $0x1178] sm:$0xf]
    %v1187 = vld [vmem:[#allocation2 + $0x117c] sm:$0xf]
    %v1188 = vld [vmem:[#allocation2 + $0x1180] sm:$0xf]
    %v1189 = vld [vmem:[#allocation2 + $0x1184] sm:$0xf]
    %v1190 = vld [vmem:[#allocation2 + $0x1188] sm:$0xf]
    %v1191 = vld [vmem:[#allocation2 + $0x118c] sm:$0xf]
    %v1192 = vld [vmem:[#allocation2 + $0x1190] sm:$0xf]
    %v1193 = vld [vmem:[#allocation2 + $0x1194] sm:$0xf]
    %v1194 = vld [vmem:[#allocation2 + $0x1198] sm:$0xf]
    %v1195 = vld [vmem:[#allocation2 + $0x119c] sm:$0xf]
    %v1196 = vld [vmem:[#allocation2 + $0x11a0] sm:$0xf]
    %v1197 = vld [vmem:[#allocation2 + $0x11a4] sm:$0xf]
    %v1198 = vld [vmem:[#allocation2 + $0x11a8] sm:$0xf]
    %v1199 = vld [vmem:[#allocation2 + $0x11ac] sm:$0xf]
    %v1200 = vld [vmem:[#allocation2 + $0x11b0] sm:$0xf]
    %v1201 = vld [vmem:[#allocation2 + $0x11b4] sm:$0xf]
    %v1202 = vld [vmem:[#allocation2 + $0x11b8] sm:$0xf]
    %v1203 = vld [vmem:[#allocation2 + $0x11bc] sm:$0xf]
    %v1204 = vld [vmem:[#allocation2 + $0x11c0] sm:$0xf]
    %v1205 = vld [vmem:[#allocation2 + $0x11c4] sm:$0xf]
    %v1206 = vld [vmem:[#allocation2 + $0x11c8] sm:$0xf]
    %v1207 = vld [vmem:[#allocation2 + $0x11cc] sm:$0xf]
    %v1208 = vld [vmem:[#allocation2 + $0x11d0] sm:$0xf]
    %v1209 = vld [vmem:[#allocation2 + $0x11d4] sm:$0xf]
    %v1210 = vld [vmem:[#allocation2 + $0x11d8] sm:$0xf]
    %v1211 = vld [vmem:[#allocation2 + $0x11dc] sm:$0xf]
    %v1212 = vld [vmem:[#allocation2 + $0x11e0] sm:$0xf]
    %v1213 = vld [vmem:[#allocation2 + $0x11e4] sm:$0xf]
    %v1214 = vld [vmem:[#allocation2 + $0x11e8] sm:$0xf]
    %v1215 = vld [vmem:[#allocation2 + $0x11ec] sm:$0xf]
    %v1216 = vld [vmem:[#allocation2 + $0x11f0] sm:$0xf]
    %v1217 = vld [vmem:[#allocation2 + $0x11f4] sm:$0xf]
    %v1218 = vld [vmem:[#allocation2 + $0x11f8] sm:$0xf]
    %v1219 = vld [vmem:[#allocation2 + $0x11fc] sm:$0xf]
    %v1220 = vld [vmem:[#allocation5] sm:$0x1]
    %v1222 = vlaneseq
    %v1223 = vshrl.u32 %v1222, 7
    %v1224 = vsub.s32 0, %v1223
    %v1225 = vrot.slane %v1220, %v1224
    %v1236 = vcombine.high %v59, %v59
    %v1238 = vunpack.c.l.s4 1966171168
    %v1239 = vunpack.c.0.s8 %v1238
    %v1240 = vlaneseq
    %v1241 = vshrl.u32 %v1240, 7
    %v1242 = vsub.s32 %v1239, %v1241
    %v1243 = vrot.slane %v59, %v1242
    %v1245 = vunpack.c.l.s4 1966171168
    %v1246 = vunpack.c.0.s8 %v1245
    %v1247 = vlaneseq
    %v1248 = vshrl.u32 %v1247, 7
    %v1249 = vsub.s32 %v1246, %v1248
    %v1250 = vrot.slane %v1236, %v1249
    %v1251 = vcombine.high %v1243, %v1243
    %v1252 = vcombine.high %v1250, %v1250
    %v1254 = vunpack.c.l.s4 1966171168
    %v1255 = vunpack.c.0.s8 %v1254
    %v1256 = vlaneseq
    %v1257 = vshrl.u32 %v1256, 7
    %v1258 = vsub.s32 %v1255, %v1257
    %v1259 = vrot.slane %v1243, %v1258
    %v1261 = vunpack.c.l.s4 1966171168
    %v1262 = vunpack.c.0.s8 %v1261
    %v1263 = vlaneseq
    %v1264 = vshrl.u32 %v1263, 7
    %v1265 = vsub.s32 %v1262, %v1264
    %v1266 = vrot.slane %v1250, %v1265
    %v1268 = vunpack.c.l.s4 1966171168
    %v1269 = vunpack.c.0.s8 %v1268
    %v1270 = vlaneseq
    %v1271 = vshrl.u32 %v1270, 7
    %v1272 = vsub.s32 %v1269, %v1271
    %v1273 = vrot.slane %v1251, %v1272
    %v1275 = vunpack.c.l.s4 1966171168
    %v1276 = vunpack.c.0.s8 %v1275
    %v1277 = vlaneseq
    %v1278 = vshrl.u32 %v1277, 7
    %v1279 = vsub.s32 %v1276, %v1278
    %v1280 = vrot.slane %v1252, %v1279
    %v1281 = vcombine.high %v1259, %v1259
    %v1282 = vcombine.high %v1266, %v1266
    %v1283 = vcombine.high %v1273, %v1273
    %v1284 = vcombine.high %v1280, %v1280
    %v1285 = vcombine.high %v60, %v60
    %v1287 = vunpack.c.l.s4 1966171168
    %v1288 = vunpack.c.0.s8 %v1287
    %v1289 = vlaneseq
    %v1290 = vshrl.u32 %v1289, 7
    %v1291 = vsub.s32 %v1288, %v1290
    %v1292 = vrot.slane %v60, %v1291
    %v1294 = vunpack.c.l.s4 1966171168
    %v1295 = vunpack.c.0.s8 %v1294
    %v1296 = vlaneseq
    %v1297 = vshrl.u32 %v1296, 7
    %v1298 = vsub.s32 %v1295, %v1297
    %v1299 = vrot.slane %v1285, %v1298
    %v1300 = vcombine.high %v1292, %v1292
    %v1301 = vcombine.high %v1299, %v1299
    %v1303 = vunpack.c.l.s4 1966171168
    %v1304 = vunpack.c.0.s8 %v1303
    %v1305 = vlaneseq
    %v1306 = vshrl.u32 %v1305, 7
    %v1307 = vsub.s32 %v1304, %v1306
    %v1308 = vrot.slane %v1292, %v1307
    %v1310 = vunpack.c.l.s4 1966171168
    %v1311 = vunpack.c.0.s8 %v1310
    %v1312 = vlaneseq
    %v1313 = vshrl.u32 %v1312, 7
    %v1314 = vsub.s32 %v1311, %v1313
    %v1315 = vrot.slane %v1299, %v1314
    %v1317 = vunpack.c.l.s4 1966171168
    %v1318 = vunpack.c.0.s8 %v1317
    %v1319 = vlaneseq
    %v1320 = vshrl.u32 %v1319, 7
    %v1321 = vsub.s32 %v1318, %v1320
    %v1322 = vrot.slane %v1300, %v1321
    %v1324 = vunpack.c.l.s4 1966171168
    %v1325 = vunpack.c.0.s8 %v1324
    %v1326 = vlaneseq
    %v1327 = vshrl.u32 %v1326, 7
    %v1328 = vsub.s32 %v1325, %v1327
    %v1329 = vrot.slane %v1301, %v1328
    %v1330 = vcombine.high %v1308, %v1308
    %v1331 = vcombine.high %v1315, %v1315
    %v1332 = vcombine.high %v1322, %v1322
    %v1333 = vcombine.high %v1329, %v1329
    %v1334 = vcombine.high %v61, %v61
    %v1336 = vunpack.c.l.s4 1966171168
    %v1337 = vunpack.c.0.s8 %v1336
    %v1338 = vlaneseq
    %v1339 = vshrl.u32 %v1338, 7
    %v1340 = vsub.s32 %v1337, %v1339
    %v1341 = vrot.slane %v61, %v1340
    %v1343 = vunpack.c.l.s4 1966171168
    %v1344 = vunpack.c.0.s8 %v1343
    %v1345 = vlaneseq
    %v1346 = vshrl.u32 %v1345, 7
    %v1347 = vsub.s32 %v1344, %v1346
    %v1348 = vrot.slane %v1334, %v1347
    %v1349 = vcombine.high %v1341, %v1341
    %v1350 = vcombine.high %v1348, %v1348
    %v1352 = vunpack.c.l.s4 1966171168
    %v1353 = vunpack.c.0.s8 %v1352
    %v1354 = vlaneseq
    %v1355 = vshrl.u32 %v1354, 7
    %v1356 = vsub.s32 %v1353, %v1355
    %v1357 = vrot.slane %v1341, %v1356
    %v1359 = vunpack.c.l.s4 1966171168
    %v1360 = vunpack.c.0.s8 %v1359
    %v1361 = vlaneseq
    %v1362 = vshrl.u32 %v1361, 7
    %v1363 = vsub.s32 %v1360, %v1362
    %v1364 = vrot.slane %v1348, %v1363
    %v1366 = vunpack.c.l.s4 1966171168
    %v1367 = vunpack.c.0.s8 %v1366
    %v1368 = vlaneseq
    %v1369 = vshrl.u32 %v1368, 7
    %v1370 = vsub.s32 %v1367, %v1369
    %v1371 = vrot.slane %v1349, %v1370
    %v1373 = vunpack.c.l.s4 1966171168
    %v1374 = vunpack.c.0.s8 %v1373
    %v1375 = vlaneseq
    %v1376 = vshrl.u32 %v1375, 7
    %v1377 = vsub.s32 %v1374, %v1376
    %v1378 = vrot.slane %v1350, %v1377
    %v1379 = vcombine.high %v1357, %v1357
    %v1380 = vcombine.high %v1364, %v1364
    %v1381 = vcombine.high %v1371, %v1371
    %v1382 = vcombine.high %v1378, %v1378
    %v1383 = vcombine.high %v62, %v62
    %v1385 = vunpack.c.l.s4 1966171168
    %v1386 = vunpack.c.0.s8 %v1385
    %v1387 = vlaneseq
    %v1388 = vshrl.u32 %v1387, 7
    %v1389 = vsub.s32 %v1386, %v1388
    %v1390 = vrot.slane %v62, %v1389
    %v1392 = vunpack.c.l.s4 1966171168
    %v1393 = vunpack.c.0.s8 %v1392
    %v1394 = vlaneseq
    %v1395 = vshrl.u32 %v1394, 7
    %v1396 = vsub.s32 %v1393, %v1395
    %v1397 = vrot.slane %v1383, %v1396
    %v1398 = vcombine.high %v1390, %v1390
    %v1399 = vcombine.high %v1397, %v1397
    %v1401 = vunpack.c.l.s4 1966171168
    %v1402 = vunpack.c.0.s8 %v1401
    %v1403 = vlaneseq
    %v1404 = vshrl.u32 %v1403, 7
    %v1405 = vsub.s32 %v1402, %v1404
    %v1406 = vrot.slane %v1390, %v1405
    %v1408 = vunpack.c.l.s4 1966171168
    %v1409 = vunpack.c.0.s8 %v1408
    %v1410 = vlaneseq
    %v1411 = vshrl.u32 %v1410, 7
    %v1412 = vsub.s32 %v1409, %v1411
    %v1413 = vrot.slane %v1397, %v1412
    %v1415 = vunpack.c.l.s4 1966171168
    %v1416 = vunpack.c.0.s8 %v1415
    %v1417 = vlaneseq
    %v1418 = vshrl.u32 %v1417, 7
    %v1419 = vsub.s32 %v1416, %v1418
    %v1420 = vrot.slane %v1398, %v1419
    %v1422 = vunpack.c.l.s4 1966171168
    %v1423 = vunpack.c.0.s8 %v1422
    %v1424 = vlaneseq
    %v1425 = vshrl.u32 %v1424, 7
    %v1426 = vsub.s32 %v1423, %v1425
    %v1427 = vrot.slane %v1399, %v1426
    %v1428 = vcombine.high %v1406, %v1406
    %v1429 = vcombine.high %v1413, %v1413
    %v1430 = vcombine.high %v1420, %v1420
    %v1431 = vcombine.high %v1427, %v1427
    %v1432 = vcombine.high %v63, %v63
    %v1434 = vunpack.c.l.s4 1966171168
    %v1435 = vunpack.c.0.s8 %v1434
    %v1436 = vlaneseq
    %v1437 = vshrl.u32 %v1436, 7
    %v1438 = vsub.s32 %v1435, %v1437
    %v1439 = vrot.slane %v63, %v1438
    %v1441 = vunpack.c.l.s4 1966171168
    %v1442 = vunpack.c.0.s8 %v1441
    %v1443 = vlaneseq
    %v1444 = vshrl.u32 %v1443, 7
    %v1445 = vsub.s32 %v1442, %v1444
    %v1446 = vrot.slane %v1432, %v1445
    %v1447 = vcombine.high %v1439, %v1439
    %v1448 = vcombine.high %v1446, %v1446
    %v1450 = vunpack.c.l.s4 1966171168
    %v1451 = vunpack.c.0.s8 %v1450
    %v1452 = vlaneseq
    %v1453 = vshrl.u32 %v1452, 7
    %v1454 = vsub.s32 %v1451, %v1453
    %v1455 = vrot.slane %v1439, %v1454
    %v1457 = vunpack.c.l.s4 1966171168
    %v1458 = vunpack.c.0.s8 %v1457
    %v1459 = vlaneseq
    %v1460 = vshrl.u32 %v1459, 7
    %v1461 = vsub.s32 %v1458, %v1460
    %v1462 = vrot.slane %v1446, %v1461
    %v1464 = vunpack.c.l.s4 1966171168
    %v1465 = vunpack.c.0.s8 %v1464
    %v1466 = vlaneseq
    %v1467 = vshrl.u32 %v1466, 7
    %v1468 = vsub.s32 %v1465, %v1467
    %v1469 = vrot.slane %v1447, %v1468
    %v1471 = vunpack.c.l.s4 1966171168
    %v1472 = vunpack.c.0.s8 %v1471
    %v1473 = vlaneseq
    %v1474 = vshrl.u32 %v1473, 7
    %v1475 = vsub.s32 %v1472, %v1474
    %v1476 = vrot.slane %v1448, %v1475
    %v1477 = vcombine.high %v1455, %v1455
    %v1478 = vcombine.high %v1462, %v1462
    %v1479 = vcombine.high %v1469, %v1469
    %v1480 = vcombine.high %v1476, %v1476
    %v1481 = vcombine.high %v64, %v64
    %v1483 = vunpack.c.l.s4 1966171168
    %v1484 = vunpack.c.0.s8 %v1483
    %v1485 = vlaneseq
    %v1486 = vshrl.u32 %v1485, 7
    %v1487 = vsub.s32 %v1484, %v1486
    %v1488 = vrot.slane %v64, %v1487
    %v1490 = vunpack.c.l.s4 1966171168
    %v1491 = vunpack.c.0.s8 %v1490
    %v1492 = vlaneseq
    %v1493 = vshrl.u32 %v1492, 7
    %v1494 = vsub.s32 %v1491, %v1493
    %v1495 = vrot.slane %v1481, %v1494
    %v1496 = vcombine.high %v1488, %v1488
    %v1497 = vcombine.high %v1495, %v1495
    %v1499 = vunpack.c.l.s4 1966171168
    %v1500 = vunpack.c.0.s8 %v1499
    %v1501 = vlaneseq
    %v1502 = vshrl.u32 %v1501, 7
    %v1503 = vsub.s32 %v1500, %v1502
    %v1504 = vrot.slane %v1488, %v1503
    %v1506 = vunpack.c.l.s4 1966171168
    %v1507 = vunpack.c.0.s8 %v1506
    %v1508 = vlaneseq
    %v1509 = vshrl.u32 %v1508, 7
    %v1510 = vsub.s32 %v1507, %v1509
    %v1511 = vrot.slane %v1495, %v1510
    %v1513 = vunpack.c.l.s4 1966171168
    %v1514 = vunpack.c.0.s8 %v1513
    %v1515 = vlaneseq
    %v1516 = vshrl.u32 %v1515, 7
    %v1517 = vsub.s32 %v1514, %v1516
    %v1518 = vrot.slane %v1496, %v1517
    %v1520 = vunpack.c.l.s4 1966171168
    %v1521 = vunpack.c.0.s8 %v1520
    %v1522 = vlaneseq
    %v1523 = vshrl.u32 %v1522, 7
    %v1524 = vsub.s32 %v1521, %v1523
    %v1525 = vrot.slane %v1497, %v1524
    %v1526 = vcombine.high %v1504, %v1504
    %v1527 = vcombine.high %v1511, %v1511
    %v1528 = vcombine.high %v1518, %v1518
    %v1529 = vcombine.high %v1525, %v1525
    %v1530 = vcombine.high %v65, %v65
    %v1532 = vunpack.c.l.s4 1966171168
    %v1533 = vunpack.c.0.s8 %v1532
    %v1534 = vlaneseq
    %v1535 = vshrl.u32 %v1534, 7
    %v1536 = vsub.s32 %v1533, %v1535
    %v1537 = vrot.slane %v65, %v1536
    %v1539 = vunpack.c.l.s4 1966171168
    %v1540 = vunpack.c.0.s8 %v1539
    %v1541 = vlaneseq
    %v1542 = vshrl.u32 %v1541, 7
    %v1543 = vsub.s32 %v1540, %v1542
    %v1544 = vrot.slane %v1530, %v1543
    %v1545 = vcombine.high %v1537, %v1537
    %v1546 = vcombine.high %v1544, %v1544
    %v1548 = vunpack.c.l.s4 1966171168
    %v1549 = vunpack.c.0.s8 %v1548
    %v1550 = vlaneseq
    %v1551 = vshrl.u32 %v1550, 7
    %v1552 = vsub.s32 %v1549, %v1551
    %v1553 = vrot.slane %v1537, %v1552
    %v1555 = vunpack.c.l.s4 1966171168
    %v1556 = vunpack.c.0.s8 %v1555
    %v1557 = vlaneseq
    %v1558 = vshrl.u32 %v1557, 7
    %v1559 = vsub.s32 %v1556, %v1558
    %v1560 = vrot.slane %v1544, %v1559
    %v1562 = vunpack.c.l.s4 1966171168
    %v1563 = vunpack.c.0.s8 %v1562
    %v1564 = vlaneseq
    %v1565 = vshrl.u32 %v1564, 7
    %v1566 = vsub.s32 %v1563, %v1565
    %v1567 = vrot.slane %v1545, %v1566
    %v1569 = vunpack.c.l.s4 1966171168
    %v1570 = vunpack.c.0.s8 %v1569
    %v1571 = vlaneseq
    %v1572 = vshrl.u32 %v1571, 7
    %v1573 = vsub.s32 %v1570, %v1572
    %v1574 = vrot.slane %v1546, %v1573
    %v1575 = vcombine.high %v1553, %v1553
    %v1576 = vcombine.high %v1560, %v1560
    %v1577 = vcombine.high %v1567, %v1567
    %v1578 = vcombine.high %v1574, %v1574
    %v1579 = vcombine.high %v66, %v66
    %v1581 = vunpack.c.l.s4 1966171168
    %v1582 = vunpack.c.0.s8 %v1581
    %v1583 = vlaneseq
    %v1584 = vshrl.u32 %v1583, 7
    %v1585 = vsub.s32 %v1582, %v1584
    %v1586 = vrot.slane %v66, %v1585
    %v1588 = vunpack.c.l.s4 1966171168
    %v1589 = vunpack.c.0.s8 %v1588
    %v1590 = vlaneseq
    %v1591 = vshrl.u32 %v1590, 7
    %v1592 = vsub.s32 %v1589, %v1591
    %v1593 = vrot.slane %v1579, %v1592
    %v1594 = vcombine.high %v1586, %v1586
    %v1595 = vcombine.high %v1593, %v1593
    %v1597 = vunpack.c.l.s4 1966171168
    %v1598 = vunpack.c.0.s8 %v1597
    %v1599 = vlaneseq
    %v1600 = vshrl.u32 %v1599, 7
    %v1601 = vsub.s32 %v1598, %v1600
    %v1602 = vrot.slane %v1586, %v1601
    %v1604 = vunpack.c.l.s4 1966171168
    %v1605 = vunpack.c.0.s8 %v1604
    %v1606 = vlaneseq
    %v1607 = vshrl.u32 %v1606, 7
    %v1608 = vsub.s32 %v1605, %v1607
    %v1609 = vrot.slane %v1593, %v1608
    %v1611 = vunpack.c.l.s4 1966171168
    %v1612 = vunpack.c.0.s8 %v1611
    %v1613 = vlaneseq
    %v1614 = vshrl.u32 %v1613, 7
    %v1615 = vsub.s32 %v1612, %v1614
    %v1616 = vrot.slane %v1594, %v1615
    %v1618 = vunpack.c.l.s4 1966171168
    %v1619 = vunpack.c.0.s8 %v1618
    %v1620 = vlaneseq
    %v1621 = vshrl.u32 %v1620, 7
    %v1622 = vsub.s32 %v1619, %v1621
    %v1623 = vrot.slane %v1595, %v1622
    %v1624 = vcombine.high %v1602, %v1602
    %v1625 = vcombine.high %v1609, %v1609
    %v1626 = vcombine.high %v1616, %v1616
    %v1627 = vcombine.high %v1623, %v1623
    %v1628 = vcombine.high %v67, %v67
    %v1630 = vunpack.c.l.s4 1966171168
    %v1631 = vunpack.c.0.s8 %v1630
    %v1632 = vlaneseq
    %v1633 = vshrl.u32 %v1632, 7
    %v1634 = vsub.s32 %v1631, %v1633
    %v1635 = vrot.slane %v67, %v1634
    %v1637 = vunpack.c.l.s4 1966171168
    %v1638 = vunpack.c.0.s8 %v1637
    %v1639 = vlaneseq
    %v1640 = vshrl.u32 %v1639, 7
    %v1641 = vsub.s32 %v1638, %v1640
    %v1642 = vrot.slane %v1628, %v1641
    %v1643 = vcombine.high %v1635, %v1635
    %v1644 = vcombine.high %v1642, %v1642
    %v1646 = vunpack.c.l.s4 1966171168
    %v1647 = vunpack.c.0.s8 %v1646
    %v1648 = vlaneseq
    %v1649 = vshrl.u32 %v1648, 7
    %v1650 = vsub.s32 %v1647, %v1649
    %v1651 = vrot.slane %v1635, %v1650
    %v1653 = vunpack.c.l.s4 1966171168
    %v1654 = vunpack.c.0.s8 %v1653
    %v1655 = vlaneseq
    %v1656 = vshrl.u32 %v1655, 7
    %v1657 = vsub.s32 %v1654, %v1656
    %v1658 = vrot.slane %v1642, %v1657
    %v1660 = vunpack.c.l.s4 1966171168
    %v1661 = vunpack.c.0.s8 %v1660
    %v1662 = vlaneseq
    %v1663 = vshrl.u32 %v1662, 7
    %v1664 = vsub.s32 %v1661, %v1663
    %v1665 = vrot.slane %v1643, %v1664
    %v1667 = vunpack.c.l.s4 1966171168
    %v1668 = vunpack.c.0.s8 %v1667
    %v1669 = vlaneseq
    %v1670 = vshrl.u32 %v1669, 7
    %v1671 = vsub.s32 %v1668, %v1670
    %v1672 = vrot.slane %v1644, %v1671
    %v1673 = vcombine.high %v1651, %v1651
    %v1674 = vcombine.high %v1658, %v1658
    %v1675 = vcombine.high %v1665, %v1665
    %v1676 = vcombine.high %v1672, %v1672
    %v2901 = vunpack.c.l.b16 %v68
    %v2902 = vunpack.c.l.b16 %v69
    %v2903 = vunpack.c.l.b16 %v70
    %v2904 = vunpack.c.l.b16 %v71
    %v2905 = vunpack.c.l.b16 %v72
    %v2906 = vunpack.c.l.b16 %v73
    %v2907 = vunpack.c.l.b16 %v74
    %v2908 = vunpack.c.l.b16 %v75
    %v2909 = vunpack.c.l.b16 %v76
    %v2910 = vunpack.c.l.b16 %v77
    %v2911 = vunpack.c.l.b16 %v78
    %v2912 = vunpack.c.l.b16 %v79
    %v2913 = vunpack.c.l.b16 %v80
    %v2914 = vunpack.c.l.b16 %v81
    %v2915 = vunpack.c.l.b16 %v82
    %v2916 = vunpack.c.l.b16 %v83
    %v2917 = vunpack.c.l.b16 %v84
    %v2918 = vunpack.c.l.b16 %v85
    %v2919 = vunpack.c.l.b16 %v86
    %v2920 = vunpack.c.l.b16 %v87
    %v2921 = vunpack.c.l.b16 %v88
    %v2922 = vunpack.c.l.b16 %v89
    %v2923 = vunpack.c.l.b16 %v90
    %v2924 = vunpack.c.l.b16 %v91
    %v2925 = vunpack.c.l.b16 %v92
    %v2926 = vunpack.c.l.b16 %v93
    %v2927 = vunpack.c.l.b16 %v94
    %v2928 = vunpack.c.l.b16 %v95
    %v2929 = vunpack.c.l.b16 %v96
    %v2930 = vunpack.c.l.b16 %v97
    %v2931 = vunpack.c.l.b16 %v98
    %v2932 = vunpack.c.l.b16 %v99
    %v2933 = vunpack.c.l.b16 %v100
    %v2934 = vunpack.c.l.b16 %v101
    %v2935 = vunpack.c.l.b16 %v102
    %v2936 = vunpack.c.l.b16 %v103
    %v2937 = vunpack.c.l.b16 %v104
    %v2938 = vunpack.c.l.b16 %v105
    %v2939 = vunpack.c.l.b16 %v106
    %v2940 = vunpack.c.l.b16 %v107
    %v2941 = vunpack.c.l.b16 %v108
    %v2942 = vunpack.c.l.b16 %v109
    %v2943 = vunpack.c.l.b16 %v110
    %v2944 = vunpack.c.l.b16 %v111
    %v2945 = vunpack.c.l.b16 %v112
    %v2946 = vunpack.c.l.b16 %v113
    %v2947 = vunpack.c.l.b16 %v114
    %v2948 = vunpack.c.l.b16 %v115
    %v2949 = vunpack.c.l.b16 %v116
    %v2950 = vunpack.c.l.b16 %v117
    %v2951 = vunpack.c.l.b16 %v118
    %v2952 = vunpack.c.l.b16 %v119
    %v2953 = vunpack.c.l.b16 %v120
    %v2954 = vunpack.c.l.b16 %v121
    %v2955 = vunpack.c.l.b16 %v122
    %v2956 = vunpack.c.l.b16 %v123
    %v2957 = vunpack.c.l.b16 %v124
    %v2958 = vunpack.c.l.b16 %v125
    %v2959 = vunpack.c.l.b16 %v126
    %v2960 = vunpack.c.l.b16 %v127
    %v2961 = vunpack.c.l.b16 %v128
    %v2962 = vunpack.c.l.b16 %v129
    %v2963 = vunpack.c.l.b16 %v130
    %v2964 = vunpack.c.l.b16 %v131
    %v2965 = vunpack.c.l.b16 %v132
    %v2966 = vunpack.c.l.b16 %v133
    %v2967 = vunpack.c.l.b16 %v134
    %v2968 = vunpack.c.l.b16 %v135
    %v2969 = vunpack.c.l.b16 %v136
    %v2970 = vunpack.c.l.b16 %v137
    %v2971 = vunpack.c.l.b16 %v138
    %v2972 = vunpack.c.l.b16 %v139
    %v2973 = vunpack.c.l.b16 %v140
    %v2974 = vunpack.c.l.b16 %v141
    %v2975 = vunpack.c.l.b16 %v142
    %v2976 = vunpack.c.l.b16 %v143
    %v2977 = vunpack.c.l.b16 %v144
    %v2978 = vunpack.c.l.b16 %v145
    %v2979 = vunpack.c.l.b16 %v146
    %v2980 = vunpack.c.l.b16 %v147
    %v2981 = vunpack.c.l.b16 %v148
    %v2982 = vunpack.c.l.b16 %v149
    %v2983 = vunpack.c.l.b16 %v150
    %v2984 = vunpack.c.l.b16 %v151
    %v2985 = vunpack.c.l.b16 %v152
    %v2986 = vunpack.c.l.b16 %v153
    %v2987 = vunpack.c.l.b16 %v154
    %v2988 = vunpack.c.l.b16 %v155
    %v2989 = vunpack.c.l.b16 %v156
    %v2990 = vunpack.c.l.b16 %v157
    %v2991 = vunpack.c.l.b16 %v158
    %v2992 = vunpack.c.l.b16 %v159
    %v2993 = vunpack.c.l.b16 %v160
    %v2994 = vunpack.c.l.b16 %v161
    %v2995 = vunpack.c.l.b16 %v162
    %v2996 = vunpack.c.l.b16 %v163
    %v2997 = vunpack.c.l.b16 %v164
    %v2998 = vunpack.c.l.b16 %v165
    %v2999 = vunpack.c.l.b16 %v166
    %v3000 = vunpack.c.l.b16 %v167
    %v3001 = vunpack.c.l.b16 %v168
    %v3002 = vunpack.c.l.b16 %v169
    %v3003 = vunpack.c.l.b16 %v170
    %v3004 = vunpack.c.l.b16 %v171
    %v3005 = vunpack.c.l.b16 %v172
    %v3006 = vunpack.c.l.b16 %v173
    %v3007 = vunpack.c.l.b16 %v174
    %v3008 = vunpack.c.l.b16 %v175
    %v3009 = vunpack.c.l.b16 %v176
    %v3010 = vunpack.c.l.b16 %v177
    %v3011 = vunpack.c.l.b16 %v178
    %v3012 = vunpack.c.l.b16 %v179
    %v3013 = vunpack.c.l.b16 %v180
    %v3014 = vunpack.c.l.b16 %v181
    %v3015 = vunpack.c.l.b16 %v182
    %v3016 = vunpack.c.l.b16 %v183
    %v3017 = vunpack.c.l.b16 %v184
    %v3018 = vunpack.c.l.b16 %v185
    %v3019 = vunpack.c.l.b16 %v186
    %v3020 = vunpack.c.l.b16 %v187
    %v3021 = vunpack.c.l.b16 %v188
    %v3022 = vunpack.c.l.b16 %v189
    %v3023 = vunpack.c.l.b16 %v190
    %v3024 = vunpack.c.l.b16 %v191
    %v3025 = vunpack.c.l.b16 %v192
    %v3026 = vunpack.c.l.b16 %v193
    %v3027 = vunpack.c.l.b16 %v194
    %v3028 = vunpack.c.l.b16 %v195
    %v3029 = vunpack.c.l.b16 %v196
    %v3030 = vunpack.c.l.b16 %v197
    %v3031 = vunpack.c.l.b16 %v198
    %v3032 = vunpack.c.l.b16 %v199
    %v3033 = vunpack.c.l.b16 %v200
    %v3034 = vunpack.c.l.b16 %v201
    %v3035 = vunpack.c.l.b16 %v202
    %v3036 = vunpack.c.l.b16 %v203
    %v3037 = vunpack.c.l.b16 %v204
    %v3038 = vunpack.c.l.b16 %v205
    %v3039 = vunpack.c.l.b16 %v206
    %v3040 = vunpack.c.l.b16 %v207
    %v3041 = vunpack.c.l.b16 %v208
    %v3042 = vunpack.c.l.b16 %v209
    %v3043 = vunpack.c.l.b16 %v210
    %v3044 = vunpack.c.l.b16 %v211
    %v3045 = vunpack.c.l.b16 %v212
    %v3046 = vunpack.c.l.b16 %v213
    %v3047 = vunpack.c.l.b16 %v214
    %v3048 = vunpack.c.l.b16 %v215
    %v3049 = vunpack.c.l.b16 %v216
    %v3050 = vunpack.c.l.b16 %v217
    %v3051 = vunpack.c.l.b16 %v218
    %v3052 = vunpack.c.l.b16 %v219
    %v3053 = vunpack.c.l.b16 %v220
    %v3054 = vunpack.c.l.b16 %v221
    %v3055 = vunpack.c.l.b16 %v222
    %v3056 = vunpack.c.l.b16 %v223
    %v3057 = vunpack.c.l.b16 %v224
    %v3058 = vunpack.c.l.b16 %v225
    %v3059 = vunpack.c.l.b16 %v226
    %v3060 = vunpack.c.l.b16 %v227
    %v3061 = vunpack.c.l.b16 %v228
    %v3062 = vunpack.c.l.b16 %v229
    %v3063 = vunpack.c.l.b16 %v230
    %v3064 = vunpack.c.l.b16 %v231
    %v3065 = vunpack.c.l.b16 %v232
    %v3066 = vunpack.c.l.b16 %v233
    %v3067 = vunpack.c.l.b16 %v234
    %v3068 = vunpack.c.l.b16 %v235
    %v3069 = vunpack.c.l.b16 %v236
    %v3070 = vunpack.c.l.b16 %v237
    %v3071 = vunpack.c.l.b16 %v238
    %v3072 = vunpack.c.l.b16 %v239
    %v3073 = vunpack.c.l.b16 %v240
    %v3074 = vunpack.c.l.b16 %v241
    %v3075 = vunpack.c.l.b16 %v242
    %v3076 = vunpack.c.l.b16 %v243
    %v3077 = vunpack.c.l.b16 %v244
    %v3078 = vunpack.c.l.b16 %v245
    %v3079 = vunpack.c.l.b16 %v246
    %v3080 = vunpack.c.l.b16 %v247
    %v3081 = vunpack.c.l.b16 %v248
    %v3082 = vunpack.c.l.b16 %v249
    %v3083 = vunpack.c.l.b16 %v250
    %v3084 = vunpack.c.l.b16 %v251
    %v3085 = vunpack.c.l.b16 %v252
    %v3086 = vunpack.c.l.b16 %v253
    %v3087 = vunpack.c.l.b16 %v254
    %v3088 = vunpack.c.l.b16 %v255
    %v3089 = vunpack.c.l.b16 %v256
    %v3090 = vunpack.c.l.b16 %v257
    %v3091 = vunpack.c.l.b16 %v258
    %v3092 = vunpack.c.l.b16 %v259
    %v3093 = vunpack.c.l.b16 %v260
    %v3094 = vunpack.c.l.b16 %v261
    %v3095 = vunpack.c.l.b16 %v262
    %v3096 = vunpack.c.l.b16 %v263
    %v3097 = vunpack.c.l.b16 %v264
    %v3098 = vunpack.c.l.b16 %v265
    %v3099 = vunpack.c.l.b16 %v266
    %v3100 = vunpack.c.l.b16 %v267
    %v3101 = vunpack.c.l.b16 %v268
    %v3102 = vunpack.c.l.b16 %v269
    %v3103 = vunpack.c.l.b16 %v270
    %v3104 = vunpack.c.l.b16 %v271
    %v3105 = vunpack.c.l.b16 %v272
    %v3106 = vunpack.c.l.b16 %v273
    %v3107 = vunpack.c.l.b16 %v274
    %v3108 = vunpack.c.l.b16 %v275
    %v3109 = vunpack.c.l.b16 %v276
    %v3110 = vunpack.c.l.b16 %v277
    %v3111 = vunpack.c.l.b16 %v278
    %v3112 = vunpack.c.l.b16 %v279
    %v3113 = vunpack.c.l.b16 %v280
    %v3114 = vunpack.c.l.b16 %v281
    %v3115 = vunpack.c.l.b16 %v282
    %v3116 = vunpack.c.l.b16 %v283
    %v3117 = vunpack.c.l.b16 %v284
    %v3118 = vunpack.c.l.b16 %v285
    %v3119 = vunpack.c.l.b16 %v286
    %v3120 = vunpack.c.l.b16 %v287
    %v3121 = vunpack.c.l.b16 %v288
    %v3122 = vunpack.c.l.b16 %v289
    %v3123 = vunpack.c.l.b16 %v290
    %v3124 = vunpack.c.l.b16 %v291
    %v3125 = vunpack.c.l.b16 %v292
    %v3126 = vunpack.c.l.b16 %v293
    %v3127 = vunpack.c.l.b16 %v294
    %v3128 = vunpack.c.l.b16 %v295
    %v3129 = vunpack.c.l.b16 %v296
    %v3130 = vunpack.c.l.b16 %v297
    %v3131 = vunpack.c.l.b16 %v298
    %v3132 = vunpack.c.l.b16 %v299
    %v3133 = vunpack.c.l.b16 %v300
    %v3134 = vunpack.c.l.b16 %v301
    %v3135 = vunpack.c.l.b16 %v302
    %v3136 = vunpack.c.l.b16 %v303
    %v3137 = vunpack.c.l.b16 %v304
    %v3138 = vunpack.c.l.b16 %v305
    %v3139 = vunpack.c.l.b16 %v306
    %v3140 = vunpack.c.l.b16 %v307
    %v3141 = vunpack.c.l.b16 %v308
    %v3142 = vunpack.c.l.b16 %v309
    %v3143 = vunpack.c.l.b16 %v310
    %v3144 = vunpack.c.l.b16 %v311
    %v3145 = vunpack.c.l.b16 %v312
    %v3146 = vunpack.c.l.b16 %v313
    %v3147 = vunpack.c.l.b16 %v314
    %v3148 = vunpack.c.l.b16 %v315
    %v3149 = vunpack.c.l.b16 %v316
    %v3150 = vunpack.c.l.b16 %v317
    %v3151 = vunpack.c.l.b16 %v318
    %v3152 = vunpack.c.l.b16 %v319
    %v3153 = vunpack.c.l.b16 %v320
    %v3154 = vunpack.c.l.b16 %v321
    %v3155 = vunpack.c.l.b16 %v322
    %v3156 = vunpack.c.l.b16 %v323
    %v3157 = vunpack.c.l.b16 %v324
    %v3158 = vunpack.c.l.b16 %v325
    %v3159 = vunpack.c.l.b16 %v326
    %v3160 = vunpack.c.l.b16 %v327
    %v3161 = vunpack.c.l.b16 %v328
    %v3162 = vunpack.c.l.b16 %v329
    %v3163 = vunpack.c.l.b16 %v330
    %v3164 = vunpack.c.l.b16 %v331
    %v3165 = vunpack.c.l.b16 %v332
    %v3166 = vunpack.c.l.b16 %v333
    %v3167 = vunpack.c.l.b16 %v334
    %v3168 = vunpack.c.l.b16 %v335
    %v3169 = vunpack.c.l.b16 %v336
    %v3170 = vunpack.c.l.b16 %v337
    %v3171 = vunpack.c.l.b16 %v338
    %v3172 = vunpack.c.l.b16 %v339
    %v3173 = vunpack.c.l.b16 %v340
    %v3174 = vunpack.c.l.b16 %v341
    %v3175 = vunpack.c.l.b16 %v342
    %v3176 = vunpack.c.l.b16 %v343
    %v3177 = vunpack.c.l.b16 %v344
    %v3178 = vunpack.c.l.b16 %v345
    %v3179 = vunpack.c.l.b16 %v346
    %v3180 = vunpack.c.l.b16 %v347
    %v3181 = vunpack.c.l.b16 %v348
    %v3182 = vunpack.c.l.b16 %v349
    %v3183 = vunpack.c.l.b16 %v350
    %v3184 = vunpack.c.l.b16 %v351
    %v3185 = vunpack.c.l.b16 %v352
    %v3186 = vunpack.c.l.b16 %v353
    %v3187 = vunpack.c.l.b16 %v354
    %v3188 = vunpack.c.l.b16 %v355
    %v3189 = vunpack.c.l.b16 %v356
    %v3190 = vunpack.c.l.b16 %v357
    %v3191 = vunpack.c.l.b16 %v358
    %v3192 = vunpack.c.l.b16 %v359
    %v3193 = vunpack.c.l.b16 %v360
    %v3194 = vunpack.c.l.b16 %v361
    %v3195 = vunpack.c.l.b16 %v362
    %v3196 = vunpack.c.l.b16 %v363
    %v3197 = vunpack.c.l.b16 %v364
    %v3198 = vunpack.c.l.b16 %v365
    %v3199 = vunpack.c.l.b16 %v366
    %v3200 = vunpack.c.l.b16 %v367
    %v3201 = vunpack.c.l.b16 %v368
    %v3202 = vunpack.c.l.b16 %v369
    %v3203 = vunpack.c.l.b16 %v370
    %v3204 = vunpack.c.l.b16 %v371
    %v3205 = vunpack.c.l.b16 %v372
    %v3206 = vunpack.c.l.b16 %v373
    %v3207 = vunpack.c.l.b16 %v374
    %v3208 = vunpack.c.l.b16 %v375
    %v3209 = vunpack.c.l.b16 %v376
    %v3210 = vunpack.c.l.b16 %v377
    %v3211 = vunpack.c.l.b16 %v378
    %v3212 = vunpack.c.l.b16 %v379
    %v3213 = vunpack.c.l.b16 %v380
    %v3214 = vunpack.c.l.b16 %v381
    %v3215 = vunpack.c.l.b16 %v382
    %v3216 = vunpack.c.l.b16 %v383
    %v3217 = vunpack.c.l.b16 %v384
    %v3218 = vunpack.c.l.b16 %v385
    %v3219 = vunpack.c.l.b16 %v386
    %v3220 = vunpack.c.l.b16 %v387
    %v3221 = vunpack.c.l.b16 %v388
    %v3222 = vunpack.c.l.b16 %v389
    %v3223 = vunpack.c.l.b16 %v390
    %v3224 = vunpack.c.l.b16 %v391
    %v3225 = vunpack.c.l.b16 %v392
    %v3226 = vunpack.c.l.b16 %v393
    %v3227 = vunpack.c.l.b16 %v394
    %v3228 = vunpack.c.l.b16 %v395
    %v3229 = vunpack.c.l.b16 %v396
    %v3230 = vunpack.c.l.b16 %v397
    %v3231 = vunpack.c.l.b16 %v398
    %v3232 = vunpack.c.l.b16 %v399
    %v3233 = vunpack.c.l.b16 %v400
    %v3234 = vunpack.c.l.b16 %v401
    %v3235 = vunpack.c.l.b16 %v402
    %v3236 = vunpack.c.l.b16 %v403
    %v3237 = vunpack.c.l.b16 %v404
    %v3238 = vunpack.c.l.b16 %v405
    %v3239 = vunpack.c.l.b16 %v406
    %v3240 = vunpack.c.l.b16 %v407
    %v3241 = vunpack.c.l.b16 %v408
    %v3242 = vunpack.c.l.b16 %v409
    %v3243 = vunpack.c.l.b16 %v410
    %v3244 = vunpack.c.l.b16 %v411
    %v3245 = vunpack.c.l.b16 %v412
    %v3246 = vunpack.c.l.b16 %v413
    %v3247 = vunpack.c.l.b16 %v414
    %v3248 = vunpack.c.l.b16 %v415
    %v3249 = vunpack.c.l.b16 %v416
    %v3250 = vunpack.c.l.b16 %v417
    %v3251 = vunpack.c.l.b16 %v418
    %v3252 = vunpack.c.l.b16 %v419
    %v3253 = vunpack.c.l.b16 %v420
    %v3254 = vunpack.c.l.b16 %v421
    %v3255 = vunpack.c.l.b16 %v422
    %v3256 = vunpack.c.l.b16 %v423
    %v3257 = vunpack.c.l.b16 %v424
    %v3258 = vunpack.c.l.b16 %v425
    %v3259 = vunpack.c.l.b16 %v426
    %v3260 = vunpack.c.l.b16 %v427
    %v3261 = vunpack.c.l.b16 %v428
    %v3262 = vunpack.c.l.b16 %v429
    %v3263 = vunpack.c.l.b16 %v430
    %v3264 = vunpack.c.l.b16 %v431
    %v3265 = vunpack.c.l.b16 %v432
    %v3266 = vunpack.c.l.b16 %v433
    %v3267 = vunpack.c.l.b16 %v434
    %v3268 = vunpack.c.l.b16 %v435
    %v3269 = vunpack.c.l.b16 %v436
    %v3270 = vunpack.c.l.b16 %v437
    %v3271 = vunpack.c.l.b16 %v438
    %v3272 = vunpack.c.l.b16 %v439
    %v3273 = vunpack.c.l.b16 %v440
    %v3274 = vunpack.c.l.b16 %v441
    %v3275 = vunpack.c.l.b16 %v442
    %v3276 = vunpack.c.l.b16 %v443
    %v3277 = vunpack.c.l.b16 %v444
    %v3278 = vunpack.c.l.b16 %v445
    %v3279 = vunpack.c.l.b16 %v446
    %v3280 = vunpack.c.l.b16 %v447
    %v3281 = vunpack.c.l.b16 %v448
    %v3282 = vunpack.c.l.b16 %v449
    %v3283 = vunpack.c.l.b16 %v450
    %v3284 = vunpack.c.l.b16 %v451
    %v3285 = vunpack.c.l.b16 %v452
    %v3286 = vunpack.c.l.b16 %v453
    %v3287 = vunpack.c.l.b16 %v454
    %v3288 = vunpack.c.l.b16 %v455
    %v3289 = vunpack.c.l.b16 %v456
    %v3290 = vunpack.c.l.b16 %v457
    %v3291 = vunpack.c.l.b16 %v458
    %v3292 = vunpack.c.l.b16 %v459
    %v3293 = vunpack.c.l.b16 %v460
    %v3294 = vunpack.c.l.b16 %v461
    %v3295 = vunpack.c.l.b16 %v462
    %v3296 = vunpack.c.l.b16 %v463
    %v3297 = vunpack.c.l.b16 %v464
    %v3298 = vunpack.c.l.b16 %v465
    %v3299 = vunpack.c.l.b16 %v466
    %v3300 = vunpack.c.l.b16 %v467
    %v3301 = vunpack.c.l.b16 %v468
    %v3302 = vunpack.c.l.b16 %v469
    %v3303 = vunpack.c.l.b16 %v470
    %v3304 = vunpack.c.l.b16 %v471
    %v3305 = vunpack.c.l.b16 %v472
    %v3306 = vunpack.c.l.b16 %v473
    %v3307 = vunpack.c.l.b16 %v474
    %v3308 = vunpack.c.l.b16 %v475
    %v3309 = vunpack.c.l.b16 %v476
    %v3310 = vunpack.c.l.b16 %v477
    %v3311 = vunpack.c.l.b16 %v478
    %v3312 = vunpack.c.l.b16 %v479
    %v3313 = vunpack.c.l.b16 %v480
    %v3314 = vunpack.c.l.b16 %v481
    %v3315 = vunpack.c.l.b16 %v482
    %v3316 = vunpack.c.l.b16 %v483
    %v3317 = vunpack.c.l.b16 %v484
    %v3318 = vunpack.c.l.b16 %v485
    %v3319 = vunpack.c.l.b16 %v486
    %v3320 = vunpack.c.l.b16 %v487
    %v3321 = vunpack.c.l.b16 %v488
    %v3322 = vunpack.c.l.b16 %v489
    %v3323 = vunpack.c.l.b16 %v490
    %v3324 = vunpack.c.l.b16 %v491
    %v3325 = vunpack.c.l.b16 %v492
    %v3326 = vunpack.c.l.b16 %v493
    %v3327 = vunpack.c.l.b16 %v494
    %v3328 = vunpack.c.l.b16 %v495
    %v3329 = vunpack.c.l.b16 %v496
    %v3330 = vunpack.c.l.b16 %v497
    %v3331 = vunpack.c.l.b16 %v498
    %v3332 = vunpack.c.l.b16 %v499
    %v3333 = vunpack.c.l.b16 %v500
    %v3334 = vunpack.c.l.b16 %v501
    %v3335 = vunpack.c.l.b16 %v502
    %v3336 = vunpack.c.l.b16 %v503
    %v3337 = vunpack.c.l.b16 %v504
    %v3338 = vunpack.c.l.b16 %v505
    %v3339 = vunpack.c.l.b16 %v506
    %v3340 = vunpack.c.l.b16 %v507
    %v3341 = vunpack.c.l.b16 %v508
    %v3342 = vunpack.c.l.b16 %v509
    %v3343 = vunpack.c.l.b16 %v510
    %v3344 = vunpack.c.l.b16 %v511
    %v3345 = vunpack.c.l.b16 %v512
    %v3346 = vunpack.c.l.b16 %v513
    %v3347 = vunpack.c.l.b16 %v514
    %v3348 = vunpack.c.l.b16 %v515
    %v3349 = vunpack.c.l.b16 %v516
    %v3350 = vunpack.c.l.b16 %v517
    %v3351 = vunpack.c.l.b16 %v518
    %v3352 = vunpack.c.l.b16 %v519
    %v3353 = vunpack.c.l.b16 %v520
    %v3354 = vunpack.c.l.b16 %v521
    %v3355 = vunpack.c.l.b16 %v522
    %v3356 = vunpack.c.l.b16 %v523
    %v3357 = vunpack.c.l.b16 %v524
    %v3358 = vunpack.c.l.b16 %v525
    %v3359 = vunpack.c.l.b16 %v526
    %v3360 = vunpack.c.l.b16 %v527
    %v3361 = vunpack.c.l.b16 %v528
    %v3362 = vunpack.c.l.b16 %v529
    %v3363 = vunpack.c.l.b16 %v530
    %v3364 = vunpack.c.l.b16 %v531
    %v3365 = vunpack.c.l.b16 %v532
    %v3366 = vunpack.c.l.b16 %v533
    %v3367 = vunpack.c.l.b16 %v534
    %v3368 = vunpack.c.l.b16 %v535
    %v3369 = vunpack.c.l.b16 %v536
    %v3370 = vunpack.c.l.b16 %v537
    %v3371 = vunpack.c.l.b16 %v538
    %v3372 = vunpack.c.l.b16 %v539
    %v3373 = vunpack.c.l.b16 %v540
    %v3374 = vunpack.c.l.b16 %v541
    %v3375 = vunpack.c.l.b16 %v542
    %v3376 = vunpack.c.l.b16 %v543
    %v3377 = vunpack.c.l.b16 %v544
    %v3378 = vunpack.c.l.b16 %v545
    %v3379 = vunpack.c.l.b16 %v546
    %v3380 = vunpack.c.l.b16 %v547
    %v3381 = vunpack.c.l.b16 %v548
    %v3382 = vunpack.c.l.b16 %v549
    %v3383 = vunpack.c.l.b16 %v550
    %v3384 = vunpack.c.l.b16 %v551
    %v3385 = vunpack.c.l.b16 %v552
    %v3386 = vunpack.c.l.b16 %v553
    %v3387 = vunpack.c.l.b16 %v554
    %v3388 = vunpack.c.l.b16 %v555
    %v3389 = vunpack.c.l.b16 %v556
    %v3390 = vunpack.c.l.b16 %v557
    %v3391 = vunpack.c.l.b16 %v558
    %v3392 = vunpack.c.l.b16 %v559
    %v3393 = vunpack.c.l.b16 %v560
    %v3394 = vunpack.c.l.b16 %v561
    %v3395 = vunpack.c.l.b16 %v562
    %v3396 = vunpack.c.l.b16 %v563
    %v3397 = vunpack.c.l.b16 %v564
    %v3398 = vunpack.c.l.b16 %v565
    %v3399 = vunpack.c.l.b16 %v566
    %v3400 = vunpack.c.l.b16 %v567
    %v3401 = vunpack.c.l.b16 %v568
    %v3402 = vunpack.c.l.b16 %v569
    %v3403 = vunpack.c.l.b16 %v570
    %v3404 = vunpack.c.l.b16 %v571
    %v3405 = vunpack.c.l.b16 %v572
    %v3406 = vunpack.c.l.b16 %v573
    %v3407 = vunpack.c.l.b16 %v574
    %v3408 = vunpack.c.l.b16 %v575
    %v3409 = vunpack.c.l.b16 %v576
    %v3410 = vunpack.c.l.b16 %v577
    %v3411 = vunpack.c.l.b16 %v578
    %v3412 = vunpack.c.l.b16 %v579
    %v3413 = vunpack.c.l.b16 %v580
    %v3414 = vunpack.c.l.b16 %v581
    %v3415 = vunpack.c.l.b16 %v582
    %v3416 = vunpack.c.l.b16 %v583
    %v3417 = vunpack.c.l.b16 %v584
    %v3418 = vunpack.c.l.b16 %v585
    %v3419 = vunpack.c.l.b16 %v586
    %v3420 = vunpack.c.l.b16 %v587
    %v3421 = vunpack.c.l.b16 %v588
    %v3422 = vunpack.c.l.b16 %v589
    %v3423 = vunpack.c.l.b16 %v590
    %v3424 = vunpack.c.l.b16 %v591
    %v3425 = vunpack.c.l.b16 %v592
    %v3426 = vunpack.c.l.b16 %v593
    %v3427 = vunpack.c.l.b16 %v594
    %v3428 = vunpack.c.l.b16 %v595
    %v3429 = vunpack.c.l.b16 %v596
    %v3430 = vunpack.c.l.b16 %v597
    %v3431 = vunpack.c.l.b16 %v598
    %v3432 = vunpack.c.l.b16 %v599
    %v3433 = vunpack.c.l.b16 %v600
    %v3434 = vunpack.c.l.b16 %v601
    %v3435 = vunpack.c.l.b16 %v602
    %v3436 = vunpack.c.l.b16 %v603
    %v3437 = vunpack.c.l.b16 %v604
    %v3438 = vunpack.c.l.b16 %v605
    %v3439 = vunpack.c.l.b16 %v606
    %v3440 = vunpack.c.l.b16 %v607
    %v3441 = vunpack.c.l.b16 %v608
    %v3442 = vunpack.c.l.b16 %v609
    %v3443 = vunpack.c.l.b16 %v610
    %v3444 = vunpack.c.l.b16 %v611
    %v3445 = vunpack.c.l.b16 %v612
    %v3446 = vunpack.c.l.b16 %v613
    %v3447 = vunpack.c.l.b16 %v614
    %v3448 = vunpack.c.l.b16 %v615
    %v3449 = vunpack.c.l.b16 %v616
    %v3450 = vunpack.c.l.b16 %v617
    %v3451 = vunpack.c.l.b16 %v618
    %v3452 = vunpack.c.l.b16 %v619
    %v3453 = vunpack.c.l.b16 %v620
    %v3454 = vunpack.c.l.b16 %v621
    %v3455 = vunpack.c.l.b16 %v622
    %v3456 = vunpack.c.l.b16 %v623
    %v3457 = vunpack.c.l.b16 %v624
    %v3458 = vunpack.c.l.b16 %v625
    %v3459 = vunpack.c.l.b16 %v626
    %v3460 = vunpack.c.l.b16 %v627
    %v3461 = vunpack.c.l.b16 %v628
    %v3462 = vunpack.c.l.b16 %v629
    %v3463 = vunpack.c.l.b16 %v630
    %v3464 = vunpack.c.l.b16 %v631
    %v3465 = vunpack.c.l.b16 %v632
    %v3466 = vunpack.c.l.b16 %v633
    %v3467 = vunpack.c.l.b16 %v634
    %v3468 = vunpack.c.l.b16 %v635
    %v3469 = vunpack.c.l.b16 %v636
    %v3470 = vunpack.c.l.b16 %v637
    %v3471 = vunpack.c.l.b16 %v638
    %v3472 = vunpack.c.l.b16 %v639
    %v3473 = vunpack.c.l.b16 %v640
    %v3474 = vunpack.c.l.b16 %v641
    %v3475 = vunpack.c.l.b16 %v642
    %v3476 = vunpack.c.l.b16 %v643
    %v3477 = vunpack.c.l.b16 %v644
    %v3478 = vunpack.c.l.b16 %v645
    %v3479 = vunpack.c.l.b16 %v646
    %v3480 = vunpack.c.l.b16 %v647
    %v3481 = vunpack.c.l.b16 %v648
    %v3482 = vunpack.c.l.b16 %v649
    %v3483 = vunpack.c.l.b16 %v650
    %v3484 = vunpack.c.l.b16 %v651
    %v3485 = vunpack.c.l.b16 %v652
    %v3486 = vunpack.c.l.b16 %v653
    %v3487 = vunpack.c.l.b16 %v654
    %v3488 = vunpack.c.l.b16 %v655
    %v3489 = vunpack.c.l.b16 %v656
    %v3490 = vunpack.c.l.b16 %v657
    %v3491 = vunpack.c.l.b16 %v658
    %v3492 = vunpack.c.l.b16 %v659
    %v3493 = vunpack.c.l.b16 %v660
    %v3494 = vunpack.c.l.b16 %v661
    %v3495 = vunpack.c.l.b16 %v662
    %v3496 = vunpack.c.l.b16 %v663
    %v3497 = vunpack.c.l.b16 %v664
    %v3498 = vunpack.c.l.b16 %v665
    %v3499 = vunpack.c.l.b16 %v666
    %v3500 = vunpack.c.l.b16 %v667
    %v3501 = vunpack.c.l.b16 %v668
    %v3502 = vunpack.c.l.b16 %v669
    %v3503 = vunpack.c.l.b16 %v670
    %v3504 = vunpack.c.l.b16 %v671
    %v3505 = vunpack.c.l.b16 %v672
    %v3506 = vunpack.c.l.b16 %v673
    %v3507 = vunpack.c.l.b16 %v674
    %v3508 = vunpack.c.l.b16 %v675
    %v3509 = vunpack.c.l.b16 %v676
    %v3510 = vunpack.c.l.b16 %v677
    %v3511 = vunpack.c.l.b16 %v678
    %v3512 = vunpack.c.l.b16 %v679
    %v3513 = vunpack.c.l.b16 %v680
    %v3514 = vunpack.c.l.b16 %v681
    %v3515 = vunpack.c.l.b16 %v682
    %v3516 = vunpack.c.l.b16 %v683
    %v3517 = vunpack.c.l.b16 %v684
    %v3518 = vunpack.c.l.b16 %v685
    %v3519 = vunpack.c.l.b16 %v686
    %v3520 = vunpack.c.l.b16 %v687
    %v3521 = vunpack.c.l.b16 %v688
    %v3522 = vunpack.c.l.b16 %v689
    %v3523 = vunpack.c.l.b16 %v690
    %v3524 = vunpack.c.l.b16 %v691
    %v3525 = vunpack.c.l.b16 %v692
    %v3526 = vunpack.c.l.b16 %v693
    %v3527 = vunpack.c.l.b16 %v694
    %v3528 = vunpack.c.l.b16 %v695
    %v3529 = vunpack.c.l.b16 %v696
    %v3530 = vunpack.c.l.b16 %v697
    %v3531 = vunpack.c.l.b16 %v698
    %v3532 = vunpack.c.l.b16 %v699
    %v3533 = vunpack.c.l.b16 %v700
    %v3534 = vunpack.c.l.b16 %v701
    %v3535 = vunpack.c.l.b16 %v702
    %v3536 = vunpack.c.l.b16 %v703
    %v3537 = vunpack.c.l.b16 %v704
    %v3538 = vunpack.c.l.b16 %v705
    %v3539 = vunpack.c.l.b16 %v706
    %v3540 = vunpack.c.l.b16 %v707
    %v3541 = vunpack.c.l.b16 %v708
    %v3542 = vunpack.c.l.b16 %v709
    %v3543 = vunpack.c.l.b16 %v710
    %v3544 = vunpack.c.l.b16 %v711
    %v3545 = vunpack.c.l.b16 %v712
    %v3546 = vunpack.c.l.b16 %v713
    %v3547 = vunpack.c.l.b16 %v714
    %v3548 = vunpack.c.l.b16 %v715
    %v3549 = vunpack.c.l.b16 %v716
    %v3550 = vunpack.c.l.b16 %v717
    %v3551 = vunpack.c.l.b16 %v718
    %v3552 = vunpack.c.l.b16 %v719
    %v3553 = vunpack.c.l.b16 %v720
    %v3554 = vunpack.c.l.b16 %v721
    %v3555 = vunpack.c.l.b16 %v722
    %v3556 = vunpack.c.l.b16 %v723
    %v3557 = vunpack.c.l.b16 %v724
    %v3558 = vunpack.c.l.b16 %v725
    %v3559 = vunpack.c.l.b16 %v726
    %v3560 = vunpack.c.l.b16 %v727
    %v3561 = vunpack.c.l.b16 %v728
    %v3562 = vunpack.c.l.b16 %v729
    %v3563 = vunpack.c.l.b16 %v730
    %v3564 = vunpack.c.l.b16 %v731
    %v3565 = vunpack.c.l.b16 %v732
    %v3566 = vunpack.c.l.b16 %v733
    %v3567 = vunpack.c.l.b16 %v734
    %v3568 = vunpack.c.l.b16 %v735
    %v3569 = vunpack.c.l.b16 %v736
    %v3570 = vunpack.c.l.b16 %v737
    %v3571 = vunpack.c.l.b16 %v738
    %v3572 = vunpack.c.l.b16 %v739
    %v3573 = vunpack.c.l.b16 %v740
    %v3574 = vunpack.c.l.b16 %v741
    %v3575 = vunpack.c.l.b16 %v742
    %v3576 = vunpack.c.l.b16 %v743
    %v3577 = vunpack.c.l.b16 %v744
    %v3578 = vunpack.c.l.b16 %v745
    %v3579 = vunpack.c.l.b16 %v746
    %v3580 = vunpack.c.l.b16 %v747
    %v3581 = vunpack.c.l.b16 %v748
    %v3582 = vunpack.c.l.b16 %v749
    %v3583 = vunpack.c.l.b16 %v750
    %v3584 = vunpack.c.l.b16 %v751
    %v3585 = vunpack.c.l.b16 %v752
    %v3586 = vunpack.c.l.b16 %v753
    %v3587 = vunpack.c.l.b16 %v754
    %v3588 = vunpack.c.l.b16 %v755
    %v3589 = vunpack.c.l.b16 %v756
    %v3590 = vunpack.c.l.b16 %v757
    %v3591 = vunpack.c.l.b16 %v758
    %v3592 = vunpack.c.l.b16 %v759
    %v3593 = vunpack.c.l.b16 %v760
    %v3594 = vunpack.c.l.b16 %v761
    %v3595 = vunpack.c.l.b16 %v762
    %v3596 = vunpack.c.l.b16 %v763
    %v3597 = vunpack.c.l.b16 %v764
    %v3598 = vunpack.c.l.b16 %v765
    %v3599 = vunpack.c.l.b16 %v766
    %v3600 = vunpack.c.l.b16 %v767
    %v3601 = vunpack.c.l.b16 %v768
    %v3602 = vunpack.c.l.b16 %v769
    %v3603 = vunpack.c.l.b16 %v770
    %v3604 = vunpack.c.l.b16 %v771
    %v3605 = vunpack.c.l.b16 %v772
    %v3606 = vunpack.c.l.b16 %v773
    %v3607 = vunpack.c.l.b16 %v774
    %v3608 = vunpack.c.l.b16 %v775
    %v3609 = vunpack.c.l.b16 %v776
    %v3610 = vunpack.c.l.b16 %v777
    %v3611 = vunpack.c.l.b16 %v778
    %v3612 = vunpack.c.l.b16 %v779
    %v3613 = vunpack.c.l.b16 %v780
    %v3614 = vunpack.c.l.b16 %v781
    %v3615 = vunpack.c.l.b16 %v782
    %v3616 = vunpack.c.l.b16 %v783
    %v3617 = vunpack.c.l.b16 %v784
    %v3618 = vunpack.c.l.b16 %v785
    %v3619 = vunpack.c.l.b16 %v786
    %v3620 = vunpack.c.l.b16 %v787
    %v3621 = vunpack.c.l.b16 %v788
    %v3622 = vunpack.c.l.b16 %v789
    %v3623 = vunpack.c.l.b16 %v790
    %v3624 = vunpack.c.l.b16 %v791
    %v3625 = vunpack.c.l.b16 %v792
    %v3626 = vunpack.c.l.b16 %v793
    %v3627 = vunpack.c.l.b16 %v794
    %v3628 = vunpack.c.l.b16 %v795
    %v3629 = vunpack.c.l.b16 %v796
    %v3630 = vunpack.c.l.b16 %v797
    %v3631 = vunpack.c.l.b16 %v798
    %v3632 = vunpack.c.l.b16 %v799
    %v3633 = vunpack.c.l.b16 %v800
    %v3634 = vunpack.c.l.b16 %v801
    %v3635 = vunpack.c.l.b16 %v802
    %v3636 = vunpack.c.l.b16 %v803
    %v3637 = vunpack.c.l.b16 %v804
    %v3638 = vunpack.c.l.b16 %v805
    %v3639 = vunpack.c.l.b16 %v806
    %v3640 = vunpack.c.l.b16 %v807
    %v3641 = vunpack.c.l.b16 %v808
    %v3642 = vunpack.c.l.b16 %v809
    %v3643 = vunpack.c.l.b16 %v810
    %v3644 = vunpack.c.l.b16 %v811
    %v3645 = vunpack.c.l.b16 %v812
    %v3646 = vunpack.c.l.b16 %v813
    %v3647 = vunpack.c.l.b16 %v814
    %v3648 = vunpack.c.l.b16 %v815
    %v3649 = vunpack.c.l.b16 %v816
    %v3650 = vunpack.c.l.b16 %v817
    %v3651 = vunpack.c.l.b16 %v818
    %v3652 = vunpack.c.l.b16 %v819
    %v3653 = vunpack.c.l.b16 %v820
    %v3654 = vunpack.c.l.b16 %v821
    %v3655 = vunpack.c.l.b16 %v822
    %v3656 = vunpack.c.l.b16 %v823
    %v3657 = vunpack.c.l.b16 %v824
    %v3658 = vunpack.c.l.b16 %v825
    %v3659 = vunpack.c.l.b16 %v826
    %v3660 = vunpack.c.l.b16 %v827
    %v3661 = vunpack.c.l.b16 %v828
    %v3662 = vunpack.c.l.b16 %v829
    %v3663 = vunpack.c.l.b16 %v830
    %v3664 = vunpack.c.l.b16 %v831
    %v3665 = vunpack.c.l.b16 %v832
    %v3666 = vunpack.c.l.b16 %v833
    %v3667 = vunpack.c.l.b16 %v834
    %v3668 = vunpack.c.l.b16 %v835
    %v3669 = vunpack.c.l.b16 %v836
    %v3670 = vunpack.c.l.b16 %v837
    %v3671 = vunpack.c.l.b16 %v838
    %v3672 = vunpack.c.l.b16 %v839
    %v3673 = vunpack.c.l.b16 %v840
    %v3674 = vunpack.c.l.b16 %v841
    %v3675 = vunpack.c.l.b16 %v842
    %v3676 = vunpack.c.l.b16 %v843
    %v3677 = vunpack.c.l.b16 %v844
    %v3678 = vunpack.c.l.b16 %v845
    %v3679 = vunpack.c.l.b16 %v846
    %v3680 = vunpack.c.l.b16 %v847
    %v3681 = vunpack.c.l.b16 %v848
    %v3682 = vunpack.c.l.b16 %v849
    %v3683 = vunpack.c.l.b16 %v850
    %v3684 = vunpack.c.l.b16 %v851
    %v3685 = vunpack.c.l.b16 %v852
    %v3686 = vunpack.c.l.b16 %v853
    %v3687 = vunpack.c.l.b16 %v854
    %v3688 = vunpack.c.l.b16 %v855
    %v3689 = vunpack.c.l.b16 %v856
    %v3690 = vunpack.c.l.b16 %v857
    %v3691 = vunpack.c.l.b16 %v858
    %v3692 = vunpack.c.l.b16 %v859
    %v3693 = vunpack.c.l.b16 %v860
    %v3694 = vunpack.c.l.b16 %v861
    %v3695 = vunpack.c.l.b16 %v862
    %v3696 = vunpack.c.l.b16 %v863
    %v3697 = vunpack.c.l.b16 %v864
    %v3698 = vunpack.c.l.b16 %v865
    %v3699 = vunpack.c.l.b16 %v866
    %v3700 = vunpack.c.l.b16 %v867
    %v3701 = vunpack.c.l.b16 %v868
    %v3702 = vunpack.c.l.b16 %v869
    %v3703 = vunpack.c.l.b16 %v870
    %v3704 = vunpack.c.l.b16 %v871
    %v3705 = vunpack.c.l.b16 %v872
    %v3706 = vunpack.c.l.b16 %v873
    %v3707 = vunpack.c.l.b16 %v874
    %v3708 = vunpack.c.l.b16 %v875
    %v3709 = vunpack.c.l.b16 %v876
    %v3710 = vunpack.c.l.b16 %v877
    %v3711 = vunpack.c.l.b16 %v878
    %v3712 = vunpack.c.l.b16 %v879
    %v3713 = vunpack.c.l.b16 %v880
    %v3714 = vunpack.c.l.b16 %v881
    %v3715 = vunpack.c.l.b16 %v882
    %v3716 = vunpack.c.l.b16 %v883
    %v3717 = vunpack.c.l.b16 %v884
    %v3718 = vunpack.c.l.b16 %v885
    %v3719 = vunpack.c.l.b16 %v886
    %v3720 = vunpack.c.l.b16 %v887
    %v3721 = vunpack.c.l.b16 %v888
    %v3722 = vunpack.c.l.b16 %v889
    %v3723 = vunpack.c.l.b16 %v890
    %v3724 = vunpack.c.l.b16 %v891
    %v3725 = vunpack.c.l.b16 %v892
    %v3726 = vunpack.c.l.b16 %v893
    %v3727 = vunpack.c.l.b16 %v894
    %v3728 = vunpack.c.l.b16 %v895
    %v3729 = vunpack.c.l.b16 %v896
    %v3730 = vunpack.c.l.b16 %v897
    %v3731 = vunpack.c.l.b16 %v898
    %v3732 = vunpack.c.l.b16 %v899
    %v3733 = vunpack.c.l.b16 %v900
    %v3734 = vunpack.c.l.b16 %v901
    %v3735 = vunpack.c.l.b16 %v902
    %v3736 = vunpack.c.l.b16 %v903
    %v3737 = vunpack.c.l.b16 %v904
    %v3738 = vunpack.c.l.b16 %v905
    %v3739 = vunpack.c.l.b16 %v906
    %v3740 = vunpack.c.l.b16 %v907
    %v3741 = vunpack.c.l.b16 %v908
    %v3742 = vunpack.c.l.b16 %v909
    %v3743 = vunpack.c.l.b16 %v910
    %v3744 = vunpack.c.l.b16 %v911
    %v3745 = vunpack.c.l.b16 %v912
    %v3746 = vunpack.c.l.b16 %v913
    %v3747 = vunpack.c.l.b16 %v914
    %v3748 = vunpack.c.l.b16 %v915
    %v3749 = vunpack.c.l.b16 %v916
    %v3750 = vunpack.c.l.b16 %v917
    %v3751 = vunpack.c.l.b16 %v918
    %v3752 = vunpack.c.l.b16 %v919
    %v3753 = vunpack.c.l.b16 %v920
    %v3754 = vunpack.c.l.b16 %v921
    %v3755 = vunpack.c.l.b16 %v922
    %v3756 = vunpack.c.l.b16 %v923
    %v3757 = vunpack.c.l.b16 %v924
    %v3758 = vunpack.c.l.b16 %v925
    %v3759 = vunpack.c.l.b16 %v926
    %v3760 = vunpack.c.l.b16 %v927
    %v3761 = vunpack.c.l.b16 %v928
    %v3762 = vunpack.c.l.b16 %v929
    %v3763 = vunpack.c.l.b16 %v930
    %v3764 = vunpack.c.l.b16 %v931
    %v3765 = vunpack.c.l.b16 %v932
    %v3766 = vunpack.c.l.b16 %v933
    %v3767 = vunpack.c.l.b16 %v934
    %v3768 = vunpack.c.l.b16 %v935
    %v3769 = vunpack.c.l.b16 %v936
    %v3770 = vunpack.c.l.b16 %v937
    %v3771 = vunpack.c.l.b16 %v938
    %v3772 = vunpack.c.l.b16 %v939
    %v3773 = vunpack.c.l.b16 %v940
    %v3774 = vunpack.c.l.b16 %v941
    %v3775 = vunpack.c.l.b16 %v942
    %v3776 = vunpack.c.l.b16 %v943
    %v3777 = vunpack.c.l.b16 %v944
    %v3778 = vunpack.c.l.b16 %v945
    %v3779 = vunpack.c.l.b16 %v946
    %v3780 = vunpack.c.l.b16 %v947
    %v3781 = vunpack.c.l.b16 %v948
    %v3782 = vunpack.c.l.b16 %v949
    %v3783 = vunpack.c.l.b16 %v950
    %v3784 = vunpack.c.l.b16 %v951
    %v3785 = vunpack.c.l.b16 %v952
    %v3786 = vunpack.c.l.b16 %v953
    %v3787 = vunpack.c.l.b16 %v954
    %v3788 = vunpack.c.l.b16 %v955
    %v3789 = vunpack.c.l.b16 %v956
    %v3790 = vunpack.c.l.b16 %v957
    %v3791 = vunpack.c.l.b16 %v958
    %v3792 = vunpack.c.l.b16 %v959
    %v3793 = vunpack.c.l.b16 %v960
    %v3794 = vunpack.c.l.b16 %v961
    %v3795 = vunpack.c.l.b16 %v962
    %v3796 = vunpack.c.l.b16 %v963
    %v3797 = vunpack.c.l.b16 %v964
    %v3798 = vunpack.c.l.b16 %v965
    %v3799 = vunpack.c.l.b16 %v966
    %v3800 = vunpack.c.l.b16 %v967
    %v3801 = vunpack.c.l.b16 %v968
    %v3802 = vunpack.c.l.b16 %v969
    %v3803 = vunpack.c.l.b16 %v970
    %v3804 = vunpack.c.l.b16 %v971
    %v3805 = vunpack.c.l.b16 %v972
    %v3806 = vunpack.c.l.b16 %v973
    %v3807 = vunpack.c.l.b16 %v974
    %v3808 = vunpack.c.l.b16 %v975
    %v3809 = vunpack.c.l.b16 %v976
    %v3810 = vunpack.c.l.b16 %v977
    %v3811 = vunpack.c.l.b16 %v978
    %v3812 = vunpack.c.l.b16 %v979
    %v3813 = vunpack.c.l.b16 %v980
    %v3814 = vunpack.c.l.b16 %v981
    %v3815 = vunpack.c.l.b16 %v982
    %v3816 = vunpack.c.l.b16 %v983
    %v3817 = vunpack.c.l.b16 %v984
    %v3818 = vunpack.c.l.b16 %v985
    %v3819 = vunpack.c.l.b16 %v986
    %v3820 = vunpack.c.l.b16 %v987
    %v3821 = vunpack.c.l.b16 %v988
    %v3822 = vunpack.c.l.b16 %v989
    %v3823 = vunpack.c.l.b16 %v990
    %v3824 = vunpack.c.l.b16 %v991
    %v3825 = vunpack.c.l.b16 %v992
    %v3826 = vunpack.c.l.b16 %v993
    %v3827 = vunpack.c.l.b16 %v994
    %v3828 = vunpack.c.l.b16 %v995
    %v3829 = vunpack.c.l.b16 %v996
    %v3830 = vunpack.c.l.b16 %v997
    %v3831 = vunpack.c.l.b16 %v998
    %v3832 = vunpack.c.l.b16 %v999
    %v3833 = vunpack.c.l.b16 %v1000
    %v3834 = vunpack.c.l.b16 %v1001
    %v3835 = vunpack.c.l.b16 %v1002
    %v3836 = vunpack.c.l.b16 %v1003
    %v3837 = vunpack.c.l.b16 %v1004
    %v3838 = vunpack.c.l.b16 %v1005
    %v3839 = vunpack.c.l.b16 %v1006
    %v3840 = vunpack.c.l.b16 %v1007
    %v3841 = vunpack.c.l.b16 %v1008
    %v3842 = vunpack.c.l.b16 %v1009
    %v3843 = vunpack.c.l.b16 %v1010
    %v3844 = vunpack.c.l.b16 %v1011
    %v3845 = vunpack.c.l.b16 %v1012
    %v3846 = vunpack.c.l.b16 %v1013
    %v3847 = vunpack.c.l.b16 %v1014
    %v3848 = vunpack.c.l.b16 %v1015
    %v3849 = vunpack.c.l.b16 %v1016
    %v3850 = vunpack.c.l.b16 %v1017
    %v3851 = vunpack.c.l.b16 %v1018
    %v3852 = vunpack.c.l.b16 %v1019
    %v3853 = vunpack.c.l.b16 %v1020
    %v3854 = vunpack.c.l.b16 %v1021
    %v3855 = vunpack.c.l.b16 %v1022
    %v3856 = vunpack.c.l.b16 %v1023
    %v3857 = vunpack.c.l.b16 %v1024
    %v3858 = vunpack.c.l.b16 %v1025
    %v3859 = vunpack.c.l.b16 %v1026
    %v3860 = vunpack.c.l.b16 %v1027
    %v3861 = vunpack.c.l.b16 %v1028
    %v3862 = vunpack.c.l.b16 %v1029
    %v3863 = vunpack.c.l.b16 %v1030
    %v3864 = vunpack.c.l.b16 %v1031
    %v3865 = vunpack.c.l.b16 %v1032
    %v3866 = vunpack.c.l.b16 %v1033
    %v3867 = vunpack.c.l.b16 %v1034
    %v3868 = vunpack.c.l.b16 %v1035
    %v3869 = vunpack.c.l.b16 %v1036
    %v3870 = vunpack.c.l.b16 %v1037
    %v3871 = vunpack.c.l.b16 %v1038
    %v3872 = vunpack.c.l.b16 %v1039
    %v3873 = vunpack.c.l.b16 %v1040
    %v3874 = vunpack.c.l.b16 %v1041
    %v3875 = vunpack.c.l.b16 %v1042
    %v3876 = vunpack.c.l.b16 %v1043
    %v3877 = vunpack.c.l.b16 %v1044
    %v3878 = vunpack.c.l.b16 %v1045
    %v3879 = vunpack.c.l.b16 %v1046
    %v3880 = vunpack.c.l.b16 %v1047
    %v3881 = vunpack.c.l.b16 %v1048
    %v3882 = vunpack.c.l.b16 %v1049
    %v3883 = vunpack.c.l.b16 %v1050
    %v3884 = vunpack.c.l.b16 %v1051
    %v3885 = vunpack.c.l.b16 %v1052
    %v3886 = vunpack.c.l.b16 %v1053
    %v3887 = vunpack.c.l.b16 %v1054
    %v3888 = vunpack.c.l.b16 %v1055
    %v3889 = vunpack.c.l.b16 %v1056
    %v3890 = vunpack.c.l.b16 %v1057
    %v3891 = vunpack.c.l.b16 %v1058
    %v3892 = vunpack.c.l.b16 %v1059
    %v3893 = vunpack.c.l.b16 %v1060
    %v3894 = vunpack.c.l.b16 %v1061
    %v3895 = vunpack.c.l.b16 %v1062
    %v3896 = vunpack.c.l.b16 %v1063
    %v3897 = vunpack.c.l.b16 %v1064
    %v3898 = vunpack.c.l.b16 %v1065
    %v3899 = vunpack.c.l.b16 %v1066
    %v3900 = vunpack.c.l.b16 %v1067
    %v3901 = vunpack.c.l.b16 %v1068
    %v3902 = vunpack.c.l.b16 %v1069
    %v3903 = vunpack.c.l.b16 %v1070
    %v3904 = vunpack.c.l.b16 %v1071
    %v3905 = vunpack.c.l.b16 %v1072
    %v3906 = vunpack.c.l.b16 %v1073
    %v3907 = vunpack.c.l.b16 %v1074
    %v3908 = vunpack.c.l.b16 %v1075
    %v3909 = vunpack.c.l.b16 %v1076
    %v3910 = vunpack.c.l.b16 %v1077
    %v3911 = vunpack.c.l.b16 %v1078
    %v3912 = vunpack.c.l.b16 %v1079
    %v3913 = vunpack.c.l.b16 %v1080
    %v3914 = vunpack.c.l.b16 %v1081
    %v3915 = vunpack.c.l.b16 %v1082
    %v3916 = vunpack.c.l.b16 %v1083
    %v3917 = vunpack.c.l.b16 %v1084
    %v3918 = vunpack.c.l.b16 %v1085
    %v3919 = vunpack.c.l.b16 %v1086
    %v3920 = vunpack.c.l.b16 %v1087
    %v3921 = vunpack.c.l.b16 %v1088
    %v3922 = vunpack.c.l.b16 %v1089
    %v3923 = vunpack.c.l.b16 %v1090
    %v3924 = vunpack.c.l.b16 %v1091
    %v3925 = vunpack.c.l.b16 %v1092
    %v3926 = vunpack.c.l.b16 %v1093
    %v3927 = vunpack.c.l.b16 %v1094
    %v3928 = vunpack.c.l.b16 %v1095
    %v3929 = vunpack.c.l.b16 %v1096
    %v3930 = vunpack.c.l.b16 %v1097
    %v3931 = vunpack.c.l.b16 %v1098
    %v3932 = vunpack.c.l.b16 %v1099
    %v3933 = vunpack.c.l.b16 %v1100
    %v3934 = vunpack.c.l.b16 %v1101
    %v3935 = vunpack.c.l.b16 %v1102
    %v3936 = vunpack.c.l.b16 %v1103
    %v3937 = vunpack.c.l.b16 %v1104
    %v3938 = vunpack.c.l.b16 %v1105
    %v3939 = vunpack.c.l.b16 %v1106
    %v3940 = vunpack.c.l.b16 %v1107
    %v3941 = vunpack.c.l.b16 %v1108
    %v3942 = vunpack.c.l.b16 %v1109
    %v3943 = vunpack.c.l.b16 %v1110
    %v3944 = vunpack.c.l.b16 %v1111
    %v3945 = vunpack.c.l.b16 %v1112
    %v3946 = vunpack.c.l.b16 %v1113
    %v3947 = vunpack.c.l.b16 %v1114
    %v3948 = vunpack.c.l.b16 %v1115
    %v3949 = vunpack.c.l.b16 %v1116
    %v3950 = vunpack.c.l.b16 %v1117
    %v3951 = vunpack.c.l.b16 %v1118
    %v3952 = vunpack.c.l.b16 %v1119
    %v3953 = vunpack.c.l.b16 %v1120
    %v3954 = vunpack.c.l.b16 %v1121
    %v3955 = vunpack.c.l.b16 %v1122
    %v3956 = vunpack.c.l.b16 %v1123
    %v3957 = vunpack.c.l.b16 %v1124
    %v3958 = vunpack.c.l.b16 %v1125
    %v3959 = vunpack.c.l.b16 %v1126
    %v3960 = vunpack.c.l.b16 %v1127
    %v3961 = vunpack.c.l.b16 %v1128
    %v3962 = vunpack.c.l.b16 %v1129
    %v3963 = vunpack.c.l.b16 %v1130
    %v3964 = vunpack.c.l.b16 %v1131
    %v3965 = vunpack.c.l.b16 %v1132
    %v3966 = vunpack.c.l.b16 %v1133
    %v3967 = vunpack.c.l.b16 %v1134
    %v3968 = vunpack.c.l.b16 %v1135
    %v3969 = vunpack.c.l.b16 %v1136
    %v3970 = vunpack.c.l.b16 %v1137
    %v3971 = vunpack.c.l.b16 %v1138
    %v3972 = vunpack.c.l.b16 %v1139
    %v3973 = vunpack.c.l.b16 %v1140
    %v3974 = vunpack.c.l.b16 %v1141
    %v3975 = vunpack.c.l.b16 %v1142
    %v3976 = vunpack.c.l.b16 %v1143
    %v3977 = vunpack.c.l.b16 %v1144
    %v3978 = vunpack.c.l.b16 %v1145
    %v3979 = vunpack.c.l.b16 %v1146
    %v3980 = vunpack.c.l.b16 %v1147
    %v3981 = vunpack.c.l.b16 %v1148
    %v3982 = vunpack.c.l.b16 %v1149
    %v3983 = vunpack.c.l.b16 %v1150
    %v3984 = vunpack.c.l.b16 %v1151
    %v3985 = vunpack.c.l.b16 %v1152
    %v3986 = vunpack.c.l.b16 %v1153
    %v3987 = vunpack.c.l.b16 %v1154
    %v3988 = vunpack.c.l.b16 %v1155
    %v3989 = vunpack.c.l.b16 %v1156
    %v3990 = vunpack.c.l.b16 %v1157
    %v3991 = vunpack.c.l.b16 %v1158
    %v3992 = vunpack.c.l.b16 %v1159
    %v3993 = vunpack.c.l.b16 %v1160
    %v3994 = vunpack.c.l.b16 %v1161
    %v3995 = vunpack.c.l.b16 %v1162
    %v3996 = vunpack.c.l.b16 %v1163
    %v3997 = vunpack.c.l.b16 %v1164
    %v3998 = vunpack.c.l.b16 %v1165
    %v3999 = vunpack.c.l.b16 %v1166
    %v4000 = vunpack.c.l.b16 %v1167
    %v4001 = vunpack.c.l.b16 %v1168
    %v4002 = vunpack.c.l.b16 %v1169
    %v4003 = vunpack.c.l.b16 %v1170
    %v4004 = vunpack.c.l.b16 %v1171
    %v4005 = vunpack.c.l.b16 %v1172
    %v4006 = vunpack.c.l.b16 %v1173
    %v4007 = vunpack.c.l.b16 %v1174
    %v4008 = vunpack.c.l.b16 %v1175
    %v4009 = vunpack.c.l.b16 %v1176
    %v4010 = vunpack.c.l.b16 %v1177
    %v4011 = vunpack.c.l.b16 %v1178
    %v4012 = vunpack.c.l.b16 %v1179
    %v4013 = vunpack.c.l.b16 %v1180
    %v4014 = vunpack.c.l.b16 %v1181
    %v4015 = vunpack.c.l.b16 %v1182
    %v4016 = vunpack.c.l.b16 %v1183
    %v4017 = vunpack.c.l.b16 %v1184
    %v4018 = vunpack.c.l.b16 %v1185
    %v4019 = vunpack.c.l.b16 %v1186
    %v4020 = vunpack.c.l.b16 %v1187
    %v4021 = vunpack.c.l.b16 %v1188
    %v4022 = vunpack.c.l.b16 %v1189
    %v4023 = vunpack.c.l.b16 %v1190
    %v4024 = vunpack.c.l.b16 %v1191
    %v4025 = vunpack.c.l.b16 %v1192
    %v4026 = vunpack.c.l.b16 %v1193
    %v4027 = vunpack.c.l.b16 %v1194
    %v4028 = vunpack.c.l.b16 %v1195
    %v4029 = vunpack.c.l.b16 %v1196
    %v4030 = vunpack.c.l.b16 %v1197
    %v4031 = vunpack.c.l.b16 %v1198
    %v4032 = vunpack.c.l.b16 %v1199
    %v4033 = vunpack.c.l.b16 %v1200
    %v4034 = vunpack.c.l.b16 %v1201
    %v4035 = vunpack.c.l.b16 %v1202
    %v4036 = vunpack.c.l.b16 %v1203
    %v4037 = vunpack.c.l.b16 %v1204
    %v4038 = vunpack.c.l.b16 %v1205
    %v4039 = vunpack.c.l.b16 %v1206
    %v4040 = vunpack.c.l.b16 %v1207
    %v4041 = vunpack.c.l.b16 %v1208
    %v4042 = vunpack.c.l.b16 %v1209
    %v4043 = vunpack.c.l.b16 %v1210
    %v4044 = vunpack.c.l.b16 %v1211
    %v4045 = vunpack.c.l.b16 %v1212
    %v4046 = vunpack.c.l.b16 %v1213
    %v4047 = vunpack.c.l.b16 %v1214
    %v4048 = vunpack.c.l.b16 %v1215
    %v4049 = vunpack.c.l.b16 %v1216
    %v4050 = vunpack.c.l.b16 %v1217
    %v4051 = vunpack.c.l.b16 %v1218
    %v4052 = vunpack.c.l.b16 %v1219
    %v4053 = vpack.c.b16 %v2902, %v2901
    %v4054 = vpack.c.b16 %v2904, %v2903
    %v4055 = vpack.c.b16 %v2906, %v2905
    %v4056 = vpack.c.b16 %v2908, %v2907
    %v4057 = vpack.c.b16 %v2910, %v2909
    %v4058 = vpack.c.b16 %v2912, %v2911
    %v4059 = vpack.c.b16 %v2914, %v2913
    %v4060 = vpack.c.b16 %v2916, %v2915
    %v4061 = vpack.c.b16 %v2918, %v2917
    %v4062 = vpack.c.b16 %v2920, %v2919
    %v4063 = vpack.c.b16 %v2922, %v2921
    %v4064 = vpack.c.b16 %v2924, %v2923
    %v4065 = vpack.c.b16 %v2926, %v2925
    %v4066 = vpack.c.b16 %v2928, %v2927
    %v4067 = vpack.c.b16 %v2930, %v2929
    %v4068 = vpack.c.b16 %v2932, %v2931
    %v4069 = vpack.c.b16 %v2934, %v2933
    %v4070 = vpack.c.b16 %v2936, %v2935
    %v4071 = vpack.c.b16 %v2938, %v2937
    %v4072 = vpack.c.b16 %v2940, %v2939
    %v4073 = vpack.c.b16 %v2942, %v2941
    %v4074 = vpack.c.b16 %v2944, %v2943
    %v4075 = vpack.c.b16 %v2946, %v2945
    %v4076 = vpack.c.b16 %v2948, %v2947
    %v4077 = vpack.c.b16 %v2950, %v2949
    %v4078 = vpack.c.b16 %v2952, %v2951
    %v4079 = vpack.c.b16 %v2954, %v2953
    %v4080 = vpack.c.b16 %v2956, %v2955
    %v4081 = vpack.c.b16 %v2958, %v2957
    %v4082 = vpack.c.b16 %v2960, %v2959
    %v4083 = vpack.c.b16 %v2962, %v2961
    %v4084 = vpack.c.b16 %v2964, %v2963
    %v4085 = vpack.c.b16 %v2966, %v2965
    %v4086 = vpack.c.b16 %v2968, %v2967
    %v4087 = vpack.c.b16 %v2970, %v2969
    %v4088 = vpack.c.b16 %v2972, %v2971
    %v4089 = vpack.c.b16 %v2974, %v2973
    %v4090 = vpack.c.b16 %v2976, %v2975
    %v4091 = vpack.c.b16 %v2978, %v2977
    %v4092 = vpack.c.b16 %v2980, %v2979
    %v4093 = vpack.c.b16 %v2982, %v2981
    %v4094 = vpack.c.b16 %v2984, %v2983
    %v4095 = vpack.c.b16 %v2986, %v2985
    %v4096 = vpack.c.b16 %v2988, %v2987
    %v4097 = vpack.c.b16 %v2990, %v2989
    %v4098 = vpack.c.b16 %v2992, %v2991
    %v4099 = vpack.c.b16 %v2994, %v2993
    %v4100 = vpack.c.b16 %v2996, %v2995
    %v4101 = vpack.c.b16 %v2998, %v2997
    %v4102 = vpack.c.b16 %v3000, %v2999
    %v4103 = vpack.c.b16 %v3002, %v3001
    %v4104 = vpack.c.b16 %v3004, %v3003
    %v4105 = vpack.c.b16 %v3006, %v3005
    %v4106 = vpack.c.b16 %v3008, %v3007
    %v4107 = vpack.c.b16 %v3010, %v3009
    %v4108 = vpack.c.b16 %v3012, %v3011
    %v4109 = vpack.c.b16 %v3014, %v3013
    %v4110 = vpack.c.b16 %v3016, %v3015
    %v4111 = vpack.c.b16 %v3018, %v3017
    %v4112 = vpack.c.b16 %v3020, %v3019
    %v4113 = vpack.c.b16 %v3022, %v3021
    %v4114 = vpack.c.b16 %v3024, %v3023
    %v4115 = vpack.c.b16 %v3026, %v3025
    %v4116 = vpack.c.b16 %v3028, %v3027
    %v4117 = vpack.c.b16 %v3030, %v3029
    %v4118 = vpack.c.b16 %v3032, %v3031
    %v4119 = vpack.c.b16 %v3034, %v3033
    %v4120 = vpack.c.b16 %v3036, %v3035
    %v4121 = vpack.c.b16 %v3038, %v3037
    %v4122 = vpack.c.b16 %v3040, %v3039
    %v4123 = vpack.c.b16 %v3042, %v3041
    %v4124 = vpack.c.b16 %v3044, %v3043
    %v4125 = vpack.c.b16 %v3046, %v3045
    %v4126 = vpack.c.b16 %v3048, %v3047
    %v4127 = vpack.c.b16 %v3050, %v3049
    %v4128 = vpack.c.b16 %v3052, %v3051
    %v4129 = vpack.c.b16 %v3054, %v3053
    %v4130 = vpack.c.b16 %v3056, %v3055
    %v4131 = vpack.c.b16 %v3058, %v3057
    %v4132 = vpack.c.b16 %v3060, %v3059
    %v4133 = vpack.c.b16 %v3062, %v3061
    %v4134 = vpack.c.b16 %v3064, %v3063
    %v4135 = vpack.c.b16 %v3066, %v3065
    %v4136 = vpack.c.b16 %v3068, %v3067
    %v4137 = vpack.c.b16 %v3070, %v3069
    %v4138 = vpack.c.b16 %v3072, %v3071
    %v4139 = vpack.c.b16 %v3074, %v3073
    %v4140 = vpack.c.b16 %v3076, %v3075
    %v4141 = vpack.c.b16 %v3078, %v3077
    %v4142 = vpack.c.b16 %v3080, %v3079
    %v4143 = vpack.c.b16 %v3082, %v3081
    %v4144 = vpack.c.b16 %v3084, %v3083
    %v4145 = vpack.c.b16 %v3086, %v3085
    %v4146 = vpack.c.b16 %v3088, %v3087
    %v4147 = vpack.c.b16 %v3090, %v3089
    %v4148 = vpack.c.b16 %v3092, %v3091
    %v4149 = vpack.c.b16 %v3094, %v3093
    %v4150 = vpack.c.b16 %v3096, %v3095
    %v4151 = vpack.c.b16 %v3098, %v3097
    %v4152 = vpack.c.b16 %v3100, %v3099
    %v4153 = vpack.c.b16 %v3102, %v3101
    %v4154 = vpack.c.b16 %v3104, %v3103
    %v4155 = vpack.c.b16 %v3106, %v3105
    %v4156 = vpack.c.b16 %v3108, %v3107
    %v4157 = vpack.c.b16 %v3110, %v3109
    %v4158 = vpack.c.b16 %v3112, %v3111
    %v4159 = vpack.c.b16 %v3114, %v3113
    %v4160 = vpack.c.b16 %v3116, %v3115
    %v4161 = vpack.c.b16 %v3118, %v3117
    %v4162 = vpack.c.b16 %v3120, %v3119
    %v4163 = vpack.c.b16 %v3122, %v3121
    %v4164 = vpack.c.b16 %v3124, %v3123
    %v4165 = vpack.c.b16 %v3126, %v3125
    %v4166 = vpack.c.b16 %v3128, %v3127
    %v4167 = vpack.c.b16 %v3130, %v3129
    %v4168 = vpack.c.b16 %v3132, %v3131
    %v4169 = vpack.c.b16 %v3134, %v3133
    %v4170 = vpack.c.b16 %v3136, %v3135
    %v4171 = vpack.c.b16 %v3138, %v3137
    %v4172 = vpack.c.b16 %v3140, %v3139
    %v4173 = vpack.c.b16 %v3142, %v3141
    %v4174 = vpack.c.b16 %v3144, %v3143
    %v4175 = vpack.c.b16 %v3146, %v3145
    %v4176 = vpack.c.b16 %v3148, %v3147
    %v4177 = vpack.c.b16 %v3150, %v3149
    %v4178 = vpack.c.b16 %v3152, %v3151
    %v4179 = vpack.c.b16 %v3154, %v3153
    %v4180 = vpack.c.b16 %v3156, %v3155
    %v4181 = vpack.c.b16 %v3158, %v3157
    %v4182 = vpack.c.b16 %v3160, %v3159
    %v4183 = vpack.c.b16 %v3162, %v3161
    %v4184 = vpack.c.b16 %v3164, %v3163
    %v4185 = vpack.c.b16 %v3166, %v3165
    %v4186 = vpack.c.b16 %v3168, %v3167
    %v4187 = vpack.c.b16 %v3170, %v3169
    %v4188 = vpack.c.b16 %v3172, %v3171
    %v4189 = vpack.c.b16 %v3174, %v3173
    %v4190 = vpack.c.b16 %v3176, %v3175
    %v4191 = vpack.c.b16 %v3178, %v3177
    %v4192 = vpack.c.b16 %v3180, %v3179
    %v4193 = vpack.c.b16 %v3182, %v3181
    %v4194 = vpack.c.b16 %v3184, %v3183
    %v4195 = vpack.c.b16 %v3186, %v3185
    %v4196 = vpack.c.b16 %v3188, %v3187
    %v4197 = vpack.c.b16 %v3190, %v3189
    %v4198 = vpack.c.b16 %v3192, %v3191
    %v4199 = vpack.c.b16 %v3194, %v3193
    %v4200 = vpack.c.b16 %v3196, %v3195
    %v4201 = vpack.c.b16 %v3198, %v3197
    %v4202 = vpack.c.b16 %v3200, %v3199
    %v4203 = vpack.c.b16 %v3202, %v3201
    %v4204 = vpack.c.b16 %v3204, %v3203
    %v4205 = vpack.c.b16 %v3206, %v3205
    %v4206 = vpack.c.b16 %v3208, %v3207
    %v4207 = vpack.c.b16 %v3210, %v3209
    %v4208 = vpack.c.b16 %v3212, %v3211
    %v4209 = vpack.c.b16 %v3214, %v3213
    %v4210 = vpack.c.b16 %v3216, %v3215
    %v4211 = vpack.c.b16 %v3218, %v3217
    %v4212 = vpack.c.b16 %v3220, %v3219
    %v4213 = vpack.c.b16 %v3222, %v3221
    %v4214 = vpack.c.b16 %v3224, %v3223
    %v4215 = vpack.c.b16 %v3226, %v3225
    %v4216 = vpack.c.b16 %v3228, %v3227
    %v4217 = vpack.c.b16 %v3230, %v3229
    %v4218 = vpack.c.b16 %v3232, %v3231
    %v4219 = vpack.c.b16 %v3234, %v3233
    %v4220 = vpack.c.b16 %v3236, %v3235
    %v4221 = vpack.c.b16 %v3238, %v3237
    %v4222 = vpack.c.b16 %v3240, %v3239
    %v4223 = vpack.c.b16 %v3242, %v3241
    %v4224 = vpack.c.b16 %v3244, %v3243
    %v4225 = vpack.c.b16 %v3246, %v3245
    %v4226 = vpack.c.b16 %v3248, %v3247
    %v4227 = vpack.c.b16 %v3250, %v3249
    %v4228 = vpack.c.b16 %v3252, %v3251
    %v4229 = vpack.c.b16 %v3254, %v3253
    %v4230 = vpack.c.b16 %v3256, %v3255
    %v4231 = vpack.c.b16 %v3258, %v3257
    %v4232 = vpack.c.b16 %v3260, %v3259
    %v4233 = vpack.c.b16 %v3262, %v3261
    %v4234 = vpack.c.b16 %v3264, %v3263
    %v4235 = vpack.c.b16 %v3266, %v3265
    %v4236 = vpack.c.b16 %v3268, %v3267
    %v4237 = vpack.c.b16 %v3270, %v3269
    %v4238 = vpack.c.b16 %v3272, %v3271
    %v4239 = vpack.c.b16 %v3274, %v3273
    %v4240 = vpack.c.b16 %v3276, %v3275
    %v4241 = vpack.c.b16 %v3278, %v3277
    %v4242 = vpack.c.b16 %v3280, %v3279
    %v4243 = vpack.c.b16 %v3282, %v3281
    %v4244 = vpack.c.b16 %v3284, %v3283
    %v4245 = vpack.c.b16 %v3286, %v3285
    %v4246 = vpack.c.b16 %v3288, %v3287
    %v4247 = vpack.c.b16 %v3290, %v3289
    %v4248 = vpack.c.b16 %v3292, %v3291
    %v4249 = vpack.c.b16 %v3294, %v3293
    %v4250 = vpack.c.b16 %v3296, %v3295
    %v4251 = vpack.c.b16 %v3298, %v3297
    %v4252 = vpack.c.b16 %v3300, %v3299
    %v4253 = vpack.c.b16 %v3302, %v3301
    %v4254 = vpack.c.b16 %v3304, %v3303
    %v4255 = vpack.c.b16 %v3306, %v3305
    %v4256 = vpack.c.b16 %v3308, %v3307
    %v4257 = vpack.c.b16 %v3310, %v3309
    %v4258 = vpack.c.b16 %v3312, %v3311
    %v4259 = vpack.c.b16 %v3314, %v3313
    %v4260 = vpack.c.b16 %v3316, %v3315
    %v4261 = vpack.c.b16 %v3318, %v3317
    %v4262 = vpack.c.b16 %v3320, %v3319
    %v4263 = vpack.c.b16 %v3322, %v3321
    %v4264 = vpack.c.b16 %v3324, %v3323
    %v4265 = vpack.c.b16 %v3326, %v3325
    %v4266 = vpack.c.b16 %v3328, %v3327
    %v4267 = vpack.c.b16 %v3330, %v3329
    %v4268 = vpack.c.b16 %v3332, %v3331
    %v4269 = vpack.c.b16 %v3334, %v3333
    %v4270 = vpack.c.b16 %v3336, %v3335
    %v4271 = vpack.c.b16 %v3338, %v3337
    %v4272 = vpack.c.b16 %v3340, %v3339
    %v4273 = vpack.c.b16 %v3342, %v3341
    %v4274 = vpack.c.b16 %v3344, %v3343
    %v4275 = vpack.c.b16 %v3346, %v3345
    %v4276 = vpack.c.b16 %v3348, %v3347
    %v4277 = vpack.c.b16 %v3350, %v3349
    %v4278 = vpack.c.b16 %v3352, %v3351
    %v4279 = vpack.c.b16 %v3354, %v3353
    %v4280 = vpack.c.b16 %v3356, %v3355
    %v4281 = vpack.c.b16 %v3358, %v3357
    %v4282 = vpack.c.b16 %v3360, %v3359
    %v4283 = vpack.c.b16 %v3362, %v3361
    %v4284 = vpack.c.b16 %v3364, %v3363
    %v4285 = vpack.c.b16 %v3366, %v3365
    %v4286 = vpack.c.b16 %v3368, %v3367
    %v4287 = vpack.c.b16 %v3370, %v3369
    %v4288 = vpack.c.b16 %v3372, %v3371
    %v4289 = vpack.c.b16 %v3374, %v3373
    %v4290 = vpack.c.b16 %v3376, %v3375
    %v4291 = vpack.c.b16 %v3378, %v3377
    %v4292 = vpack.c.b16 %v3380, %v3379
    %v4293 = vpack.c.b16 %v3382, %v3381
    %v4294 = vpack.c.b16 %v3384, %v3383
    %v4295 = vpack.c.b16 %v3386, %v3385
    %v4296 = vpack.c.b16 %v3388, %v3387
    %v4297 = vpack.c.b16 %v3390, %v3389
    %v4298 = vpack.c.b16 %v3392, %v3391
    %v4299 = vpack.c.b16 %v3394, %v3393
    %v4300 = vpack.c.b16 %v3396, %v3395
    %v4301 = vpack.c.b16 %v3398, %v3397
    %v4302 = vpack.c.b16 %v3400, %v3399
    %v4303 = vpack.c.b16 %v3402, %v3401
    %v4304 = vpack.c.b16 %v3404, %v3403
    %v4305 = vpack.c.b16 %v3406, %v3405
    %v4306 = vpack.c.b16 %v3408, %v3407
    %v4307 = vpack.c.b16 %v3410, %v3409
    %v4308 = vpack.c.b16 %v3412, %v3411
    %v4309 = vpack.c.b16 %v3414, %v3413
    %v4310 = vpack.c.b16 %v3416, %v3415
    %v4311 = vpack.c.b16 %v3418, %v3417
    %v4312 = vpack.c.b16 %v3420, %v3419
    %v4313 = vpack.c.b16 %v3422, %v3421
    %v4314 = vpack.c.b16 %v3424, %v3423
    %v4315 = vpack.c.b16 %v3426, %v3425
    %v4316 = vpack.c.b16 %v3428, %v3427
    %v4317 = vpack.c.b16 %v3430, %v3429
    %v4318 = vpack.c.b16 %v3432, %v3431
    %v4319 = vpack.c.b16 %v3434, %v3433
    %v4320 = vpack.c.b16 %v3436, %v3435
    %v4321 = vpack.c.b16 %v3438, %v3437
    %v4322 = vpack.c.b16 %v3440, %v3439
    %v4323 = vpack.c.b16 %v3442, %v3441
    %v4324 = vpack.c.b16 %v3444, %v3443
    %v4325 = vpack.c.b16 %v3446, %v3445
    %v4326 = vpack.c.b16 %v3448, %v3447
    %v4327 = vpack.c.b16 %v3450, %v3449
    %v4328 = vpack.c.b16 %v3452, %v3451
    %v4329 = vpack.c.b16 %v3454, %v3453
    %v4330 = vpack.c.b16 %v3456, %v3455
    %v4331 = vpack.c.b16 %v3458, %v3457
    %v4332 = vpack.c.b16 %v3460, %v3459
    %v4333 = vpack.c.b16 %v3462, %v3461
    %v4334 = vpack.c.b16 %v3464, %v3463
    %v4335 = vpack.c.b16 %v3466, %v3465
    %v4336 = vpack.c.b16 %v3468, %v3467
    %v4337 = vpack.c.b16 %v3470, %v3469
    %v4338 = vpack.c.b16 %v3472, %v3471
    %v4339 = vpack.c.b16 %v3474, %v3473
    %v4340 = vpack.c.b16 %v3476, %v3475
    %v4341 = vpack.c.b16 %v3478, %v3477
    %v4342 = vpack.c.b16 %v3480, %v3479
    %v4343 = vpack.c.b16 %v3482, %v3481
    %v4344 = vpack.c.b16 %v3484, %v3483
    %v4345 = vpack.c.b16 %v3486, %v3485
    %v4346 = vpack.c.b16 %v3488, %v3487
    %v4347 = vpack.c.b16 %v3490, %v3489
    %v4348 = vpack.c.b16 %v3492, %v3491
    %v4349 = vpack.c.b16 %v3494, %v3493
    %v4350 = vpack.c.b16 %v3496, %v3495
    %v4351 = vpack.c.b16 %v3498, %v3497
    %v4352 = vpack.c.b16 %v3500, %v3499
    %v4353 = vpack.c.b16 %v3502, %v3501
    %v4354 = vpack.c.b16 %v3504, %v3503
    %v4355 = vpack.c.b16 %v3506, %v3505
    %v4356 = vpack.c.b16 %v3508, %v3507
    %v4357 = vpack.c.b16 %v3510, %v3509
    %v4358 = vpack.c.b16 %v3512, %v3511
    %v4359 = vpack.c.b16 %v3514, %v3513
    %v4360 = vpack.c.b16 %v3516, %v3515
    %v4361 = vpack.c.b16 %v3518, %v3517
    %v4362 = vpack.c.b16 %v3520, %v3519
    %v4363 = vpack.c.b16 %v3522, %v3521
    %v4364 = vpack.c.b16 %v3524, %v3523
    %v4365 = vpack.c.b16 %v3526, %v3525
    %v4366 = vpack.c.b16 %v3528, %v3527
    %v4367 = vpack.c.b16 %v3530, %v3529
    %v4368 = vpack.c.b16 %v3532, %v3531
    %v4369 = vpack.c.b16 %v3534, %v3533
    %v4370 = vpack.c.b16 %v3536, %v3535
    %v4371 = vpack.c.b16 %v3538, %v3537
    %v4372 = vpack.c.b16 %v3540, %v3539
    %v4373 = vpack.c.b16 %v3542, %v3541
    %v4374 = vpack.c.b16 %v3544, %v3543
    %v4375 = vpack.c.b16 %v3546, %v3545
    %v4376 = vpack.c.b16 %v3548, %v3547
    %v4377 = vpack.c.b16 %v3550, %v3549
    %v4378 = vpack.c.b16 %v3552, %v3551
    %v4379 = vpack.c.b16 %v3554, %v3553
    %v4380 = vpack.c.b16 %v3556, %v3555
    %v4381 = vpack.c.b16 %v3558, %v3557
    %v4382 = vpack.c.b16 %v3560, %v3559
    %v4383 = vpack.c.b16 %v3562, %v3561
    %v4384 = vpack.c.b16 %v3564, %v3563
    %v4385 = vpack.c.b16 %v3566, %v3565
    %v4386 = vpack.c.b16 %v3568, %v3567
    %v4387 = vpack.c.b16 %v3570, %v3569
    %v4388 = vpack.c.b16 %v3572, %v3571
    %v4389 = vpack.c.b16 %v3574, %v3573
    %v4390 = vpack.c.b16 %v3576, %v3575
    %v4391 = vpack.c.b16 %v3578, %v3577
    %v4392 = vpack.c.b16 %v3580, %v3579
    %v4393 = vpack.c.b16 %v3582, %v3581
    %v4394 = vpack.c.b16 %v3584, %v3583
    %v4395 = vpack.c.b16 %v3586, %v3585
    %v4396 = vpack.c.b16 %v3588, %v3587
    %v4397 = vpack.c.b16 %v3590, %v3589
    %v4398 = vpack.c.b16 %v3592, %v3591
    %v4399 = vpack.c.b16 %v3594, %v3593
    %v4400 = vpack.c.b16 %v3596, %v3595
    %v4401 = vpack.c.b16 %v3598, %v3597
    %v4402 = vpack.c.b16 %v3600, %v3599
    %v4403 = vpack.c.b16 %v3602, %v3601
    %v4404 = vpack.c.b16 %v3604, %v3603
    %v4405 = vpack.c.b16 %v3606, %v3605
    %v4406 = vpack.c.b16 %v3608, %v3607
    %v4407 = vpack.c.b16 %v3610, %v3609
    %v4408 = vpack.c.b16 %v3612, %v3611
    %v4409 = vpack.c.b16 %v3614, %v3613
    %v4410 = vpack.c.b16 %v3616, %v3615
    %v4411 = vpack.c.b16 %v3618, %v3617
    %v4412 = vpack.c.b16 %v3620, %v3619
    %v4413 = vpack.c.b16 %v3622, %v3621
    %v4414 = vpack.c.b16 %v3624, %v3623
    %v4415 = vpack.c.b16 %v3626, %v3625
    %v4416 = vpack.c.b16 %v3628, %v3627
    %v4417 = vpack.c.b16 %v3630, %v3629
    %v4418 = vpack.c.b16 %v3632, %v3631
    %v4419 = vpack.c.b16 %v3634, %v3633
    %v4420 = vpack.c.b16 %v3636, %v3635
    %v4421 = vpack.c.b16 %v3638, %v3637
    %v4422 = vpack.c.b16 %v3640, %v3639
    %v4423 = vpack.c.b16 %v3642, %v3641
    %v4424 = vpack.c.b16 %v3644, %v3643
    %v4425 = vpack.c.b16 %v3646, %v3645
    %v4426 = vpack.c.b16 %v3648, %v3647
    %v4427 = vpack.c.b16 %v3650, %v3649
    %v4428 = vpack.c.b16 %v3652, %v3651
    %v4429 = vpack.c.b16 %v3654, %v3653
    %v4430 = vpack.c.b16 %v3656, %v3655
    %v4431 = vpack.c.b16 %v3658, %v3657
    %v4432 = vpack.c.b16 %v3660, %v3659
    %v4433 = vpack.c.b16 %v3662, %v3661
    %v4434 = vpack.c.b16 %v3664, %v3663
    %v4435 = vpack.c.b16 %v3666, %v3665
    %v4436 = vpack.c.b16 %v3668, %v3667
    %v4437 = vpack.c.b16 %v3670, %v3669
    %v4438 = vpack.c.b16 %v3672, %v3671
    %v4439 = vpack.c.b16 %v3674, %v3673
    %v4440 = vpack.c.b16 %v3676, %v3675
    %v4441 = vpack.c.b16 %v3678, %v3677
    %v4442 = vpack.c.b16 %v3680, %v3679
    %v4443 = vpack.c.b16 %v3682, %v3681
    %v4444 = vpack.c.b16 %v3684, %v3683
    %v4445 = vpack.c.b16 %v3686, %v3685
    %v4446 = vpack.c.b16 %v3688, %v3687
    %v4447 = vpack.c.b16 %v3690, %v3689
    %v4448 = vpack.c.b16 %v3692, %v3691
    %v4449 = vpack.c.b16 %v3694, %v3693
    %v4450 = vpack.c.b16 %v3696, %v3695
    %v4451 = vpack.c.b16 %v3698, %v3697
    %v4452 = vpack.c.b16 %v3700, %v3699
    %v4453 = vpack.c.b16 %v3702, %v3701
    %v4454 = vpack.c.b16 %v3704, %v3703
    %v4455 = vpack.c.b16 %v3706, %v3705
    %v4456 = vpack.c.b16 %v3708, %v3707
    %v4457 = vpack.c.b16 %v3710, %v3709
    %v4458 = vpack.c.b16 %v3712, %v3711
    %v4459 = vpack.c.b16 %v3714, %v3713
    %v4460 = vpack.c.b16 %v3716, %v3715
    %v4461 = vpack.c.b16 %v3718, %v3717
    %v4462 = vpack.c.b16 %v3720, %v3719
    %v4463 = vpack.c.b16 %v3722, %v3721
    %v4464 = vpack.c.b16 %v3724, %v3723
    %v4465 = vpack.c.b16 %v3726, %v3725
    %v4466 = vpack.c.b16 %v3728, %v3727
    %v4467 = vpack.c.b16 %v3730, %v3729
    %v4468 = vpack.c.b16 %v3732, %v3731
    %v4469 = vpack.c.b16 %v3734, %v3733
    %v4470 = vpack.c.b16 %v3736, %v3735
    %v4471 = vpack.c.b16 %v3738, %v3737
    %v4472 = vpack.c.b16 %v3740, %v3739
    %v4473 = vpack.c.b16 %v3742, %v3741
    %v4474 = vpack.c.b16 %v3744, %v3743
    %v4475 = vpack.c.b16 %v3746, %v3745
    %v4476 = vpack.c.b16 %v3748, %v3747
    %v4477 = vpack.c.b16 %v3750, %v3749
    %v4478 = vpack.c.b16 %v3752, %v3751
    %v4479 = vpack.c.b16 %v3754, %v3753
    %v4480 = vpack.c.b16 %v3756, %v3755
    %v4481 = vpack.c.b16 %v3758, %v3757
    %v4482 = vpack.c.b16 %v3760, %v3759
    %v4483 = vpack.c.b16 %v3762, %v3761
    %v4484 = vpack.c.b16 %v3764, %v3763
    %v4485 = vpack.c.b16 %v3766, %v3765
    %v4486 = vpack.c.b16 %v3768, %v3767
    %v4487 = vpack.c.b16 %v3770, %v3769
    %v4488 = vpack.c.b16 %v3772, %v3771
    %v4489 = vpack.c.b16 %v3774, %v3773
    %v4490 = vpack.c.b16 %v3776, %v3775
    %v4491 = vpack.c.b16 %v3778, %v3777
    %v4492 = vpack.c.b16 %v3780, %v3779
    %v4493 = vpack.c.b16 %v3782, %v3781
    %v4494 = vpack.c.b16 %v3784, %v3783
    %v4495 = vpack.c.b16 %v3786, %v3785
    %v4496 = vpack.c.b16 %v3788, %v3787
    %v4497 = vpack.c.b16 %v3790, %v3789
    %v4498 = vpack.c.b16 %v3792, %v3791
    %v4499 = vpack.c.b16 %v3794, %v3793
    %v4500 = vpack.c.b16 %v3796, %v3795
    %v4501 = vpack.c.b16 %v3798, %v3797
    %v4502 = vpack.c.b16 %v3800, %v3799
    %v4503 = vpack.c.b16 %v3802, %v3801
    %v4504 = vpack.c.b16 %v3804, %v3803
    %v4505 = vpack.c.b16 %v3806, %v3805
    %v4506 = vpack.c.b16 %v3808, %v3807
    %v4507 = vpack.c.b16 %v3810, %v3809
    %v4508 = vpack.c.b16 %v3812, %v3811
    %v4509 = vpack.c.b16 %v3814, %v3813
    %v4510 = vpack.c.b16 %v3816, %v3815
    %v4511 = vpack.c.b16 %v3818, %v3817
    %v4512 = vpack.c.b16 %v3820, %v3819
    %v4513 = vpack.c.b16 %v3822, %v3821
    %v4514 = vpack.c.b16 %v3824, %v3823
    %v4515 = vpack.c.b16 %v3826, %v3825
    %v4516 = vpack.c.b16 %v3828, %v3827
    %v4517 = vpack.c.b16 %v3830, %v3829
    %v4518 = vpack.c.b16 %v3832, %v3831
    %v4519 = vpack.c.b16 %v3834, %v3833
    %v4520 = vpack.c.b16 %v3836, %v3835
    %v4521 = vpack.c.b16 %v3838, %v3837
    %v4522 = vpack.c.b16 %v3840, %v3839
    %v4523 = vpack.c.b16 %v3842, %v3841
    %v4524 = vpack.c.b16 %v3844, %v3843
    %v4525 = vpack.c.b16 %v3846, %v3845
    %v4526 = vpack.c.b16 %v3848, %v3847
    %v4527 = vpack.c.b16 %v3850, %v3849
    %v4528 = vpack.c.b16 %v3852, %v3851
    %v4529 = vpack.c.b16 %v3854, %v3853
    %v4530 = vpack.c.b16 %v3856, %v3855
    %v4531 = vpack.c.b16 %v3858, %v3857
    %v4532 = vpack.c.b16 %v3860, %v3859
    %v4533 = vpack.c.b16 %v3862, %v3861
    %v4534 = vpack.c.b16 %v3864, %v3863
    %v4535 = vpack.c.b16 %v3866, %v3865
    %v4536 = vpack.c.b16 %v3868, %v3867
    %v4537 = vpack.c.b16 %v3870, %v3869
    %v4538 = vpack.c.b16 %v3872, %v3871
    %v4539 = vpack.c.b16 %v3874, %v3873
    %v4540 = vpack.c.b16 %v3876, %v3875
    %v4541 = vpack.c.b16 %v3878, %v3877
    %v4542 = vpack.c.b16 %v3880, %v3879
    %v4543 = vpack.c.b16 %v3882, %v3881
    %v4544 = vpack.c.b16 %v3884, %v3883
    %v4545 = vpack.c.b16 %v3886, %v3885
    %v4546 = vpack.c.b16 %v3888, %v3887
    %v4547 = vpack.c.b16 %v3890, %v3889
    %v4548 = vpack.c.b16 %v3892, %v3891
    %v4549 = vpack.c.b16 %v3894, %v3893
    %v4550 = vpack.c.b16 %v3896, %v3895
    %v4551 = vpack.c.b16 %v3898, %v3897
    %v4552 = vpack.c.b16 %v3900, %v3899
    %v4553 = vpack.c.b16 %v3902, %v3901
    %v4554 = vpack.c.b16 %v3904, %v3903
    %v4555 = vpack.c.b16 %v3906, %v3905
    %v4556 = vpack.c.b16 %v3908, %v3907
    %v4557 = vpack.c.b16 %v3910, %v3909
    %v4558 = vpack.c.b16 %v3912, %v3911
    %v4559 = vpack.c.b16 %v3914, %v3913
    %v4560 = vpack.c.b16 %v3916, %v3915
    %v4561 = vpack.c.b16 %v3918, %v3917
    %v4562 = vpack.c.b16 %v3920, %v3919
    %v4563 = vpack.c.b16 %v3922, %v3921
    %v4564 = vpack.c.b16 %v3924, %v3923
    %v4565 = vpack.c.b16 %v3926, %v3925
    %v4566 = vpack.c.b16 %v3928, %v3927
    %v4567 = vpack.c.b16 %v3930, %v3929
    %v4568 = vpack.c.b16 %v3932, %v3931
    %v4569 = vpack.c.b16 %v3934, %v3933
    %v4570 = vpack.c.b16 %v3936, %v3935
    %v4571 = vpack.c.b16 %v3938, %v3937
    %v4572 = vpack.c.b16 %v3940, %v3939
    %v4573 = vpack.c.b16 %v3942, %v3941
    %v4574 = vpack.c.b16 %v3944, %v3943
    %v4575 = vpack.c.b16 %v3946, %v3945
    %v4576 = vpack.c.b16 %v3948, %v3947
    %v4577 = vpack.c.b16 %v3950, %v3949
    %v4578 = vpack.c.b16 %v3952, %v3951
    %v4579 = vpack.c.b16 %v3954, %v3953
    %v4580 = vpack.c.b16 %v3956, %v3955
    %v4581 = vpack.c.b16 %v3958, %v3957
    %v4582 = vpack.c.b16 %v3960, %v3959
    %v4583 = vpack.c.b16 %v3962, %v3961
    %v4584 = vpack.c.b16 %v3964, %v3963
    %v4585 = vpack.c.b16 %v3966, %v3965
    %v4586 = vpack.c.b16 %v3968, %v3967
    %v4587 = vpack.c.b16 %v3970, %v3969
    %v4588 = vpack.c.b16 %v3972, %v3971
    %v4589 = vpack.c.b16 %v3974, %v3973
    %v4590 = vpack.c.b16 %v3976, %v3975
    %v4591 = vpack.c.b16 %v3978, %v3977
    %v4592 = vpack.c.b16 %v3980, %v3979
    %v4593 = vpack.c.b16 %v3982, %v3981
    %v4594 = vpack.c.b16 %v3984, %v3983
    %v4595 = vpack.c.b16 %v3986, %v3985
    %v4596 = vpack.c.b16 %v3988, %v3987
    %v4597 = vpack.c.b16 %v3990, %v3989
    %v4598 = vpack.c.b16 %v3992, %v3991
    %v4599 = vpack.c.b16 %v3994, %v3993
    %v4600 = vpack.c.b16 %v3996, %v3995
    %v4601 = vpack.c.b16 %v3998, %v3997
    %v4602 = vpack.c.b16 %v4000, %v3999
    %v4603 = vpack.c.b16 %v4002, %v4001
    %v4604 = vpack.c.b16 %v4004, %v4003
    %v4605 = vpack.c.b16 %v4006, %v4005
    %v4606 = vpack.c.b16 %v4008, %v4007
    %v4607 = vpack.c.b16 %v4010, %v4009
    %v4608 = vpack.c.b16 %v4012, %v4011
    %v4609 = vpack.c.b16 %v4014, %v4013
    %v4610 = vpack.c.b16 %v4016, %v4015
    %v4611 = vpack.c.b16 %v4018, %v4017
    %v4612 = vpack.c.b16 %v4020, %v4019
    %v4613 = vpack.c.b16 %v4022, %v4021
    %v4614 = vpack.c.b16 %v4024, %v4023
    %v4615 = vpack.c.b16 %v4026, %v4025
    %v4616 = vpack.c.b16 %v4028, %v4027
    %v4617 = vpack.c.b16 %v4030, %v4029
    %v4618 = vpack.c.b16 %v4032, %v4031
    %v4619 = vpack.c.b16 %v4034, %v4033
    %v4620 = vpack.c.b16 %v4036, %v4035
    %v4621 = vpack.c.b16 %v4038, %v4037
    %v4622 = vpack.c.b16 %v4040, %v4039
    %v4623 = vpack.c.b16 %v4042, %v4041
    %v4624 = vpack.c.b16 %v4044, %v4043
    %v4625 = vpack.c.b16 %v4046, %v4045
    %v4626 = vpack.c.b16 %v4048, %v4047
    %v4627 = vpack.c.b16 %v4050, %v4049
    %v4628 = vpack.c.b16 %v4052, %v4051
    %5205 = vmatprep.subr.bf16.mxu0 0
    %5206 = vmatpush1.bf16.msra.mxu0 %v4053
    %5207 = vmatprep.subr.bf16.mxu0 0
    %5208 = vmatpush1.bf16.msra.mxu0 %v4054
    %5209 = vmatprep.subr.bf16.mxu0 0
    %5210 = vmatpush1.bf16.msra.mxu0 %v4055
    %5211 = vmatprep.subr.bf16.mxu0 0
    %5212 = vmatpush1.bf16.msra.mxu0 %v4056
    %5213 = vmatprep.subr.bf16.mxu0 0
    %5214 = vmatpush1.bf16.msra.mxu0 %v4057
    %5215 = vmatprep.subr.bf16.mxu0 0
    %5216 = vmatpush1.bf16.msra.mxu0 %v4058
    %5217 = vmatprep.subr.bf16.mxu0 0
    %5218 = vmatpush1.bf16.msra.mxu0 %v4059
    %5219 = vmatprep.subr.bf16.mxu0 0
    %5220 = vmatpush1.bf16.msra.mxu0 %v4060
    %5221 = vmatprep.subr.bf16.mxu0 0
    %5222 = vmatpush1.bf16.msra.mxu0 %v4061
    %5223 = vmatprep.subr.bf16.mxu0 0
    %5224 = vmatpush1.bf16.msra.mxu0 %v4062
    %5225 = vmatprep.subr.bf16.mxu0 0
    %5226 = vmatpush1.bf16.msra.mxu0 %v4063
    %5227 = vmatprep.subr.bf16.mxu0 0
    %5228 = vmatpush1.bf16.msra.mxu0 %v4064
    %5229 = vmatprep.subr.bf16.mxu0 0
    %5230 = vmatpush1.bf16.msra.mxu0 %v4065
    %5231 = vmatprep.subr.bf16.mxu0 0
    %5232 = vmatpush1.bf16.msra.mxu0 %v4066
    %5233 = vmatprep.subr.bf16.mxu0 0
    %5234 = vmatpush1.bf16.msra.mxu0 %v4067
    %5235 = vmatprep.subr.bf16.mxu0 0
    %5236 = vmatpush1.bf16.msra.mxu0 %v4068
    %5237 = vmatprep.mubr.bf16.mxu0 %v1273
    %5238 = vmatmul.mubr.bf16.gmra.mrb[0].mxu0 %v1259
    %v5239 = vpop.f32.mrb[0].mxu0
    %v5240 = vadd.f32 %v1225, %v5239
    %v5241 = vpop.f32.mrb[0].mxu0
    %v5242 = vpop.f32.mrb[0].mxu0
    %v5243 = vpop.f32.mrb[0].mxu0
    %5244 = vdwg.mxu0
    %5245 = vmatprep.subr.bf16.mxu0 0
    %5246 = vmatpush1.bf16.msra.mxu0 %v4069
    %5247 = vmatprep.subr.bf16.mxu0 0
    %5248 = vmatpush1.bf16.msra.mxu0 %v4070
    %5249 = vmatprep.subr.bf16.mxu0 0
    %5250 = vmatpush1.bf16.msra.mxu0 %v4071
    %5251 = vmatprep.subr.bf16.mxu0 0
    %5252 = vmatpush1.bf16.msra.mxu0 %v4072
    %5253 = vmatprep.subr.bf16.mxu0 0
    %5254 = vmatpush1.bf16.msra.mxu0 %v4073
    %5255 = vmatprep.subr.bf16.mxu0 0
    %5256 = vmatpush1.bf16.msra.mxu0 %v4074
    %5257 = vmatprep.subr.bf16.mxu0 0
    %5258 = vmatpush1.bf16.msra.mxu0 %v4075
    %5259 = vmatprep.subr.bf16.mxu0 0
    %5260 = vmatpush1.bf16.msra.mxu0 %v4076
    %5261 = vmatprep.subr.bf16.mxu0 0
    %5262 = vmatpush1.bf16.msra.mxu0 %v4077
    %5263 = vmatprep.subr.bf16.mxu0 0
    %5264 = vmatpush1.bf16.msra.mxu0 %v4078
    %5265 = vmatprep.subr.bf16.mxu0 0
    %5266 = vmatpush1.bf16.msra.mxu0 %v4079
    %5267 = vmatprep.subr.bf16.mxu0 0
    %5268 = vmatpush1.bf16.msra.mxu0 %v4080
    %5269 = vmatprep.subr.bf16.mxu0 0
    %5270 = vmatpush1.bf16.msra.mxu0 %v4081
    %5271 = vmatprep.subr.bf16.mxu0 0
    %5272 = vmatpush1.bf16.msra.mxu0 %v4082
    %5273 = vmatprep.subr.bf16.mxu0 0
    %5274 = vmatpush1.bf16.msra.mxu0 %v4083
    %5275 = vmatprep.subr.bf16.mxu0 0
    %5276 = vmatpush1.bf16.msra.mxu0 %v4084
    %5277 = vmatprep.mubr.bf16.mxu0 %v1283
    %5278 = vmatmul.mubr.bf16.gmra.mrb[0].mxu0 %v1281
    %v5279 = vpop.f32.mrb[0].mxu0
    %v5280 = vadd.f32 %v5240, %v5279
    %v5281 = vpop.f32.mrb[0].mxu0
    %v5282 = vpop.f32.mrb[0].mxu0
    %v5283 = vpop.f32.mrb[0].mxu0
    %5284 = vdwg.mxu0
    %5285 = vmatprep.subr.bf16.mxu0 0
    %5286 = vmatpush1.bf16.msra.mxu0 %v4085
    %5287 = vmatprep.subr.bf16.mxu0 0
    %5288 = vmatpush1.bf16.msra.mxu0 %v4086
    %5289 = vmatprep.subr.bf16.mxu0 0
    %5290 = vmatpush1.bf16.msra.mxu0 %v4087
    %5291 = vmatprep.subr.bf16.mxu0 0
    %5292 = vmatpush1.bf16.msra.mxu0 %v4088
    %5293 = vmatprep.subr.bf16.mxu0 0
    %5294 = vmatpush1.bf16.msra.mxu0 %v4089
    %5295 = vmatprep.subr.bf16.mxu0 0
    %5296 = vmatpush1.bf16.msra.mxu0 %v4090
    %5297 = vmatprep.subr.bf16.mxu0 0
    %5298 = vmatpush1.bf16.msra.mxu0 %v4091
    %5299 = vmatprep.subr.bf16.mxu0 0
    %5300 = vmatpush1.bf16.msra.mxu0 %v4092
    %5301 = vmatprep.subr.bf16.mxu0 0
    %5302 = vmatpush1.bf16.msra.mxu0 %v4093
    %5303 = vmatprep.subr.bf16.mxu0 0
    %5304 = vmatpush1.bf16.msra.mxu0 %v4094
    %5305 = vmatprep.subr.bf16.mxu0 0
    %5306 = vmatpush1.bf16.msra.mxu0 %v4095
    %5307 = vmatprep.subr.bf16.mxu0 0
    %5308 = vmatpush1.bf16.msra.mxu0 %v4096
    %5309 = vmatprep.subr.bf16.mxu0 0
    %5310 = vmatpush1.bf16.msra.mxu0 %v4097
    %5311 = vmatprep.subr.bf16.mxu0 0
    %5312 = vmatpush1.bf16.msra.mxu0 %v4098
    %5313 = vmatprep.subr.bf16.mxu0 0
    %5314 = vmatpush1.bf16.msra.mxu0 %v4099
    %5315 = vmatprep.subr.bf16.mxu0 0
    %5316 = vmatpush1.bf16.msra.mxu0 %v4100
    %5317 = vmatprep.mubr.bf16.mxu0 %v1280
    %5318 = vmatmul.mubr.bf16.gmra.mrb[0].mxu0 %v1266
    %v5319 = vpop.f32.mrb[0].mxu0
    %v5320 = vadd.f32 %v5280, %v5319
    %v5321 = vpop.f32.mrb[0].mxu0
    %v5322 = vpop.f32.mrb[0].mxu0
    %v5323 = vpop.f32.mrb[0].mxu0
    %5324 = vdwg.mxu0
    %5325 = vmatprep.subr.bf16.mxu0 0
    %5326 = vmatpush1.bf16.msra.mxu0 %v4101
    %5327 = vmatprep.subr.bf16.mxu0 0
    %5328 = vmatpush1.bf16.msra.mxu0 %v4102
    %5329 = vmatprep.subr.bf16.mxu0 0
    %5330 = vmatpush1.bf16.msra.mxu0 %v4103
    %5331 = vmatprep.subr.bf16.mxu0 0
    %5332 = vmatpush1.bf16.msra.mxu0 %v4104
    %5333 = vmatprep.subr.bf16.mxu0 0
    %5334 = vmatpush1.bf16.msra.mxu0 %v4105
    %5335 = vmatprep.subr.bf16.mxu0 0
    %5336 = vmatpush1.bf16.msra.mxu0 %v4106
    %5337 = vmatprep.subr.bf16.mxu0 0
    %5338 = vmatpush1.bf16.msra.mxu0 %v4107
    %5339 = vmatprep.subr.bf16.mxu0 0
    %5340 = vmatpush1.bf16.msra.mxu0 %v4108
    %5341 = vmatprep.subr.bf16.mxu0 0
    %5342 = vmatpush1.bf16.msra.mxu0 %v4109
    %5343 = vmatprep.subr.bf16.mxu0 0
    %5344 = vmatpush1.bf16.msra.mxu0 %v4110
    %5345 = vmatprep.subr.bf16.mxu0 0
    %5346 = vmatpush1.bf16.msra.mxu0 %v4111
    %5347 = vmatprep.subr.bf16.mxu0 0
    %5348 = vmatpush1.bf16.msra.mxu0 %v4112
    %5349 = vmatprep.subr.bf16.mxu0 0
    %5350 = vmatpush1.bf16.msra.mxu0 %v4113
    %5351 = vmatprep.subr.bf16.mxu0 0
    %5352 = vmatpush1.bf16.msra.mxu0 %v4114
    %5353 = vmatprep.subr.bf16.mxu0 0
    %5354 = vmatpush1.bf16.msra.mxu0 %v4115
    %5355 = vmatprep.subr.bf16.mxu0 0
    %5356 = vmatpush1.bf16.msra.mxu0 %v4116
    %5357 = vmatprep.mubr.bf16.mxu0 %v1284
    %5358 = vmatmul.mubr.bf16.gmra.mrb[0].mxu0 %v1282
    %v5359 = vpop.f32.mrb[0].mxu0
    %v5360 = vadd.f32 %v5320, %v5359
    %v5361 = vpop.f32.mrb[0].mxu0
    %v5362 = vpop.f32.mrb[0].mxu0
    %v5363 = vpop.f32.mrb[0].mxu0
    %5364 = vdwg.mxu0
    %5365 = vmatprep.subr.bf16.mxu0 0
    %5366 = vmatpush1.bf16.msra.mxu0 %v4117
    %5367 = vmatprep.subr.bf16.mxu0 0
    %5368 = vmatpush1.bf16.msra.mxu0 %v4118
    %5369 = vmatprep.subr.bf16.mxu0 0
    %5370 = vmatpush1.bf16.msra.mxu0 %v4119
    %5371 = vmatprep.subr.bf16.mxu0 0
    %5372 = vmatpush1.bf16.msra.mxu0 %v4120
    %5373 = vmatprep.subr.bf16.mxu0 0
    %5374 = vmatpush1.bf16.msra.mxu0 %v4121
    %5375 = vmatprep.subr.bf16.mxu0 0
    %5376 = vmatpush1.bf16.msra.mxu0 %v4122
    %5377 = vmatprep.subr.bf16.mxu0 0
    %5378 = vmatpush1.bf16.msra.mxu0 %v4123
    %5379 = vmatprep.subr.bf16.mxu0 0
    %5380 = vmatpush1.bf16.msra.mxu0 %v4124
    %5381 = vmatprep.subr.bf16.mxu0 0
    %5382 = vmatpush1.bf16.msra.mxu0 %v4125
    %5383 = vmatprep.subr.bf16.mxu0 0
    %5384 = vmatpush1.bf16.msra.mxu0 %v4126
    %5385 = vmatprep.subr.bf16.mxu0 0
    %5386 = vmatpush1.bf16.msra.mxu0 %v4127
    %5387 = vmatprep.subr.bf16.mxu0 0
    %5388 = vmatpush1.bf16.msra.mxu0 %v4128
    %5389 = vmatprep.subr.bf16.mxu0 0
    %5390 = vmatpush1.bf16.msra.mxu0 %v4129
    %5391 = vmatprep.subr.bf16.mxu0 0
    %5392 = vmatpush1.bf16.msra.mxu0 %v4130
    %5393 = vmatprep.subr.bf16.mxu0 0
    %5394 = vmatpush1.bf16.msra.mxu0 %v4131
    %5395 = vmatprep.subr.bf16.mxu0 0
    %5396 = vmatpush1.bf16.msra.mxu0 %v4132
    %5397 = vmatprep.mubr.bf16.mxu0 %v1322
    %5398 = vmatmul.mubr.bf16.gmra.mrb[0].mxu0 %v1308
    %v5399 = vpop.f32.mrb[0].mxu0
    %v5400 = vadd.f32 %v5360, %v5399
    %v5401 = vpop.f32.mrb[0].mxu0
    %v5402 = vpop.f32.mrb[0].mxu0
    %v5403 = vpop.f32.mrb[0].mxu0
    %5404 = vdwg.mxu0
    %5405 = vmatprep.subr.bf16.mxu0 0
    %5406 = vmatpush1.bf16.msra.mxu0 %v4133
    %5407 = vmatprep.subr.bf16.mxu0 0
    %5408 = vmatpush1.bf16.msra.mxu0 %v4134
    %5409 = vmatprep.subr.bf16.mxu0 0
    %5410 = vmatpush1.bf16.msra.mxu0 %v4135
    %5411 = vmatprep.subr.bf16.mxu0 0
    %5412 = vmatpush1.bf16.msra.mxu0 %v4136
    %5413 = vmatprep.subr.bf16.mxu0 0
    %5414 = vmatpush1.bf16.msra.mxu0 %v4137
    %5415 = vmatprep.subr.bf16.mxu0 0
    %5416 = vmatpush1.bf16.msra.mxu0 %v4138
    %5417 = vmatprep.subr.bf16.mxu0 0
    %5418 = vmatpush1.bf16.msra.mxu0 %v4139
    %5419 = vmatprep.subr.bf16.mxu0 0
    %5420 = vmatpush1.bf16.msra.mxu0 %v4140
    %5421 = vmatprep.subr.bf16.mxu0 0
    %5422 = vmatpush1.bf16.msra.mxu0 %v4141
    %5423 = vmatprep.subr.bf16.mxu0 0
    %5424 = vmatpush1.bf16.msra.mxu0 %v4142
    %5425 = vmatprep.subr.bf16.mxu0 0
    %5426 = vmatpush1.bf16.msra.mxu0 %v4143
    %5427 = vmatprep.subr.bf16.mxu0 0
    %5428 = vmatpush1.bf16.msra.mxu0 %v4144
    %5429 = vmatprep.subr.bf16.mxu0 0
    %5430 = vmatpush1.bf16.msra.mxu0 %v4145
    %5431 = vmatprep.subr.bf16.mxu0 0
    %5432 = vmatpush1.bf16.msra.mxu0 %v4146
    %5433 = vmatprep.subr.bf16.mxu0 0
    %5434 = vmatpush1.bf16.msra.mxu0 %v4147
    %5435 = vmatprep.subr.bf16.mxu0 0
    %5436 = vmatpush1.bf16.msra.mxu0 %v4148
    %5437 = vmatprep.mubr.bf16.mxu0 %v1332
    %5438 = vmatmul.mubr.bf16.gmra.mrb[0].mxu0 %v1330
    %v5439 = vpop.f32.mrb[0].mxu0
    %v5440 = vadd.f32 %v5400, %v5439
    %v5441 = vpop.f32.mrb[0].mxu0
    %v5442 = vpop.f32.mrb[0].mxu0
    %v5443 = vpop.f32.mrb[0].mxu0
    %5444 = vdwg.mxu0
    %5445 = vmatprep.subr.bf16.mxu0 0
    %5446 = vmatpush1.bf16.msra.mxu0 %v4149
    %5447 = vmatprep.subr.bf16.mxu0 0
    %5448 = vmatpush1.bf16.msra.mxu0 %v4150
    %5449 = vmatprep.subr.bf16.mxu0 0
    %5450 = vmatpush1.bf16.msra.mxu0 %v4151
    %5451 = vmatprep.subr.bf16.mxu0 0
    %5452 = vmatpush1.bf16.msra.mxu0 %v4152
    %5453 = vmatprep.subr.bf16.mxu0 0
    %5454 = vmatpush1.bf16.msra.mxu0 %v4153
    %5455 = vmatprep.subr.bf16.mxu0 0
    %5456 = vmatpush1.bf16.msra.mxu0 %v4154
    %5457 = vmatprep.subr.bf16.mxu0 0
    %5458 = vmatpush1.bf16.msra.mxu0 %v4155
    %5459 = vmatprep.subr.bf16.mxu0 0
    %5460 = vmatpush1.bf16.msra.mxu0 %v4156
    %5461 = vmatprep.subr.bf16.mxu0 0
    %5462 = vmatpush1.bf16.msra.mxu0 %v4157
    %5463 = vmatprep.subr.bf16.mxu0 0
    %5464 = vmatpush1.bf16.msra.mxu0 %v4158
    %5465 = vmatprep.subr.bf16.mxu0 0
    %5466 = vmatpush1.bf16.msra.mxu0 %v4159
    %5467 = vmatprep.subr.bf16.mxu0 0
    %5468 = vmatpush1.bf16.msra.mxu0 %v4160
    %5469 = vmatprep.subr.bf16.mxu0 0
    %5470 = vmatpush1.bf16.msra.mxu0 %v4161
    %5471 = vmatprep.subr.bf16.mxu0 0
    %5472 = vmatpush1.bf16.msra.mxu0 %v4162
    %5473 = vmatprep.subr.bf16.mxu0 0
    %5474 = vmatpush1.bf16.msra.mxu0 %v4163
    %5475 = vmatprep.subr.bf16.mxu0 0
    %5476 = vmatpush1.bf16.msra.mxu0 %v4164
    %5477 = vmatprep.mubr.bf16.mxu0 %v1329
    %5478 = vmatmul.mubr.bf16.gmra.mrb[0].mxu0 %v1315
    %v5479 = vpop.f32.mrb[0].mxu0
    %v5480 = vadd.f32 %v5440, %v5479
    %v5481 = vpop.f32.mrb[0].mxu0
    %v5482 = vpop.f32.mrb[0].mxu0
    %v5483 = vpop.f32.mrb[0].mxu0
    %5484 = vdwg.mxu0
    %5485 = vmatprep.subr.bf16.mxu0 0
    %5486 = vmatpush1.bf16.msra.mxu0 %v4165
    %5487 = vmatprep.subr.bf16.mxu0 0
    %5488 = vmatpush1.bf16.msra.mxu0 %v4166
    %5489 = vmatprep.subr.bf16.mxu0 0
    %5490 = vmatpush1.bf16.msra.mxu0 %v4167
    %5491 = vmatprep.subr.bf16.mxu0 0
    %5492 = vmatpush1.bf16.msra.mxu0 %v4168
    %5493 = vmatprep.subr.bf16.mxu0 0
    %5494 = vmatpush1.bf16.msra.mxu0 %v4169
    %5495 = vmatprep.subr.bf16.mxu0 0
    %5496 = vmatpush1.bf16.msra.mxu0 %v4170
    %5497 = vmatprep.subr.bf16.mxu0 0
    %5498 = vmatpush1.bf16.msra.mxu0 %v4171
    %5499 = vmatprep.subr.bf16.mxu0 0
    %5500 = vmatpush1.bf16.msra.mxu0 %v4172
    %5501 = vmatprep.subr.bf16.mxu0 0
    %5502 = vmatpush1.bf16.msra.mxu0 %v4173
    %5503 = vmatprep.subr.bf16.mxu0 0
    %5504 = vmatpush1.bf16.msra.mxu0 %v4174
    %5505 = vmatprep.subr.bf16.mxu0 0
    %5506 = vmatpush1.bf16.msra.mxu0 %v4175
    %5507 = vmatprep.subr.bf16.mxu0 0
    %5508 = vmatpush1.bf16.msra.mxu0 %v4176
    %5509 = vmatprep.subr.bf16.mxu0 0
    %5510 = vmatpush1.bf16.msra.mxu0 %v4177
    %5511 = vmatprep.subr.bf16.mxu0 0
    %5512 = vmatpush1.bf16.msra.mxu0 %v4178
    %5513 = vmatprep.subr.bf16.mxu0 0
    %5514 = vmatpush1.bf16.msra.mxu0 %v4179
    %5515 = vmatprep.subr.bf16.mxu0 0
    %5516 = vmatpush1.bf16.msra.mxu0 %v4180
    %5517 = vmatprep.mubr.bf16.mxu0 %v1333
    %5518 = vmatmul.mubr.bf16.gmra.mrb[0].mxu0 %v1331
    %v5519 = vpop.f32.mrb[0].mxu0
    %v5520 = vadd.f32 %v5480, %v5519
    %v5521 = vpop.f32.mrb[0].mxu0
    %v5522 = vpop.f32.mrb[0].mxu0
    %v5523 = vpop.f32.mrb[0].mxu0
    %5524 = vdwg.mxu0
    %5525 = vmatprep.subr.bf16.mxu0 0
    %5526 = vmatpush1.bf16.msra.mxu0 %v4181
    %5527 = vmatprep.subr.bf16.mxu0 0
    %5528 = vmatpush1.bf16.msra.mxu0 %v4182
    %5529 = vmatprep.subr.bf16.mxu0 0
    %5530 = vmatpush1.bf16.msra.mxu0 %v4183
    %5531 = vmatprep.subr.bf16.mxu0 0
    %5532 = vmatpush1.bf16.msra.mxu0 %v4184
    %5533 = vmatprep.subr.bf16.mxu0 0
    %5534 = vmatpush1.bf16.msra.mxu0 %v4185
    %5535 = vmatprep.subr.bf16.mxu0 0
    %5536 = vmatpush1.bf16.msra.mxu0 %v4186
    %5537 = vmatprep.subr.bf16.mxu0 0
    %5538 = vmatpush1.bf16.msra.mxu0 %v4187
    %5539 = vmatprep.subr.bf16.mxu0 0
    %5540 = vmatpush1.bf16.msra.mxu0 %v4188
    %5541 = vmatprep.subr.bf16.mxu0 0
    %5542 = vmatpush1.bf16.msra.mxu0 %v4189
    %5543 = vmatprep.subr.bf16.mxu0 0
    %5544 = vmatpush1.bf16.msra.mxu0 %v4190
    %5545 = vmatprep.subr.bf16.mxu0 0
    %5546 = vmatpush1.bf16.msra.mxu0 %v4191
    %5547 = vmatprep.subr.bf16.mxu0 0
    %5548 = vmatpush1.bf16.msra.mxu0 %v4192
    %5549 = vmatprep.subr.bf16.mxu0 0
    %5550 = vmatpush1.bf16.msra.mxu0 %v4193
    %5551 = vmatprep.subr.bf16.mxu0 0
    %5552 = vmatpush1.bf16.msra.mxu0 %v4194
    %5553 = vmatprep.subr.bf16.mxu0 0
    %5554 = vmatpush1.bf16.msra.mxu0 %v4195
    %5555 = vmatprep.subr.bf16.mxu0 0
    %5556 = vmatpush1.bf16.msra.mxu0 %v4196
    %5557 = vmatprep.mubr.bf16.mxu0 %v1371
    %5558 = vmatmul.mubr.bf16.gmra.mrb[0].mxu0 %v1357
    %v5559 = vpop.f32.mrb[0].mxu0
    %v5560 = vadd.f32 %v5520, %v5559
    %v5561 = vpop.f32.mrb[0].mxu0
    %v5562 = vpop.f32.mrb[0].mxu0
    %v5563 = vpop.f32.mrb[0].mxu0
    %5564 = vdwg.mxu0
    %5565 = vmatprep.subr.bf16.mxu0 0
    %5566 = vmatpush1.bf16.msra.mxu0 %v4197
    %5567 = vmatprep.subr.bf16.mxu0 0
    %5568 = vmatpush1.bf16.msra.mxu0 %v4198
    %5569 = vmatprep.subr.bf16.mxu0 0
    %5570 = vmatpush1.bf16.msra.mxu0 %v4199
    %5571 = vmatprep.subr.bf16.mxu0 0
    %5572 = vmatpush1.bf16.msra.mxu0 %v4200
    %5573 = vmatprep.subr.bf16.mxu0 0
    %5574 = vmatpush1.bf16.msra.mxu0 %v4201
    %5575 = vmatprep.subr.bf16.mxu0 0
    %5576 = vmatpush1.bf16.msra.mxu0 %v4202
    %5577 = vmatprep.subr.bf16.mxu0 0
    %5578 = vmatpush1.bf16.msra.mxu0 %v4203
    %5579 = vmatprep.subr.bf16.mxu0 0
    %5580 = vmatpush1.bf16.msra.mxu0 %v4204
    %5581 = vmatprep.subr.bf16.mxu0 0
    %5582 = vmatpush1.bf16.msra.mxu0 %v4205
    %5583 = vmatprep.subr.bf16.mxu0 0
    %5584 = vmatpush1.bf16.msra.mxu0 %v4206
    %5585 = vmatprep.subr.bf16.mxu0 0
    %5586 = vmatpush1.bf16.msra.mxu0 %v4207
    %5587 = vmatprep.subr.bf16.mxu0 0
    %5588 = vmatpush1.bf16.msra.mxu0 %v4208
    %5589 = vmatprep.subr.bf16.mxu0 0
    %5590 = vmatpush1.bf16.msra.mxu0 %v4209
    %5591 = vmatprep.subr.bf16.mxu0 0
    %5592 = vmatpush1.bf16.msra.mxu0 %v4210
    %5593 = vmatprep.subr.bf16.mxu0 0
    %5594 = vmatpush1.bf16.msra.mxu0 %v4211
    %5595 = vmatprep.subr.bf16.mxu0 0
    %5596 = vmatpush1.bf16.msra.mxu0 %v4212
    %5597 = vmatprep.mubr.bf16.mxu0 %v1381
    %5598 = vmatmul.mubr.bf16.gmra.mrb[0].mxu0 %v1379
    %v5599 = vpop.f32.mrb[0].mxu0
    %v5600 = vadd.f32 %v5560, %v5599
    %v5601 = vpop.f32.mrb[0].mxu0
    %v5602 = vpop.f32.mrb[0].mxu0
    %v5603 = vpop.f32.mrb[0].mxu0
    %5604 = vdwg.mxu0
    %5605 = vmatprep.subr.bf16.mxu0 0
    %5606 = vmatpush1.bf16.msra.mxu0 %v4213
    %5607 = vmatprep.subr.bf16.mxu0 0
    %5608 = vmatpush1.bf16.msra.mxu0 %v4214
    %5609 = vmatprep.subr.bf16.mxu0 0
    %5610 = vmatpush1.bf16.msra.mxu0 %v4215
    %5611 = vmatprep.subr.bf16.mxu0 0
    %5612 = vmatpush1.bf16.msra.mxu0 %v4216
    %5613 = vmatprep.subr.bf16.mxu0 0
    %5614 = vmatpush1.bf16.msra.mxu0 %v4217
    %5615 = vmatprep.subr.bf16.mxu0 0
    %5616 = vmatpush1.bf16.msra.mxu0 %v4218
    %5617 = vmatprep.subr.bf16.mxu0 0
    %5618 = vmatpush1.bf16.msra.mxu0 %v4219
    %5619 = vmatprep.subr.bf16.mxu0 0
    %5620 = vmatpush1.bf16.msra.mxu0 %v4220
    %5621 = vmatprep.subr.bf16.mxu0 0
    %5622 = vmatpush1.bf16.msra.mxu0 %v4221
    %5623 = vmatprep.subr.bf16.mxu0 0
    %5624 = vmatpush1.bf16.msra.mxu0 %v4222
    %5625 = vmatprep.subr.bf16.mxu0 0
    %5626 = vmatpush1.bf16.msra.mxu0 %v4223
    %5627 = vmatprep.subr.bf16.mxu0 0
    %5628 = vmatpush1.bf16.msra.mxu0 %v4224
    %5629 = vmatprep.subr.bf16.mxu0 0
    %5630 = vmatpush1.bf16.msra.mxu0 %v4225
    %5631 = vmatprep.subr.bf16.mxu0 0
    %5632 = vmatpush1.bf16.msra.mxu0 %v4226
    %5633 = vmatprep.subr.bf16.mxu0 0
    %5634 = vmatpush1.bf16.msra.mxu0 %v4227
    %5635 = vmatprep.subr.bf16.mxu0 0
    %5636 = vmatpush1.bf16.msra.mxu0 %v4228
    %5637 = vmatprep.mubr.bf16.mxu0 %v1378
    %5638 = vmatmul.mubr.bf16.gmra.mrb[0].mxu0 %v1364
    %v5639 = vpop.f32.mrb[0].mxu0
    %v5640 = vadd.f32 %v5600, %v5639
    %v5641 = vpop.f32.mrb[0].mxu0
    %v5642 = vpop.f32.mrb[0].mxu0
    %v5643 = vpop.f32.mrb[0].mxu0
    %5644 = vdwg.mxu0
    %5645 = vmatprep.subr.bf16.mxu0 0
    %5646 = vmatpush1.bf16.msra.mxu0 %v4229
    %5647 = vmatprep.subr.bf16.mxu0 0
    %5648 = vmatpush1.bf16.msra.mxu0 %v4230
    %5649 = vmatprep.subr.bf16.mxu0 0
    %5650 = vmatpush1.bf16.msra.mxu0 %v4231
    %5651 = vmatprep.subr.bf16.mxu0 0
    %5652 = vmatpush1.bf16.msra.mxu0 %v4232
    %5653 = vmatprep.subr.bf16.mxu0 0
    %5654 = vmatpush1.bf16.msra.mxu0 %v4233
    %5655 = vmatprep.subr.bf16.mxu0 0
    %5656 = vmatpush1.bf16.msra.mxu0 %v4234
    %5657 = vmatprep.subr.bf16.mxu0 0
    %5658 = vmatpush1.bf16.msra.mxu0 %v4235
    %5659 = vmatprep.subr.bf16.mxu0 0
    %5660 = vmatpush1.bf16.msra.mxu0 %v4236
    %5661 = vmatprep.subr.bf16.mxu0 0
    %5662 = vmatpush1.bf16.msra.mxu0 %v4237
    %5663 = vmatprep.subr.bf16.mxu0 0
    %5664 = vmatpush1.bf16.msra.mxu0 %v4238
    %5665 = vmatprep.subr.bf16.mxu0 0
    %5666 = vmatpush1.bf16.msra.mxu0 %v4239
    %5667 = vmatprep.subr.bf16.mxu0 0
    %5668 = vmatpush1.bf16.msra.mxu0 %v4240
    %5669 = vmatprep.subr.bf16.mxu0 0
    %5670 = vmatpush1.bf16.msra.mxu0 %v4241
    %5671 = vmatprep.subr.bf16.mxu0 0
    %5672 = vmatpush1.bf16.msra.mxu0 %v4242
    %5673 = vmatprep.subr.bf16.mxu0 0
    %5674 = vmatpush1.bf16.msra.mxu0 %v4243
    %5675 = vmatprep.subr.bf16.mxu0 0
    %5676 = vmatpush1.bf16.msra.mxu0 %v4244
    %5677 = vmatprep.mubr.bf16.mxu0 %v1382
    %5678 = vmatmul.mubr.bf16.gmra.mrb[0].mxu0 %v1380
    %v5679 = vpop.f32.mrb[0].mxu0
    %v5680 = vadd.f32 %v5640, %v5679
    %v5681 = vpop.f32.mrb[0].mxu0
    %v5682 = vpop.f32.mrb[0].mxu0
    %v5683 = vpop.f32.mrb[0].mxu0
    %5684 = vdwg.mxu0
    %5685 = vmatprep.subr.bf16.mxu0 0
    %5686 = vmatpush1.bf16.msra.mxu0 %v4245
    %5687 = vmatprep.subr.bf16.mxu0 0
    %5688 = vmatpush1.bf16.msra.mxu0 %v4246
    %5689 = vmatprep.subr.bf16.mxu0 0
    %5690 = vmatpush1.bf16.msra.mxu0 %v4247
    %5691 = vmatprep.subr.bf16.mxu0 0
    %5692 = vmatpush1.bf16.msra.mxu0 %v4248
    %5693 = vmatprep.subr.bf16.mxu0 0
    %5694 = vmatpush1.bf16.msra.mxu0 %v4249
    %5695 = vmatprep.subr.bf16.mxu0 0
    %5696 = vmatpush1.bf16.msra.mxu0 %v4250
    %5697 = vmatprep.subr.bf16.mxu0 0
    %5698 = vmatpush1.bf16.msra.mxu0 %v4251
    %5699 = vmatprep.subr.bf16.mxu0 0
    %5700 = vmatpush1.bf16.msra.mxu0 %v4252
    %5701 = vmatprep.subr.bf16.mxu0 0
    %5702 = vmatpush1.bf16.msra.mxu0 %v4253
    %5703 = vmatprep.subr.bf16.mxu0 0
    %5704 = vmatpush1.bf16.msra.mxu0 %v4254
    %5705 = vmatprep.subr.bf16.mxu0 0
    %5706 = vmatpush1.bf16.msra.mxu0 %v4255
    %5707 = vmatprep.subr.bf16.mxu0 0
    %5708 = vmatpush1.bf16.msra.mxu0 %v4256
    %5709 = vmatprep.subr.bf16.mxu0 0
    %5710 = vmatpush1.bf16.msra.mxu0 %v4257
    %5711 = vmatprep.subr.bf16.mxu0 0
    %5712 = vmatpush1.bf16.msra.mxu0 %v4258
    %5713 = vmatprep.subr.bf16.mxu0 0
    %5714 = vmatpush1.bf16.msra.mxu0 %v4259
    %5715 = vmatprep.subr.bf16.mxu0 0
    %5716 = vmatpush1.bf16.msra.mxu0 %v4260
    %5717 = vmatprep.mubr.bf16.mxu0 %v1420
    %5718 = vmatmul.mubr.bf16.gmra.mrb[0].mxu0 %v1406
    %v5719 = vpop.f32.mrb[0].mxu0
    %v5720 = vadd.f32 %v5680, %v5719
    %v5721 = vpop.f32.mrb[0].mxu0
    %v5722 = vpop.f32.mrb[0].mxu0
    %v5723 = vpop.f32.mrb[0].mxu0
    %5724 = vdwg.mxu0
    %5725 = vmatprep.subr.bf16.mxu0 0
    %5726 = vmatpush1.bf16.msra.mxu0 %v4261
    %5727 = vmatprep.subr.bf16.mxu0 0
    %5728 = vmatpush1.bf16.msra.mxu0 %v4262
    %5729 = vmatprep.subr.bf16.mxu0 0
    %5730 = vmatpush1.bf16.msra.mxu0 %v4263
    %5731 = vmatprep.subr.bf16.mxu0 0
    %5732 = vmatpush1.bf16.msra.mxu0 %v4264
    %5733 = vmatprep.subr.bf16.mxu0 0
    %5734 = vmatpush1.bf16.msra.mxu0 %v4265
    %5735 = vmatprep.subr.bf16.mxu0 0
    %5736 = vmatpush1.bf16.msra.mxu0 %v4266
    %5737 = vmatprep.subr.bf16.mxu0 0
    %5738 = vmatpush1.bf16.msra.mxu0 %v4267
    %5739 = vmatprep.subr.bf16.mxu0 0
    %5740 = vmatpush1.bf16.msra.mxu0 %v4268
    %5741 = vmatprep.subr.bf16.mxu0 0
    %5742 = vmatpush1.bf16.msra.mxu0 %v4269
    %5743 = vmatprep.subr.bf16.mxu0 0
    %5744 = vmatpush1.bf16.msra.mxu0 %v4270
    %5745 = vmatprep.subr.bf16.mxu0 0
    %5746 = vmatpush1.bf16.msra.mxu0 %v4271
    %5747 = vmatprep.subr.bf16.mxu0 0
    %5748 = vmatpush1.bf16.msra.mxu0 %v4272
    %5749 = vmatprep.subr.bf16.mxu0 0
    %5750 = vmatpush1.bf16.msra.mxu0 %v4273
    %5751 = vmatprep.subr.bf16.mxu0 0
    %5752 = vmatpush1.bf16.msra.mxu0 %v4274
    %5753 = vmatprep.subr.bf16.mxu0 0
    %5754 = vmatpush1.bf16.msra.mxu0 %v4275
    %5755 = vmatprep.subr.bf16.mxu0 0
    %5756 = vmatpush1.bf16.msra.mxu0 %v4276
    %5757 = vmatprep.mubr.bf16.mxu0 %v1430
    %5758 = vmatmul.mubr.bf16.gmra.mrb[0].mxu0 %v1428
    %v5759 = vpop.f32.mrb[0].mxu0
    %v5760 = vadd.f32 %v5720, %v5759
    %v5761 = vpop.f32.mrb[0].mxu0
    %v5762 = vpop.f32.mrb[0].mxu0
    %v5763 = vpop.f32.mrb[0].mxu0
    %5764 = vdwg.mxu0
    %5765 = vmatprep.subr.bf16.mxu0 0
    %5766 = vmatpush1.bf16.msra.mxu0 %v4277
    %5767 = vmatprep.subr.bf16.mxu0 0
    %5768 = vmatpush1.bf16.msra.mxu0 %v4278
    %5769 = vmatprep.subr.bf16.mxu0 0
    %5770 = vmatpush1.bf16.msra.mxu0 %v4279
    %5771 = vmatprep.subr.bf16.mxu0 0
    %5772 = vmatpush1.bf16.msra.mxu0 %v4280
    %5773 = vmatprep.subr.bf16.mxu0 0
    %5774 = vmatpush1.bf16.msra.mxu0 %v4281
    %5775 = vmatprep.subr.bf16.mxu0 0
    %5776 = vmatpush1.bf16.msra.mxu0 %v4282
    %5777 = vmatprep.subr.bf16.mxu0 0
    %5778 = vmatpush1.bf16.msra.mxu0 %v4283
    %5779 = vmatprep.subr.bf16.mxu0 0
    %5780 = vmatpush1.bf16.msra.mxu0 %v4284
    %5781 = vmatprep.subr.bf16.mxu0 0
    %5782 = vmatpush1.bf16.msra.mxu0 %v4285
    %5783 = vmatprep.subr.bf16.mxu0 0
    %5784 = vmatpush1.bf16.msra.mxu0 %v4286
    %5785 = vmatprep.subr.bf16.mxu0 0
    %5786 = vmatpush1.bf16.msra.mxu0 %v4287
    %5787 = vmatprep.subr.bf16.mxu0 0
    %5788 = vmatpush1.bf16.msra.mxu0 %v4288
    %5789 = vmatprep.subr.bf16.mxu0 0
    %5790 = vmatpush1.bf16.msra.mxu0 %v4289
    %5791 = vmatprep.subr.bf16.mxu0 0
    %5792 = vmatpush1.bf16.msra.mxu0 %v4290
    %5793 = vmatprep.subr.bf16.mxu0 0
    %5794 = vmatpush1.bf16.msra.mxu0 %v4291
    %5795 = vmatprep.subr.bf16.mxu0 0
    %5796 = vmatpush1.bf16.msra.mxu0 %v4292
    %5797 = vmatprep.mubr.bf16.mxu0 %v1427
    %5798 = vmatmul.mubr.bf16.gmra.mrb[0].mxu0 %v1413
    %v5799 = vpop.f32.mrb[0].mxu0
    %v5800 = vadd.f32 %v5760, %v5799
    %v5801 = vpop.f32.mrb[0].mxu0
    %v5802 = vpop.f32.mrb[0].mxu0
    %v5803 = vpop.f32.mrb[0].mxu0
    %5804 = vdwg.mxu0
    %5805 = vmatprep.subr.bf16.mxu0 0
    %5806 = vmatpush1.bf16.msra.mxu0 %v4293
    %5807 = vmatprep.subr.bf16.mxu0 0
    %5808 = vmatpush1.bf16.msra.mxu0 %v4294
    %5809 = vmatprep.subr.bf16.mxu0 0
    %5810 = vmatpush1.bf16.msra.mxu0 %v4295
    %5811 = vmatprep.subr.bf16.mxu0 0
    %5812 = vmatpush1.bf16.msra.mxu0 %v4296
    %5813 = vmatprep.subr.bf16.mxu0 0
    %5814 = vmatpush1.bf16.msra.mxu0 %v4297
    %5815 = vmatprep.subr.bf16.mxu0 0
    %5816 = vmatpush1.bf16.msra.mxu0 %v4298
    %5817 = vmatprep.subr.bf16.mxu0 0
    %5818 = vmatpush1.bf16.msra.mxu0 %v4299
    %5819 = vmatprep.subr.bf16.mxu0 0
    %5820 = vmatpush1.bf16.msra.mxu0 %v4300
    %5821 = vmatprep.subr.bf16.mxu0 0
    %5822 = vmatpush1.bf16.msra.mxu0 %v4301
    %5823 = vmatprep.subr.bf16.mxu0 0
    %5824 = vmatpush1.bf16.msra.mxu0 %v4302
    %5825 = vmatprep.subr.bf16.mxu0 0
    %5826 = vmatpush1.bf16.msra.mxu0 %v4303
    %5827 = vmatprep.subr.bf16.mxu0 0
    %5828 = vmatpush1.bf16.msra.mxu0 %v4304
    %5829 = vmatprep.subr.bf16.mxu0 0
    %5830 = vmatpush1.bf16.msra.mxu0 %v4305
    %5831 = vmatprep.subr.bf16.mxu0 0
    %5832 = vmatpush1.bf16.msra.mxu0 %v4306
    %5833 = vmatprep.subr.bf16.mxu0 0
    %5834 = vmatpush1.bf16.msra.mxu0 %v4307
    %5835 = vmatprep.subr.bf16.mxu0 0
    %5836 = vmatpush1.bf16.msra.mxu0 %v4308
    %5837 = vmatprep.mubr.bf16.mxu0 %v1431
    %5838 = vmatmul.mubr.bf16.gmra.mrb[0].mxu0 %v1429
    %v5839 = vpop.f32.mrb[0].mxu0
    %v5840 = vadd.f32 %v5800, %v5839
    %v5841 = vpop.f32.mrb[0].mxu0
    %v5842 = vpop.f32.mrb[0].mxu0
    %v5843 = vpop.f32.mrb[0].mxu0
    %5844 = vdwg.mxu0
    %5845 = vmatprep.subr.bf16.mxu0 0
    %5846 = vmatpush1.bf16.msra.mxu0 %v4309
    %5847 = vmatprep.subr.bf16.mxu0 0
    %5848 = vmatpush1.bf16.msra.mxu0 %v4310
    %5849 = vmatprep.subr.bf16.mxu0 0
    %5850 = vmatpush1.bf16.msra.mxu0 %v4311
    %5851 = vmatprep.subr.bf16.mxu0 0
    %5852 = vmatpush1.bf16.msra.mxu0 %v4312
    %5853 = vmatprep.subr.bf16.mxu0 0
    %5854 = vmatpush1.bf16.msra.mxu0 %v4313
    %5855 = vmatprep.subr.bf16.mxu0 0
    %5856 = vmatpush1.bf16.msra.mxu0 %v4314
    %5857 = vmatprep.subr.bf16.mxu0 0
    %5858 = vmatpush1.bf16.msra.mxu0 %v4315
    %5859 = vmatprep.subr.bf16.mxu0 0
    %5860 = vmatpush1.bf16.msra.mxu0 %v4316
    %5861 = vmatprep.subr.bf16.mxu0 0
    %5862 = vmatpush1.bf16.msra.mxu0 %v4317
    %5863 = vmatprep.subr.bf16.mxu0 0
    %5864 = vmatpush1.bf16.msra.mxu0 %v4318
    %5865 = vmatprep.subr.bf16.mxu0 0
    %5866 = vmatpush1.bf16.msra.mxu0 %v4319
    %5867 = vmatprep.subr.bf16.mxu0 0
    %5868 = vmatpush1.bf16.msra.mxu0 %v4320
    %5869 = vmatprep.subr.bf16.mxu0 0
    %5870 = vmatpush1.bf16.msra.mxu0 %v4321
    %5871 = vmatprep.subr.bf16.mxu0 0
    %5872 = vmatpush1.bf16.msra.mxu0 %v4322
    %5873 = vmatprep.subr.bf16.mxu0 0
    %5874 = vmatpush1.bf16.msra.mxu0 %v4323
    %5875 = vmatprep.subr.bf16.mxu0 0
    %5876 = vmatpush1.bf16.msra.mxu0 %v4324
    %5877 = vmatprep.mubr.bf16.mxu0 %v1469
    %5878 = vmatmul.mubr.bf16.gmra.mrb[0].mxu0 %v1455
    %v5879 = vpop.f32.mrb[0].mxu0
    %v5880 = vadd.f32 %v5840, %v5879
    %v5881 = vpop.f32.mrb[0].mxu0
    %v5882 = vpop.f32.mrb[0].mxu0
    %v5883 = vpop.f32.mrb[0].mxu0
    %5884 = vdwg.mxu0
    %5885 = vmatprep.subr.bf16.mxu0 0
    %5886 = vmatpush1.bf16.msra.mxu0 %v4325
    %5887 = vmatprep.subr.bf16.mxu0 0
    %5888 = vmatpush1.bf16.msra.mxu0 %v4326
    %5889 = vmatprep.subr.bf16.mxu0 0
    %5890 = vmatpush1.bf16.msra.mxu0 %v4327
    %5891 = vmatprep.subr.bf16.mxu0 0
    %5892 = vmatpush1.bf16.msra.mxu0 %v4328
    %5893 = vmatprep.subr.bf16.mxu0 0
    %5894 = vmatpush1.bf16.msra.mxu0 %v4329
    %5895 = vmatprep.subr.bf16.mxu0 0
    %5896 = vmatpush1.bf16.msra.mxu0 %v4330
    %5897 = vmatprep.subr.bf16.mxu0 0
    %5898 = vmatpush1.bf16.msra.mxu0 %v4331
    %5899 = vmatprep.subr.bf16.mxu0 0
    %5900 = vmatpush1.bf16.msra.mxu0 %v4332
    %5901 = vmatprep.subr.bf16.mxu0 0
    %5902 = vmatpush1.bf16.msra.mxu0 %v4333
    %5903 = vmatprep.subr.bf16.mxu0 0
    %5904 = vmatpush1.bf16.msra.mxu0 %v4334
    %5905 = vmatprep.subr.bf16.mxu0 0
    %5906 = vmatpush1.bf16.msra.mxu0 %v4335
    %5907 = vmatprep.subr.bf16.mxu0 0
    %5908 = vmatpush1.bf16.msra.mxu0 %v4336
    %5909 = vmatprep.subr.bf16.mxu0 0
    %5910 = vmatpush1.bf16.msra.mxu0 %v4337
    %5911 = vmatprep.subr.bf16.mxu0 0
    %5912 = vmatpush1.bf16.msra.mxu0 %v4338
    %5913 = vmatprep.subr.bf16.mxu0 0
    %5914 = vmatpush1.bf16.msra.mxu0 %v4339
    %5915 = vmatprep.subr.bf16.mxu0 0
    %5916 = vmatpush1.bf16.msra.mxu0 %v4340
    %5917 = vmatprep.mubr.bf16.mxu0 %v1479
    %5918 = vmatmul.mubr.bf16.gmra.mrb[0].mxu0 %v1477
    %v5919 = vpop.f32.mrb[0].mxu0
    %v5920 = vadd.f32 %v5880, %v5919
    %v5921 = vpop.f32.mrb[0].mxu0
    %v5922 = vpop.f32.mrb[0].mxu0
    %v5923 = vpop.f32.mrb[0].mxu0
    %5924 = vdwg.mxu0
    %5925 = vmatprep.subr.bf16.mxu0 0
    %5926 = vmatpush1.bf16.msra.mxu0 %v4341
    %5927 = vmatprep.subr.bf16.mxu0 0
    %5928 = vmatpush1.bf16.msra.mxu0 %v4342
    %5929 = vmatprep.subr.bf16.mxu0 0
    %5930 = vmatpush1.bf16.msra.mxu0 %v4343
    %5931 = vmatprep.subr.bf16.mxu0 0
    %5932 = vmatpush1.bf16.msra.mxu0 %v4344
    %5933 = vmatprep.subr.bf16.mxu0 0
    %5934 = vmatpush1.bf16.msra.mxu0 %v4345
    %5935 = vmatprep.subr.bf16.mxu0 0
    %5936 = vmatpush1.bf16.msra.mxu0 %v4346
    %5937 = vmatprep.subr.bf16.mxu0 0
    %5938 = vmatpush1.bf16.msra.mxu0 %v4347
    %5939 = vmatprep.subr.bf16.mxu0 0
    %5940 = vmatpush1.bf16.msra.mxu0 %v4348
    %5941 = vmatprep.subr.bf16.mxu0 0
    %5942 = vmatpush1.bf16.msra.mxu0 %v4349
    %5943 = vmatprep.subr.bf16.mxu0 0
    %5944 = vmatpush1.bf16.msra.mxu0 %v4350
    %5945 = vmatprep.subr.bf16.mxu0 0
    %5946 = vmatpush1.bf16.msra.mxu0 %v4351
    %5947 = vmatprep.subr.bf16.mxu0 0
    %5948 = vmatpush1.bf16.msra.mxu0 %v4352
    %5949 = vmatprep.subr.bf16.mxu0 0
    %5950 = vmatpush1.bf16.msra.mxu0 %v4353
    %5951 = vmatprep.subr.bf16.mxu0 0
    %5952 = vmatpush1.bf16.msra.mxu0 %v4354
    %5953 = vmatprep.subr.bf16.mxu0 0
    %5954 = vmatpush1.bf16.msra.mxu0 %v4355
    %5955 = vmatprep.subr.bf16.mxu0 0
    %5956 = vmatpush1.bf16.msra.mxu0 %v4356
    %5957 = vmatprep.mubr.bf16.mxu0 %v1476
    %5958 = vmatmul.mubr.bf16.gmra.mrb[0].mxu0 %v1462
    %v5959 = vpop.f32.mrb[0].mxu0
    %v5960 = vadd.f32 %v5920, %v5959
    %v5961 = vpop.f32.mrb[0].mxu0
    %v5962 = vpop.f32.mrb[0].mxu0
    %v5963 = vpop.f32.mrb[0].mxu0
    %5964 = vdwg.mxu0
    %5965 = vmatprep.subr.bf16.mxu0 0
    %5966 = vmatpush1.bf16.msra.mxu0 %v4357
    %5967 = vmatprep.subr.bf16.mxu0 0
    %5968 = vmatpush1.bf16.msra.mxu0 %v4358
    %5969 = vmatprep.subr.bf16.mxu0 0
    %5970 = vmatpush1.bf16.msra.mxu0 %v4359
    %5971 = vmatprep.subr.bf16.mxu0 0
    %5972 = vmatpush1.bf16.msra.mxu0 %v4360
    %5973 = vmatprep.subr.bf16.mxu0 0
    %5974 = vmatpush1.bf16.msra.mxu0 %v4361
    %5975 = vmatprep.subr.bf16.mxu0 0
    %5976 = vmatpush1.bf16.msra.mxu0 %v4362
    %5977 = vmatprep.subr.bf16.mxu0 0
    %5978 = vmatpush1.bf16.msra.mxu0 %v4363
    %5979 = vmatprep.subr.bf16.mxu0 0
    %5980 = vmatpush1.bf16.msra.mxu0 %v4364
    %5981 = vmatprep.subr.bf16.mxu0 0
    %5982 = vmatpush1.bf16.msra.mxu0 %v4365
    %5983 = vmatprep.subr.bf16.mxu0 0
    %5984 = vmatpush1.bf16.msra.mxu0 %v4366
    %5985 = vmatprep.subr.bf16.mxu0 0
    %5986 = vmatpush1.bf16.msra.mxu0 %v4367
    %5987 = vmatprep.subr.bf16.mxu0 0
    %5988 = vmatpush1.bf16.msra.mxu0 %v4368
    %5989 = vmatprep.subr.bf16.mxu0 0
    %5990 = vmatpush1.bf16.msra.mxu0 %v4369
    %5991 = vmatprep.subr.bf16.mxu0 0
    %5992 = vmatpush1.bf16.msra.mxu0 %v4370
    %5993 = vmatprep.subr.bf16.mxu0 0
    %5994 = vmatpush1.bf16.msra.mxu0 %v4371
    %5995 = vmatprep.subr.bf16.mxu0 0
    %5996 = vmatpush1.bf16.msra.mxu0 %v4372
    %5997 = vmatprep.mubr.bf16.mxu0 %v1480
    %5998 = vmatmul.mubr.bf16.gmra.mrb[0].mxu0 %v1478
    %v5999 = vpop.f32.mrb[0].mxu0
    %v6000 = vadd.f32 %v5960, %v5999
    %v6001 = vpop.f32.mrb[0].mxu0
    %v6002 = vpop.f32.mrb[0].mxu0
    %v6003 = vpop.f32.mrb[0].mxu0
    %6004 = vdwg.mxu0
    %6005 = vmatprep.subr.bf16.mxu0 0
    %6006 = vmatpush1.bf16.msra.mxu0 %v4373
    %6007 = vmatprep.subr.bf16.mxu0 0
    %6008 = vmatpush1.bf16.msra.mxu0 %v4374
    %6009 = vmatprep.subr.bf16.mxu0 0
    %6010 = vmatpush1.bf16.msra.mxu0 %v4375
    %6011 = vmatprep.subr.bf16.mxu0 0
    %6012 = vmatpush1.bf16.msra.mxu0 %v4376
    %6013 = vmatprep.subr.bf16.mxu0 0
    %6014 = vmatpush1.bf16.msra.mxu0 %v4377
    %6015 = vmatprep.subr.bf16.mxu0 0
    %6016 = vmatpush1.bf16.msra.mxu0 %v4378
    %6017 = vmatprep.subr.bf16.mxu0 0
    %6018 = vmatpush1.bf16.msra.mxu0 %v4379
    %6019 = vmatprep.subr.bf16.mxu0 0
    %6020 = vmatpush1.bf16.msra.mxu0 %v4380
    %6021 = vmatprep.subr.bf16.mxu0 0
    %6022 = vmatpush1.bf16.msra.mxu0 %v4381
    %6023 = vmatprep.subr.bf16.mxu0 0
    %6024 = vmatpush1.bf16.msra.mxu0 %v4382
    %6025 = vmatprep.subr.bf16.mxu0 0
    %6026 = vmatpush1.bf16.msra.mxu0 %v4383
    %6027 = vmatprep.subr.bf16.mxu0 0
    %6028 = vmatpush1.bf16.msra.mxu0 %v4384
    %6029 = vmatprep.subr.bf16.mxu0 0
    %6030 = vmatpush1.bf16.msra.mxu0 %v4385
    %6031 = vmatprep.subr.bf16.mxu0 0
    %6032 = vmatpush1.bf16.msra.mxu0 %v4386
    %6033 = vmatprep.subr.bf16.mxu0 0
    %6034 = vmatpush1.bf16.msra.mxu0 %v4387
    %6035 = vmatprep.subr.bf16.mxu0 0
    %6036 = vmatpush1.bf16.msra.mxu0 %v4388
    %6037 = vmatprep.mubr.bf16.mxu0 %v1518
    %6038 = vmatmul.mubr.bf16.gmra.mrb[0].mxu0 %v1504
    %v6039 = vpop.f32.mrb[0].mxu0
    %v6040 = vadd.f32 %v6000, %v6039
    %v6041 = vpop.f32.mrb[0].mxu0
    %v6042 = vpop.f32.mrb[0].mxu0
    %v6043 = vpop.f32.mrb[0].mxu0
    %6044 = vdwg.mxu0
    %6045 = vmatprep.subr.bf16.mxu0 0
    %6046 = vmatpush1.bf16.msra.mxu0 %v4389
    %6047 = vmatprep.subr.bf16.mxu0 0
    %6048 = vmatpush1.bf16.msra.mxu0 %v4390
    %6049 = vmatprep.subr.bf16.mxu0 0
    %6050 = vmatpush1.bf16.msra.mxu0 %v4391
    %6051 = vmatprep.subr.bf16.mxu0 0
    %6052 = vmatpush1.bf16.msra.mxu0 %v4392
    %6053 = vmatprep.subr.bf16.mxu0 0
    %6054 = vmatpush1.bf16.msra.mxu0 %v4393
    %6055 = vmatprep.subr.bf16.mxu0 0
    %6056 = vmatpush1.bf16.msra.mxu0 %v4394
    %6057 = vmatprep.subr.bf16.mxu0 0
    %6058 = vmatpush1.bf16.msra.mxu0 %v4395
    %6059 = vmatprep.subr.bf16.mxu0 0
    %6060 = vmatpush1.bf16.msra.mxu0 %v4396
    %6061 = vmatprep.subr.bf16.mxu0 0
    %6062 = vmatpush1.bf16.msra.mxu0 %v4397
    %6063 = vmatprep.subr.bf16.mxu0 0
    %6064 = vmatpush1.bf16.msra.mxu0 %v4398
    %6065 = vmatprep.subr.bf16.mxu0 0
    %6066 = vmatpush1.bf16.msra.mxu0 %v4399
    %6067 = vmatprep.subr.bf16.mxu0 0
    %6068 = vmatpush1.bf16.msra.mxu0 %v4400
    %6069 = vmatprep.subr.bf16.mxu0 0
    %6070 = vmatpush1.bf16.msra.mxu0 %v4401
    %6071 = vmatprep.subr.bf16.mxu0 0
    %6072 = vmatpush1.bf16.msra.mxu0 %v4402
    %6073 = vmatprep.subr.bf16.mxu0 0
    %6074 = vmatpush1.bf16.msra.mxu0 %v4403
    %6075 = vmatprep.subr.bf16.mxu0 0
    %6076 = vmatpush1.bf16.msra.mxu0 %v4404
    %6077 = vmatprep.mubr.bf16.mxu0 %v1528
    %6078 = vmatmul.mubr.bf16.gmra.mrb[0].mxu0 %v1526
    %v6079 = vpop.f32.mrb[0].mxu0
    %v6080 = vadd.f32 %v6040, %v6079
    %v6081 = vpop.f32.mrb[0].mxu0
    %v6082 = vpop.f32.mrb[0].mxu0
    %v6083 = vpop.f32.mrb[0].mxu0
    %6084 = vdwg.mxu0
    %6085 = vmatprep.subr.bf16.mxu0 0
    %6086 = vmatpush1.bf16.msra.mxu0 %v4405
    %6087 = vmatprep.subr.bf16.mxu0 0
    %6088 = vmatpush1.bf16.msra.mxu0 %v4406
    %6089 = vmatprep.subr.bf16.mxu0 0
    %6090 = vmatpush1.bf16.msra.mxu0 %v4407
    %6091 = vmatprep.subr.bf16.mxu0 0
    %6092 = vmatpush1.bf16.msra.mxu0 %v4408
    %6093 = vmatprep.subr.bf16.mxu0 0
    %6094 = vmatpush1.bf16.msra.mxu0 %v4409
    %6095 = vmatprep.subr.bf16.mxu0 0
    %6096 = vmatpush1.bf16.msra.mxu0 %v4410
    %6097 = vmatprep.subr.bf16.mxu0 0
    %6098 = vmatpush1.bf16.msra.mxu0 %v4411
    %6099 = vmatprep.subr.bf16.mxu0 0
    %6100 = vmatpush1.bf16.msra.mxu0 %v4412
    %6101 = vmatprep.subr.bf16.mxu0 0
    %6102 = vmatpush1.bf16.msra.mxu0 %v4413
    %6103 = vmatprep.subr.bf16.mxu0 0
    %6104 = vmatpush1.bf16.msra.mxu0 %v4414
    %6105 = vmatprep.subr.bf16.mxu0 0
    %6106 = vmatpush1.bf16.msra.mxu0 %v4415
    %6107 = vmatprep.subr.bf16.mxu0 0
    %6108 = vmatpush1.bf16.msra.mxu0 %v4416
    %6109 = vmatprep.subr.bf16.mxu0 0
    %6110 = vmatpush1.bf16.msra.mxu0 %v4417
    %6111 = vmatprep.subr.bf16.mxu0 0
    %6112 = vmatpush1.bf16.msra.mxu0 %v4418
    %6113 = vmatprep.subr.bf16.mxu0 0
    %6114 = vmatpush1.bf16.msra.mxu0 %v4419
    %6115 = vmatprep.subr.bf16.mxu0 0
    %6116 = vmatpush1.bf16.msra.mxu0 %v4420
    %6117 = vmatprep.mubr.bf16.mxu0 %v1525
    %6118 = vmatmul.mubr.bf16.gmra.mrb[0].mxu0 %v1511
    %v6119 = vpop.f32.mrb[0].mxu0
    %v6120 = vadd.f32 %v6080, %v6119
    %v6121 = vpop.f32.mrb[0].mxu0
    %v6122 = vpop.f32.mrb[0].mxu0
    %v6123 = vpop.f32.mrb[0].mxu0
    %6124 = vdwg.mxu0
    %6125 = vmatprep.subr.bf16.mxu0 0
    %6126 = vmatpush1.bf16.msra.mxu0 %v4421
    %6127 = vmatprep.subr.bf16.mxu0 0
    %6128 = vmatpush1.bf16.msra.mxu0 %v4422
    %6129 = vmatprep.subr.bf16.mxu0 0
    %6130 = vmatpush1.bf16.msra.mxu0 %v4423
    %6131 = vmatprep.subr.bf16.mxu0 0
    %6132 = vmatpush1.bf16.msra.mxu0 %v4424
    %6133 = vmatprep.subr.bf16.mxu0 0
    %6134 = vmatpush1.bf16.msra.mxu0 %v4425
    %6135 = vmatprep.subr.bf16.mxu0 0
    %6136 = vmatpush1.bf16.msra.mxu0 %v4426
    %6137 = vmatprep.subr.bf16.mxu0 0
    %6138 = vmatpush1.bf16.msra.mxu0 %v4427
    %6139 = vmatprep.subr.bf16.mxu0 0
    %6140 = vmatpush1.bf16.msra.mxu0 %v4428
    %6141 = vmatprep.subr.bf16.mxu0 0
    %6142 = vmatpush1.bf16.msra.mxu0 %v4429
    %6143 = vmatprep.subr.bf16.mxu0 0
    %6144 = vmatpush1.bf16.msra.mxu0 %v4430
    %6145 = vmatprep.subr.bf16.mxu0 0
    %6146 = vmatpush1.bf16.msra.mxu0 %v4431
    %6147 = vmatprep.subr.bf16.mxu0 0
    %6148 = vmatpush1.bf16.msra.mxu0 %v4432
    %6149 = vmatprep.subr.bf16.mxu0 0
    %6150 = vmatpush1.bf16.msra.mxu0 %v4433
    %6151 = vmatprep.subr.bf16.mxu0 0
    %6152 = vmatpush1.bf16.msra.mxu0 %v4434
    %6153 = vmatprep.subr.bf16.mxu0 0
    %6154 = vmatpush1.bf16.msra.mxu0 %v4435
    %6155 = vmatprep.subr.bf16.mxu0 0
    %6156 = vmatpush1.bf16.msra.mxu0 %v4436
    %6157 = vmatprep.mubr.bf16.mxu0 %v1529
    %6158 = vmatmul.mubr.bf16.gmra.mrb[0].mxu0 %v1527
    %v6159 = vpop.f32.mrb[0].mxu0
    %v6160 = vadd.f32 %v6120, %v6159
    %v6161 = vpop.f32.mrb[0].mxu0
    %v6162 = vpop.f32.mrb[0].mxu0
    %v6163 = vpop.f32.mrb[0].mxu0
    %6164 = vdwg.mxu0
    %6165 = vmatprep.subr.bf16.mxu0 0
    %6166 = vmatpush1.bf16.msra.mxu0 %v4437
    %6167 = vmatprep.subr.bf16.mxu0 0
    %6168 = vmatpush1.bf16.msra.mxu0 %v4438
    %6169 = vmatprep.subr.bf16.mxu0 0
    %6170 = vmatpush1.bf16.msra.mxu0 %v4439
    %6171 = vmatprep.subr.bf16.mxu0 0
    %6172 = vmatpush1.bf16.msra.mxu0 %v4440
    %6173 = vmatprep.subr.bf16.mxu0 0
    %6174 = vmatpush1.bf16.msra.mxu0 %v4441
    %6175 = vmatprep.subr.bf16.mxu0 0
    %6176 = vmatpush1.bf16.msra.mxu0 %v4442
    %6177 = vmatprep.subr.bf16.mxu0 0
    %6178 = vmatpush1.bf16.msra.mxu0 %v4443
    %6179 = vmatprep.subr.bf16.mxu0 0
    %6180 = vmatpush1.bf16.msra.mxu0 %v4444
    %6181 = vmatprep.subr.bf16.mxu0 0
    %6182 = vmatpush1.bf16.msra.mxu0 %v4445
    %6183 = vmatprep.subr.bf16.mxu0 0
    %6184 = vmatpush1.bf16.msra.mxu0 %v4446
    %6185 = vmatprep.subr.bf16.mxu0 0
    %6186 = vmatpush1.bf16.msra.mxu0 %v4447
    %6187 = vmatprep.subr.bf16.mxu0 0
    %6188 = vmatpush1.bf16.msra.mxu0 %v4448
    %6189 = vmatprep.subr.bf16.mxu0 0
    %6190 = vmatpush1.bf16.msra.mxu0 %v4449
    %6191 = vmatprep.subr.bf16.mxu0 0
    %6192 = vmatpush1.bf16.msra.mxu0 %v4450
    %6193 = vmatprep.subr.bf16.mxu0 0
    %6194 = vmatpush1.bf16.msra.mxu0 %v4451
    %6195 = vmatprep.subr.bf16.mxu0 0
    %6196 = vmatpush1.bf16.msra.mxu0 %v4452
    %6197 = vmatprep.mubr.bf16.mxu0 %v1567
    %6198 = vmatmul.mubr.bf16.gmra.mrb[0].mxu0 %v1553
    %v6199 = vpop.f32.mrb[0].mxu0
    %v6200 = vadd.f32 %v6160, %v6199
    %v6201 = vpop.f32.mrb[0].mxu0
    %v6202 = vpop.f32.mrb[0].mxu0
    %v6203 = vpop.f32.mrb[0].mxu0
    %6204 = vdwg.mxu0
    %6205 = vmatprep.subr.bf16.mxu0 0
    %6206 = vmatpush1.bf16.msra.mxu0 %v4453
    %6207 = vmatprep.subr.bf16.mxu0 0
    %6208 = vmatpush1.bf16.msra.mxu0 %v4454
    %6209 = vmatprep.subr.bf16.mxu0 0
    %6210 = vmatpush1.bf16.msra.mxu0 %v4455
    %6211 = vmatprep.subr.bf16.mxu0 0
    %6212 = vmatpush1.bf16.msra.mxu0 %v4456
    %6213 = vmatprep.subr.bf16.mxu0 0
    %6214 = vmatpush1.bf16.msra.mxu0 %v4457
    %6215 = vmatprep.subr.bf16.mxu0 0
    %6216 = vmatpush1.bf16.msra.mxu0 %v4458
    %6217 = vmatprep.subr.bf16.mxu0 0
    %6218 = vmatpush1.bf16.msra.mxu0 %v4459
    %6219 = vmatprep.subr.bf16.mxu0 0
    %6220 = vmatpush1.bf16.msra.mxu0 %v4460
    %6221 = vmatprep.subr.bf16.mxu0 0
    %6222 = vmatpush1.bf16.msra.mxu0 %v4461
    %6223 = vmatprep.subr.bf16.mxu0 0
    %6224 = vmatpush1.bf16.msra.mxu0 %v4462
    %6225 = vmatprep.subr.bf16.mxu0 0
    %6226 = vmatpush1.bf16.msra.mxu0 %v4463
    %6227 = vmatprep.subr.bf16.mxu0 0
    %6228 = vmatpush1.bf16.msra.mxu0 %v4464
    %6229 = vmatprep.subr.bf16.mxu0 0
    %6230 = vmatpush1.bf16.msra.mxu0 %v4465
    %6231 = vmatprep.subr.bf16.mxu0 0
    %6232 = vmatpush1.bf16.msra.mxu0 %v4466
    %6233 = vmatprep.subr.bf16.mxu0 0
    %6234 = vmatpush1.bf16.msra.mxu0 %v4467
    %6235 = vmatprep.subr.bf16.mxu0 0
    %6236 = vmatpush1.bf16.msra.mxu0 %v4468
    %6237 = vmatprep.mubr.bf16.mxu0 %v1577
    %6238 = vmatmul.mubr.bf16.gmra.mrb[0].mxu0 %v1575
    %v6239 = vpop.f32.mrb[0].mxu0
    %v6240 = vadd.f32 %v6200, %v6239
    %v6241 = vpop.f32.mrb[0].mxu0
    %v6242 = vpop.f32.mrb[0].mxu0
    %v6243 = vpop.f32.mrb[0].mxu0
    %6244 = vdwg.mxu0
    %6245 = vmatprep.subr.bf16.mxu0 0
    %6246 = vmatpush1.bf16.msra.mxu0 %v4469
    %6247 = vmatprep.subr.bf16.mxu0 0
    %6248 = vmatpush1.bf16.msra.mxu0 %v4470
    %6249 = vmatprep.subr.bf16.mxu0 0
    %6250 = vmatpush1.bf16.msra.mxu0 %v4471
    %6251 = vmatprep.subr.bf16.mxu0 0
    %6252 = vmatpush1.bf16.msra.mxu0 %v4472
    %6253 = vmatprep.subr.bf16.mxu0 0
    %6254 = vmatpush1.bf16.msra.mxu0 %v4473
    %6255 = vmatprep.subr.bf16.mxu0 0
    %6256 = vmatpush1.bf16.msra.mxu0 %v4474
    %6257 = vmatprep.subr.bf16.mxu0 0
    %6258 = vmatpush1.bf16.msra.mxu0 %v4475
    %6259 = vmatprep.subr.bf16.mxu0 0
    %6260 = vmatpush1.bf16.msra.mxu0 %v4476
    %6261 = vmatprep.subr.bf16.mxu0 0
    %6262 = vmatpush1.bf16.msra.mxu0 %v4477
    %6263 = vmatprep.subr.bf16.mxu0 0
    %6264 = vmatpush1.bf16.msra.mxu0 %v4478
    %6265 = vmatprep.subr.bf16.mxu0 0
    %6266 = vmatpush1.bf16.msra.mxu0 %v4479
    %6267 = vmatprep.subr.bf16.mxu0 0
    %6268 = vmatpush1.bf16.msra.mxu0 %v4480
    %6269 = vmatprep.subr.bf16.mxu0 0
    %6270 = vmatpush1.bf16.msra.mxu0 %v4481
    %6271 = vmatprep.subr.bf16.mxu0 0
    %6272 = vmatpush1.bf16.msra.mxu0 %v4482
    %6273 = vmatprep.subr.bf16.mxu0 0
    %6274 = vmatpush1.bf16.msra.mxu0 %v4483
    %6275 = vmatprep.subr.bf16.mxu0 0
    %6276 = vmatpush1.bf16.msra.mxu0 %v4484
    %6277 = vmatprep.mubr.bf16.mxu0 %v1574
    %6278 = vmatmul.mubr.bf16.gmra.mrb[0].mxu0 %v1560
    %v6279 = vpop.f32.mrb[0].mxu0
    %v6280 = vadd.f32 %v6240, %v6279
    %v6281 = vpop.f32.mrb[0].mxu0
    %v6282 = vpop.f32.mrb[0].mxu0
    %v6283 = vpop.f32.mrb[0].mxu0
    %6284 = vdwg.mxu0
    %6285 = vmatprep.subr.bf16.mxu0 0
    %6286 = vmatpush1.bf16.msra.mxu0 %v4485
    %6287 = vmatprep.subr.bf16.mxu0 0
    %6288 = vmatpush1.bf16.msra.mxu0 %v4486
    %6289 = vmatprep.subr.bf16.mxu0 0
    %6290 = vmatpush1.bf16.msra.mxu0 %v4487
    %6291 = vmatprep.subr.bf16.mxu0 0
    %6292 = vmatpush1.bf16.msra.mxu0 %v4488
    %6293 = vmatprep.subr.bf16.mxu0 0
    %6294 = vmatpush1.bf16.msra.mxu0 %v4489
    %6295 = vmatprep.subr.bf16.mxu0 0
    %6296 = vmatpush1.bf16.msra.mxu0 %v4490
    %6297 = vmatprep.subr.bf16.mxu0 0
    %6298 = vmatpush1.bf16.msra.mxu0 %v4491
    %6299 = vmatprep.subr.bf16.mxu0 0
    %6300 = vmatpush1.bf16.msra.mxu0 %v4492
    %6301 = vmatprep.subr.bf16.mxu0 0
    %6302 = vmatpush1.bf16.msra.mxu0 %v4493
    %6303 = vmatprep.subr.bf16.mxu0 0
    %6304 = vmatpush1.bf16.msra.mxu0 %v4494
    %6305 = vmatprep.subr.bf16.mxu0 0
    %6306 = vmatpush1.bf16.msra.mxu0 %v4495
    %6307 = vmatprep.subr.bf16.mxu0 0
    %6308 = vmatpush1.bf16.msra.mxu0 %v4496
    %6309 = vmatprep.subr.bf16.mxu0 0
    %6310 = vmatpush1.bf16.msra.mxu0 %v4497
    %6311 = vmatprep.subr.bf16.mxu0 0
    %6312 = vmatpush1.bf16.msra.mxu0 %v4498
    %6313 = vmatprep.subr.bf16.mxu0 0
    %6314 = vmatpush1.bf16.msra.mxu0 %v4499
    %6315 = vmatprep.subr.bf16.mxu0 0
    %6316 = vmatpush1.bf16.msra.mxu0 %v4500
    %6317 = vmatprep.mubr.bf16.mxu0 %v1578
    %6318 = vmatmul.mubr.bf16.gmra.mrb[0].mxu0 %v1576
    %v6319 = vpop.f32.mrb[0].mxu0
    %v6320 = vadd.f32 %v6280, %v6319
    %v6321 = vpop.f32.mrb[0].mxu0
    %v6322 = vpop.f32.mrb[0].mxu0
    %v6323 = vpop.f32.mrb[0].mxu0
    %6324 = vdwg.mxu0
    %6325 = vmatprep.subr.bf16.mxu0 0
    %6326 = vmatpush1.bf16.msra.mxu0 %v4501
    %6327 = vmatprep.subr.bf16.mxu0 0
    %6328 = vmatpush1.bf16.msra.mxu0 %v4502
    %6329 = vmatprep.subr.bf16.mxu0 0
    %6330 = vmatpush1.bf16.msra.mxu0 %v4503
    %6331 = vmatprep.subr.bf16.mxu0 0
    %6332 = vmatpush1.bf16.msra.mxu0 %v4504
    %6333 = vmatprep.subr.bf16.mxu0 0
    %6334 = vmatpush1.bf16.msra.mxu0 %v4505
    %6335 = vmatprep.subr.bf16.mxu0 0
    %6336 = vmatpush1.bf16.msra.mxu0 %v4506
    %6337 = vmatprep.subr.bf16.mxu0 0
    %6338 = vmatpush1.bf16.msra.mxu0 %v4507
    %6339 = vmatprep.subr.bf16.mxu0 0
    %6340 = vmatpush1.bf16.msra.mxu0 %v4508
    %6341 = vmatprep.subr.bf16.mxu0 0
    %6342 = vmatpush1.bf16.msra.mxu0 %v4509
    %6343 = vmatprep.subr.bf16.mxu0 0
    %6344 = vmatpush1.bf16.msra.mxu0 %v4510
    %6345 = vmatprep.subr.bf16.mxu0 0
    %6346 = vmatpush1.bf16.msra.mxu0 %v4511
    %6347 = vmatprep.subr.bf16.mxu0 0
    %6348 = vmatpush1.bf16.msra.mxu0 %v4512
    %6349 = vmatprep.subr.bf16.mxu0 0
    %6350 = vmatpush1.bf16.msra.mxu0 %v4513
    %6351 = vmatprep.subr.bf16.mxu0 0
    %6352 = vmatpush1.bf16.msra.mxu0 %v4514
    %6353 = vmatprep.subr.bf16.mxu0 0
    %6354 = vmatpush1.bf16.msra.mxu0 %v4515
    %6355 = vmatprep.subr.bf16.mxu0 0
    %6356 = vmatpush1.bf16.msra.mxu0 %v4516
    %6357 = vmatprep.mubr.bf16.mxu0 %v1616
    %6358 = vmatmul.mubr.bf16.gmra.mrb[0].mxu0 %v1602
    %v6359 = vpop.f32.mrb[0].mxu0
    %v6360 = vadd.f32 %v6320, %v6359
    %v6361 = vpop.f32.mrb[0].mxu0
    %v6362 = vpop.f32.mrb[0].mxu0
    %v6363 = vpop.f32.mrb[0].mxu0
    %6364 = vdwg.mxu0
    %6365 = vmatprep.subr.bf16.mxu0 0
    %6366 = vmatpush1.bf16.msra.mxu0 %v4517
    %6367 = vmatprep.subr.bf16.mxu0 0
    %6368 = vmatpush1.bf16.msra.mxu0 %v4518
    %6369 = vmatprep.subr.bf16.mxu0 0
    %6370 = vmatpush1.bf16.msra.mxu0 %v4519
    %6371 = vmatprep.subr.bf16.mxu0 0
    %6372 = vmatpush1.bf16.msra.mxu0 %v4520
    %6373 = vmatprep.subr.bf16.mxu0 0
    %6374 = vmatpush1.bf16.msra.mxu0 %v4521
    %6375 = vmatprep.subr.bf16.mxu0 0
    %6376 = vmatpush1.bf16.msra.mxu0 %v4522
    %6377 = vmatprep.subr.bf16.mxu0 0
    %6378 = vmatpush1.bf16.msra.mxu0 %v4523
    %6379 = vmatprep.subr.bf16.mxu0 0
    %6380 = vmatpush1.bf16.msra.mxu0 %v4524
    %6381 = vmatprep.subr.bf16.mxu0 0
    %6382 = vmatpush1.bf16.msra.mxu0 %v4525
    %6383 = vmatprep.subr.bf16.mxu0 0
    %6384 = vmatpush1.bf16.msra.mxu0 %v4526
    %6385 = vmatprep.subr.bf16.mxu0 0
    %6386 = vmatpush1.bf16.msra.mxu0 %v4527
    %6387 = vmatprep.subr.bf16.mxu0 0
    %6388 = vmatpush1.bf16.msra.mxu0 %v4528
    %6389 = vmatprep.subr.bf16.mxu0 0
    %6390 = vmatpush1.bf16.msra.mxu0 %v4529
    %6391 = vmatprep.subr.bf16.mxu0 0
    %6392 = vmatpush1.bf16.msra.mxu0 %v4530
    %6393 = vmatprep.subr.bf16.mxu0 0
    %6394 = vmatpush1.bf16.msra.mxu0 %v4531
    %6395 = vmatprep.subr.bf16.mxu0 0
    %6396 = vmatpush1.bf16.msra.mxu0 %v4532
    %6397 = vmatprep.mubr.bf16.mxu0 %v1626
    %6398 = vmatmul.mubr.bf16.gmra.mrb[0].mxu0 %v1624
    %v6399 = vpop.f32.mrb[0].mxu0
    %v6400 = vadd.f32 %v6360, %v6399
    %v6401 = vpop.f32.mrb[0].mxu0
    %v6402 = vpop.f32.mrb[0].mxu0
    %v6403 = vpop.f32.mrb[0].mxu0
    %6404 = vdwg.mxu0
    %6405 = vmatprep.subr.bf16.mxu0 0
    %6406 = vmatpush1.bf16.msra.mxu0 %v4533
    %6407 = vmatprep.subr.bf16.mxu0 0
    %6408 = vmatpush1.bf16.msra.mxu0 %v4534
    %6409 = vmatprep.subr.bf16.mxu0 0
    %6410 = vmatpush1.bf16.msra.mxu0 %v4535
    %6411 = vmatprep.subr.bf16.mxu0 0
    %6412 = vmatpush1.bf16.msra.mxu0 %v4536
    %6413 = vmatprep.subr.bf16.mxu0 0
    %6414 = vmatpush1.bf16.msra.mxu0 %v4537
    %6415 = vmatprep.subr.bf16.mxu0 0
    %6416 = vmatpush1.bf16.msra.mxu0 %v4538
    %6417 = vmatprep.subr.bf16.mxu0 0
    %6418 = vmatpush1.bf16.msra.mxu0 %v4539
    %6419 = vmatprep.subr.bf16.mxu0 0
    %6420 = vmatpush1.bf16.msra.mxu0 %v4540
    %6421 = vmatprep.subr.bf16.mxu0 0
    %6422 = vmatpush1.bf16.msra.mxu0 %v4541
    %6423 = vmatprep.subr.bf16.mxu0 0
    %6424 = vmatpush1.bf16.msra.mxu0 %v4542
    %6425 = vmatprep.subr.bf16.mxu0 0
    %6426 = vmatpush1.bf16.msra.mxu0 %v4543
    %6427 = vmatprep.subr.bf16.mxu0 0
    %6428 = vmatpush1.bf16.msra.mxu0 %v4544
    %6429 = vmatprep.subr.bf16.mxu0 0
    %6430 = vmatpush1.bf16.msra.mxu0 %v4545
    %6431 = vmatprep.subr.bf16.mxu0 0
    %6432 = vmatpush1.bf16.msra.mxu0 %v4546
    %6433 = vmatprep.subr.bf16.mxu0 0
    %6434 = vmatpush1.bf16.msra.mxu0 %v4547
    %6435 = vmatprep.subr.bf16.mxu0 0
    %6436 = vmatpush1.bf16.msra.mxu0 %v4548
    %6437 = vmatprep.mubr.bf16.mxu0 %v1623
    %6438 = vmatmul.mubr.bf16.gmra.mrb[0].mxu0 %v1609
    %v6439 = vpop.f32.mrb[0].mxu0
    %v6440 = vadd.f32 %v6400, %v6439
    %v6441 = vpop.f32.mrb[0].mxu0
    %v6442 = vpop.f32.mrb[0].mxu0
    %v6443 = vpop.f32.mrb[0].mxu0
    %6444 = vdwg.mxu0
    %6445 = vmatprep.subr.bf16.mxu0 0
    %6446 = vmatpush1.bf16.msra.mxu0 %v4549
    %6447 = vmatprep.subr.bf16.mxu0 0
    %6448 = vmatpush1.bf16.msra.mxu0 %v4550
    %6449 = vmatprep.subr.bf16.mxu0 0
    %6450 = vmatpush1.bf16.msra.mxu0 %v4551
    %6451 = vmatprep.subr.bf16.mxu0 0
    %6452 = vmatpush1.bf16.msra.mxu0 %v4552
    %6453 = vmatprep.subr.bf16.mxu0 0
    %6454 = vmatpush1.bf16.msra.mxu0 %v4553
    %6455 = vmatprep.subr.bf16.mxu0 0
    %6456 = vmatpush1.bf16.msra.mxu0 %v4554
    %6457 = vmatprep.subr.bf16.mxu0 0
    %6458 = vmatpush1.bf16.msra.mxu0 %v4555
    %6459 = vmatprep.subr.bf16.mxu0 0
    %6460 = vmatpush1.bf16.msra.mxu0 %v4556
    %6461 = vmatprep.subr.bf16.mxu0 0
    %6462 = vmatpush1.bf16.msra.mxu0 %v4557
    %6463 = vmatprep.subr.bf16.mxu0 0
    %6464 = vmatpush1.bf16.msra.mxu0 %v4558
    %6465 = vmatprep.subr.bf16.mxu0 0
    %6466 = vmatpush1.bf16.msra.mxu0 %v4559
    %6467 = vmatprep.subr.bf16.mxu0 0
    %6468 = vmatpush1.bf16.msra.mxu0 %v4560
    %6469 = vmatprep.subr.bf16.mxu0 0
    %6470 = vmatpush1.bf16.msra.mxu0 %v4561
    %6471 = vmatprep.subr.bf16.mxu0 0
    %6472 = vmatpush1.bf16.msra.mxu0 %v4562
    %6473 = vmatprep.subr.bf16.mxu0 0
    %6474 = vmatpush1.bf16.msra.mxu0 %v4563
    %6475 = vmatprep.subr.bf16.mxu0 0
    %6476 = vmatpush1.bf16.msra.mxu0 %v4564
    %6477 = vmatprep.mubr.bf16.mxu0 %v1627
    %6478 = vmatmul.mubr.bf16.gmra.mrb[0].mxu0 %v1625
    %v6479 = vpop.f32.mrb[0].mxu0
    %v6480 = vadd.f32 %v6440, %v6479
    %v6481 = vpop.f32.mrb[0].mxu0
    %v6482 = vpop.f32.mrb[0].mxu0
    %v6483 = vpop.f32.mrb[0].mxu0
    %6484 = vdwg.mxu0
    %6485 = vmatprep.subr.bf16.mxu0 0
    %6486 = vmatpush1.bf16.msra.mxu0 %v4565
    %6487 = vmatprep.subr.bf16.mxu0 0
    %6488 = vmatpush1.bf16.msra.mxu0 %v4566
    %6489 = vmatprep.subr.bf16.mxu0 0
    %6490 = vmatpush1.bf16.msra.mxu0 %v4567
    %6491 = vmatprep.subr.bf16.mxu0 0
    %6492 = vmatpush1.bf16.msra.mxu0 %v4568
    %6493 = vmatprep.subr.bf16.mxu0 0
    %6494 = vmatpush1.bf16.msra.mxu0 %v4569
    %6495 = vmatprep.subr.bf16.mxu0 0
    %6496 = vmatpush1.bf16.msra.mxu0 %v4570
    %6497 = vmatprep.subr.bf16.mxu0 0
    %6498 = vmatpush1.bf16.msra.mxu0 %v4571
    %6499 = vmatprep.subr.bf16.mxu0 0
    %6500 = vmatpush1.bf16.msra.mxu0 %v4572
    %6501 = vmatprep.subr.bf16.mxu0 0
    %6502 = vmatpush1.bf16.msra.mxu0 %v4573
    %6503 = vmatprep.subr.bf16.mxu0 0
    %6504 = vmatpush1.bf16.msra.mxu0 %v4574
    %6505 = vmatprep.subr.bf16.mxu0 0
    %6506 = vmatpush1.bf16.msra.mxu0 %v4575
    %6507 = vmatprep.subr.bf16.mxu0 0
    %6508 = vmatpush1.bf16.msra.mxu0 %v4576
    %6509 = vmatprep.subr.bf16.mxu0 0
    %6510 = vmatpush1.bf16.msra.mxu0 %v4577
    %6511 = vmatprep.subr.bf16.mxu0 0
    %6512 = vmatpush1.bf16.msra.mxu0 %v4578
    %6513 = vmatprep.subr.bf16.mxu0 0
    %6514 = vmatpush1.bf16.msra.mxu0 %v4579
    %6515 = vmatprep.subr.bf16.mxu0 0
    %6516 = vmatpush1.bf16.msra.mxu0 %v4580
    %6517 = vmatprep.mubr.bf16.mxu0 %v1665
    %6518 = vmatmul.mubr.bf16.gmra.mrb[0].mxu0 %v1651
    %v6519 = vpop.f32.mrb[0].mxu0
    %v6520 = vadd.f32 %v6480, %v6519
    %v6521 = vpop.f32.mrb[0].mxu0
    %v6522 = vpop.f32.mrb[0].mxu0
    %v6523 = vpop.f32.mrb[0].mxu0
    %6524 = vdwg.mxu0
    %6525 = vmatprep.subr.bf16.mxu0 0
    %6526 = vmatpush1.bf16.msra.mxu0 %v4581
    %6527 = vmatprep.subr.bf16.mxu0 0
    %6528 = vmatpush1.bf16.msra.mxu0 %v4582
    %6529 = vmatprep.subr.bf16.mxu0 0
    %6530 = vmatpush1.bf16.msra.mxu0 %v4583
    %6531 = vmatprep.subr.bf16.mxu0 0
    %6532 = vmatpush1.bf16.msra.mxu0 %v4584
    %6533 = vmatprep.subr.bf16.mxu0 0
    %6534 = vmatpush1.bf16.msra.mxu0 %v4585
    %6535 = vmatprep.subr.bf16.mxu0 0
    %6536 = vmatpush1.bf16.msra.mxu0 %v4586
    %6537 = vmatprep.subr.bf16.mxu0 0
    %6538 = vmatpush1.bf16.msra.mxu0 %v4587
    %6539 = vmatprep.subr.bf16.mxu0 0
    %6540 = vmatpush1.bf16.msra.mxu0 %v4588
    %6541 = vmatprep.subr.bf16.mxu0 0
    %6542 = vmatpush1.bf16.msra.mxu0 %v4589
    %6543 = vmatprep.subr.bf16.mxu0 0
    %6544 = vmatpush1.bf16.msra.mxu0 %v4590
    %6545 = vmatprep.subr.bf16.mxu0 0
    %6546 = vmatpush1.bf16.msra.mxu0 %v4591
    %6547 = vmatprep.subr.bf16.mxu0 0
    %6548 = vmatpush1.bf16.msra.mxu0 %v4592
    %6549 = vmatprep.subr.bf16.mxu0 0
    %6550 = vmatpush1.bf16.msra.mxu0 %v4593
    %6551 = vmatprep.subr.bf16.mxu0 0
    %6552 = vmatpush1.bf16.msra.mxu0 %v4594
    %6553 = vmatprep.subr.bf16.mxu0 0
    %6554 = vmatpush1.bf16.msra.mxu0 %v4595
    %6555 = vmatprep.subr.bf16.mxu0 0
    %6556 = vmatpush1.bf16.msra.mxu0 %v4596
    %6557 = vmatprep.mubr.bf16.mxu0 %v1675
    %6558 = vmatmul.mubr.bf16.gmra.mrb[0].mxu0 %v1673
    %v6559 = vpop.f32.mrb[0].mxu0
    %v6560 = vadd.f32 %v6520, %v6559
    %v6561 = vpop.f32.mrb[0].mxu0
    %v6562 = vpop.f32.mrb[0].mxu0
    %v6563 = vpop.f32.mrb[0].mxu0
    %6564 = vdwg.mxu0
    %6565 = vmatprep.subr.bf16.mxu0 0
    %6566 = vmatpush1.bf16.msra.mxu0 %v4597
    %6567 = vmatprep.subr.bf16.mxu0 0
    %6568 = vmatpush1.bf16.msra.mxu0 %v4598
    %6569 = vmatprep.subr.bf16.mxu0 0
    %6570 = vmatpush1.bf16.msra.mxu0 %v4599
    %6571 = vmatprep.subr.bf16.mxu0 0
    %6572 = vmatpush1.bf16.msra.mxu0 %v4600
    %6573 = vmatprep.subr.bf16.mxu0 0
    %6574 = vmatpush1.bf16.msra.mxu0 %v4601
    %6575 = vmatprep.subr.bf16.mxu0 0
    %6576 = vmatpush1.bf16.msra.mxu0 %v4602
    %6577 = vmatprep.subr.bf16.mxu0 0
    %6578 = vmatpush1.bf16.msra.mxu0 %v4603
    %6579 = vmatprep.subr.bf16.mxu0 0
    %6580 = vmatpush1.bf16.msra.mxu0 %v4604
    %6581 = vmatprep.subr.bf16.mxu0 0
    %6582 = vmatpush1.bf16.msra.mxu0 %v4605
    %6583 = vmatprep.subr.bf16.mxu0 0
    %6584 = vmatpush1.bf16.msra.mxu0 %v4606
    %6585 = vmatprep.subr.bf16.mxu0 0
    %6586 = vmatpush1.bf16.msra.mxu0 %v4607
    %6587 = vmatprep.subr.bf16.mxu0 0
    %6588 = vmatpush1.bf16.msra.mxu0 %v4608
    %6589 = vmatprep.subr.bf16.mxu0 0
    %6590 = vmatpush1.bf16.msra.mxu0 %v4609
    %6591 = vmatprep.subr.bf16.mxu0 0
    %6592 = vmatpush1.bf16.msra.mxu0 %v4610
    %6593 = vmatprep.subr.bf16.mxu0 0
    %6594 = vmatpush1.bf16.msra.mxu0 %v4611
    %6595 = vmatprep.subr.bf16.mxu0 0
    %6596 = vmatpush1.bf16.msra.mxu0 %v4612
    %6597 = vmatprep.mubr.bf16.mxu0 %v1672
    %6598 = vmatmul.mubr.bf16.gmra.mrb[0].mxu0 %v1658
    %v6599 = vpop.f32.mrb[0].mxu0
    %v6600 = vadd.f32 %v6560, %v6599
    %v6601 = vpop.f32.mrb[0].mxu0
    %v6602 = vpop.f32.mrb[0].mxu0
    %v6603 = vpop.f32.mrb[0].mxu0
    %6604 = vdwg.mxu0
    %6605 = vmatprep.subr.bf16.mxu0 0
    %6606 = vmatpush1.bf16.msra.mxu0 %v4613
    %6607 = vmatprep.subr.bf16.mxu0 0
    %6608 = vmatpush1.bf16.msra.mxu0 %v4614
    %6609 = vmatprep.subr.bf16.mxu0 0
    %6610 = vmatpush1.bf16.msra.mxu0 %v4615
    %6611 = vmatprep.subr.bf16.mxu0 0
    %6612 = vmatpush1.bf16.msra.mxu0 %v4616
    %6613 = vmatprep.subr.bf16.mxu0 0
    %6614 = vmatpush1.bf16.msra.mxu0 %v4617
    %6615 = vmatprep.subr.bf16.mxu0 0
    %6616 = vmatpush1.bf16.msra.mxu0 %v4618
    %6617 = vmatprep.subr.bf16.mxu0 0
    %6618 = vmatpush1.bf16.msra.mxu0 %v4619
    %6619 = vmatprep.subr.bf16.mxu0 0
    %6620 = vmatpush1.bf16.msra.mxu0 %v4620
    %6621 = vmatprep.subr.bf16.mxu0 0
    %6622 = vmatpush1.bf16.msra.mxu0 %v4621
    %6623 = vmatprep.subr.bf16.mxu0 0
    %6624 = vmatpush1.bf16.msra.mxu0 %v4622
    %6625 = vmatprep.subr.bf16.mxu0 0
    %6626 = vmatpush1.bf16.msra.mxu0 %v4623
    %6627 = vmatprep.subr.bf16.mxu0 0
    %6628 = vmatpush1.bf16.msra.mxu0 %v4624
    %6629 = vmatprep.subr.bf16.mxu0 0
    %6630 = vmatpush1.bf16.msra.mxu0 %v4625
    %6631 = vmatprep.subr.bf16.mxu0 0
    %6632 = vmatpush1.bf16.msra.mxu0 %v4626
    %6633 = vmatprep.subr.bf16.mxu0 0
    %6634 = vmatpush1.bf16.msra.mxu0 %v4627
    %6635 = vmatprep.subr.bf16.mxu0 0
    %6636 = vmatpush1.bf16.msra.mxu0 %v4628
    %6637 = vmatprep.mubr.bf16.mxu0 %v1676
    %6638 = vmatmul.mubr.bf16.gmra.mrb[0].mxu0 %v1674
    %v6639 = vpop.f32.mrb[0].mxu0
    %v6640 = vadd.f32 %v6600, %v6639
    %v6641 = vpop.f32.mrb[0].mxu0
    %v6642 = vpop.f32.mrb[0].mxu0
    %v6643 = vpop.f32.mrb[0].mxu0
    %6644 = vdwg.mxu0
    %v6645 = vmax.f32 %v6640, 0.0
    %v6646 = vpack.c.bf16 %v6645, %v6645
    %v6647 = vld [vmem:[%s3] sm:$0xf]
    %v6648 = vld [vmem:[%s3 + $0x4] sm:$0xf]
    %v6649 = vld [vmem:[%s3 + $0x8] sm:$0xf]
    %v6650 = vld [vmem:[%s3 + $0xc] sm:$0xf]
    %v6651 = vld [vmem:[%s3 + $0x10] sm:$0xf]
    %v6652 = vld [vmem:[%s3 + $0x14] sm:$0xf]
    %v6653 = vld [vmem:[%s3 + $0x18] sm:$0xf]
    %v6654 = vld [vmem:[%s3 + $0x1c] sm:$0xf]
    %v6655 = vld [vmem:[%s3 + $0x20] sm:$0xf]
    %v6656 = vld [vmem:[%s3 + $0x24] sm:$0xf]
    %v6657 = vld [vmem:[%s3 + $0x28] sm:$0xf]
    %v6658 = vld [vmem:[%s3 + $0x2c] sm:$0xf]
    %v6659 = vld [vmem:[%s3 + $0x30] sm:$0xf]
    %v6660 = vld [vmem:[%s3 + $0x34] sm:$0xf]
    %v6661 = vld [vmem:[%s3 + $0x38] sm:$0xf]
    %v6662 = vld [vmem:[%s3 + $0x3c] sm:$0xf]
    %v6663 = vld [vmem:[#allocation7] sm:$0x1]
    %v6665 = vlaneseq
    %v6666 = vshrl.u32 %v6665, 7
    %v6667 = vsub.s32 0, %v6666
    %v6668 = vrot.slane %v6663, %v6667
    %v6686 = vunpack.c.l.b16 %v6647
    %v6687 = vunpack.c.l.b16 %v6648
    %v6688 = vunpack.c.l.b16 %v6649
    %v6689 = vunpack.c.l.b16 %v6650
    %v6690 = vunpack.c.l.b16 %v6651
    %v6691 = vunpack.c.l.b16 %v6652
    %v6692 = vunpack.c.l.b16 %v6653
    %v6693 = vunpack.c.l.b16 %v6654
    %v6694 = vunpack.c.l.b16 %v6655
    %v6695 = vunpack.c.l.b16 %v6656
    %v6696 = vunpack.c.l.b16 %v6657
    %v6697 = vunpack.c.l.b16 %v6658
    %v6698 = vunpack.c.l.b16 %v6659
    %v6699 = vunpack.c.l.b16 %v6660
    %v6700 = vunpack.c.l.b16 %v6661
    %v6701 = vunpack.c.l.b16 %v6662
    %v6702 = vpack.c.b16 %v6687, %v6686
    %v6703 = vpack.c.b16 %v6689, %v6688
    %v6704 = vpack.c.b16 %v6691, %v6690
    %v6705 = vpack.c.b16 %v6693, %v6692
    %v6706 = vpack.c.b16 %v6695, %v6694
    %v6707 = vpack.c.b16 %v6697, %v6696
    %v6708 = vpack.c.b16 %v6699, %v6698
    %v6709 = vpack.c.b16 %v6701, %v6700
    %6718 = vmatprep.subr.bf16.mxu0 0
    %6719 = vmatpush1.bf16.msra.mxu0 %v6702
    %6720 = vmatprep.subr.bf16.mxu0 0
    %6721 = vmatpush1.bf16.msra.mxu0 %v6703
    %6722 = vmatprep.subr.bf16.mxu0 0
    %6723 = vmatpush1.bf16.msra.mxu0 %v6704
    %6724 = vmatprep.subr.bf16.mxu0 0
    %6725 = vmatpush1.bf16.msra.mxu0 %v6705
    %6726 = vmatprep.subr.bf16.mxu0 0
    %6727 = vmatpush1.bf16.msra.mxu0 %v6706
    %6728 = vmatprep.subr.bf16.mxu0 0
    %6729 = vmatpush1.bf16.msra.mxu0 %v6707
    %6730 = vmatprep.subr.bf16.mxu0 0
    %6731 = vmatpush1.bf16.msra.mxu0 %v6708
    %6732 = vmatprep.subr.bf16.mxu0 0
    %6733 = vmatpush1.bf16.msra.mxu0 %v6709
    %6734 = vmatprep.subr.bf16.mxu0 0
    %6735 = vmatpush1.bf16.msra.mxu0 0
    %6736 = vmatprep.subr.bf16.mxu0 0
    %6737 = vmatpush1.bf16.msra.mxu0 0
    %6738 = vmatprep.subr.bf16.mxu0 0
    %6739 = vmatpush1.bf16.msra.mxu0 0
    %6740 = vmatprep.subr.bf16.mxu0 0
    %6741 = vmatpush1.bf16.msra.mxu0 0
    %6742 = vmatprep.subr.bf16.mxu0 0
    %6743 = vmatpush1.bf16.msra.mxu0 0
    %6744 = vmatprep.subr.bf16.mxu0 0
    %6745 = vmatpush1.bf16.msra.mxu0 0
    %6746 = vmatprep.subr.bf16.mxu0 0
    %6747 = vmatpush1.bf16.msra.mxu0 0
    %6748 = vmatprep.subr.bf16.mxu0 0
    %6749 = vmatpush1.bf16.msra.mxu0 0
    %6750 = vmatprep.mubr.bf16.mxu0 0
    %6751 = vmatmul.mubr.bf16.gmra.mrb[0].mxu0 %v6646
    %v6752 = vpop.f32.mrb[0].mxu0
    %v6753 = vadd.f32 %v6668, %v6752
    %v6754 = vpop.f32.mrb[0].mxu0
    %v6755 = vpop.f32.mrb[0].mxu0
    %v6756 = vpop.f32.mrb[0].mxu0
    %6757 = vdwg.mxu0
    %vm6758 = vcmask 74752
    %v6759 = vsel %vm6758, %v6753, -inf
    %6760 = vmax.xlane.f32.xlu0 %v6759
    %v6761 = vpop.xlane.xlu0 %6760
    %v6762 = vsub.f32 %v6753, %v6761
    %v6763 = vmul.f32 %v6762, 1.442695
    %v6764 = vpow.pop %v6763
    %v6765 = vsel %vm6758, %v6764, 0.0
    %6766 = vadd.xlane.f32.xlu0 %v6765
    %v6767 = vpop.xlane.xlu0 %6766
    %v6768 = vlog2.pop %v6767
    %v6769 = vmul.f32 %v6768, 0.6931472
    %v6770 = vsub.f32 %v6762, %v6769
    %6771 = vst.msk [vmem:[#allocation8] sm:$0x3] %vm6758, %v6770
    // Predicated region
    $region34: #{net_forward.3} parent=1 // pred_check
      _
    $region35: #{net_forward.3} parent=1 // pred_check_branch
      %6773 = sbr.rel (0) target = $region37
    $region36: #{net_forward.3} parent=1 // pred_region
      %s6775 = ssub.s32 32, 32
      %6776 = vsyncadd [#allocation4], %s6775
      %s6778 = sshll.u32 [#allocation8], 4
      %s6779 = int_to_ptr.vmem [resolvable:$true] %s6778
      %6781 = dma.vmem_to_hbm [thread:$0]  %s6779, 32, %s5, [#allocation4]
    $region37: #{net_forward.3} parent=1 // pred_fallthru
      _
    // Predicated region
    $region38: #{net_forward.3} parent=1 // pred_check
      _
    $region39: #{net_forward.3} parent=1 // pred_check_branch
      %6783 = sbr.rel (0) target = $region41
    $region40: #{net_forward.3} parent=1 // pred_region
      %6784 = dma.done [#allocation4], 32
    $region41: #{net_forward.3} parent=1 // pred_fallthru
      _
    %6785 = vsyncpa [#allocation3], 1
    %6786 = vsyncpa [#allocation6], 1
    %6787 = vsyncpa [#allocation4], 1

// kernel: net_forward.2
$region0: #{net_forward.2}
  #allocation0 [shape = 'u32[]', space=smem, size = 0x4, offset = 0x4, fixed_abs, tag = 'smem constant byte address 0x4 - core index']
  #allocation1 [shape = 'u32[144,128]{1,0:T(1,128)}', space=vmem, size = 0x12000, scoped, tag = 'internal scratch']
  #allocation2 [shape = 'f32[9,726]{1,0:T(8,128)}', space=vmem, size = 0xc000, scoped, tag = 'scratch operand']
  #allocation3 [shape = 'bf16[288,668]{1,0:T(16,128)(2,1)}', space=vmem, size = 0x6c000, scoped, tag = 'scratch operand']
  #allocation4 [shape = 'bf16[64,668]{1,0:T(16,128)(2,1)}', space=vmem, size = 0x18000, scoped, tag = 'scratch operand']
  %s0 = inlined_call_operand.vmem [shape: f32[2,784], index: 0, kind: input, shape index: {}]
  %s1 = inlined_call_operand.vmem [shape: f32[32,9], index: 1, kind: input, shape index: {}]
  %s2 = inlined_call_operand.vmem [shape: f32[32,1], index: 2, kind: input, shape index: {}]
  %s3 = inlined_call_operand.hbm [shape: bf16[64,288], index: 3, kind: input, shape index: {}]
  %s4 = inlined_call_operand.vmem [shape: f32[64,1], index: 4, kind: input, shape index: {}]
  %s5 = inlined_call_operand.vmem [shape: bf16[639,144], index: 5, kind: input, shape index: {}]
  %s6 = inlined_call_operand.vmem [shape: bf16[2,64,144], index: 6, kind: output, shape index: {}]
  %s7 = sld [smem:[#allocation0]]
  $region38: #{net_forward.2} parent=0
    _
  %s9 = ssub.s32 1, %s7
  %s10 = scalar_select 0, %s9, %s7
  $region1: #{net_forward.2} parent=0
    #allocation5 [shape = 'u8[49152]{0}', space=vmem, size = 0xc000, scoped, tag = 'input window, operand 3, single buffered']
    #allocation6 [shape = 's32[1]{0}', space=sflag, size = 0x4, scoped, tag = 'scoped memory for net_forward.2']
    %11 = vsyncpa [#allocation6], 0
    // Predicated region
    $region2: #{net_forward.2} parent=1 // pred_check
      _
    $region3: #{net_forward.2} parent=1 // pred_check_branch
      %13 = sbr.rel (0) target = $region5
    $region4: #{net_forward.2} parent=1 // pred_region
      _
    $region5: #{net_forward.2} parent=1 // pred_fallthru
      _
    // Predicated region
    $region6: #{net_forward.2} parent=1 // pred_check
      _
    $region7: #{net_forward.2} parent=1 // pred_check_branch
      %15 = sbr.rel (0) target = $region9
    $region8: #{net_forward.2} parent=1 // pred_region
      _
    $region9: #{net_forward.2} parent=1 // pred_fallthru
      _
    // Predicated region
    $region10: #{net_forward.2} parent=1 // pred_check
      _
    $region11: #{net_forward.2} parent=1 // pred_check_branch
      %17 = sbr.rel (0) target = $region13
    $region12: #{net_forward.2} parent=1 // pred_region
      _
    $region13: #{net_forward.2} parent=1 // pred_fallthru
      _
    // Predicated region
    $region14: #{net_forward.2} parent=1 // pred_check
      _
    $region15: #{net_forward.2} parent=1 // pred_check_branch
      %19 = sbr.rel (0) target = $region17
    $region16: #{net_forward.2} parent=1 // pred_region
      %s21 = ssub.s32 1536, 1536
      %22 = vsyncadd [#allocation6], %s21
      %s23 = sshll.u32 [#allocation5], 4
      %s24 = int_to_ptr.vmem [resolvable:$true] %s23
      %29 = dma.hbm_to_vmem [thread:$0]  %s3, 1536, %s24, [#allocation6], 192, 192, 12
    $region17: #{net_forward.2} parent=1 // pred_fallthru
      _
    // Predicated region
    $region18: #{net_forward.2} parent=1 // pred_check
      _
    $region19: #{net_forward.2} parent=1 // pred_check_branch
      %31 = sbr.rel (0) target = $region21
    $region20: #{net_forward.2} parent=1 // pred_region
      _
    $region21: #{net_forward.2} parent=1 // pred_fallthru
      _
    // Predicated region
    $region22: #{net_forward.2} parent=1 // pred_check
      _
    $region23: #{net_forward.2} parent=1 // pred_check_branch
      %33 = sbr.rel (0) target = $region25
    $region24: #{net_forward.2} parent=1 // pred_region
      _
    $region25: #{net_forward.2} parent=1 // pred_fallthru
      _
    // Predicated region
    $region26: #{net_forward.2} parent=1 // pred_check
      _
    $region27: #{net_forward.2} parent=1 // pred_check_branch
      %35 = sbr.rel (0) target = $region29
    $region28: #{net_forward.2} parent=1 // pred_region
      %36 = dma.done [#allocation6], 1536
    $region29: #{net_forward.2} parent=1 // pred_fallthru
      _
    %v38 = vld [vmem:[%s0] ss:$2 sm:$0x7f]
    %v39 = vlaneseq
    %vm40 = vcmp.ge.s32.totalorder %v39, 0
    %vm41 = vcmp.lt.s32.totalorder %v39, 726
    %vm42 = vmand %vm40, %vm41
    %43 = vst.msk [vmem:[#allocation2] ss:$8 sm:$0xf] %vm42, %v38
    %44 = vst.msk [vmem:[#allocation2] ss:$8 sm:$0x30] %vm42, %v38
    %46 = vrot.lane.b32.xlu0 %v38, 127
    %v47 = vpop.permute.xlu0 %46
    %v48 = vrot.slane %v47, 1
    %vm49 = vcmask 1039360
    %v50 = vsel %vm49, %v47, %v48
    %s52 = scalar_lea.vmem [#allocation2], 1
    %53 = vst.msk [vmem:[%s52] ss:$8 sm:$0xf] %vm42, %v50
    %54 = vst.msk [vmem:[%s52] ss:$8 sm:$0x30] %vm42, %v50
    %55 = vrot.lane.b32.xlu0 %v38, 126
    %v56 = vpop.permute.xlu0 %55
    %v57 = vrot.slane %v56, 1
    %vm58 = vcmask 1031168
    %v59 = vsel %vm58, %v56, %v57
    %s61 = scalar_lea.vmem [#allocation2], 2
    %62 = vst.msk [vmem:[%s61] ss:$8 sm:$0xf] %vm42, %v59
    %63 = vst.msk [vmem:[%s61] ss:$8 sm:$0x30] %vm42, %v59
    %64 = vrot.lane.b32.xlu0 %v38, 100
    %v65 = vpop.permute.xlu0 %64
    %v66 = vrot.slane %v65, 1
    %vm67 = vcmask 818176
    %v68 = vsel %vm67, %v65, %v66
    %s70 = scalar_lea.vmem [#allocation2], 3
    %71 = vst.msk [vmem:[%s70] ss:$8 sm:$0xf] %vm42, %v68
    %72 = vst.msk [vmem:[%s70] ss:$8 sm:$0x30] %vm42, %v68
    %73 = vrot.lane.b32.xlu0 %v38, 99
    %v74 = vpop.permute.xlu0 %73
    %v75 = vrot.slane %v74, 1
    %vm76 = vcmask 809984
    %v77 = vsel %vm76, %v74, %v75
    %s79 = scalar_lea.vmem [#allocation2], 4
    %80 = vst.msk [vmem:[%s79] ss:$8 sm:$0xf] %vm42, %v77
    %81 = vst.msk [vmem:[%s79] ss:$8 sm:$0x30] %vm42, %v77
    %82 = vrot.lane.b32.xlu0 %v38, 98
    %v83 = vpop.permute.xlu0 %82
    %v84 = vrot.slane %v83, 1
    %vm85 = vcmask 801792
    %v86 = vsel %vm85, %v83, %v84
    %s88 = scalar_lea.vmem [#allocation2], 5
    %89 = vst.msk [vmem:[%s88] ss:$8 sm:$0xf] %vm42, %v86
    %90 = vst.msk [vmem:[%s88] ss:$8 sm:$0x30] %vm42, %v86
    %91 = vrot.lane.b32.xlu0 %v38, 72
    %v92 = vpop.permute.xlu0 %91
    %v93 = vrot.slane %v92, 1
    %vm94 = vcmask 588800
    %v95 = vsel %vm94, %v92, %v93
    %s97 = scalar_lea.vmem [#allocation2], 6
    %98 = vst.msk [vmem:[%s97] ss:$8 sm:$0xf] %vm42, %v95
    %99 = vst.msk [vmem:[%s97] ss:$8 sm:$0x30] %vm42, %v95
    %100 = vrot.lane.b32.xlu0 %v38, 71
    %v101 = vpop.permute.xlu0 %100
    %v102 = vrot.slane %v101, 1
    %vm103 = vcmask 580608
    %v104 = vsel %vm103, %v101, %v102
    %s106 = scalar_lea.vmem [#allocation2], 7
    %107 = vst.msk [vmem:[%s106] ss:$8 sm:$0xf] %vm42, %v104
    %108 = vst.msk [vmem:[%s106] ss:$8 sm:$0x30] %vm42, %v104
    %109 = vrot.lane.b32.xlu0 %v38, 70
    %v110 = vpop.permute.xlu0 %109
    %v111 = vrot.slane %v110, 1
    %vm112 = vcmask 572416
    %v113 = vsel %vm112, %v110, %v111
    %s115 = scalar_lea.vmem [#allocation2], 48
    %116 = vst.msk [vmem:[%s115] ss:$8 sm:$0xf] %vm42, %v113
    %117 = vst.msk [vmem:[%s115] ss:$8 sm:$0x30] %vm42, %v113
    %v118 = vld [vmem:[%s1] sm:$0xff]
    %v119 = vld [vmem:[%s1 + $0x8] sm:$0xff]
    %v120 = vld [vmem:[%s1 + $0x10] sm:$0xff]
    %v121 = vld [vmem:[%s1 + $0x18] sm:$0xff]
    %v122 = vld [vmem:[#allocation2] sm:$0xff]
    %v123 = vld [vmem:[#allocation2 + $0x8] sm:$0xff]
    %v124 = vld [vmem:[#allocation2 + $0x10] sm:$0xff]
    %v125 = vld [vmem:[#allocation2 + $0x18] sm:$0xff]
    %v126 = vld [vmem:[#allocation2 + $0x20] sm:$0xff]
    %v127 = vld [vmem:[#allocation2 + $0x28] sm:$0xff]
    %v128 = vld [vmem:[#allocation2 + $0x30] sm:$0x1]
    %v129 = vld [vmem:[#allocation2 + $0x38] sm:$0x1]
    %v130 = vld [vmem:[#allocation2 + $0x40] sm:$0x1]
    %v131 = vld [vmem:[#allocation2 + $0x48] sm:$0x1]
    %v132 = vld [vmem:[#allocation2 + $0x50] sm:$0x1]
    %v133 = vld [vmem:[#allocation2 + $0x58] sm:$0x1]
    %v134 = vld [vmem:[%s2] sm:$0xff]
    %v135 = vld [vmem:[%s2 + $0x8] sm:$0xff]
    %v136 = vld [vmem:[%s2 + $0x10] sm:$0xff]
    %v137 = vld [vmem:[%s2 + $0x18] sm:$0xff]
    %139 = vset.pattern.permute.xlu0 0
    %140 = vperm.xlu0 %139, %v134
    %v141 = vpop.permute.xlu0 %140
    %144 = vset.pattern.permute.xlu0 0
    %145 = vperm.xlu0 %144, %v135
    %v146 = vpop.permute.xlu0 %145
    %149 = vset.pattern.permute.xlu0 0
    %150 = vperm.xlu0 %149, %v136
    %v151 = vpop.permute.xlu0 %150
    %154 = vset.pattern.permute.xlu0 0
    %155 = vperm.xlu0 %154, %v137
    %v156 = vpop.permute.xlu0 %155
    %vm158 = vcmask 72704
    %v160 = vsel %vm158, %v118, 0
    %v163 = vsel %vm158, %v119, 0
    %v166 = vsel %vm158, %v120, 0
    %v169 = vsel %vm158, %v121, 0
    %vm171 = vcmask 1040384
    %v173 = vsel %vm171, %v128, 0
    %v176 = vsel %vm171, %v129, 0
    %v179 = vsel %vm171, %v130, 0
    %v182 = vsel %vm171, %v131, 0
    %v185 = vsel %vm171, %v132, 0
    %v188 = vsel %vm171, %v133, 0
    %190 = vmatprep.subr.mxu0 %v123
    %191 = vmatpush1.msra.mxu0 %v122
    %192 = vmatprep.subr.mxu0 %v176
    %193 = vmatpush1.msra.mxu0 %v173
    %194 = vmatprep.subr.mxu0 0.0
    %195 = vmatpush1.msra.mxu0 0.0
    %196 = vmatprep.subr.mxu0 0.0
    %197 = vmatpush1.msra.mxu0 0.0
    %198 = vmatprep.subr.mxu0 0.0
    %199 = vmatpush1.msra.mxu0 0.0
    %200 = vmatprep.subr.mxu0 0.0
    %201 = vmatpush1.msra.mxu0 0.0
    %202 = vmatprep.subr.mxu0 0.0
    %203 = vmatpush1.msra.mxu0 0.0
    %204 = vmatprep.subr.mxu0 0.0
    %205 = vmatpush1.msra.mxu0 0.0
    %206 = vmatprep.subr.mxu0 0.0
    %207 = vmatpush1.msra.mxu0 0.0
    %208 = vmatprep.subr.mxu0 0.0
    %209 = vmatpush1.msra.mxu0 0.0
    %210 = vmatprep.subr.mxu0 0.0
    %211 = vmatpush1.msra.mxu0 0.0
    %212 = vmatprep.subr.mxu0 0.0
    %213 = vmatpush1.msra.mxu0 0.0
    %214 = vmatprep.subr.mxu0 0.0
    %215 = vmatpush1.msra.mxu0 0.0
    %216 = vmatprep.subr.mxu0 0.0
    %217 = vmatpush1.msra.mxu0 0.0
    %218 = vmatprep.subr.mxu0 0.0
    %219 = vmatpush1.msra.mxu0 0.0
    %220 = vmatprep.subr.mxu0 0.0
    %221 = vmatpush1.msra.mxu0 0.0
    %222 = vmatprep.subr.mxu0 0.0
    %223 = vmatpush1.msra.mxu0 0.0
    %224 = vmatprep.subr.mxu0 0.0
    %225 = vmatpush1.msra.mxu0 0.0
    %226 = vmatprep.subr.mxu0 0.0
    %227 = vmatpush1.msra.mxu0 0.0
    %228 = vmatprep.subr.mxu0 0.0
    %229 = vmatpush1.msra.mxu0 0.0
    %230 = vmatprep.subr.mxu0 0.0
    %231 = vmatpush1.msra.mxu0 0.0
    %232 = vmatprep.subr.mxu0 0.0
    %233 = vmatpush1.msra.mxu0 0.0
    %234 = vmatprep.subr.mxu0 0.0
    %235 = vmatpush1.msra.mxu0 0.0
    %236 = vmatprep.subr.mxu0 0.0
    %237 = vmatpush1.msra.mxu0 0.0
    %238 = vmatprep.subr.mxu0 0.0
    %239 = vmatpush1.msra.mxu0 0.0
    %240 = vmatprep.subr.mxu0 0.0
    %241 = vmatpush1.msra.mxu0 0.0
    %242 = vmatprep.subr.mxu0 0.0
    %243 = vmatpush1.msra.mxu0 0.0
    %244 = vmatprep.subr.mxu0 0.0
    %245 = vmatpush1.msra.mxu0 0.0
    %246 = vmatprep.subr.mxu0 0.0
    %247 = vmatpush1.msra.mxu0 0.0
    %248 = vmatprep.subr.mxu0 0.0
    %249 = vmatpush1.msra.mxu0 0.0
    %250 = vmatprep.subr.mxu0 0.0
    %251 = vmatpush1.msra.mxu0 0.0
    %252 = vmatprep.subr.mxu0 0.0
    %253 = vmatpush1.msra.mxu0 0.0
    %254 = vmatprep.mubr.f32.mxu0 0.0
    %255 = vmatmul.mubr.f32.gmra.mrb[0].mxu0 %v160
    %v256 = vpop.f32.mrb[0].mxu0
    %v257 = vadd.f32 %v141, %v256
    %v258 = vpop.f32.mrb[0].mxu0
    %v259 = vadd.f32 %v141, %v258
    %260 = vmatprep.mubr.f32.mxu0 0.0
    %261 = vmatmul.mubr.f32.gmra.mrb[0].mxu0 %v163
    %v262 = vpop.f32.mrb[0].mxu0
    %v263 = vadd.f32 %v146, %v262
    %v264 = vpop.f32.mrb[0].mxu0
    %v265 = vadd.f32 %v146, %v264
    %266 = vmatprep.mubr.f32.mxu0 0.0
    %267 = vmatmul.mubr.f32.gmra.mrb[0].mxu0 %v166
    %v268 = vpop.f32.mrb[0].mxu0
    %v269 = vadd.f32 %v151, %v268
    %v270 = vpop.f32.mrb[0].mxu0
    %v271 = vadd.f32 %v151, %v270
    %272 = vmatprep.mubr.f32.mxu0 0.0
    %273 = vmatmul.mubr.f32.gmra.mrb[0].mxu0 %v169
    %v274 = vpop.f32.mrb[0].mxu0
    %v275 = vadd.f32 %v156, %v274
    %v276 = vpop.f32.mrb[0].mxu0
    %v277 = vadd.f32 %v156, %v276
    %278 = vdwg.mxu0
    %279 = vmatprep.subr.mxu0 %v125
    %280 = vmatpush1.msra.mxu0 %v124
    %281 = vmatprep.subr.mxu0 %v182
    %282 = vmatpush1.msra.mxu0 %v179
    %283 = vmatprep.subr.mxu0 0.0
    %284 = vmatpush1.msra.mxu0 0.0
    %285 = vmatprep.subr.mxu0 0.0
    %286 = vmatpush1.msra.mxu0 0.0
    %287 = vmatprep.subr.mxu0 0.0
    %288 = vmatpush1.msra.mxu0 0.0
    %289 = vmatprep.subr.mxu0 0.0
    %290 = vmatpush1.msra.mxu0 0.0
    %291 = vmatprep.subr.mxu0 0.0
    %292 = vmatpush1.msra.mxu0 0.0
    %293 = vmatprep.subr.mxu0 0.0
    %294 = vmatpush1.msra.mxu0 0.0
    %295 = vmatprep.subr.mxu0 0.0
    %296 = vmatpush1.msra.mxu0 0.0
    %297 = vmatprep.subr.mxu0 0.0
    %298 = vmatpush1.msra.mxu0 0.0
    %299 = vmatprep.subr.mxu0 0.0
    %300 = vmatpush1.msra.mxu0 0.0
    %301 = vmatprep.subr.mxu0 0.0
    %302 = vmatpush1.msra.mxu0 0.0
    %303 = vmatprep.subr.mxu0 0.0
    %304 = vmatpush1.msra.mxu0 0.0
    %305 = vmatprep.subr.mxu0 0.0
    %306 = vmatpush1.msra.mxu0 0.0
    %307 = vmatprep.subr.mxu0 0.0
    %308 = vmatpush1.msra.mxu0 0.0
    %309 = vmatprep.subr.mxu0 0.0
    %310 = vmatpush1.msra.mxu0 0.0
    %311 = vmatprep.subr.mxu0 0.0
    %312 = vmatpush1.msra.mxu0 0.0
    %313 = vmatprep.subr.mxu0 0.0
    %314 = vmatpush1.msra.mxu0 0.0
    %315 = vmatprep.subr.mxu0 0.0
    %316 = vmatpush1.msra.mxu0 0.0
    %317 = vmatprep.subr.mxu0 0.0
    %318 = vmatpush1.msra.mxu0 0.0
    %319 = vmatprep.subr.mxu0 0.0
    %320 = vmatpush1.msra.mxu0 0.0
    %321 = vmatprep.subr.mxu0 0.0
    %322 = vmatpush1.msra.mxu0 0.0
    %323 = vmatprep.subr.mxu0 0.0
    %324 = vmatpush1.msra.mxu0 0.0
    %325 = vmatprep.subr.mxu0 0.0
    %326 = vmatpush1.msra.mxu0 0.0
    %327 = vmatprep.subr.mxu0 0.0
    %328 = vmatpush1.msra.mxu0 0.0
    %329 = vmatprep.subr.mxu0 0.0
    %330 = vmatpush1.msra.mxu0 0.0
    %331 = vmatprep.subr.mxu0 0.0
    %332 = vmatpush1.msra.mxu0 0.0
    %333 = vmatprep.subr.mxu0 0.0
    %334 = vmatpush1.msra.mxu0 0.0
    %335 = vmatprep.subr.mxu0 0.0
    %336 = vmatpush1.msra.mxu0 0.0
    %337 = vmatprep.subr.mxu0 0.0
    %338 = vmatpush1.msra.mxu0 0.0
    %339 = vmatprep.subr.mxu0 0.0
    %340 = vmatpush1.msra.mxu0 0.0
    %341 = vmatprep.subr.mxu0 0.0
    %342 = vmatpush1.msra.mxu0 0.0
    %343 = vmatprep.mubr.f32.mxu0 0.0
    %344 = vmatmul.mubr.f32.gmra.mrb[0].mxu0 %v160
    %v345 = vpop.f32.mrb[0].mxu0
    %v346 = vadd.f32 %v141, %v345
    %v347 = vpop.f32.mrb[0].mxu0
    %v348 = vadd.f32 %v141, %v347
    %349 = vmatprep.mubr.f32.mxu0 0.0
    %350 = vmatmul.mubr.f32.gmra.mrb[0].mxu0 %v163
    %v351 = vpop.f32.mrb[0].mxu0
    %v352 = vadd.f32 %v146, %v351
    %v353 = vpop.f32.mrb[0].mxu0
    %v354 = vadd.f32 %v146, %v353
    %355 = vmatprep.mubr.f32.mxu0 0.0
    %356 = vmatmul.mubr.f32.gmra.mrb[0].mxu0 %v166
    %v357 = vpop.f32.mrb[0].mxu0
    %v358 = vadd.f32 %v151, %v357
    %v359 = vpop.f32.mrb[0].mxu0
    %v360 = vadd.f32 %v151, %v359
    %361 = vmatprep.mubr.f32.mxu0 0.0
    %362 = vmatmul.mubr.f32.gmra.mrb[0].mxu0 %v169
    %v363 = vpop.f32.mrb[0].mxu0
    %v364 = vadd.f32 %v156, %v363
    %v365 = vpop.f32.mrb[0].mxu0
    %v366 = vadd.f32 %v156, %v365
    %367 = vdwg.mxu0
    %368 = vmatprep.subr.mxu0 %v127
    %369 = vmatpush1.msra.mxu0 %v126
    %370 = vmatprep.subr.mxu0 %v188
    %371 = vmatpush1.msra.mxu0 %v185
    %372 = vmatprep.subr.mxu0 0.0
    %373 = vmatpush1.msra.mxu0 0.0
    %374 = vmatprep.subr.mxu0 0.0
    %375 = vmatpush1.msra.mxu0 0.0
    %376 = vmatprep.subr.mxu0 0.0
    %377 = vmatpush1.msra.mxu0 0.0
    %378 = vmatprep.subr.mxu0 0.0
    %379 = vmatpush1.msra.mxu0 0.0
    %380 = vmatprep.subr.mxu0 0.0
    %381 = vmatpush1.msra.mxu0 0.0
    %382 = vmatprep.subr.mxu0 0.0
    %383 = vmatpush1.msra.mxu0 0.0
    %384 = vmatprep.subr.mxu0 0.0
    %385 = vmatpush1.msra.mxu0 0.0
    %386 = vmatprep.subr.mxu0 0.0
    %387 = vmatpush1.msra.mxu0 0.0
    %388 = vmatprep.subr.mxu0 0.0
    %389 = vmatpush1.msra.mxu0 0.0
    %390 = vmatprep.subr.mxu0 0.0
    %391 = vmatpush1.msra.mxu0 0.0
    %392 = vmatprep.subr.mxu0 0.0
    %393 = vmatpush1.msra.mxu0 0.0
    %394 = vmatprep.subr.mxu0 0.0
    %395 = vmatpush1.msra.mxu0 0.0
    %396 = vmatprep.subr.mxu0 0.0
    %397 = vmatpush1.msra.mxu0 0.0
    %398 = vmatprep.subr.mxu0 0.0
    %399 = vmatpush1.msra.mxu0 0.0
    %400 = vmatprep.subr.mxu0 0.0
    %401 = vmatpush1.msra.mxu0 0.0
    %402 = vmatprep.subr.mxu0 0.0
    %403 = vmatpush1.msra.mxu0 0.0
    %404 = vmatprep.subr.mxu0 0.0
    %405 = vmatpush1.msra.mxu0 0.0
    %406 = vmatprep.subr.mxu0 0.0
    %407 = vmatpush1.msra.mxu0 0.0
    %408 = vmatprep.subr.mxu0 0.0
    %409 = vmatpush1.msra.mxu0 0.0
    %410 = vmatprep.subr.mxu0 0.0
    %411 = vmatpush1.msra.mxu0 0.0
    %412 = vmatprep.subr.mxu0 0.0
    %413 = vmatpush1.msra.mxu0 0.0
    %414 = vmatprep.subr.mxu0 0.0
    %415 = vmatpush1.msra.mxu0 0.0
    %416 = vmatprep.subr.mxu0 0.0
    %417 = vmatpush1.msra.mxu0 0.0
    %418 = vmatprep.subr.mxu0 0.0
    %419 = vmatpush1.msra.mxu0 0.0
    %420 = vmatprep.subr.mxu0 0.0
    %421 = vmatpush1.msra.mxu0 0.0
    %422 = vmatprep.subr.mxu0 0.0
    %423 = vmatpush1.msra.mxu0 0.0
    %424 = vmatprep.subr.mxu0 0.0
    %425 = vmatpush1.msra.mxu0 0.0
    %426 = vmatprep.subr.mxu0 0.0
    %427 = vmatpush1.msra.mxu0 0.0
    %428 = vmatprep.subr.mxu0 0.0
    %429 = vmatpush1.msra.mxu0 0.0
    %430 = vmatprep.subr.mxu0 0.0
    %431 = vmatpush1.msra.mxu0 0.0
    %432 = vmatprep.mubr.f32.mxu0 0.0
    %433 = vmatmul.mubr.f32.gmra.mrb[0].mxu0 %v160
    %v434 = vpop.f32.mrb[0].mxu0
    %v435 = vadd.f32 %v141, %v434
    %v436 = vpop.f32.mrb[0].mxu0
    %v437 = vadd.f32 %v141, %v436
    %438 = vmatprep.mubr.f32.mxu0 0.0
    %439 = vmatmul.mubr.f32.gmra.mrb[0].mxu0 %v163
    %v440 = vpop.f32.mrb[0].mxu0
    %v441 = vadd.f32 %v146, %v440
    %v442 = vpop.f32.mrb[0].mxu0
    %v443 = vadd.f32 %v146, %v442
    %444 = vmatprep.mubr.f32.mxu0 0.0
    %445 = vmatmul.mubr.f32.gmra.mrb[0].mxu0 %v166
    %v446 = vpop.f32.mrb[0].mxu0
    %v447 = vadd.f32 %v151, %v446
    %v448 = vpop.f32.mrb[0].mxu0
    %v449 = vadd.f32 %v151, %v448
    %450 = vmatprep.mubr.f32.mxu0 0.0
    %451 = vmatmul.mubr.f32.gmra.mrb[0].mxu0 %v169
    %v452 = vpop.f32.mrb[0].mxu0
    %v453 = vadd.f32 %v156, %v452
    %v454 = vpop.f32.mrb[0].mxu0
    %v455 = vadd.f32 %v156, %v454
    %456 = vdwg.mxu0
    %v457 = vmax.f32 %v257, 0.0
    %v458 = vmax.f32 %v259, 0.0
    %v459 = vmax.f32 %v346, 0.0
    %v460 = vmax.f32 %v348, 0.0
    %v461 = vmax.f32 %v435, 0.0
    %v462 = vmax.f32 %v437, 0.0
    %v463 = vmax.f32 %v263, 0.0
    %v464 = vmax.f32 %v265, 0.0
    %v465 = vmax.f32 %v352, 0.0
    %v466 = vmax.f32 %v354, 0.0
    %v467 = vmax.f32 %v441, 0.0
    %v468 = vmax.f32 %v443, 0.0
    %v469 = vmax.f32 %v269, 0.0
    %v470 = vmax.f32 %v271, 0.0
    %v471 = vmax.f32 %v358, 0.0
    %v472 = vmax.f32 %v360, 0.0
    %v473 = vmax.f32 %v447, 0.0
    %v474 = vmax.f32 %v449, 0.0
    %v475 = vmax.f32 %v275, 0.0
    %v476 = vmax.f32 %v277, 0.0
    %v477 = vmax.f32 %v364, 0.0
    %v478 = vmax.f32 %v366, 0.0
    %v479 = vmax.f32 %v453, 0.0
    %v480 = vmax.f32 %v455, 0.0
    %v481 = vpack.c.bf16 %v463, %v457
    %v482 = vpack.c.bf16 %v464, %v458
    %v483 = vpack.c.bf16 %v465, %v459
    %v484 = vpack.c.bf16 %v466, %v460
    %v485 = vpack.c.bf16 %v467, %v461
    %v486 = vpack.c.bf16 %v468, %v462
    %v487 = vpack.c.bf16 %v475, %v469
    %v488 = vpack.c.bf16 %v476, %v470
    %v489 = vpack.c.bf16 %v477, %v471
    %v490 = vpack.c.bf16 %v478, %v472
    %v491 = vpack.c.bf16 %v479, %v473
    %v492 = vpack.c.bf16 %v480, %v474
    %493 = vst [vmem:[#allocation3] sm:$0xff] %v481
    %494 = vst [vmem:[#allocation3 + $0x8] sm:$0xff] %v482
    %495 = vst [vmem:[#allocation3 + $0x10] sm:$0xff] %v483
    %496 = vst [vmem:[#allocation3 + $0x18] sm:$0xff] %v484
    %497 = vst [vmem:[#allocation3 + $0x20] sm:$0xff] %v485
    %vm498 = vcmask 228352
    %499 = vst.msk [vmem:[#allocation3 + $0x28] sm:$0xff] %vm498, %v486
    %500 = vst [vmem:[#allocation3 + $0x30] sm:$0xff] %v487
    %501 = vst [vmem:[#allocation3 + $0x38] sm:$0xff] %v488
    %502 = vst [vmem:[#allocation3 + $0x40] sm:$0xff] %v489
    %503 = vst [vmem:[#allocation3 + $0x48] sm:$0xff] %v490
    %504 = vst [vmem:[#allocation3 + $0x50] sm:$0xff] %v491
    %505 = vst.msk [vmem:[#allocation3 + $0x58] sm:$0xff] %vm498, %v492
    %518 = vrot.lane.b32.xlu0 %v481, 127
    %v519 = vpop.permute.xlu0 %518
    %520 = vrot.lane.b32.xlu0 %v482, 127
    %v521 = vpop.permute.xlu0 %520
    %522 = vrot.lane.b32.xlu0 %v483, 127
    %v523 = vpop.permute.xlu0 %522
    %524 = vrot.lane.b32.xlu0 %v484, 127
    %v525 = vpop.permute.xlu0 %524
    %526 = vrot.lane.b32.xlu0 %v485, 127
    %v527 = vpop.permute.xlu0 %526
    %528 = vrot.lane.b32.xlu0 %v486, 127
    %v529 = vpop.permute.xlu0 %528
    %530 = vrot.lane.b32.xlu0 %v487, 127
    %v531 = vpop.permute.xlu0 %530
    %532 = vrot.lane.b32.xlu0 %v488, 127
    %v533 = vpop.permute.xlu0 %532
    %534 = vrot.lane.b32.xlu0 %v489, 127
    %v535 = vpop.permute.xlu0 %534
    %536 = vrot.lane.b32.xlu0 %v490, 127
    %v537 = vpop.permute.xlu0 %536
    %538 = vrot.lane.b32.xlu0 %v491, 127
    %v539 = vpop.permute.xlu0 %538
    %540 = vrot.lane.b32.xlu0 %v492, 127
    %v541 = vpop.permute.xlu0 %540
    %vm542 = vcmask 1039360
    %v543 = vsel %vm542, %v519, %v521
    %v544 = vsel %vm542, %v521, %v523
    %v545 = vsel %vm542, %v523, %v525
    %v546 = vsel %vm542, %v525, %v527
    %v547 = vsel %vm542, %v527, %v529
    %v548 = vsel %vm542, %v531, %v533
    %v549 = vsel %vm542, %v533, %v535
    %v550 = vsel %vm542, %v535, %v537
    %v551 = vsel %vm542, %v537, %v539
    %v552 = vsel %vm542, %v539, %v541
    %565 = vst [vmem:[#allocation3 + $0x60] sm:$0xff] %v543
    %566 = vst [vmem:[#allocation3 + $0x68] sm:$0xff] %v544
    %567 = vst [vmem:[#allocation3 + $0x70] sm:$0xff] %v545
    %568 = vst [vmem:[#allocation3 + $0x78] sm:$0xff] %v546
    %569 = vst [vmem:[#allocation3 + $0x80] sm:$0xff] %v547
    %570 = vst.msk [vmem:[#allocation3 + $0x88] sm:$0xff] %vm498, %v529
    %571 = vst [vmem:[#allocation3 + $0x90] sm:$0xff] %v548
    %572 = vst [vmem:[#allocation3 + $0x98] sm:$0xff] %v549
    %573 = vst [vmem:[#allocation3 + $0xa0] sm:$0xff] %v550
    %574 = vst [vmem:[#allocation3 + $0xa8] sm:$0xff] %v551
    %575 = vst [vmem:[#allocation3 + $0xb0] sm:$0xff] %v552
    %576 = vst.msk [vmem:[#allocation3 + $0xb8] sm:$0xff] %vm498, %v541
    %577 = vrot.lane.b32.xlu0 %v481, 126
    %v578 = vpop.permute.xlu0 %577
    %579 = vrot.lane.b32.xlu0 %v482, 126
    %v580 = vpop.permute.xlu0 %579
    %581 = vrot.lane.b32.xlu0 %v483, 126
    %v582 = vpop.permute.xlu0 %581
    %583 = vrot.lane.b32.xlu0 %v484, 126
    %v584 = vpop.permute.xlu0 %583
    %585 = vrot.lane.b32.xlu0 %v485, 126
    %v586 = vpop.permute.xlu0 %585
    %587 = vrot.lane.b32.xlu0 %v486, 126
    %v588 = vpop.permute.xlu0 %587
    %589 = vrot.lane.b32.xlu0 %v487, 126
    %v590 = vpop.permute.xlu0 %589
    %591 = vrot.lane.b32.xlu0 %v488, 126
    %v592 = vpop.permute.xlu0 %591
    %593 = vrot.lane.b32.xlu0 %v489, 126
    %v594 = vpop.permute.xlu0 %593
    %595 = vrot.lane.b32.xlu0 %v490, 126
    %v596 = vpop.permute.xlu0 %595
    %597 = vrot.lane.b32.xlu0 %v491, 126
    %v598 = vpop.permute.xlu0 %597
    %599 = vrot.lane.b32.xlu0 %v492, 126
    %v600 = vpop.permute.xlu0 %599
    %vm601 = vcmask 1031168
    %v602 = vsel %vm601, %v578, %v580
    %v603 = vsel %vm601, %v580, %v582
    %v604 = vsel %vm601, %v582, %v584
    %v605 = vsel %vm601, %v584, %v586
    %v606 = vsel %vm601, %v586, %v588
    %v607 = vsel %vm601, %v590, %v592
    %v608 = vsel %vm601, %v592, %v594
    %v609 = vsel %vm601, %v594, %v596
    %v610 = vsel %vm601, %v596, %v598
    %v611 = vsel %vm601, %v598, %v600
    %624 = vst [vmem:[#allocation3 + $0xc0] sm:$0xff] %v602
    %625 = vst [vmem:[#allocation3 + $0xc8] sm:$0xff] %v603
    %626 = vst [vmem:[#allocation3 + $0xd0] sm:$0xff] %v604
    %627 = vst [vmem:[#allocation3 + $0xd8] sm:$0xff] %v605
    %628 = vst [vmem:[#allocation3 + $0xe0] sm:$0xff] %v606
    %629 = vst.msk [vmem:[#allocation3 + $0xe8] sm:$0xff] %vm498, %v588
    %630 = vst [vmem:[#allocation3 + $0xf0] sm:$0xff] %v607
    %631 = vst [vmem:[#allocation3 + $0xf8] sm:$0xff] %v608
    %632 = vst [vmem:[#allocation3 + $0x100] sm:$0xff] %v609
    %633 = vst [vmem:[#allocation3 + $0x108] sm:$0xff] %v610
    %634 = vst [vmem:[#allocation3 + $0x110] sm:$0xff] %v611
    %635 = vst.msk [vmem:[#allocation3 + $0x118] sm:$0xff] %vm498, %v600
    %636 = vrot.lane.b32.xlu0 %v481, 100
    %v637 = vpop.permute.xlu0 %636
    %638 = vrot.lane.b32.xlu0 %v482, 100
    %v639 = vpop.permute.xlu0 %638
    %640 = vrot.lane.b32.xlu0 %v483, 100
    %v641 = vpop.permute.xlu0 %640
    %642 = vrot.lane.b32.xlu0 %v484, 100
    %v643 = vpop.permute.xlu0 %642
    %644 = vrot.lane.b32.xlu0 %v485, 100
    %v645 = vpop.permute.xlu0 %644
    %646 = vrot.lane.b32.xlu0 %v486, 100
    %v647 = vpop.permute.xlu0 %646
    %648 = vrot.lane.b32.xlu0 %v487, 100
    %v649 = vpop.permute.xlu0 %648
    %650 = vrot.lane.b32.xlu0 %v488, 100
    %v651 = vpop.permute.xlu0 %650
    %652 = vrot.lane.b32.xlu0 %v489, 100
    %v653 = vpop.permute.xlu0 %652
    %654 = vrot.lane.b32.xlu0 %v490, 100
    %v655 = vpop.permute.xlu0 %654
    %656 = vrot.lane.b32.xlu0 %v491, 100
    %v657 = vpop.permute.xlu0 %656
    %658 = vrot.lane.b32.xlu0 %v492, 100
    %v659 = vpop.permute.xlu0 %658
    %vm660 = vcmask 818176
    %v661 = vsel %vm660, %v637, %v639
    %v662 = vsel %vm660, %v639, %v641
    %v663 = vsel %vm660, %v641, %v643
    %v664 = vsel %vm660, %v643, %v645
    %v665 = vsel %vm660, %v645, %v647
    %v666 = vsel %vm660, %v649, %v651
    %v667 = vsel %vm660, %v651, %v653
    %v668 = vsel %vm660, %v653, %v655
    %v669 = vsel %vm660, %v655, %v657
    %v670 = vsel %vm660, %v657, %v659
    %683 = vst [vmem:[#allocation3 + $0x120] sm:$0xff] %v661
    %684 = vst [vmem:[#allocation3 + $0x128] sm:$0xff] %v662
    %685 = vst [vmem:[#allocation3 + $0x130] sm:$0xff] %v663
    %686 = vst [vmem:[#allocation3 + $0x138] sm:$0xff] %v664
    %687 = vst [vmem:[#allocation3 + $0x140] sm:$0xff] %v665
    %688 = vst.msk [vmem:[#allocation3 + $0x148] sm:$0xff] %vm498, %v647
    %689 = vst [vmem:[#allocation3 + $0x150] sm:$0xff] %v666
    %690 = vst [vmem:[#allocation3 + $0x158] sm:$0xff] %v667
    %691 = vst [vmem:[#allocation3 + $0x160] sm:$0xff] %v668
    %692 = vst [vmem:[#allocation3 + $0x168] sm:$0xff] %v669
    %693 = vst [vmem:[#allocation3 + $0x170] sm:$0xff] %v670
    %694 = vst.msk [vmem:[#allocation3 + $0x178] sm:$0xff] %vm498, %v659
    %695 = vrot.lane.b32.xlu0 %v481, 99
    %v696 = vpop.permute.xlu0 %695
    %697 = vrot.lane.b32.xlu0 %v482, 99
    %v698 = vpop.permute.xlu0 %697
    %699 = vrot.lane.b32.xlu0 %v483, 99
    %v700 = vpop.permute.xlu0 %699
    %701 = vrot.lane.b32.xlu0 %v484, 99
    %v702 = vpop.permute.xlu0 %701
    %703 = vrot.lane.b32.xlu0 %v485, 99
    %v704 = vpop.permute.xlu0 %703
    %705 = vrot.lane.b32.xlu0 %v486, 99
    %v706 = vpop.permute.xlu0 %705
    %707 = vrot.lane.b32.xlu0 %v487, 99
    %v708 = vpop.permute.xlu0 %707
    %709 = vrot.lane.b32.xlu0 %v488, 99
    %v710 = vpop.permute.xlu0 %709
    %711 = vrot.lane.b32.xlu0 %v489, 99
    %v712 = vpop.permute.xlu0 %711
    %713 = vrot.lane.b32.xlu0 %v490, 99
    %v714 = vpop.permute.xlu0 %713
    %715 = vrot.lane.b32.xlu0 %v491, 99
    %v716 = vpop.permute.xlu0 %715
    %717 = vrot.lane.b32.xlu0 %v492, 99
    %v718 = vpop.permute.xlu0 %717
    %vm719 = vcmask 809984
    %v720 = vsel %vm719, %v696, %v698
    %v721 = vsel %vm719, %v698, %v700
    %v722 = vsel %vm719, %v700, %v702
    %v723 = vsel %vm719, %v702, %v704
    %v724 = vsel %vm719, %v704, %v706
    %v725 = vsel %vm719, %v708, %v710
    %v726 = vsel %vm719, %v710, %v712
    %v727 = vsel %vm719, %v712, %v714
    %v728 = vsel %vm719, %v714, %v716
    %v729 = vsel %vm719, %v716, %v718
    %742 = vst [vmem:[#allocation3 + $0x180] sm:$0xff] %v720
    %743 = vst [vmem:[#allocation3 + $0x188] sm:$0xff] %v721
    %744 = vst [vmem:[#allocation3 + $0x190] sm:$0xff] %v722
    %745 = vst [vmem:[#allocation3 + $0x198] sm:$0xff] %v723
    %746 = vst [vmem:[#allocation3 + $0x1a0] sm:$0xff] %v724
    %747 = vst.msk [vmem:[#allocation3 + $0x1a8] sm:$0xff] %vm498, %v706
    %748 = vst [vmem:[#allocation3 + $0x1b0] sm:$0xff] %v725
    %749 = vst [vmem:[#allocation3 + $0x1b8] sm:$0xff] %v726
    %750 = vst [vmem:[#allocation3 + $0x1c0] sm:$0xff] %v727
    %751 = vst [vmem:[#allocation3 + $0x1c8] sm:$0xff] %v728
    %752 = vst [vmem:[#allocation3 + $0x1d0] sm:$0xff] %v729
    %753 = vst.msk [vmem:[#allocation3 + $0x1d8] sm:$0xff] %vm498, %v718
    %754 = vrot.lane.b32.xlu0 %v481, 98
    %v755 = vpop.permute.xlu0 %754
    %756 = vrot.lane.b32.xlu0 %v482, 98
    %v757 = vpop.permute.xlu0 %756
    %758 = vrot.lane.b32.xlu0 %v483, 98
    %v759 = vpop.permute.xlu0 %758
    %760 = vrot.lane.b32.xlu0 %v484, 98
    %v761 = vpop.permute.xlu0 %760
    %762 = vrot.lane.b32.xlu0 %v485, 98
    %v763 = vpop.permute.xlu0 %762
    %764 = vrot.lane.b32.xlu0 %v486, 98
    %v765 = vpop.permute.xlu0 %764
    %766 = vrot.lane.b32.xlu0 %v487, 98
    %v767 = vpop.permute.xlu0 %766
    %768 = vrot.lane.b32.xlu0 %v488, 98
    %v769 = vpop.permute.xlu0 %768
    %770 = vrot.lane.b32.xlu0 %v489, 98
    %v771 = vpop.permute.xlu0 %770
    %772 = vrot.lane.b32.xlu0 %v490, 98
    %v773 = vpop.permute.xlu0 %772
    %774 = vrot.lane.b32.xlu0 %v491, 98
    %v775 = vpop.permute.xlu0 %774
    %776 = vrot.lane.b32.xlu0 %v492, 98
    %v777 = vpop.permute.xlu0 %776
    %vm778 = vcmask 801792
    %v779 = vsel %vm778, %v755, %v757
    %v780 = vsel %vm778, %v757, %v759
    %v781 = vsel %vm778, %v759, %v761
    %v782 = vsel %vm778, %v761, %v763
    %v783 = vsel %vm778, %v763, %v765
    %v784 = vsel %vm778, %v767, %v769
    %v785 = vsel %vm778, %v769, %v771
    %v786 = vsel %vm778, %v771, %v773
    %v787 = vsel %vm778, %v773, %v775
    %v788 = vsel %vm778, %v775, %v777
    %801 = vst [vmem:[#allocation3 + $0x1e0] sm:$0xff] %v779
    %802 = vst [vmem:[#allocation3 + $0x1e8] sm:$0xff] %v780
    %803 = vst [vmem:[#allocation3 + $0x1f0] sm:$0xff] %v781
    %804 = vst [vmem:[#allocation3 + $0x1f8] sm:$0xff] %v782
    %805 = vst [vmem:[#allocation3 + $0x200] sm:$0xff] %v783
    %806 = vst.msk [vmem:[#allocation3 + $0x208] sm:$0xff] %vm498, %v765
    %807 = vst [vmem:[#allocation3 + $0x210] sm:$0xff] %v784
    %808 = vst [vmem:[#allocation3 + $0x218] sm:$0xff] %v785
    %809 = vst [vmem:[#allocation3 + $0x220] sm:$0xff] %v786
    %810 = vst [vmem:[#allocation3 + $0x228] sm:$0xff] %v787
    %811 = vst [vmem:[#allocation3 + $0x230] sm:$0xff] %v788
    %812 = vst.msk [vmem:[#allocation3 + $0x238] sm:$0xff] %vm498, %v777
    %813 = vrot.lane.b32.xlu0 %v481, 72
    %v814 = vpop.permute.xlu0 %813
    %815 = vrot.lane.b32.xlu0 %v482, 72
    %v816 = vpop.permute.xlu0 %815
    %817 = vrot.lane.b32.xlu0 %v483, 72
    %v818 = vpop.permute.xlu0 %817
    %819 = vrot.lane.b32.xlu0 %v484, 72
    %v820 = vpop.permute.xlu0 %819
    %821 = vrot.lane.b32.xlu0 %v485, 72
    %v822 = vpop.permute.xlu0 %821
    %823 = vrot.lane.b32.xlu0 %v486, 72
    %v824 = vpop.permute.xlu0 %823
    %825 = vrot.lane.b32.xlu0 %v487, 72
    %v826 = vpop.permute.xlu0 %825
    %827 = vrot.lane.b32.xlu0 %v488, 72
    %v828 = vpop.permute.xlu0 %827
    %829 = vrot.lane.b32.xlu0 %v489, 72
    %v830 = vpop.permute.xlu0 %829
    %831 = vrot.lane.b32.xlu0 %v490, 72
    %v832 = vpop.permute.xlu0 %831
    %833 = vrot.lane.b32.xlu0 %v491, 72
    %v834 = vpop.permute.xlu0 %833
    %835 = vrot.lane.b32.xlu0 %v492, 72
    %v836 = vpop.permute.xlu0 %835
    %vm837 = vcmask 588800
    %v838 = vsel %vm837, %v814, %v816
    %v839 = vsel %vm837, %v816, %v818
    %v840 = vsel %vm837, %v818, %v820
    %v841 = vsel %vm837, %v820, %v822
    %v842 = vsel %vm837, %v822, %v824
    %v843 = vsel %vm837, %v826, %v828
    %v844 = vsel %vm837, %v828, %v830
    %v845 = vsel %vm837, %v830, %v832
    %v846 = vsel %vm837, %v832, %v834
    %v847 = vsel %vm837, %v834, %v836
    %860 = vst [vmem:[#allocation3 + $0x240] sm:$0xff] %v838
    %861 = vst [vmem:[#allocation3 + $0x248] sm:$0xff] %v839
    %862 = vst [vmem:[#allocation3 + $0x250] sm:$0xff] %v840
    %863 = vst [vmem:[#allocation3 + $0x258] sm:$0xff] %v841
    %864 = vst [vmem:[#allocation3 + $0x260] sm:$0xff] %v842
    %865 = vst.msk [vmem:[#allocation3 + $0x268] sm:$0xff] %vm498, %v824
    %866 = vst [vmem:[#allocation3 + $0x270] sm:$0xff] %v843
    %867 = vst [vmem:[#allocation3 + $0x278] sm:$0xff] %v844
    %868 = vst [vmem:[#allocation3 + $0x280] sm:$0xff] %v845
    %869 = vst [vmem:[#allocation3 + $0x288] sm:$0xff] %v846
    %870 = vst [vmem:[#allocation3 + $0x290] sm:$0xff] %v847
    %871 = vst.msk [vmem:[#allocation3 + $0x298] sm:$0xff] %vm498, %v836
    %872 = vrot.lane.b32.xlu0 %v481, 71
    %v873 = vpop.permute.xlu0 %872
    %874 = vrot.lane.b32.xlu0 %v482, 71
    %v875 = vpop.permute.xlu0 %874
    %876 = vrot.lane.b32.xlu0 %v483, 71
    %v877 = vpop.permute.xlu0 %876
    %878 = vrot.lane.b32.xlu0 %v484, 71
    %v879 = vpop.permute.xlu0 %878
    %880 = vrot.lane.b32.xlu0 %v485, 71
    %v881 = vpop.permute.xlu0 %880
    %882 = vrot.lane.b32.xlu0 %v486, 71
    %v883 = vpop.permute.xlu0 %882
    %884 = vrot.lane.b32.xlu0 %v487, 71
    %v885 = vpop.permute.xlu0 %884
    %886 = vrot.lane.b32.xlu0 %v488, 71
    %v887 = vpop.permute.xlu0 %886
    %888 = vrot.lane.b32.xlu0 %v489, 71
    %v889 = vpop.permute.xlu0 %888
    %890 = vrot.lane.b32.xlu0 %v490, 71
    %v891 = vpop.permute.xlu0 %890
    %892 = vrot.lane.b32.xlu0 %v491, 71
    %v893 = vpop.permute.xlu0 %892
    %894 = vrot.lane.b32.xlu0 %v492, 71
    %v895 = vpop.permute.xlu0 %894
    %vm896 = vcmask 580608
    %v897 = vsel %vm896, %v873, %v875
    %v898 = vsel %vm896, %v875, %v877
    %v899 = vsel %vm896, %v877, %v879
    %v900 = vsel %vm896, %v879, %v881
    %v901 = vsel %vm896, %v881, %v883
    %v902 = vsel %vm896, %v885, %v887
    %v903 = vsel %vm896, %v887, %v889
    %v904 = vsel %vm896, %v889, %v891
    %v905 = vsel %vm896, %v891, %v893
    %v906 = vsel %vm896, %v893, %v895
    %919 = vst [vmem:[#allocation3 + $0x2a0] sm:$0xff] %v897
    %920 = vst [vmem:[#allocation3 + $0x2a8] sm:$0xff] %v898
    %921 = vst [vmem:[#allocation3 + $0x2b0] sm:$0xff] %v899
    %922 = vst [vmem:[#allocation3 + $0x2b8] sm:$0xff] %v900
    %923 = vst [vmem:[#allocation3 + $0x2c0] sm:$0xff] %v901
    %924 = vst.msk [vmem:[#allocation3 + $0x2c8] sm:$0xff] %vm498, %v883
    %925 = vst [vmem:[#allocation3 + $0x2d0] sm:$0xff] %v902
    %926 = vst [vmem:[#allocation3 + $0x2d8] sm:$0xff] %v903
    %927 = vst [vmem:[#allocation3 + $0x2e0] sm:$0xff] %v904
    %928 = vst [vmem:[#allocation3 + $0x2e8] sm:$0xff] %v905
    %929 = vst [vmem:[#allocation3 + $0x2f0] sm:$0xff] %v906
    %930 = vst.msk [vmem:[#allocation3 + $0x2f8] sm:$0xff] %vm498, %v895
    %931 = vrot.lane.b32.xlu0 %v481, 70
    %v932 = vpop.permute.xlu0 %931
    %933 = vrot.lane.b32.xlu0 %v482, 70
    %v934 = vpop.permute.xlu0 %933
    %935 = vrot.lane.b32.xlu0 %v483, 70
    %v936 = vpop.permute.xlu0 %935
    %937 = vrot.lane.b32.xlu0 %v484, 70
    %v938 = vpop.permute.xlu0 %937
    %939 = vrot.lane.b32.xlu0 %v485, 70
    %v940 = vpop.permute.xlu0 %939
    %941 = vrot.lane.b32.xlu0 %v486, 70
    %v942 = vpop.permute.xlu0 %941
    %943 = vrot.lane.b32.xlu0 %v487, 70
    %v944 = vpop.permute.xlu0 %943
    %945 = vrot.lane.b32.xlu0 %v488, 70
    %v946 = vpop.permute.xlu0 %945
    %947 = vrot.lane.b32.xlu0 %v489, 70
    %v948 = vpop.permute.xlu0 %947
    %949 = vrot.lane.b32.xlu0 %v490, 70
    %v950 = vpop.permute.xlu0 %949
    %951 = vrot.lane.b32.xlu0 %v491, 70
    %v952 = vpop.permute.xlu0 %951
    %953 = vrot.lane.b32.xlu0 %v492, 70
    %v954 = vpop.permute.xlu0 %953
    %vm955 = vcmask 572416
    %v956 = vsel %vm955, %v932, %v934
    %v957 = vsel %vm955, %v934, %v936
    %v958 = vsel %vm955, %v936, %v938
    %v959 = vsel %vm955, %v938, %v940
    %v960 = vsel %vm955, %v940, %v942
    %v961 = vsel %vm955, %v944, %v946
    %v962 = vsel %vm955, %v946, %v948
    %v963 = vsel %vm955, %v948, %v950
    %v964 = vsel %vm955, %v950, %v952
    %v965 = vsel %vm955, %v952, %v954
    %978 = vst [vmem:[#allocation3 + $0x300] sm:$0xff] %v956
    %979 = vst [vmem:[#allocation3 + $0x308] sm:$0xff] %v957
    %980 = vst [vmem:[#allocation3 + $0x310] sm:$0xff] %v958
    %981 = vst [vmem:[#allocation3 + $0x318] sm:$0xff] %v959
    %982 = vst [vmem:[#allocation3 + $0x320] sm:$0xff] %v960
    %983 = vst.msk [vmem:[#allocation3 + $0x328] sm:$0xff] %vm498, %v942
    %984 = vst [vmem:[#allocation3 + $0x330] sm:$0xff] %v961
    %985 = vst [vmem:[#allocation3 + $0x338] sm:$0xff] %v962
    %986 = vst [vmem:[#allocation3 + $0x340] sm:$0xff] %v963
    %987 = vst [vmem:[#allocation3 + $0x348] sm:$0xff] %v964
    %988 = vst [vmem:[#allocation3 + $0x350] sm:$0xff] %v965
    %989 = vst.msk [vmem:[#allocation3 + $0x358] sm:$0xff] %vm498, %v954
    %v990 = vld [vmem:[#allocation5] sm:$0xff]
    %v991 = vld [vmem:[#allocation5 + $0x8] sm:$0xf]
    %v992 = vld [vmem:[#allocation5 + $0xc] sm:$0xff]
    %v993 = vld [vmem:[#allocation5 + $0x14] sm:$0xf]
    %v994 = vld [vmem:[#allocation5 + $0x18] sm:$0xff]
    %v995 = vld [vmem:[#allocation5 + $0x20] sm:$0xf]
    %v996 = vld [vmem:[#allocation5 + $0x24] sm:$0xff]
    %v997 = vld [vmem:[#allocation5 + $0x2c] sm:$0xf]
    %v998 = vld [vmem:[#allocation5 + $0x30] sm:$0xff]
    %v999 = vld [vmem:[#allocation5 + $0x38] sm:$0xf]
    %v1000 = vld [vmem:[#allocation5 + $0x3c] sm:$0xff]
    %v1001 = vld [vmem:[#allocation5 + $0x44] sm:$0xf]
    %v1002 = vld [vmem:[#allocation5 + $0x48] sm:$0xff]
    %v1003 = vld [vmem:[#allocation5 + $0x50] sm:$0xf]
    %v1004 = vld [vmem:[#allocation5 + $0x54] sm:$0xff]
    %v1005 = vld [vmem:[#allocation5 + $0x5c] sm:$0xf]
    %v1006 = vld [vmem:[#allocation3] sm:$0xff]
    %v1007 = vld [vmem:[#allocation3 + $0x8] sm:$0xff]
    %v1008 = vld [vmem:[#allocation3 + $0x10] sm:$0xff]
    %v1009 = vld [vmem:[#allocation3 + $0x18] sm:$0xff]
    %v1010 = vld [vmem:[#allocation3 + $0x20] sm:$0xff]
    %v1011 = vld [vmem:[#allocation3 + $0x28] sm:$0xff]
    %v1012 = vld [vmem:[#allocation3 + $0x30] sm:$0xff]
    %v1013 = vld [vmem:[#allocation3 + $0x38] sm:$0xff]
    %v1014 = vld [vmem:[#allocation3 + $0x40] sm:$0xff]
    %v1015 = vld [vmem:[#allocation3 + $0x48] sm:$0xff]
    %v1016 = vld [vmem:[#allocation3 + $0x50] sm:$0xff]
    %v1017 = vld [vmem:[#allocation3 + $0x58] sm:$0xff]
    %v1018 = vld [vmem:[#allocation3 + $0x60] sm:$0xff]
    %v1019 = vld [vmem:[#allocation3 + $0x68] sm:$0xff]
    %v1020 = vld [vmem:[#allocation3 + $0x70] sm:$0xff]
    %v1021 = vld [vmem:[#allocation3 + $0x78] sm:$0xff]
    %v1022 = vld [vmem:[#allocation3 + $0x80] sm:$0xff]
    %v1023 = vld [vmem:[#allocation3 + $0x88] sm:$0xff]
    %v1024 = vld [vmem:[#allocation3 + $0x90] sm:$0xff]
    %v1025 = vld [vmem:[#allocation3 + $0x98] sm:$0xff]
    %v1026 = vld [vmem:[#allocation3 + $0xa0] sm:$0xff]
    %v1027 = vld [vmem:[#allocation3 + $0xa8] sm:$0xff]
    %v1028 = vld [vmem:[#allocation3 + $0xb0] sm:$0xff]
    %v1029 = vld [vmem:[#allocation3 + $0xb8] sm:$0xff]
    %v1030 = vld [vmem:[#allocation3 + $0xc0] sm:$0xff]
    %v1031 = vld [vmem:[#allocation3 + $0xc8] sm:$0xff]
    %v1032 = vld [vmem:[#allocation3 + $0xd0] sm:$0xff]
    %v1033 = vld [vmem:[#allocation3 + $0xd8] sm:$0xff]
    %v1034 = vld [vmem:[#allocation3 + $0xe0] sm:$0xff]
    %v1035 = vld [vmem:[#allocation3 + $0xe8] sm:$0xff]
    %v1036 = vld [vmem:[#allocation3 + $0xf0] sm:$0xff]
    %v1037 = vld [vmem:[#allocation3 + $0xf8] sm:$0xff]
    %v1038 = vld [vmem:[#allocation3 + $0x100] sm:$0xff]
    %v1039 = vld [vmem:[#allocation3 + $0x108] sm:$0xff]
    %v1040 = vld [vmem:[#allocation3 + $0x110] sm:$0xff]
    %v1041 = vld [vmem:[#allocation3 + $0x118] sm:$0xff]
    %v1042 = vld [vmem:[#allocation3 + $0x120] sm:$0xff]
    %v1043 = vld [vmem:[#allocation3 + $0x128] sm:$0xff]
    %v1044 = vld [vmem:[#allocation3 + $0x130] sm:$0xff]
    %v1045 = vld [vmem:[#allocation3 + $0x138] sm:$0xff]
    %v1046 = vld [vmem:[#allocation3 + $0x140] sm:$0xff]
    %v1047 = vld [vmem:[#allocation3 + $0x148] sm:$0xff]
    %v1048 = vld [vmem:[#allocation3 + $0x150] sm:$0xff]
    %v1049 = vld [vmem:[#allocation3 + $0x158] sm:$0xff]
    %v1050 = vld [vmem:[#allocation3 + $0x160] sm:$0xff]
    %v1051 = vld [vmem:[#allocation3 + $0x168] sm:$0xff]
    %v1052 = vld [vmem:[#allocation3 + $0x170] sm:$0xff]
    %v1053 = vld [vmem:[#allocation3 + $0x178] sm:$0xff]
    %v1054 = vld [vmem:[#allocation3 + $0x180] sm:$0xff]
    %v1055 = vld [vmem:[#allocation3 + $0x188] sm:$0xff]
    %v1056 = vld [vmem:[#allocation3 + $0x190] sm:$0xff]
    %v1057 = vld [vmem:[#allocation3 + $0x198] sm:$0xff]
    %v1058 = vld [vmem:[#allocation3 + $0x1a0] sm:$0xff]
    %v1059 = vld [vmem:[#allocation3 + $0x1a8] sm:$0xff]
    %v1060 = vld [vmem:[#allocation3 + $0x1b0] sm:$0xff]
    %v1061 = vld [vmem:[#allocation3 + $0x1b8] sm:$0xff]
    %v1062 = vld [vmem:[#allocation3 + $0x1c0] sm:$0xff]
    %v1063 = vld [vmem:[#allocation3 + $0x1c8] sm:$0xff]
    %v1064 = vld [vmem:[#allocation3 + $0x1d0] sm:$0xff]
    %v1065 = vld [vmem:[#allocation3 + $0x1d8] sm:$0xff]
    %v1066 = vld [vmem:[#allocation3 + $0x1e0] sm:$0xff]
    %v1067 = vld [vmem:[#allocation3 + $0x1e8] sm:$0xff]
    %v1068 = vld [vmem:[#allocation3 + $0x1f0] sm:$0xff]
    %v1069 = vld [vmem:[#allocation3 + $0x1f8] sm:$0xff]
    %v1070 = vld [vmem:[#allocation3 + $0x200] sm:$0xff]
    %v1071 = vld [vmem:[#allocation3 + $0x208] sm:$0xff]
    %v1072 = vld [vmem:[#allocation3 + $0x210] sm:$0xff]
    %v1073 = vld [vmem:[#allocation3 + $0x218] sm:$0xff]
    %v1074 = vld [vmem:[#allocation3 + $0x220] sm:$0xff]
    %v1075 = vld [vmem:[#allocation3 + $0x228] sm:$0xff]
    %v1076 = vld [vmem:[#allocation3 + $0x230] sm:$0xff]
    %v1077 = vld [vmem:[#allocation3 + $0x238] sm:$0xff]
    %v1078 = vld [vmem:[#allocation3 + $0x240] sm:$0xff]
    %v1079 = vld [vmem:[#allocation3 + $0x248] sm:$0xff]
    %v1080 = vld [vmem:[#allocation3 + $0x250] sm:$0xff]
    %v1081 = vld [vmem:[#allocation3 + $0x258] sm:$0xff]
    %v1082 = vld [vmem:[#allocation3 + $0x260] sm:$0xff]
    %v1083 = vld [vmem:[#allocation3 + $0x268] sm:$0xff]
    %v1084 = vld [vmem:[#allocation3 + $0x270] sm:$0xff]
    %v1085 = vld [vmem:[#allocation3 + $0x278] sm:$0xff]
    %v1086 = vld [vmem:[#allocation3 + $0x280] sm:$0xff]
    %v1087 = vld [vmem:[#allocation3 + $0x288] sm:$0xff]
    %v1088 = vld [vmem:[#allocation3 + $0x290] sm:$0xff]
    %v1089 = vld [vmem:[#allocation3 + $0x298] sm:$0xff]
    %v1090 = vld [vmem:[#allocation3 + $0x2a0] sm:$0xff]
    %v1091 = vld [vmem:[#allocation3 + $0x2a8] sm:$0xff]
    %v1092 = vld [vmem:[#allocation3 + $0x2b0] sm:$0xff]
    %v1093 = vld [vmem:[#allocation3 + $0x2b8] sm:$0xff]
    %v1094 = vld [vmem:[#allocation3 + $0x2c0] sm:$0xff]
    %v1095 = vld [vmem:[#allocation3 + $0x2c8] sm:$0xff]
    %v1096 = vld [vmem:[#allocation3 + $0x2d0] sm:$0xff]
    %v1097 = vld [vmem:[#allocation3 + $0x2d8] sm:$0xff]
    %v1098 = vld [vmem:[#allocation3 + $0x2e0] sm:$0xff]
    %v1099 = vld [vmem:[#allocation3 + $0x2e8] sm:$0xff]
    %v1100 = vld [vmem:[#allocation3 + $0x2f0] sm:$0xff]
    %v1101 = vld [vmem:[#allocation3 + $0x2f8] sm:$0xff]
    %v1102 = vld [vmem:[#allocation3 + $0x300] sm:$0xff]
    %v1103 = vld [vmem:[#allocation3 + $0x308] sm:$0xff]
    %v1104 = vld [vmem:[#allocation3 + $0x310] sm:$0xff]
    %v1105 = vld [vmem:[#allocation3 + $0x318] sm:$0xff]
    %v1106 = vld [vmem:[#allocation3 + $0x320] sm:$0xff]
    %v1107 = vld [vmem:[#allocation3 + $0x328] sm:$0xff]
    %v1108 = vld [vmem:[#allocation3 + $0x330] sm:$0xff]
    %v1109 = vld [vmem:[#allocation3 + $0x338] sm:$0xff]
    %v1110 = vld [vmem:[#allocation3 + $0x340] sm:$0xff]
    %v1111 = vld [vmem:[#allocation3 + $0x348] sm:$0xff]
    %v1112 = vld [vmem:[#allocation3 + $0x350] sm:$0xff]
    %v1113 = vld [vmem:[#allocation3 + $0x358] sm:$0xff]
    %v1114 = vld [vmem:[%s4] sm:$0xff]
    %v1115 = vld [vmem:[%s4 + $0x8] sm:$0xff]
    %v1116 = vld [vmem:[%s4 + $0x10] sm:$0xff]
    %v1117 = vld [vmem:[%s4 + $0x18] sm:$0xff]
    %v1118 = vld [vmem:[%s4 + $0x20] sm:$0xff]
    %v1119 = vld [vmem:[%s4 + $0x28] sm:$0xff]
    %v1120 = vld [vmem:[%s4 + $0x30] sm:$0xff]
    %v1121 = vld [vmem:[%s4 + $0x38] sm:$0xff]
    %1123 = vset.pattern.permute.xlu0 0
    %1124 = vperm.xlu0 %1123, %v1114
    %v1125 = vpop.permute.xlu0 %1124
    %1128 = vset.pattern.permute.xlu0 0
    %1129 = vperm.xlu0 %1128, %v1115
    %v1130 = vpop.permute.xlu0 %1129
    %1133 = vset.pattern.permute.xlu0 0
    %1134 = vperm.xlu0 %1133, %v1116
    %v1135 = vpop.permute.xlu0 %1134
    %1138 = vset.pattern.permute.xlu0 0
    %1139 = vperm.xlu0 %1138, %v1117
    %v1140 = vpop.permute.xlu0 %1139
    %1143 = vset.pattern.permute.xlu0 0
    %1144 = vperm.xlu0 %1143, %v1118
    %v1145 = vpop.permute.xlu0 %1144
    %1148 = vset.pattern.permute.xlu0 0
    %1149 = vperm.xlu0 %1148, %v1119
    %v1150 = vpop.permute.xlu0 %1149
    %1153 = vset.pattern.permute.xlu0 0
    %1154 = vperm.xlu0 %1153, %v1120
    %v1155 = vpop.permute.xlu0 %1154
    %1158 = vset.pattern.permute.xlu0 0
    %1159 = vperm.xlu0 %1158, %v1121
    %v1160 = vpop.permute.xlu0 %1159
    %v1178 = vunpack.c.l.b16 %v990
    %v1179 = vunpack.c.h.b16 %v990
    %v1180 = vunpack.c.l.b16 %v991
    %v1181 = vunpack.c.l.b16 %v992
    %v1182 = vunpack.c.h.b16 %v992
    %v1183 = vunpack.c.l.b16 %v993
    %v1184 = vunpack.c.l.b16 %v994
    %v1185 = vunpack.c.h.b16 %v994
    %v1186 = vunpack.c.l.b16 %v995
    %v1187 = vunpack.c.l.b16 %v996
    %v1188 = vunpack.c.h.b16 %v996
    %v1189 = vunpack.c.l.b16 %v997
    %v1190 = vunpack.c.l.b16 %v998
    %v1191 = vunpack.c.h.b16 %v998
    %v1192 = vunpack.c.l.b16 %v999
    %v1193 = vunpack.c.l.b16 %v1000
    %v1194 = vunpack.c.h.b16 %v1000
    %v1195 = vunpack.c.l.b16 %v1001
    %v1196 = vunpack.c.l.b16 %v1002
    %v1197 = vunpack.c.h.b16 %v1002
    %v1198 = vunpack.c.l.b16 %v1003
    %v1199 = vunpack.c.l.b16 %v1004
    %v1200 = vunpack.c.h.b16 %v1004
    %v1201 = vunpack.c.l.b16 %v1005
    %v1202 = vpack.c.b16 %v1181, %v1178
    %v1203 = vpack.c.b16 %v1182, %v1179
    %v1204 = vpack.c.b16 %v1183, %v1180
    %v1205 = vpack.c.b16 %v1187, %v1184
    %v1206 = vpack.c.b16 %v1188, %v1185
    %v1207 = vpack.c.b16 %v1189, %v1186
    %v1208 = vpack.c.b16 %v1193, %v1190
    %v1209 = vpack.c.b16 %v1194, %v1191
    %v1210 = vpack.c.b16 %v1195, %v1192
    %v1211 = vpack.c.b16 %v1199, %v1196
    %v1212 = vpack.c.b16 %v1200, %v1197
    %v1213 = vpack.c.b16 %v1201, %v1198
    %vm1222 = vcmask 261120
    %v1224 = vsel %vm1222, %v1204, 0
    %v1227 = vsel %vm1222, %v1207, 0
    %v1230 = vsel %vm1222, %v1210, 0
    %v1233 = vsel %vm1222, %v1213, 0
    %1235 = vmatprep.subr.bf16.mxu0 %v1007
    %1236 = vmatpush1.bf16.msra.mxu0 %v1006
    %1237 = vmatprep.subr.bf16.mxu0 %v1013
    %1238 = vmatpush1.bf16.msra.mxu0 %v1012
    %1239 = vmatprep.subr.bf16.mxu0 %v1019
    %1240 = vmatpush1.bf16.msra.mxu0 %v1018
    %1241 = vmatprep.subr.bf16.mxu0 %v1025
    %1242 = vmatpush1.bf16.msra.mxu0 %v1024
    %1243 = vmatprep.subr.bf16.mxu0 %v1031
    %1244 = vmatpush1.bf16.msra.mxu0 %v1030
    %1245 = vmatprep.subr.bf16.mxu0 %v1037
    %1246 = vmatpush1.bf16.msra.mxu0 %v1036
    %1247 = vmatprep.subr.bf16.mxu0 %v1043
    %1248 = vmatpush1.bf16.msra.mxu0 %v1042
    %1249 = vmatprep.subr.bf16.mxu0 %v1049
    %1250 = vmatpush1.bf16.msra.mxu0 %v1048
    %1251 = vmatprep.subr.bf16.mxu0 %v1055
    %1252 = vmatpush1.bf16.msra.mxu0 %v1054
    %1253 = vmatprep.subr.bf16.mxu0 %v1061
    %1254 = vmatpush1.bf16.msra.mxu0 %v1060
    %1255 = vmatprep.subr.bf16.mxu0 %v1067
    %1256 = vmatpush1.bf16.msra.mxu0 %v1066
    %1257 = vmatprep.subr.bf16.mxu0 %v1073
    %1258 = vmatpush1.bf16.msra.mxu0 %v1072
    %1259 = vmatprep.subr.bf16.mxu0 %v1079
    %1260 = vmatpush1.bf16.msra.mxu0 %v1078
    %1261 = vmatprep.subr.bf16.mxu0 %v1085
    %1262 = vmatpush1.bf16.msra.mxu0 %v1084
    %1263 = vmatprep.subr.bf16.mxu0 %v1091
    %1264 = vmatpush1.bf16.msra.mxu0 %v1090
    %1265 = vmatprep.subr.bf16.mxu0 %v1097
    %1266 = vmatpush1.bf16.msra.mxu0 %v1096
    %1267 = vmatprep.mubr.bf16.mxu0 %v1203
    %1268 = vmatmul.mubr.bf16.gmra.mrb[0].mxu0 %v1202
    %v1269 = vpop.f32.mrb[0].mxu0
    %v1270 = vadd.f32 %v1125, %v1269
    %v1271 = vpop.f32.mrb[0].mxu0
    %v1272 = vadd.f32 %v1125, %v1271
    %v1273 = vpop.f32.mrb[0].mxu0
    %v1274 = vadd.f32 %v1130, %v1273
    %v1275 = vpop.f32.mrb[0].mxu0
    %v1276 = vadd.f32 %v1130, %v1275
    %1277 = vmatprep.mubr.bf16.mxu0 %v1206
    %1278 = vmatmul.mubr.bf16.gmra.mrb[0].mxu0 %v1205
    %v1279 = vpop.f32.mrb[0].mxu0
    %v1280 = vadd.f32 %v1135, %v1279
    %v1281 = vpop.f32.mrb[0].mxu0
    %v1282 = vadd.f32 %v1135, %v1281
    %v1283 = vpop.f32.mrb[0].mxu0
    %v1284 = vadd.f32 %v1140, %v1283
    %v1285 = vpop.f32.mrb[0].mxu0
    %v1286 = vadd.f32 %v1140, %v1285
    %1287 = vmatprep.mubr.bf16.mxu0 %v1209
    %1288 = vmatmul.mubr.bf16.gmra.mrb[0].mxu0 %v1208
    %v1289 = vpop.f32.mrb[0].mxu0
    %v1290 = vadd.f32 %v1145, %v1289
    %v1291 = vpop.f32.mrb[0].mxu0
    %v1292 = vadd.f32 %v1145, %v1291
    %v1293 = vpop.f32.mrb[0].mxu0
    %v1294 = vadd.f32 %v1150, %v1293
    %v1295 = vpop.f32.mrb[0].mxu0
    %v1296 = vadd.f32 %v1150, %v1295
    %1297 = vmatprep.mubr.bf16.mxu0 %v1212
    %1298 = vmatmul.mubr.bf16.gmra.mrb[0].mxu0 %v1211
    %v1299 = vpop.f32.mrb[0].mxu0
    %v1300 = vadd.f32 %v1155, %v1299
    %v1301 = vpop.f32.mrb[0].mxu0
    %v1302 = vadd.f32 %v1155, %v1301
    %v1303 = vpop.f32.mrb[0].mxu0
    %v1304 = vadd.f32 %v1160, %v1303
    %v1305 = vpop.f32.mrb[0].mxu0
    %v1306 = vadd.f32 %v1160, %v1305
    %1307 = vdwg.mxu0
    %1308 = vmatprep.subr.bf16.mxu0 %v1103
    %1309 = vmatpush1.bf16.msra.mxu0 %v1102
    %1310 = vmatprep.subr.bf16.mxu0 %v1109
    %1311 = vmatpush1.bf16.msra.mxu0 %v1108
    %1312 = vmatprep.subr.bf16.mxu0 0
    %1313 = vmatpush1.bf16.msra.mxu0 0
    %1314 = vmatprep.subr.bf16.mxu0 0
    %1315 = vmatpush1.bf16.msra.mxu0 0
    %1316 = vmatprep.subr.bf16.mxu0 0
    %1317 = vmatpush1.bf16.msra.mxu0 0
    %1318 = vmatprep.subr.bf16.mxu0 0
    %1319 = vmatpush1.bf16.msra.mxu0 0
    %1320 = vmatprep.subr.bf16.mxu0 0
    %1321 = vmatpush1.bf16.msra.mxu0 0
    %1322 = vmatprep.subr.bf16.mxu0 0
    %1323 = vmatpush1.bf16.msra.mxu0 0
    %1324 = vmatprep.subr.bf16.mxu0 0
    %1325 = vmatpush1.bf16.msra.mxu0 0
    %1326 = vmatprep.subr.bf16.mxu0 0
    %1327 = vmatpush1.bf16.msra.mxu0 0
    %1328 = vmatprep.subr.bf16.mxu0 0
    %1329 = vmatpush1.bf16.msra.mxu0 0
    %1330 = vmatprep.subr.bf16.mxu0 0
    %1331 = vmatpush1.bf16.msra.mxu0 0
    %1332 = vmatprep.subr.bf16.mxu0 0
    %1333 = vmatpush1.bf16.msra.mxu0 0
    %1334 = vmatprep.subr.bf16.mxu0 0
    %1335 = vmatpush1.bf16.msra.mxu0 0
    %1336 = vmatprep.subr.bf16.mxu0 0
    %1337 = vmatpush1.bf16.msra.mxu0 0
    %1338 = vmatprep.subr.bf16.mxu0 0
    %1339 = vmatpush1.bf16.msra.mxu0 0
    %1340 = vmatprep.mubr.bf16.mxu0 0
    %1341 = vmatmul.mubr.bf16.gmra.mrb[0].mxu0 %v1224
    %v1342 = vpop.f32.mrb[0].mxu0
    %v1343 = vadd.f32 %v1270, %v1342
    %v1344 = vpop.f32.mrb[0].mxu0
    %v1345 = vadd.f32 %v1272, %v1344
    %v1346 = vpop.f32.mrb[0].mxu0
    %v1347 = vadd.f32 %v1274, %v1346
    %v1348 = vpop.f32.mrb[0].mxu0
    %v1349 = vadd.f32 %v1276, %v1348
    %1350 = vmatprep.mubr.bf16.mxu0 0
    %1351 = vmatmul.mubr.bf16.gmra.mrb[0].mxu0 %v1227
    %v1352 = vpop.f32.mrb[0].mxu0
    %v1353 = vadd.f32 %v1280, %v1352
    %v1354 = vpop.f32.mrb[0].mxu0
    %v1355 = vadd.f32 %v1282, %v1354
    %v1356 = vpop.f32.mrb[0].mxu0
    %v1357 = vadd.f32 %v1284, %v1356
    %v1358 = vpop.f32.mrb[0].mxu0
    %v1359 = vadd.f32 %v1286, %v1358
    %1360 = vmatprep.mubr.bf16.mxu0 0
    %1361 = vmatmul.mubr.bf16.gmra.mrb[0].mxu0 %v1230
    %v1362 = vpop.f32.mrb[0].mxu0
    %v1363 = vadd.f32 %v1290, %v1362
    %v1364 = vpop.f32.mrb[0].mxu0
    %v1365 = vadd.f32 %v1292, %v1364
    %v1366 = vpop.f32.mrb[0].mxu0
    %v1367 = vadd.f32 %v1294, %v1366
    %v1368 = vpop.f32.mrb[0].mxu0
    %v1369 = vadd.f32 %v1296, %v1368
    %1370 = vmatprep.mubr.bf16.mxu0 0
    %1371 = vmatmul.mubr.bf16.gmra.mrb[0].mxu0 %v1233
    %v1372 = vpop.f32.mrb[0].mxu0
    %v1373 = vadd.f32 %v1300, %v1372
    %v1374 = vpop.f32.mrb[0].mxu0
    %v1375 = vadd.f32 %v1302, %v1374
    %v1376 = vpop.f32.mrb[0].mxu0
    %v1377 = vadd.f32 %v1304, %v1376
    %v1378 = vpop.f32.mrb[0].mxu0
    %v1379 = vadd.f32 %v1306, %v1378
    %1380 = vdwg.mxu0
    %1381 = vmatprep.subr.bf16.mxu0 %v1009
    %1382 = vmatpush1.bf16.msra.mxu0 %v1008
    %1383 = vmatprep.subr.bf16.mxu0 %v1015
    %1384 = vmatpush1.bf16.msra.mxu0 %v1014
    %1385 = vmatprep.subr.bf16.mxu0 %v1021
    %1386 = vmatpush1.bf16.msra.mxu0 %v1020
    %1387 = vmatprep.subr.bf16.mxu0 %v1027
    %1388 = vmatpush1.bf16.msra.mxu0 %v1026
    %1389 = vmatprep.subr.bf16.mxu0 %v1033
    %1390 = vmatpush1.bf16.msra.mxu0 %v1032
    %1391 = vmatprep.subr.bf16.mxu0 %v1039
    %1392 = vmatpush1.bf16.msra.mxu0 %v1038
    %1393 = vmatprep.subr.bf16.mxu0 %v1045
    %1394 = vmatpush1.bf16.msra.mxu0 %v1044
    %1395 = vmatprep.subr.bf16.mxu0 %v1051
    %1396 = vmatpush1.bf16.msra.mxu0 %v1050
    %1397 = vmatprep.subr.bf16.mxu0 %v1057
    %1398 = vmatpush1.bf16.msra.mxu0 %v1056
    %1399 = vmatprep.subr.bf16.mxu0 %v1063
    %1400 = vmatpush1.bf16.msra.mxu0 %v1062
    %1401 = vmatprep.subr.bf16.mxu0 %v1069
    %1402 = vmatpush1.bf16.msra.mxu0 %v1068
    %1403 = vmatprep.subr.bf16.mxu0 %v1075
    %1404 = vmatpush1.bf16.msra.mxu0 %v1074
    %1405 = vmatprep.subr.bf16.mxu0 %v1081
    %1406 = vmatpush1.bf16.msra.mxu0 %v1080
    %1407 = vmatprep.subr.bf16.mxu0 %v1087
    %1408 = vmatpush1.bf16.msra.mxu0 %v1086
    %1409 = vmatprep.subr.bf16.mxu0 %v1093
    %1410 = vmatpush1.bf16.msra.mxu0 %v1092
    %1411 = vmatprep.subr.bf16.mxu0 %v1099
    %1412 = vmatpush1.bf16.msra.mxu0 %v1098
    %1413 = vmatprep.mubr.bf16.mxu0 %v1203
    %1414 = vmatmul.mubr.bf16.gmra.mrb[0].mxu0 %v1202
    %v1415 = vpop.f32.mrb[0].mxu0
    %v1416 = vadd.f32 %v1125, %v1415
    %v1417 = vpop.f32.mrb[0].mxu0
    %v1418 = vadd.f32 %v1125, %v1417
    %v1419 = vpop.f32.mrb[0].mxu0
    %v1420 = vadd.f32 %v1130, %v1419
    %v1421 = vpop.f32.mrb[0].mxu0
    %v1422 = vadd.f32 %v1130, %v1421
    %1423 = vmatprep.mubr.bf16.mxu0 %v1206
    %1424 = vmatmul.mubr.bf16.gmra.mrb[0].mxu0 %v1205
    %v1425 = vpop.f32.mrb[0].mxu0
    %v1426 = vadd.f32 %v1135, %v1425
    %v1427 = vpop.f32.mrb[0].mxu0
    %v1428 = vadd.f32 %v1135, %v1427
    %v1429 = vpop.f32.mrb[0].mxu0
    %v1430 = vadd.f32 %v1140, %v1429
    %v1431 = vpop.f32.mrb[0].mxu0
    %v1432 = vadd.f32 %v1140, %v1431
    %1433 = vmatprep.mubr.bf16.mxu0 %v1209
    %1434 = vmatmul.mubr.bf16.gmra.mrb[0].mxu0 %v1208
    %v1435 = vpop.f32.mrb[0].mxu0
    %v1436 = vadd.f32 %v1145, %v1435
    %v1437 = vpop.f32.mrb[0].mxu0
    %v1438 = vadd.f32 %v1145, %v1437
    %v1439 = vpop.f32.mrb[0].mxu0
    %v1440 = vadd.f32 %v1150, %v1439
    %v1441 = vpop.f32.mrb[0].mxu0
    %v1442 = vadd.f32 %v1150, %v1441
    %1443 = vmatprep.mubr.bf16.mxu0 %v1212
    %1444 = vmatmul.mubr.bf16.gmra.mrb[0].mxu0 %v1211
    %v1445 = vpop.f32.mrb[0].mxu0
    %v1446 = vadd.f32 %v1155, %v1445
    %v1447 = vpop.f32.mrb[0].mxu0
    %v1448 = vadd.f32 %v1155, %v1447
    %v1449 = vpop.f32.mrb[0].mxu0
    %v1450 = vadd.f32 %v1160, %v1449
    %v1451 = vpop.f32.mrb[0].mxu0
    %v1452 = vadd.f32 %v1160, %v1451
    %1453 = vdwg.mxu0
    %1454 = vmatprep.subr.bf16.mxu0 %v1105
    %1455 = vmatpush1.bf16.msra.mxu0 %v1104
    %1456 = vmatprep.subr.bf16.mxu0 %v1111
    %1457 = vmatpush1.bf16.msra.mxu0 %v1110
    %1458 = vmatprep.subr.bf16.mxu0 0
    %1459 = vmatpush1.bf16.msra.mxu0 0
    %1460 = vmatprep.subr.bf16.mxu0 0
    %1461 = vmatpush1.bf16.msra.mxu0 0
    %1462 = vmatprep.subr.bf16.mxu0 0
    %1463 = vmatpush1.bf16.msra.mxu0 0
    %1464 = vmatprep.subr.bf16.mxu0 0
    %1465 = vmatpush1.bf16.msra.mxu0 0
    %1466 = vmatprep.subr.bf16.mxu0 0
    %1467 = vmatpush1.bf16.msra.mxu0 0
    %1468 = vmatprep.subr.bf16.mxu0 0
    %1469 = vmatpush1.bf16.msra.mxu0 0
    %1470 = vmatprep.subr.bf16.mxu0 0
    %1471 = vmatpush1.bf16.msra.mxu0 0
    %1472 = vmatprep.subr.bf16.mxu0 0
    %1473 = vmatpush1.bf16.msra.mxu0 0
    %1474 = vmatprep.subr.bf16.mxu0 0
    %1475 = vmatpush1.bf16.msra.mxu0 0
    %1476 = vmatprep.subr.bf16.mxu0 0
    %1477 = vmatpush1.bf16.msra.mxu0 0
    %1478 = vmatprep.subr.bf16.mxu0 0
    %1479 = vmatpush1.bf16.msra.mxu0 0
    %1480 = vmatprep.subr.bf16.mxu0 0
    %1481 = vmatpush1.bf16.msra.mxu0 0
    %1482 = vmatprep.subr.bf16.mxu0 0
    %1483 = vmatpush1.bf16.msra.mxu0 0
    %1484 = vmatprep.subr.bf16.mxu0 0
    %1485 = vmatpush1.bf16.msra.mxu0 0
    %1486 = vmatprep.mubr.bf16.mxu0 0
    %1487 = vmatmul.mubr.bf16.gmra.mrb[0].mxu0 %v1224
    %v1488 = vpop.f32.mrb[0].mxu0
    %v1489 = vadd.f32 %v1416, %v1488
    %v1490 = vpop.f32.mrb[0].mxu0
    %v1491 = vadd.f32 %v1418, %v1490
    %v1492 = vpop.f32.mrb[0].mxu0
    %v1493 = vadd.f32 %v1420, %v1492
    %v1494 = vpop.f32.mrb[0].mxu0
    %v1495 = vadd.f32 %v1422, %v1494
    %1496 = vmatprep.mubr.bf16.mxu0 0
    %1497 = vmatmul.mubr.bf16.gmra.mrb[0].mxu0 %v1227
    %v1498 = vpop.f32.mrb[0].mxu0
    %v1499 = vadd.f32 %v1426, %v1498
    %v1500 = vpop.f32.mrb[0].mxu0
    %v1501 = vadd.f32 %v1428, %v1500
    %v1502 = vpop.f32.mrb[0].mxu0
    %v1503 = vadd.f32 %v1430, %v1502
    %v1504 = vpop.f32.mrb[0].mxu0
    %v1505 = vadd.f32 %v1432, %v1504
    %1506 = vmatprep.mubr.bf16.mxu0 0
    %1507 = vmatmul.mubr.bf16.gmra.mrb[0].mxu0 %v1230
    %v1508 = vpop.f32.mrb[0].mxu0
    %v1509 = vadd.f32 %v1436, %v1508
    %v1510 = vpop.f32.mrb[0].mxu0
    %v1511 = vadd.f32 %v1438, %v1510
    %v1512 = vpop.f32.mrb[0].mxu0
    %v1513 = vadd.f32 %v1440, %v1512
    %v1514 = vpop.f32.mrb[0].mxu0
    %v1515 = vadd.f32 %v1442, %v1514
    %1516 = vmatprep.mubr.bf16.mxu0 0
    %1517 = vmatmul.mubr.bf16.gmra.mrb[0].mxu0 %v1233
    %v1518 = vpop.f32.mrb[0].mxu0
    %v1519 = vadd.f32 %v1446, %v1518
    %v1520 = vpop.f32.mrb[0].mxu0
    %v1521 = vadd.f32 %v1448, %v1520
    %v1522 = vpop.f32.mrb[0].mxu0
    %v1523 = vadd.f32 %v1450, %v1522
    %v1524 = vpop.f32.mrb[0].mxu0
    %v1525 = vadd.f32 %v1452, %v1524
    %1526 = vdwg.mxu0
    %1527 = vmatprep.subr.bf16.mxu0 %v1011
    %1528 = vmatpush1.bf16.msra.mxu0 %v1010
    %1529 = vmatprep.subr.bf16.mxu0 %v1017
    %1530 = vmatpush1.bf16.msra.mxu0 %v1016
    %1531 = vmatprep.subr.bf16.mxu0 %v1023
    %1532 = vmatpush1.bf16.msra.mxu0 %v1022
    %1533 = vmatprep.subr.bf16.mxu0 %v1029
    %1534 = vmatpush1.bf16.msra.mxu0 %v1028
    %1535 = vmatprep.subr.bf16.mxu0 %v1035
    %1536 = vmatpush1.bf16.msra.mxu0 %v1034
    %1537 = vmatprep.subr.bf16.mxu0 %v1041
    %1538 = vmatpush1.bf16.msra.mxu0 %v1040
    %1539 = vmatprep.subr.bf16.mxu0 %v1047
    %1540 = vmatpush1.bf16.msra.mxu0 %v1046
    %1541 = vmatprep.subr.bf16.mxu0 %v1053
    %1542 = vmatpush1.bf16.msra.mxu0 %v1052
    %1543 = vmatprep.subr.bf16.mxu0 %v1059
    %1544 = vmatpush1.bf16.msra.mxu0 %v1058
    %1545 = vmatprep.subr.bf16.mxu0 %v1065
    %1546 = vmatpush1.bf16.msra.mxu0 %v1064
    %1547 = vmatprep.subr.bf16.mxu0 %v1071
    %1548 = vmatpush1.bf16.msra.mxu0 %v1070
    %1549 = vmatprep.subr.bf16.mxu0 %v1077
    %1550 = vmatpush1.bf16.msra.mxu0 %v1076
    %1551 = vmatprep.subr.bf16.mxu0 %v1083
    %1552 = vmatpush1.bf16.msra.mxu0 %v1082
    %1553 = vmatprep.subr.bf16.mxu0 %v1089
    %1554 = vmatpush1.bf16.msra.mxu0 %v1088
    %1555 = vmatprep.subr.bf16.mxu0 %v1095
    %1556 = vmatpush1.bf16.msra.mxu0 %v1094
    %1557 = vmatprep.subr.bf16.mxu0 %v1101
    %1558 = vmatpush1.bf16.msra.mxu0 %v1100
    %1559 = vmatprep.mubr.bf16.mxu0 %v1203
    %1560 = vmatmul.mubr.bf16.gmra.mrb[0].mxu0 %v1202
    %v1561 = vpop.f32.mrb[0].mxu0
    %v1562 = vadd.f32 %v1125, %v1561
    %v1563 = vpop.f32.mrb[0].mxu0
    %v1564 = vadd.f32 %v1125, %v1563
    %v1565 = vpop.f32.mrb[0].mxu0
    %v1566 = vadd.f32 %v1130, %v1565
    %v1567 = vpop.f32.mrb[0].mxu0
    %v1568 = vadd.f32 %v1130, %v1567
    %1569 = vmatprep.mubr.bf16.mxu0 %v1206
    %1570 = vmatmul.mubr.bf16.gmra.mrb[0].mxu0 %v1205
    %v1571 = vpop.f32.mrb[0].mxu0
    %v1572 = vadd.f32 %v1135, %v1571
    %v1573 = vpop.f32.mrb[0].mxu0
    %v1574 = vadd.f32 %v1135, %v1573
    %v1575 = vpop.f32.mrb[0].mxu0
    %v1576 = vadd.f32 %v1140, %v1575
    %v1577 = vpop.f32.mrb[0].mxu0
    %v1578 = vadd.f32 %v1140, %v1577
    %1579 = vmatprep.mubr.bf16.mxu0 %v1209
    %1580 = vmatmul.mubr.bf16.gmra.mrb[0].mxu0 %v1208
    %v1581 = vpop.f32.mrb[0].mxu0
    %v1582 = vadd.f32 %v1145, %v1581
    %v1583 = vpop.f32.mrb[0].mxu0
    %v1584 = vadd.f32 %v1145, %v1583
    %v1585 = vpop.f32.mrb[0].mxu0
    %v1586 = vadd.f32 %v1150, %v1585
    %v1587 = vpop.f32.mrb[0].mxu0
    %v1588 = vadd.f32 %v1150, %v1587
    %1589 = vmatprep.mubr.bf16.mxu0 %v1212
    %1590 = vmatmul.mubr.bf16.gmra.mrb[0].mxu0 %v1211
    %v1591 = vpop.f32.mrb[0].mxu0
    %v1592 = vadd.f32 %v1155, %v1591
    %v1593 = vpop.f32.mrb[0].mxu0
    %v1594 = vadd.f32 %v1155, %v1593
    %v1595 = vpop.f32.mrb[0].mxu0
    %v1596 = vadd.f32 %v1160, %v1595
    %v1597 = vpop.f32.mrb[0].mxu0
    %v1598 = vadd.f32 %v1160, %v1597
    %1599 = vdwg.mxu0
    %1600 = vmatprep.subr.bf16.mxu0 %v1107
    %1601 = vmatpush1.bf16.msra.mxu0 %v1106
    %1602 = vmatprep.subr.bf16.mxu0 %v1113
    %1603 = vmatpush1.bf16.msra.mxu0 %v1112
    %1604 = vmatprep.subr.bf16.mxu0 0
    %1605 = vmatpush1.bf16.msra.mxu0 0
    %1606 = vmatprep.subr.bf16.mxu0 0
    %1607 = vmatpush1.bf16.msra.mxu0 0
    %1608 = vmatprep.subr.bf16.mxu0 0
    %1609 = vmatpush1.bf16.msra.mxu0 0
    %1610 = vmatprep.subr.bf16.mxu0 0
    %1611 = vmatpush1.bf16.msra.mxu0 0
    %1612 = vmatprep.subr.bf16.mxu0 0
    %1613 = vmatpush1.bf16.msra.mxu0 0
    %1614 = vmatprep.subr.bf16.mxu0 0
    %1615 = vmatpush1.bf16.msra.mxu0 0
    %1616 = vmatprep.subr.bf16.mxu0 0
    %1617 = vmatpush1.bf16.msra.mxu0 0
    %1618 = vmatprep.subr.bf16.mxu0 0
    %1619 = vmatpush1.bf16.msra.mxu0 0
    %1620 = vmatprep.subr.bf16.mxu0 0
    %1621 = vmatpush1.bf16.msra.mxu0 0
    %1622 = vmatprep.subr.bf16.mxu0 0
    %1623 = vmatpush1.bf16.msra.mxu0 0
    %1624 = vmatprep.subr.bf16.mxu0 0
    %1625 = vmatpush1.bf16.msra.mxu0 0
    %1626 = vmatprep.subr.bf16.mxu0 0
    %1627 = vmatpush1.bf16.msra.mxu0 0
    %1628 = vmatprep.subr.bf16.mxu0 0
    %1629 = vmatpush1.bf16.msra.mxu0 0
    %1630 = vmatprep.subr.bf16.mxu0 0
    %1631 = vmatpush1.bf16.msra.mxu0 0
    %1632 = vmatprep.mubr.bf16.mxu0 0
    %1633 = vmatmul.mubr.bf16.gmra.mrb[0].mxu0 %v1224
    %v1634 = vpop.f32.mrb[0].mxu0
    %v1635 = vadd.f32 %v1562, %v1634
    %v1636 = vpop.f32.mrb[0].mxu0
    %v1637 = vadd.f32 %v1564, %v1636
    %v1638 = vpop.f32.mrb[0].mxu0
    %v1639 = vadd.f32 %v1566, %v1638
    %v1640 = vpop.f32.mrb[0].mxu0
    %v1641 = vadd.f32 %v1568, %v1640
    %1642 = vmatprep.mubr.bf16.mxu0 0
    %1643 = vmatmul.mubr.bf16.gmra.mrb[0].mxu0 %v1227
    %v1644 = vpop.f32.mrb[0].mxu0
    %v1645 = vadd.f32 %v1572, %v1644
    %v1646 = vpop.f32.mrb[0].mxu0
    %v1647 = vadd.f32 %v1574, %v1646
    %v1648 = vpop.f32.mrb[0].mxu0
    %v1649 = vadd.f32 %v1576, %v1648
    %v1650 = vpop.f32.mrb[0].mxu0
    %v1651 = vadd.f32 %v1578, %v1650
    %1652 = vmatprep.mubr.bf16.mxu0 0
    %1653 = vmatmul.mubr.bf16.gmra.mrb[0].mxu0 %v1230
    %v1654 = vpop.f32.mrb[0].mxu0
    %v1655 = vadd.f32 %v1582, %v1654
    %v1656 = vpop.f32.mrb[0].mxu0
    %v1657 = vadd.f32 %v1584, %v1656
    %v1658 = vpop.f32.mrb[0].mxu0
    %v1659 = vadd.f32 %v1586, %v1658
    %v1660 = vpop.f32.mrb[0].mxu0
    %v1661 = vadd.f32 %v1588, %v1660
    %1662 = vmatprep.mubr.bf16.mxu0 0
    %1663 = vmatmul.mubr.bf16.gmra.mrb[0].mxu0 %v1233
    %v1664 = vpop.f32.mrb[0].mxu0
    %v1665 = vadd.f32 %v1592, %v1664
    %v1666 = vpop.f32.mrb[0].mxu0
    %v1667 = vadd.f32 %v1594, %v1666
    %v1668 = vpop.f32.mrb[0].mxu0
    %v1669 = vadd.f32 %v1596, %v1668
    %v1670 = vpop.f32.mrb[0].mxu0
    %v1671 = vadd.f32 %v1598, %v1670
    %1672 = vdwg.mxu0
    %v1673 = vmax.f32 %v1343, 0.0
    %v1674 = vmax.f32 %v1345, 0.0
    %v1675 = vmax.f32 %v1489, 0.0
    %v1676 = vmax.f32 %v1491, 0.0
    %v1677 = vmax.f32 %v1635, 0.0
    %v1678 = vmax.f32 %v1637, 0.0
    %v1679 = vmax.f32 %v1347, 0.0
    %v1680 = vmax.f32 %v1349, 0.0
    %v1681 = vmax.f32 %v1493, 0.0
    %v1682 = vmax.f32 %v1495, 0.0
    %v1683 = vmax.f32 %v1639, 0.0
    %v1684 = vmax.f32 %v1641, 0.0
    %v1685 = vmax.f32 %v1353, 0.0
    %v1686 = vmax.f32 %v1355, 0.0
    %v1687 = vmax.f32 %v1499, 0.0
    %v1688 = vmax.f32 %v1501, 0.0
    %v1689 = vmax.f32 %v1645, 0.0
    %v1690 = vmax.f32 %v1647, 0.0
    %v1691 = vmax.f32 %v1357, 0.0
    %v1692 = vmax.f32 %v1359, 0.0
    %v1693 = vmax.f32 %v1503, 0.0
    %v1694 = vmax.f32 %v1505, 0.0
    %v1695 = vmax.f32 %v1649, 0.0
    %v1696 = vmax.f32 %v1651, 0.0
    %v1697 = vmax.f32 %v1363, 0.0
    %v1698 = vmax.f32 %v1365, 0.0
    %v1699 = vmax.f32 %v1509, 0.0
    %v1700 = vmax.f32 %v1511, 0.0
    %v1701 = vmax.f32 %v1655, 0.0
    %v1702 = vmax.f32 %v1657, 0.0
    %v1703 = vmax.f32 %v1367, 0.0
    %v1704 = vmax.f32 %v1369, 0.0
    %v1705 = vmax.f32 %v1513, 0.0
    %v1706 = vmax.f32 %v1515, 0.0
    %v1707 = vmax.f32 %v1659, 0.0
    %v1708 = vmax.f32 %v1661, 0.0
    %v1709 = vmax.f32 %v1373, 0.0
    %v1710 = vmax.f32 %v1375, 0.0
    %v1711 = vmax.f32 %v1519, 0.0
    %v1712 = vmax.f32 %v1521, 0.0
    %v1713 = vmax.f32 %v1665, 0.0
    %v1714 = vmax.f32 %v1667, 0.0
    %v1715 = vmax.f32 %v1377, 0.0
    %v1716 = vmax.f32 %v1379, 0.0
    %v1717 = vmax.f32 %v1523, 0.0
    %v1718 = vmax.f32 %v1525, 0.0
    %v1719 = vmax.f32 %v1669, 0.0
    %v1720 = vmax.f32 %v1671, 0.0
    %v1721 = vpack.c.bf16 %v1679, %v1673
    %v1722 = vpack.c.bf16 %v1680, %v1674
    %v1723 = vpack.c.bf16 %v1681, %v1675
    %v1724 = vpack.c.bf16 %v1682, %v1676
    %v1725 = vpack.c.bf16 %v1683, %v1677
    %v1726 = vpack.c.bf16 %v1684, %v1678
    %v1727 = vpack.c.bf16 %v1691, %v1685
    %v1728 = vpack.c.bf16 %v1692, %v1686
    %v1729 = vpack.c.bf16 %v1693, %v1687
    %v1730 = vpack.c.bf16 %v1694, %v1688
    %v1731 = vpack.c.bf16 %v1695, %v1689
    %v1732 = vpack.c.bf16 %v1696, %v1690
    %v1733 = vpack.c.bf16 %v1703, %v1697
    %v1734 = vpack.c.bf16 %v1704, %v1698
    %v1735 = vpack.c.bf16 %v1705, %v1699
    %v1736 = vpack.c.bf16 %v1706, %v1700
    %v1737 = vpack.c.bf16 %v1707, %v1701
    %v1738 = vpack.c.bf16 %v1708, %v1702
    %v1739 = vpack.c.bf16 %v1715, %v1709
    %v1740 = vpack.c.bf16 %v1716, %v1710
    %v1741 = vpack.c.bf16 %v1717, %v1711
    %v1742 = vpack.c.bf16 %v1718, %v1712
    %v1743 = vpack.c.bf16 %v1719, %v1713
    %v1744 = vpack.c.bf16 %v1720, %v1714
    %1745 = vst [vmem:[#allocation4] sm:$0xff] %v1721
    %1746 = vst [vmem:[#allocation4 + $0x8] sm:$0xff] %v1722
    %1747 = vst [vmem:[#allocation4 + $0x10] sm:$0xff] %v1723
    %1748 = vst [vmem:[#allocation4 + $0x18] sm:$0xff] %v1724
    %1749 = vst [vmem:[#allocation4 + $0x20] sm:$0xff] %v1725
    %1750 = vst.msk [vmem:[#allocation4 + $0x28] sm:$0xff] %vm498, %v1726
    %1751 = vst [vmem:[#allocation4 + $0x30] sm:$0xff] %v1727
    %1752 = vst [vmem:[#allocation4 + $0x38] sm:$0xff] %v1728
    %1753 = vst [vmem:[#allocation4 + $0x40] sm:$0xff] %v1729
    %1754 = vst [vmem:[#allocation4 + $0x48] sm:$0xff] %v1730
    %1755 = vst [vmem:[#allocation4 + $0x50] sm:$0xff] %v1731
    %1756 = vst.msk [vmem:[#allocation4 + $0x58] sm:$0xff] %vm498, %v1732
    %1757 = vst [vmem:[#allocation4 + $0x60] sm:$0xff] %v1733
    %1758 = vst [vmem:[#allocation4 + $0x68] sm:$0xff] %v1734
    %1759 = vst [vmem:[#allocation4 + $0x70] sm:$0xff] %v1735
    %1760 = vst [vmem:[#allocation4 + $0x78] sm:$0xff] %v1736
    %1761 = vst [vmem:[#allocation4 + $0x80] sm:$0xff] %v1737
    %1762 = vst.msk [vmem:[#allocation4 + $0x88] sm:$0xff] %vm498, %v1738
    %1763 = vst [vmem:[#allocation4 + $0x90] sm:$0xff] %v1739
    %1764 = vst [vmem:[#allocation4 + $0x98] sm:$0xff] %v1740
    %1765 = vst [vmem:[#allocation4 + $0xa0] sm:$0xff] %v1741
    %1766 = vst [vmem:[#allocation4 + $0xa8] sm:$0xff] %v1742
    %1767 = vst [vmem:[#allocation4 + $0xb0] sm:$0xff] %v1743
    %1768 = vst.msk [vmem:[#allocation4 + $0xb8] sm:$0xff] %vm498, %v1744
    %v1769 = vld [vmem:[#allocation4] sm:$0xff]
    %v1770 = vld [vmem:[#allocation4 + $0x8] sm:$0xff]
    %v1771 = vld [vmem:[#allocation4 + $0x10] sm:$0xff]
    %v1772 = vld [vmem:[#allocation4 + $0x18] sm:$0xff]
    %v1773 = vld [vmem:[#allocation4 + $0x20] sm:$0xff]
    %v1774 = vld [vmem:[#allocation4 + $0x28] sm:$0xff]
    %v1775 = vld [vmem:[#allocation4 + $0x30] sm:$0xff]
    %v1776 = vld [vmem:[#allocation4 + $0x38] sm:$0xff]
    %v1777 = vld [vmem:[#allocation4 + $0x40] sm:$0xff]
    %v1778 = vld [vmem:[#allocation4 + $0x48] sm:$0xff]
    %v1779 = vld [vmem:[#allocation4 + $0x50] sm:$0xff]
    %v1780 = vld [vmem:[#allocation4 + $0x58] sm:$0xff]
    %v1781 = vld [vmem:[#allocation4 + $0x60] sm:$0xff]
    %v1782 = vld [vmem:[#allocation4 + $0x68] sm:$0xff]
    %v1783 = vld [vmem:[#allocation4 + $0x70] sm:$0xff]
    %v1784 = vld [vmem:[#allocation4 + $0x78] sm:$0xff]
    %v1785 = vld [vmem:[#allocation4 + $0x80] sm:$0xff]
    %v1786 = vld [vmem:[#allocation4 + $0x88] sm:$0xff]
    %v1787 = vld [vmem:[#allocation4 + $0x90] sm:$0xff]
    %v1788 = vld [vmem:[#allocation4 + $0x98] sm:$0xff]
    %v1789 = vld [vmem:[#allocation4 + $0xa0] sm:$0xff]
    %v1790 = vld [vmem:[#allocation4 + $0xa8] sm:$0xff]
    %v1791 = vld [vmem:[#allocation4 + $0xb0] sm:$0xff]
    %v1792 = vld [vmem:[#allocation4 + $0xb8] sm:$0xff]
    %1817 = vrot.lane.b32.xlu0 %v1769, 127
    %v1818 = vpop.permute.xlu0 %1817
    %1819 = vrot.lane.b32.xlu0 %v1770, 127
    %v1820 = vpop.permute.xlu0 %1819
    %1821 = vrot.lane.b32.xlu0 %v1771, 127
    %v1822 = vpop.permute.xlu0 %1821
    %1823 = vrot.lane.b32.xlu0 %v1772, 127
    %v1824 = vpop.permute.xlu0 %1823
    %1825 = vrot.lane.b32.xlu0 %v1773, 127
    %v1826 = vpop.permute.xlu0 %1825
    %1827 = vrot.lane.b32.xlu0 %v1774, 127
    %v1828 = vpop.permute.xlu0 %1827
    %1829 = vrot.lane.b32.xlu0 %v1775, 127
    %v1830 = vpop.permute.xlu0 %1829
    %1831 = vrot.lane.b32.xlu0 %v1776, 127
    %v1832 = vpop.permute.xlu0 %1831
    %1833 = vrot.lane.b32.xlu0 %v1777, 127
    %v1834 = vpop.permute.xlu0 %1833
    %1835 = vrot.lane.b32.xlu0 %v1778, 127
    %v1836 = vpop.permute.xlu0 %1835
    %1837 = vrot.lane.b32.xlu0 %v1779, 127
    %v1838 = vpop.permute.xlu0 %1837
    %1839 = vrot.lane.b32.xlu0 %v1780, 127
    %v1840 = vpop.permute.xlu0 %1839
    %1841 = vrot.lane.b32.xlu0 %v1781, 127
    %v1842 = vpop.permute.xlu0 %1841
    %1843 = vrot.lane.b32.xlu0 %v1782, 127
    %v1844 = vpop.permute.xlu0 %1843
    %1845 = vrot.lane.b32.xlu0 %v1783, 127
    %v1846 = vpop.permute.xlu0 %1845
    %1847 = vrot.lane.b32.xlu0 %v1784, 127
    %v1848 = vpop.permute.xlu0 %1847
    %1849 = vrot.lane.b32.xlu0 %v1785, 127
    %v1850 = vpop.permute.xlu0 %1849
    %1851 = vrot.lane.b32.xlu0 %v1786, 127
    %v1852 = vpop.permute.xlu0 %1851
    %1853 = vrot.lane.b32.xlu0 %v1787, 127
    %v1854 = vpop.permute.xlu0 %1853
    %1855 = vrot.lane.b32.xlu0 %v1788, 127
    %v1856 = vpop.permute.xlu0 %1855
    %1857 = vrot.lane.b32.xlu0 %v1789, 127
    %v1858 = vpop.permute.xlu0 %1857
    %1859 = vrot.lane.b32.xlu0 %v1790, 127
    %v1860 = vpop.permute.xlu0 %1859
    %1861 = vrot.lane.b32.xlu0 %v1791, 127
    %v1862 = vpop.permute.xlu0 %1861
    %1863 = vrot.lane.b32.xlu0 %v1792, 127
    %v1864 = vpop.permute.xlu0 %1863
    %v1865 = vsel %vm542, %v1818, %v1820
    %v1866 = vsel %vm542, %v1820, %v1822
    %v1867 = vsel %vm542, %v1822, %v1824
    %v1868 = vsel %vm542, %v1824, %v1826
    %v1869 = vsel %vm542, %v1826, %v1828
    %v1870 = vsel %vm542, %v1830, %v1832
    %v1871 = vsel %vm542, %v1832, %v1834
    %v1872 = vsel %vm542, %v1834, %v1836
    %v1873 = vsel %vm542, %v1836, %v1838
    %v1874 = vsel %vm542, %v1838, %v1840
    %v1875 = vsel %vm542, %v1842, %v1844
    %v1876 = vsel %vm542, %v1844, %v1846
    %v1877 = vsel %vm542, %v1846, %v1848
    %v1878 = vsel %vm542, %v1848, %v1850
    %v1879 = vsel %vm542, %v1850, %v1852
    %v1880 = vsel %vm542, %v1854, %v1856
    %v1881 = vsel %vm542, %v1856, %v1858
    %v1882 = vsel %vm542, %v1858, %v1860
    %v1883 = vsel %vm542, %v1860, %v1862
    %v1884 = vsel %vm542, %v1862, %v1864
    %v1909 = vmax.bf16 %v1769, %v1865
    %v1910 = vmax.bf16 %v1770, %v1866
    %v1911 = vmax.bf16 %v1771, %v1867
    %v1912 = vmax.bf16 %v1772, %v1868
    %v1913 = vmax.bf16 %v1773, %v1869
    %v1914 = vmax.bf16 %v1774, %v1828
    %v1915 = vmax.bf16 %v1775, %v1870
    %v1916 = vmax.bf16 %v1776, %v1871
    %v1917 = vmax.bf16 %v1777, %v1872
    %v1918 = vmax.bf16 %v1778, %v1873
    %v1919 = vmax.bf16 %v1779, %v1874
    %v1920 = vmax.bf16 %v1780, %v1840
    %v1921 = vmax.bf16 %v1781, %v1875
    %v1922 = vmax.bf16 %v1782, %v1876
    %v1923 = vmax.bf16 %v1783, %v1877
    %v1924 = vmax.bf16 %v1784, %v1878
    %v1925 = vmax.bf16 %v1785, %v1879
    %v1926 = vmax.bf16 %v1786, %v1852
    %v1927 = vmax.bf16 %v1787, %v1880
    %v1928 = vmax.bf16 %v1788, %v1881
    %v1929 = vmax.bf16 %v1789, %v1882
    %v1930 = vmax.bf16 %v1790, %v1883
    %v1931 = vmax.bf16 %v1791, %v1884
    %v1932 = vmax.bf16 %v1792, %v1864
    %1957 = vrot.lane.b32.xlu0 %v1909, 100
    %v1958 = vpop.permute.xlu0 %1957
    %1959 = vrot.lane.b32.xlu0 %v1910, 100
    %v1960 = vpop.permute.xlu0 %1959
    %1961 = vrot.lane.b32.xlu0 %v1911, 100
    %v1962 = vpop.permute.xlu0 %1961
    %1963 = vrot.lane.b32.xlu0 %v1912, 100
    %v1964 = vpop.permute.xlu0 %1963
    %1965 = vrot.lane.b32.xlu0 %v1913, 100
    %v1966 = vpop.permute.xlu0 %1965
    %1967 = vrot.lane.b32.xlu0 %v1914, 100
    %v1968 = vpop.permute.xlu0 %1967
    %1969 = vrot.lane.b32.xlu0 %v1915, 100
    %v1970 = vpop.permute.xlu0 %1969
    %1971 = vrot.lane.b32.xlu0 %v1916, 100
    %v1972 = vpop.permute.xlu0 %1971
    %1973 = vrot.lane.b32.xlu0 %v1917, 100
    %v1974 = vpop.permute.xlu0 %1973
    %1975 = vrot.lane.b32.xlu0 %v1918, 100
    %v1976 = vpop.permute.xlu0 %1975
    %1977 = vrot.lane.b32.xlu0 %v1919, 100
    %v1978 = vpop.permute.xlu0 %1977
    %1979 = vrot.lane.b32.xlu0 %v1920, 100
    %v1980 = vpop.permute.xlu0 %1979
    %1981 = vrot.lane.b32.xlu0 %v1921, 100
    %v1982 = vpop.permute.xlu0 %1981
    %1983 = vrot.lane.b32.xlu0 %v1922, 100
    %v1984 = vpop.permute.xlu0 %1983
    %1985 = vrot.lane.b32.xlu0 %v1923, 100
    %v1986 = vpop.permute.xlu0 %1985
    %1987 = vrot.lane.b32.xlu0 %v1924, 100
    %v1988 = vpop.permute.xlu0 %1987
    %1989 = vrot.lane.b32.xlu0 %v1925, 100
    %v1990 = vpop.permute.xlu0 %1989
    %1991 = vrot.lane.b32.xlu0 %v1926, 100
    %v1992 = vpop.permute.xlu0 %1991
    %1993 = vrot.lane.b32.xlu0 %v1927, 100
    %v1994 = vpop.permute.xlu0 %1993
    %1995 = vrot.lane.b32.xlu0 %v1928, 100
    %v1996 = vpop.permute.xlu0 %1995
    %1997 = vrot.lane.b32.xlu0 %v1929, 100
    %v1998 = vpop.permute.xlu0 %1997
    %1999 = vrot.lane.b32.xlu0 %v1930, 100
    %v2000 = vpop.permute.xlu0 %1999
    %2001 = vrot.lane.b32.xlu0 %v1931, 100
    %v2002 = vpop.permute.xlu0 %2001
    %2003 = vrot.lane.b32.xlu0 %v1932, 100
    %v2004 = vpop.permute.xlu0 %2003
    %v2005 = vsel %vm660, %v1958, %v1960
    %v2006 = vsel %vm660, %v1960, %v1962
    %v2007 = vsel %vm660, %v1962, %v1964
    %v2008 = vsel %vm660, %v1964, %v1966
    %v2009 = vsel %vm660, %v1966, %v1968
    %v2010 = vsel %vm660, %v1970, %v1972
    %v2011 = vsel %vm660, %v1972, %v1974
    %v2012 = vsel %vm660, %v1974, %v1976
    %v2013 = vsel %vm660, %v1976, %v1978
    %v2014 = vsel %vm660, %v1978, %v1980
    %v2015 = vsel %vm660, %v1982, %v1984
    %v2016 = vsel %vm660, %v1984, %v1986
    %v2017 = vsel %vm660, %v1986, %v1988
    %v2018 = vsel %vm660, %v1988, %v1990
    %v2019 = vsel %vm660, %v1990, %v1992
    %v2020 = vsel %vm660, %v1994, %v1996
    %v2021 = vsel %vm660, %v1996, %v1998
    %v2022 = vsel %vm660, %v1998, %v2000
    %v2023 = vsel %vm660, %v2000, %v2002
    %v2024 = vsel %vm660, %v2002, %v2004
    %v2045 = vmax.bf16 %v1909, %v2005
    %v2046 = vmax.bf16 %v1910, %v2006
    %v2047 = vmax.bf16 %v1911, %v2007
    %v2048 = vmax.bf16 %v1912, %v2008
    %v2049 = vmax.bf16 %v1913, %v2009
    %v2050 = vmax.bf16 %v1915, %v2010
    %v2051 = vmax.bf16 %v1916, %v2011
    %v2052 = vmax.bf16 %v1917, %v2012
    %v2053 = vmax.bf16 %v1918, %v2013
    %v2054 = vmax.bf16 %v1919, %v2014
    %v2055 = vmax.bf16 %v1921, %v2015
    %v2056 = vmax.bf16 %v1922, %v2016
    %v2057 = vmax.bf16 %v1923, %v2017
    %v2058 = vmax.bf16 %v1924, %v2018
    %v2059 = vmax.bf16 %v1925, %v2019
    %v2060 = vmax.bf16 %v1927, %v2020
    %v2061 = vmax.bf16 %v1928, %v2021
    %v2062 = vmax.bf16 %v1929, %v2022
    %v2063 = vmax.bf16 %v1930, %v2023
    %v2064 = vmax.bf16 %v1931, %v2024
    %v2065 = vld [vmem:[%s5] sm:$0xff]
    %v2066 = vld [vmem:[%s5 + $0x8] sm:$0xff]
    %v2067 = vld [vmem:[%s5 + $0x10] sm:$0xff]
    %v2068 = vld [vmem:[%s5 + $0x18] sm:$0xff]
    %v2069 = vld [vmem:[%s5 + $0x20] sm:$0xff]
    %v2070 = vld [vmem:[%s5 + $0x28] sm:$0xff]
    %v2071 = vld [vmem:[%s5 + $0x30] sm:$0xff]
    %v2072 = vld [vmem:[%s5 + $0x38] sm:$0xff]
    %v2073 = vld [vmem:[%s5 + $0x40] sm:$0xff]
    %v2074 = vld [vmem:[%s5 + $0x48] sm:$0xff]
    %v2075 = vld [vmem:[%s5 + $0x50] sm:$0xff]
    %v2076 = vld [vmem:[%s5 + $0x58] sm:$0xff]
    %v2077 = vld [vmem:[%s5 + $0x60] sm:$0xff]
    %v2078 = vld [vmem:[%s5 + $0x68] sm:$0xff]
    %v2079 = vld [vmem:[%s5 + $0x70] sm:$0xff]
    %v2080 = vld [vmem:[%s5 + $0x78] sm:$0xff]
    %v2081 = vld [vmem:[%s5 + $0x80] sm:$0xff]
    %v2082 = vld [vmem:[%s5 + $0x88] sm:$0xff]
    %v2083 = vld [vmem:[%s5 + $0x90] sm:$0xff]
    %v2084 = vld [vmem:[%s5 + $0x98] sm:$0xff]
    %v2085 = vld [vmem:[%s5 + $0xa0] sm:$0xff]
    %v2086 = vld [vmem:[%s5 + $0xa8] sm:$0xff]
    %v2087 = vld [vmem:[%s5 + $0xb0] sm:$0xff]
    %v2088 = vld [vmem:[%s5 + $0xb8] sm:$0xff]
    %v2089 = vld [vmem:[%s5 + $0xc0] sm:$0xff]
    %v2090 = vld [vmem:[%s5 + $0xc8] sm:$0xff]
    %v2091 = vld [vmem:[%s5 + $0xd0] sm:$0xff]
    %v2092 = vld [vmem:[%s5 + $0xd8] sm:$0xff]
    %v2093 = vld [vmem:[%s5 + $0xe0] sm:$0xff]
    %v2094 = vld [vmem:[%s5 + $0xe8] sm:$0xff]
    %v2095 = vld [vmem:[%s5 + $0xf0] sm:$0xff]
    %v2096 = vld [vmem:[%s5 + $0xf8] sm:$0xff]
    %v2097 = vld [vmem:[%s5 + $0x100] sm:$0xff]
    %v2098 = vld [vmem:[%s5 + $0x108] sm:$0xff]
    %v2099 = vld [vmem:[%s5 + $0x110] sm:$0xff]
    %v2100 = vld [vmem:[%s5 + $0x118] sm:$0xff]
    %v2101 = vld [vmem:[%s5 + $0x120] sm:$0xff]
    %v2102 = vld [vmem:[%s5 + $0x128] sm:$0xff]
    %v2103 = vld [vmem:[%s5 + $0x130] sm:$0xff]
    %v2104 = vld [vmem:[%s5 + $0x138] sm:$0xff]
    %v2105 = vld [vmem:[%s5 + $0x140] sm:$0xff]
    %v2106 = vld [vmem:[%s5 + $0x148] sm:$0xff]
    %v2107 = vld [vmem:[%s5 + $0x150] sm:$0xff]
    %v2108 = vld [vmem:[%s5 + $0x158] sm:$0xff]
    %v2109 = vld [vmem:[%s5 + $0x160] sm:$0xff]
    %v2110 = vld [vmem:[%s5 + $0x168] sm:$0xff]
    %v2111 = vld [vmem:[%s5 + $0x170] sm:$0xff]
    %v2112 = vld [vmem:[%s5 + $0x178] sm:$0xff]
    %v2113 = vld [vmem:[%s5 + $0x180] sm:$0xff]
    %v2114 = vld [vmem:[%s5 + $0x188] sm:$0xff]
    %v2115 = vld [vmem:[%s5 + $0x190] sm:$0xff]
    %v2116 = vld [vmem:[%s5 + $0x198] sm:$0xff]
    %v2117 = vld [vmem:[%s5 + $0x1a0] sm:$0xff]
    %v2118 = vld [vmem:[%s5 + $0x1a8] sm:$0xff]
    %v2119 = vld [vmem:[%s5 + $0x1b0] sm:$0xff]
    %v2120 = vld [vmem:[%s5 + $0x1b8] sm:$0xff]
    %v2121 = vld [vmem:[%s5 + $0x1c0] sm:$0xff]
    %v2122 = vld [vmem:[%s5 + $0x1c8] sm:$0xff]
    %v2123 = vld [vmem:[%s5 + $0x1d0] sm:$0xff]
    %v2124 = vld [vmem:[%s5 + $0x1d8] sm:$0xff]
    %v2125 = vld [vmem:[%s5 + $0x1e0] sm:$0xff]
    %v2126 = vld [vmem:[%s5 + $0x1e8] sm:$0xff]
    %v2127 = vld [vmem:[%s5 + $0x1f0] sm:$0xff]
    %v2128 = vld [vmem:[%s5 + $0x1f8] sm:$0xff]
    %v2129 = vld [vmem:[%s5 + $0x200] sm:$0xff]
    %v2130 = vld [vmem:[%s5 + $0x208] sm:$0xff]
    %v2131 = vld [vmem:[%s5 + $0x210] sm:$0xff]
    %v2132 = vld [vmem:[%s5 + $0x218] sm:$0xff]
    %v2133 = vld [vmem:[%s5 + $0x220] sm:$0xff]
    %v2134 = vld [vmem:[%s5 + $0x228] sm:$0xff]
    %v2135 = vld [vmem:[%s5 + $0x230] sm:$0xff]
    %v2136 = vld [vmem:[%s5 + $0x238] sm:$0xff]
    %v2137 = vld [vmem:[%s5 + $0x240] sm:$0xff]
    %v2138 = vld [vmem:[%s5 + $0x248] sm:$0xff]
    %v2139 = vld [vmem:[%s5 + $0x250] sm:$0xff]
    %v2140 = vld [vmem:[%s5 + $0x258] sm:$0xff]
    %v2141 = vld [vmem:[%s5 + $0x260] sm:$0xff]
    %v2142 = vld [vmem:[%s5 + $0x268] sm:$0xff]
    %v2143 = vld [vmem:[%s5 + $0x270] sm:$0xff]
    %v2144 = vld [vmem:[%s5 + $0x278] sm:$0xff]
    %v2225 = vunpack.c.l.b16 %v2065
    %v2226 = vunpack.c.h.b16 %v2065
    %v2227 = vunpack.c.l.b16 %v2066
    %v2228 = vunpack.c.h.b16 %v2066
    %v2229 = vunpack.c.l.b16 %v2067
    %v2230 = vunpack.c.h.b16 %v2067
    %v2231 = vunpack.c.l.b16 %v2068
    %v2232 = vunpack.c.h.b16 %v2068
    %v2233 = vunpack.c.l.b16 %v2069
    %v2234 = vunpack.c.h.b16 %v2069
    %v2235 = vunpack.c.l.b16 %v2070
    %v2236 = vunpack.c.h.b16 %v2070
    %v2237 = vunpack.c.l.b16 %v2071
    %v2238 = vunpack.c.h.b16 %v2071
    %v2239 = vunpack.c.l.b16 %v2072
    %v2240 = vunpack.c.h.b16 %v2072
    %v2241 = vunpack.c.l.b16 %v2073
    %v2242 = vunpack.c.h.b16 %v2073
    %v2243 = vunpack.c.l.b16 %v2074
    %v2244 = vunpack.c.h.b16 %v2074
    %v2245 = vunpack.c.l.b16 %v2075
    %v2246 = vunpack.c.h.b16 %v2075
    %v2247 = vunpack.c.l.b16 %v2076
    %v2248 = vunpack.c.h.b16 %v2076
    %v2249 = vunpack.c.l.b16 %v2077
    %v2250 = vunpack.c.h.b16 %v2077
    %v2251 = vunpack.c.l.b16 %v2078
    %v2252 = vunpack.c.h.b16 %v2078
    %v2253 = vunpack.c.l.b16 %v2079
    %v2254 = vunpack.c.h.b16 %v2079
    %v2255 = vunpack.c.l.b16 %v2080
    %v2256 = vunpack.c.h.b16 %v2080
    %v2257 = vunpack.c.l.b16 %v2081
    %v2258 = vunpack.c.h.b16 %v2081
    %v2259 = vunpack.c.l.b16 %v2082
    %v2260 = vunpack.c.h.b16 %v2082
    %v2261 = vunpack.c.l.b16 %v2083
    %v2262 = vunpack.c.h.b16 %v2083
    %v2263 = vunpack.c.l.b16 %v2084
    %v2264 = vunpack.c.h.b16 %v2084
    %v2265 = vunpack.c.l.b16 %v2085
    %v2266 = vunpack.c.h.b16 %v2085
    %v2267 = vunpack.c.l.b16 %v2086
    %v2268 = vunpack.c.h.b16 %v2086
    %v2269 = vunpack.c.l.b16 %v2087
    %v2270 = vunpack.c.h.b16 %v2087
    %v2271 = vunpack.c.l.b16 %v2088
    %v2272 = vunpack.c.h.b16 %v2088
    %v2273 = vunpack.c.l.b16 %v2089
    %v2274 = vunpack.c.h.b16 %v2089
    %v2275 = vunpack.c.l.b16 %v2090
    %v2276 = vunpack.c.h.b16 %v2090
    %v2277 = vunpack.c.l.b16 %v2091
    %v2278 = vunpack.c.h.b16 %v2091
    %v2279 = vunpack.c.l.b16 %v2092
    %v2280 = vunpack.c.h.b16 %v2092
    %v2281 = vunpack.c.l.b16 %v2093
    %v2282 = vunpack.c.h.b16 %v2093
    %v2283 = vunpack.c.l.b16 %v2094
    %v2284 = vunpack.c.h.b16 %v2094
    %v2285 = vunpack.c.l.b16 %v2095
    %v2286 = vunpack.c.h.b16 %v2095
    %v2287 = vunpack.c.l.b16 %v2096
    %v2288 = vunpack.c.h.b16 %v2096
    %v2289 = vunpack.c.l.b16 %v2097
    %v2290 = vunpack.c.h.b16 %v2097
    %v2291 = vunpack.c.l.b16 %v2098
    %v2292 = vunpack.c.h.b16 %v2098
    %v2293 = vunpack.c.l.b16 %v2099
    %v2294 = vunpack.c.h.b16 %v2099
    %v2295 = vunpack.c.l.b16 %v2100
    %v2296 = vunpack.c.h.b16 %v2100
    %v2297 = vunpack.c.l.b16 %v2101
    %v2298 = vunpack.c.h.b16 %v2101
    %v2299 = vunpack.c.l.b16 %v2102
    %v2300 = vunpack.c.h.b16 %v2102
    %v2301 = vunpack.c.l.b16 %v2103
    %v2302 = vunpack.c.h.b16 %v2103
    %v2303 = vunpack.c.l.b16 %v2104
    %v2304 = vunpack.c.h.b16 %v2104
    %v2305 = vunpack.c.l.b16 %v2105
    %v2306 = vunpack.c.h.b16 %v2105
    %v2307 = vunpack.c.l.b16 %v2106
    %v2308 = vunpack.c.h.b16 %v2106
    %v2309 = vunpack.c.l.b16 %v2107
    %v2310 = vunpack.c.h.b16 %v2107
    %v2311 = vunpack.c.l.b16 %v2108
    %v2312 = vunpack.c.h.b16 %v2108
    %v2313 = vunpack.c.l.b16 %v2109
    %v2314 = vunpack.c.h.b16 %v2109
    %v2315 = vunpack.c.l.b16 %v2110
    %v2316 = vunpack.c.h.b16 %v2110
    %v2317 = vunpack.c.l.b16 %v2111
    %v2318 = vunpack.c.h.b16 %v2111
    %v2319 = vunpack.c.l.b16 %v2112
    %v2320 = vunpack.c.h.b16 %v2112
    %v2321 = vunpack.c.l.b16 %v2113
    %v2322 = vunpack.c.h.b16 %v2113
    %v2323 = vunpack.c.l.b16 %v2114
    %v2324 = vunpack.c.h.b16 %v2114
    %v2325 = vunpack.c.l.b16 %v2115
    %v2326 = vunpack.c.h.b16 %v2115
    %v2327 = vunpack.c.l.b16 %v2116
    %v2328 = vunpack.c.h.b16 %v2116
    %v2329 = vunpack.c.l.b16 %v2117
    %v2330 = vunpack.c.h.b16 %v2117
    %v2331 = vunpack.c.l.b16 %v2118
    %v2332 = vunpack.c.h.b16 %v2118
    %v2333 = vunpack.c.l.b16 %v2119
    %v2334 = vunpack.c.h.b16 %v2119
    %v2335 = vunpack.c.l.b16 %v2120
    %v2336 = vunpack.c.h.b16 %v2120
    %v2337 = vunpack.c.l.b16 %v2121
    %v2338 = vunpack.c.h.b16 %v2121
    %v2339 = vunpack.c.l.b16 %v2122
    %v2340 = vunpack.c.h.b16 %v2122
    %v2341 = vunpack.c.l.b16 %v2123
    %v2342 = vunpack.c.h.b16 %v2123
    %v2343 = vunpack.c.l.b16 %v2124
    %v2344 = vunpack.c.h.b16 %v2124
    %v2345 = vunpack.c.l.b16 %v2125
    %v2346 = vunpack.c.h.b16 %v2125
    %v2347 = vunpack.c.l.b16 %v2126
    %v2348 = vunpack.c.h.b16 %v2126
    %v2349 = vunpack.c.l.b16 %v2127
    %v2350 = vunpack.c.h.b16 %v2127
    %v2351 = vunpack.c.l.b16 %v2128
    %v2352 = vunpack.c.h.b16 %v2128
    %v2353 = vunpack.c.l.b16 %v2129
    %v2354 = vunpack.c.h.b16 %v2129
    %v2355 = vunpack.c.l.b16 %v2130
    %v2356 = vunpack.c.h.b16 %v2130
    %v2357 = vunpack.c.l.b16 %v2131
    %v2358 = vunpack.c.h.b16 %v2131
    %v2359 = vunpack.c.l.b16 %v2132
    %v2360 = vunpack.c.h.b16 %v2132
    %v2361 = vunpack.c.l.b16 %v2133
    %v2362 = vunpack.c.h.b16 %v2133
    %v2363 = vunpack.c.l.b16 %v2134
    %v2364 = vunpack.c.h.b16 %v2134
    %v2365 = vunpack.c.l.b16 %v2135
    %v2366 = vunpack.c.h.b16 %v2135
    %v2367 = vunpack.c.l.b16 %v2136
    %v2368 = vunpack.c.h.b16 %v2136
    %v2369 = vunpack.c.l.b16 %v2137
    %v2370 = vunpack.c.h.b16 %v2137
    %v2371 = vunpack.c.l.b16 %v2138
    %v2372 = vunpack.c.h.b16 %v2138
    %v2373 = vunpack.c.l.b16 %v2139
    %v2374 = vunpack.c.h.b16 %v2139
    %v2375 = vunpack.c.l.b16 %v2140
    %v2376 = vunpack.c.h.b16 %v2140
    %v2377 = vunpack.c.l.b16 %v2141
    %v2378 = vunpack.c.h.b16 %v2141
    %v2379 = vunpack.c.l.b16 %v2142
    %v2380 = vunpack.c.h.b16 %v2142
    %v2381 = vunpack.c.l.b16 %v2143
    %v2382 = vunpack.c.h.b16 %v2143
    %v2383 = vunpack.c.l.b16 %v2144
    %v2384 = vunpack.c.h.b16 %v2144
    %v2385 = vpack.c.b16 %v2227, %v2225
    %v2386 = vpack.c.b16 %v2228, %v2226
    %v2387 = vpack.c.b16 %v2231, %v2229
    %v2388 = vpack.c.b16 %v2232, %v2230
    %v2389 = vpack.c.b16 %v2235, %v2233
    %v2390 = vpack.c.b16 %v2236, %v2234
    %v2391 = vpack.c.b16 %v2239, %v2237
    %v2392 = vpack.c.b16 %v2240, %v2238
    %v2393 = vpack.c.b16 %v2243, %v2241
    %v2394 = vpack.c.b16 %v2244, %v2242
    %v2395 = vpack.c.b16 %v2247, %v2245
    %v2396 = vpack.c.b16 %v2248, %v2246
    %v2397 = vpack.c.b16 %v2251, %v2249
    %v2398 = vpack.c.b16 %v2252, %v2250
    %v2399 = vpack.c.b16 %v2255, %v2253
    %v2400 = vpack.c.b16 %v2256, %v2254
    %v2401 = vpack.c.b16 %v2259, %v2257
    %v2402 = vpack.c.b16 %v2260, %v2258
    %v2403 = vpack.c.b16 %v2263, %v2261
    %v2404 = vpack.c.b16 %v2264, %v2262
    %v2405 = vpack.c.b16 %v2267, %v2265
    %v2406 = vpack.c.b16 %v2268, %v2266
    %v2407 = vpack.c.b16 %v2271, %v2269
    %v2408 = vpack.c.b16 %v2272, %v2270
    %v2409 = vpack.c.b16 %v2275, %v2273
    %v2410 = vpack.c.b16 %v2276, %v2274
    %v2411 = vpack.c.b16 %v2279, %v2277
    %v2412 = vpack.c.b16 %v2280, %v2278
    %v2413 = vpack.c.b16 %v2283, %v2281
    %v2414 = vpack.c.b16 %v2284, %v2282
    %v2415 = vpack.c.b16 %v2287, %v2285
    %v2416 = vpack.c.b16 %v2288, %v2286
    %v2417 = vpack.c.b16 %v2291, %v2289
    %v2418 = vpack.c.b16 %v2292, %v2290
    %v2419 = vpack.c.b16 %v2295, %v2293
    %v2420 = vpack.c.b16 %v2296, %v2294
    %v2421 = vpack.c.b16 %v2299, %v2297
    %v2422 = vpack.c.b16 %v2300, %v2298
    %v2423 = vpack.c.b16 %v2303, %v2301
    %v2424 = vpack.c.b16 %v2304, %v2302
    %v2425 = vpack.c.b16 %v2307, %v2305
    %v2426 = vpack.c.b16 %v2308, %v2306
    %v2427 = vpack.c.b16 %v2311, %v2309
    %v2428 = vpack.c.b16 %v2312, %v2310
    %v2429 = vpack.c.b16 %v2315, %v2313
    %v2430 = vpack.c.b16 %v2316, %v2314
    %v2431 = vpack.c.b16 %v2319, %v2317
    %v2432 = vpack.c.b16 %v2320, %v2318
    %v2433 = vpack.c.b16 %v2323, %v2321
    %v2434 = vpack.c.b16 %v2324, %v2322
    %v2435 = vpack.c.b16 %v2327, %v2325
    %v2436 = vpack.c.b16 %v2328, %v2326
    %v2437 = vpack.c.b16 %v2331, %v2329
    %v2438 = vpack.c.b16 %v2332, %v2330
    %v2439 = vpack.c.b16 %v2335, %v2333
    %v2440 = vpack.c.b16 %v2336, %v2334
    %v2441 = vpack.c.b16 %v2339, %v2337
    %v2442 = vpack.c.b16 %v2340, %v2338
    %v2443 = vpack.c.b16 %v2343, %v2341
    %v2444 = vpack.c.b16 %v2344, %v2342
    %v2445 = vpack.c.b16 %v2347, %v2345
    %v2446 = vpack.c.b16 %v2348, %v2346
    %v2447 = vpack.c.b16 %v2351, %v2349
    %v2448 = vpack.c.b16 %v2352, %v2350
    %v2449 = vpack.c.b16 %v2355, %v2353
    %v2450 = vpack.c.b16 %v2356, %v2354
    %v2451 = vpack.c.b16 %v2359, %v2357
    %v2452 = vpack.c.b16 %v2360, %v2358
    %v2453 = vpack.c.b16 %v2363, %v2361
    %v2454 = vpack.c.b16 %v2364, %v2362
    %v2455 = vpack.c.b16 %v2367, %v2365
    %v2456 = vpack.c.b16 %v2368, %v2366
    %v2457 = vpack.c.b16 %v2371, %v2369
    %v2458 = vpack.c.b16 %v2372, %v2370
    %v2459 = vpack.c.b16 %v2375, %v2373
    %v2460 = vpack.c.b16 %v2376, %v2374
    %v2461 = vpack.c.b16 %v2379, %v2377
    %v2462 = vpack.c.b16 %v2380, %v2378
    %v2463 = vpack.c.b16 %v2383, %v2381
    %v2464 = vpack.c.b16 %v2384, %v2382
    %v2544 = vsel %vm49, %v2049, 0
    %v2547 = vsel %vm49, %v2054, 0
    %v2550 = vsel %vm49, %v2059, 0
    %v2553 = vsel %vm49, %v2064, 0
    %vm2555 = vcmask 1046528
    %vm2556 = vcmask 1047552
    %v2557 = vsel %vm2555, 4294967295, 65535
    %v2558 = vsel %vm2556, %v2557, 0
    %v2560 = vand.u32 %v2463, %v2558
    %v2563 = vand.u32 %v2464, %v2558
    %2565 = vmatprep.subr.bf16.mxu0 %v2386
    %2566 = vmatpush1.bf16.msra.mxu0 %v2385
    %2567 = vmatprep.subr.bf16.mxu0 %v2388
    %2568 = vmatpush1.bf16.msra.mxu0 %v2387
    %2569 = vmatprep.subr.bf16.mxu0 %v2390
    %2570 = vmatpush1.bf16.msra.mxu0 %v2389
    %2571 = vmatprep.subr.bf16.mxu0 %v2392
    %2572 = vmatpush1.bf16.msra.mxu0 %v2391
    %2573 = vmatprep.subr.bf16.mxu0 %v2394
    %2574 = vmatpush1.bf16.msra.mxu0 %v2393
    %2575 = vmatprep.subr.bf16.mxu0 %v2396
    %2576 = vmatpush1.bf16.msra.mxu0 %v2395
    %2577 = vmatprep.subr.bf16.mxu0 %v2398
    %2578 = vmatpush1.bf16.msra.mxu0 %v2397
    %2579 = vmatprep.subr.bf16.mxu0 %v2400
    %2580 = vmatpush1.bf16.msra.mxu0 %v2399
    %2581 = vmatprep.subr.bf16.mxu0 %v2402
    %2582 = vmatpush1.bf16.msra.mxu0 %v2401
    %2583 = vmatprep.subr.bf16.mxu0 %v2404
    %2584 = vmatpush1.bf16.msra.mxu0 %v2403
    %2585 = vmatprep.subr.bf16.mxu0 %v2406
    %2586 = vmatpush1.bf16.msra.mxu0 %v2405
    %2587 = vmatprep.subr.bf16.mxu0 %v2408
    %2588 = vmatpush1.bf16.msra.mxu0 %v2407
    %2589 = vmatprep.subr.bf16.mxu0 %v2410
    %2590 = vmatpush1.bf16.msra.mxu0 %v2409
    %2591 = vmatprep.subr.bf16.mxu0 %v2412
    %2592 = vmatpush1.bf16.msra.mxu0 %v2411
    %2593 = vmatprep.subr.bf16.mxu0 %v2414
    %2594 = vmatpush1.bf16.msra.mxu0 %v2413
    %2595 = vmatprep.subr.bf16.mxu0 %v2416
    %2596 = vmatpush1.bf16.msra.mxu0 %v2415
    %2597 = vmatprep.mubr.bf16.mxu0 %v2046
    %2598 = vmatmul.mubr.bf16.gmra.mrb[0].mxu0 %v2045
    %v2599 = vpop.f32.mrb[0].mxu0
    %v2600 = vadd.f32 0.0, %v2599
    %v2601 = vpop.f32.mrb[0].mxu0
    %v2602 = vadd.f32 0.0, %v2601
    %v2603 = vpop.f32.mrb[0].mxu0
    %v2604 = vadd.f32 0.0, %v2603
    %v2605 = vpop.f32.mrb[0].mxu0
    %v2606 = vadd.f32 0.0, %v2605
    %2607 = vmatprep.mubr.bf16.mxu0 %v2051
    %2608 = vmatmul.mubr.bf16.gmra.mrb[0].mxu0 %v2050
    %v2609 = vpop.f32.mrb[0].mxu0
    %v2610 = vadd.f32 0.0, %v2609
    %v2611 = vpop.f32.mrb[0].mxu0
    %v2612 = vadd.f32 0.0, %v2611
    %v2613 = vpop.f32.mrb[0].mxu0
    %v2614 = vadd.f32 0.0, %v2613
    %v2615 = vpop.f32.mrb[0].mxu0
    %v2616 = vadd.f32 0.0, %v2615
    %2617 = vmatprep.mubr.bf16.mxu0 %v2056
    %2618 = vmatmul.mubr.bf16.gmra.mrb[0].mxu0 %v2055
    %v2619 = vpop.f32.mrb[0].mxu0
    %v2620 = vadd.f32 0.0, %v2619
    %v2621 = vpop.f32.mrb[0].mxu0
    %v2622 = vadd.f32 0.0, %v2621
    %v2623 = vpop.f32.mrb[0].mxu0
    %v2624 = vadd.f32 0.0, %v2623
    %v2625 = vpop.f32.mrb[0].mxu0
    %v2626 = vadd.f32 0.0, %v2625
    %2627 = vmatprep.mubr.bf16.mxu0 %v2061
    %2628 = vmatmul.mubr.bf16.gmra.mrb[0].mxu0 %v2060
    %v2629 = vpop.f32.mrb[0].mxu0
    %v2630 = vadd.f32 0.0, %v2629
    %v2631 = vpop.f32.mrb[0].mxu0
    %v2632 = vadd.f32 0.0, %v2631
    %v2633 = vpop.f32.mrb[0].mxu0
    %v2634 = vadd.f32 0.0, %v2633
    %v2635 = vpop.f32.mrb[0].mxu0
    %v2636 = vadd.f32 0.0, %v2635
    %2637 = vdwg.mxu0
    %2638 = vmatprep.subr.bf16.mxu0 %v2418
    %2639 = vmatpush1.bf16.msra.mxu0 %v2417
    %2640 = vmatprep.subr.bf16.mxu0 %v2420
    %2641 = vmatpush1.bf16.msra.mxu0 %v2419
    %2642 = vmatprep.subr.bf16.mxu0 %v2422
    %2643 = vmatpush1.bf16.msra.mxu0 %v2421
    %2644 = vmatprep.subr.bf16.mxu0 %v2424
    %2645 = vmatpush1.bf16.msra.mxu0 %v2423
    %2646 = vmatprep.subr.bf16.mxu0 %v2426
    %2647 = vmatpush1.bf16.msra.mxu0 %v2425
    %2648 = vmatprep.subr.bf16.mxu0 %v2428
    %2649 = vmatpush1.bf16.msra.mxu0 %v2427
    %2650 = vmatprep.subr.bf16.mxu0 %v2430
    %2651 = vmatpush1.bf16.msra.mxu0 %v2429
    %2652 = vmatprep.subr.bf16.mxu0 %v2432
    %2653 = vmatpush1.bf16.msra.mxu0 %v2431
    %2654 = vmatprep.subr.bf16.mxu0 %v2434
    %2655 = vmatpush1.bf16.msra.mxu0 %v2433
    %2656 = vmatprep.subr.bf16.mxu0 %v2436
    %2657 = vmatpush1.bf16.msra.mxu0 %v2435
    %2658 = vmatprep.subr.bf16.mxu0 %v2438
    %2659 = vmatpush1.bf16.msra.mxu0 %v2437
    %2660 = vmatprep.subr.bf16.mxu0 %v2440
    %2661 = vmatpush1.bf16.msra.mxu0 %v2439
    %2662 = vmatprep.subr.bf16.mxu0 %v2442
    %2663 = vmatpush1.bf16.msra.mxu0 %v2441
    %2664 = vmatprep.subr.bf16.mxu0 %v2444
    %2665 = vmatpush1.bf16.msra.mxu0 %v2443
    %2666 = vmatprep.subr.bf16.mxu0 %v2446
    %2667 = vmatpush1.bf16.msra.mxu0 %v2445
    %2668 = vmatprep.subr.bf16.mxu0 %v2448
    %2669 = vmatpush1.bf16.msra.mxu0 %v2447
    %2670 = vmatprep.mubr.bf16.mxu0 %v2048
    %2671 = vmatmul.mubr.bf16.gmra.mrb[0].mxu0 %v2047
    %v2672 = vpop.f32.mrb[0].mxu0
    %v2673 = vadd.f32 %v2600, %v2672
    %v2674 = vpop.f32.mrb[0].mxu0
    %v2675 = vadd.f32 %v2602, %v2674
    %v2676 = vpop.f32.mrb[0].mxu0
    %v2677 = vadd.f32 %v2604, %v2676
    %v2678 = vpop.f32.mrb[0].mxu0
    %v2679 = vadd.f32 %v2606, %v2678
    %2680 = vmatprep.mubr.bf16.mxu0 %v2053
    %2681 = vmatmul.mubr.bf16.gmra.mrb[0].mxu0 %v2052
    %v2682 = vpop.f32.mrb[0].mxu0
    %v2683 = vadd.f32 %v2610, %v2682
    %v2684 = vpop.f32.mrb[0].mxu0
    %v2685 = vadd.f32 %v2612, %v2684
    %v2686 = vpop.f32.mrb[0].mxu0
    %v2687 = vadd.f32 %v2614, %v2686
    %v2688 = vpop.f32.mrb[0].mxu0
    %v2689 = vadd.f32 %v2616, %v2688
    %2690 = vmatprep.mubr.bf16.mxu0 %v2058
    %2691 = vmatmul.mubr.bf16.gmra.mrb[0].mxu0 %v2057
    %v2692 = vpop.f32.mrb[0].mxu0
    %v2693 = vadd.f32 %v2620, %v2692
    %v2694 = vpop.f32.mrb[0].mxu0
    %v2695 = vadd.f32 %v2622, %v2694
    %v2696 = vpop.f32.mrb[0].mxu0
    %v2697 = vadd.f32 %v2624, %v2696
    %v2698 = vpop.f32.mrb[0].mxu0
    %v2699 = vadd.f32 %v2626, %v2698
    %2700 = vmatprep.mubr.bf16.mxu0 %v2063
    %2701 = vmatmul.mubr.bf16.gmra.mrb[0].mxu0 %v2062
    %v2702 = vpop.f32.mrb[0].mxu0
    %v2703 = vadd.f32 %v2630, %v2702
    %v2704 = vpop.f32.mrb[0].mxu0
    %v2705 = vadd.f32 %v2632, %v2704
    %v2706 = vpop.f32.mrb[0].mxu0
    %v2707 = vadd.f32 %v2634, %v2706
    %v2708 = vpop.f32.mrb[0].mxu0
    %v2709 = vadd.f32 %v2636, %v2708
    %2710 = vdwg.mxu0
    %2711 = vmatprep.subr.bf16.mxu0 %v2450
    %2712 = vmatpush1.bf16.msra.mxu0 %v2449
    %2713 = vmatprep.subr.bf16.mxu0 %v2452
    %2714 = vmatpush1.bf16.msra.mxu0 %v2451
    %2715 = vmatprep.subr.bf16.mxu0 %v2454
    %2716 = vmatpush1.bf16.msra.mxu0 %v2453
    %2717 = vmatprep.subr.bf16.mxu0 %v2456
    %2718 = vmatpush1.bf16.msra.mxu0 %v2455
    %2719 = vmatprep.subr.bf16.mxu0 %v2458
    %2720 = vmatpush1.bf16.msra.mxu0 %v2457
    %2721 = vmatprep.subr.bf16.mxu0 %v2460
    %2722 = vmatpush1.bf16.msra.mxu0 %v2459
    %2723 = vmatprep.subr.bf16.mxu0 %v2462
    %2724 = vmatpush1.bf16.msra.mxu0 %v2461
    %2725 = vmatprep.subr.bf16.mxu0 %v2563
    %2726 = vmatpush1.bf16.msra.mxu0 %v2560
    %2727 = vmatprep.subr.bf16.mxu0 0
    %2728 = vmatpush1.bf16.msra.mxu0 0
    %2729 = vmatprep.subr.bf16.mxu0 0
    %2730 = vmatpush1.bf16.msra.mxu0 0
    %2731 = vmatprep.subr.bf16.mxu0 0
    %2732 = vmatpush1.bf16.msra.mxu0 0
    %2733 = vmatprep.subr.bf16.mxu0 0
    %2734 = vmatpush1.bf16.msra.mxu0 0
    %2735 = vmatprep.subr.bf16.mxu0 0
    %2736 = vmatpush1.bf16.msra.mxu0 0
    %2737 = vmatprep.subr.bf16.mxu0 0
    %2738 = vmatpush1.bf16.msra.mxu0 0
    %2739 = vmatprep.subr.bf16.mxu0 0
    %2740 = vmatpush1.bf16.msra.mxu0 0
    %2741 = vmatprep.subr.bf16.mxu0 0
    %2742 = vmatpush1.bf16.msra.mxu0 0
    %2743 = vmatprep.mubr.bf16.mxu0 0
    %2744 = vmatmul.mubr.bf16.gmra.mrb[0].mxu0 %v2544
    %v2745 = vpop.f32.mrb[0].mxu0
    %v2746 = vadd.f32 %v2673, %v2745
    %v2747 = vpop.f32.mrb[0].mxu0
    %v2748 = vadd.f32 %v2675, %v2747
    %v2749 = vpop.f32.mrb[0].mxu0
    %v2750 = vadd.f32 %v2677, %v2749
    %v2751 = vpop.f32.mrb[0].mxu0
    %v2752 = vadd.f32 %v2679, %v2751
    %2753 = vmatprep.mubr.bf16.mxu0 0
    %2754 = vmatmul.mubr.bf16.gmra.mrb[0].mxu0 %v2547
    %v2755 = vpop.f32.mrb[0].mxu0
    %v2756 = vadd.f32 %v2683, %v2755
    %v2757 = vpop.f32.mrb[0].mxu0
    %v2758 = vadd.f32 %v2685, %v2757
    %v2759 = vpop.f32.mrb[0].mxu0
    %v2760 = vadd.f32 %v2687, %v2759
    %v2761 = vpop.f32.mrb[0].mxu0
    %v2762 = vadd.f32 %v2689, %v2761
    %2763 = vmatprep.mubr.bf16.mxu0 0
    %2764 = vmatmul.mubr.bf16.gmra.mrb[0].mxu0 %v2550
    %v2765 = vpop.f32.mrb[0].mxu0
    %v2766 = vadd.f32 %v2693, %v2765
    %v2767 = vpop.f32.mrb[0].mxu0
    %v2768 = vadd.f32 %v2695, %v2767
    %v2769 = vpop.f32.mrb[0].mxu0
    %v2770 = vadd.f32 %v2697, %v2769
    %v2771 = vpop.f32.mrb[0].mxu0
    %v2772 = vadd.f32 %v2699, %v2771
    %2773 = vmatprep.mubr.bf16.mxu0 0
    %2774 = vmatmul.mubr.bf16.gmra.mrb[0].mxu0 %v2553
    %v2775 = vpop.f32.mrb[0].mxu0
    %v2776 = vadd.f32 %v2703, %v2775
    %v2777 = vpop.f32.mrb[0].mxu0
    %v2778 = vadd.f32 %v2705, %v2777
    %v2779 = vpop.f32.mrb[0].mxu0
    %v2780 = vadd.f32 %v2707, %v2779
    %v2781 = vpop.f32.mrb[0].mxu0
    %v2782 = vadd.f32 %v2709, %v2781
    %2783 = vdwg.mxu0
    %v2784 = vpack.c.bf16 %v2750, %v2746
    %v2785 = vpack.c.bf16 %v2752, %v2748
    %v2786 = vpack.c.bf16 %v2760, %v2756
    %v2787 = vpack.c.bf16 %v2762, %v2758
    %v2788 = vpack.c.bf16 %v2770, %v2766
    %v2789 = vpack.c.bf16 %v2772, %v2768
    %v2790 = vpack.c.bf16 %v2780, %v2776
    %v2791 = vpack.c.bf16 %v2782, %v2778
    %v2800 = vunpack.c.l.b16 %v2784
    %v2801 = vunpack.c.l.b16 %v2785
    %v2802 = vunpack.c.h.b16 %v2784
    %v2803 = vunpack.c.h.b16 %v2785
    %v2804 = vunpack.c.l.b16 %v2786
    %v2805 = vunpack.c.l.b16 %v2787
    %v2806 = vunpack.c.h.b16 %v2786
    %v2807 = vunpack.c.h.b16 %v2787
    %v2808 = vunpack.c.l.b16 %v2788
    %v2809 = vunpack.c.l.b16 %v2789
    %v2810 = vunpack.c.h.b16 %v2788
    %v2811 = vunpack.c.h.b16 %v2789
    %v2812 = vunpack.c.l.b16 %v2790
    %v2813 = vunpack.c.l.b16 %v2791
    %v2814 = vunpack.c.h.b16 %v2790
    %v2815 = vunpack.c.h.b16 %v2791
    %v2816 = vpack.c.b16 %v2801, %v2800
    %v2817 = vpack.c.b16 %v2803, %v2802
    %v2818 = vpack.c.b16 %v2805, %v2804
    %v2819 = vpack.c.b16 %v2807, %v2806
    %v2820 = vpack.c.b16 %v2809, %v2808
    %v2821 = vpack.c.b16 %v2811, %v2810
    %v2822 = vpack.c.b16 %v2813, %v2812
    %v2823 = vpack.c.b16 %v2815, %v2814
    %vm2832 = vcmask 1043456
    %vm2833 = vcmask 130052
    %vm2834 = vmor %vm2833, %vm2832
    %2835 = vst.msk [vmem:[%s6] sm:$0xff] %vm2834, %v2816
    %2836 = vst.msk [vmem:[%s6 + $0x8] sm:$0xff] %vm2834, %v2817
    %2837 = vst.msk [vmem:[%s6 + $0x10] sm:$0xff] %vm2834, %v2818
    %2838 = vst.msk [vmem:[%s6 + $0x18] sm:$0xff] %vm2834, %v2819
    %2839 = vst.msk [vmem:[%s6 + $0x20] sm:$0xff] %vm2834, %v2820
    %2840 = vst.msk [vmem:[%s6 + $0x28] sm:$0xff] %vm2834, %v2821
    %2841 = vst.msk [vmem:[%s6 + $0x30] sm:$0xff] %vm2834, %v2822
    %2842 = vst.msk [vmem:[%s6 + $0x38] sm:$0xff] %vm2834, %v2823
    %s2843 = scalar_lea.vmem %s0, 1
    %v2844 = vld [vmem:[%s2843] ss:$2 sm:$0x7f]
    %2845 = vst.msk [vmem:[#allocation2] ss:$8 sm:$0xf] %vm42, %v2844
    %2846 = vst.msk [vmem:[#allocation2] ss:$8 sm:$0x30] %vm42, %v2844
    %2848 = vrot.lane.b32.xlu0 %v2844, 127
    %v2849 = vpop.permute.xlu0 %2848
    %v2850 = vrot.slane %v2849, 1
    %v2851 = vsel %vm49, %v2849, %v2850
    %2853 = vst.msk [vmem:[%s52] ss:$8 sm:$0xf] %vm42, %v2851
    %2854 = vst.msk [vmem:[%s52] ss:$8 sm:$0x30] %vm42, %v2851
    %2855 = vrot.lane.b32.xlu0 %v2844, 126
    %v2856 = vpop.permute.xlu0 %2855
    %v2857 = vrot.slane %v2856, 1
    %v2858 = vsel %vm58, %v2856, %v2857
    %2860 = vst.msk [vmem:[%s61] ss:$8 sm:$0xf] %vm42, %v2858
    %2861 = vst.msk [vmem:[%s61] ss:$8 sm:$0x30] %vm42, %v2858
    %2862 = vrot.lane.b32.xlu0 %v2844, 100
    %v2863 = vpop.permute.xlu0 %2862
    %v2864 = vrot.slane %v2863, 1
    %v2865 = vsel %vm67, %v2863, %v2864
    %2867 = vst.msk [vmem:[%s70] ss:$8 sm:$0xf] %vm42, %v2865
    %2868 = vst.msk [vmem:[%s70] ss:$8 sm:$0x30] %vm42, %v2865
    %2869 = vrot.lane.b32.xlu0 %v2844, 99
    %v2870 = vpop.permute.xlu0 %2869
    %v2871 = vrot.slane %v2870, 1
    %v2872 = vsel %vm76, %v2870, %v2871
    %2874 = vst.msk [vmem:[%s79] ss:$8 sm:$0xf] %vm42, %v2872
    %2875 = vst.msk [vmem:[%s79] ss:$8 sm:$0x30] %vm42, %v2872
    %2876 = vrot.lane.b32.xlu0 %v2844, 98
    %v2877 = vpop.permute.xlu0 %2876
    %v2878 = vrot.slane %v2877, 1
    %v2879 = vsel %vm85, %v2877, %v2878
    %2881 = vst.msk [vmem:[%s88] ss:$8 sm:$0xf] %vm42, %v2879
    %2882 = vst.msk [vmem:[%s88] ss:$8 sm:$0x30] %vm42, %v2879
    %2883 = vrot.lane.b32.xlu0 %v2844, 72
    %v2884 = vpop.permute.xlu0 %2883
    %v2885 = vrot.slane %v2884, 1
    %v2886 = vsel %vm94, %v2884, %v2885
    %2888 = vst.msk [vmem:[%s97] ss:$8 sm:$0xf] %vm42, %v2886
    %2889 = vst.msk [vmem:[%s97] ss:$8 sm:$0x30] %vm42, %v2886
    %2890 = vrot.lane.b32.xlu0 %v2844, 71
    %v2891 = vpop.permute.xlu0 %2890
    %v2892 = vrot.slane %v2891, 1
    %v2893 = vsel %vm103, %v2891, %v2892
    %2895 = vst.msk [vmem:[%s106] ss:$8 sm:$0xf] %vm42, %v2893
    %2896 = vst.msk [vmem:[%s106] ss:$8 sm:$0x30] %vm42, %v2893
    %2897 = vrot.lane.b32.xlu0 %v2844, 70
    %v2898 = vpop.permute.xlu0 %2897
    %v2899 = vrot.slane %v2898, 1
    %v2900 = vsel %vm112, %v2898, %v2899
    %2902 = vst.msk [vmem:[%s115] ss:$8 sm:$0xf] %vm42, %v2900
    %2903 = vst.msk [vmem:[%s115] ss:$8 sm:$0x30] %vm42, %v2900
    %v2904 = vld [vmem:[%s1] sm:$0xff]
    %v2905 = vld [vmem:[%s1 + $0x8] sm:$0xff]
    %v2906 = vld [vmem:[%s1 + $0x10] sm:$0xff]
    %v2907 = vld [vmem:[%s1 + $0x18] sm:$0xff]
    %v2908 = vld [vmem:[#allocation2] sm:$0xff]
    %v2909 = vld [vmem:[#allocation2 + $0x8] sm:$0xff]
    %v2910 = vld [vmem:[#allocation2 + $0x10] sm:$0xff]
    %v2911 = vld [vmem:[#allocation2 + $0x18] sm:$0xff]
    %v2912 = vld [vmem:[#allocation2 + $0x20] sm:$0xff]
    %v2913 = vld [vmem:[#allocation2 + $0x28] sm:$0xff]
    %v2914 = vld [vmem:[#allocation2 + $0x30] sm:$0x1]
    %v2915 = vld [vmem:[#allocation2 + $0x38] sm:$0x1]
    %v2916 = vld [vmem:[#allocation2 + $0x40] sm:$0x1]
    %v2917 = vld [vmem:[#allocation2 + $0x48] sm:$0x1]
    %v2918 = vld [vmem:[#allocation2 + $0x50] sm:$0x1]
    %v2919 = vld [vmem:[#allocation2 + $0x58] sm:$0x1]
    %v2920 = vld [vmem:[%s2] sm:$0xff]
    %v2921 = vld [vmem:[%s2 + $0x8] sm:$0xff]
    %v2922 = vld [vmem:[%s2 + $0x10] sm:$0xff]
    %v2923 = vld [vmem:[%s2 + $0x18] sm:$0xff]
    %2925 = vset.pattern.permute.xlu0 0
    %2926 = vperm.xlu0 %2925, %v2920
    %v2927 = vpop.permute.xlu0 %2926
    %2930 = vset.pattern.permute.xlu0 0
    %2931 = vperm.xlu0 %2930, %v2921
    %v2932 = vpop.permute.xlu0 %2931
    %2935 = vset.pattern.permute.xlu0 0
    %2936 = vperm.xlu0 %2935, %v2922
    %v2937 = vpop.permute.xlu0 %2936
    %2940 = vset.pattern.permute.xlu0 0
    %2941 = vperm.xlu0 %2940, %v2923
    %v2942 = vpop.permute.xlu0 %2941
    %v2945 = vsel %vm158, %v2904, 0
    %v2948 = vsel %vm158, %v2905, 0
    %v2951 = vsel %vm158, %v2906, 0
    %v2954 = vsel %vm158, %v2907, 0
    %v2957 = vsel %vm171, %v2914, 0
    %v2960 = vsel %vm171, %v2915, 0
    %v2963 = vsel %vm171, %v2916, 0
    %v2966 = vsel %vm171, %v2917, 0
    %v2969 = vsel %vm171, %v2918, 0
    %v2972 = vsel %vm171, %v2919, 0
    %2974 = vmatprep.subr.mxu0 %v2909
    %2975 = vmatpush1.msra.mxu0 %v2908
    %2976 = vmatprep.subr.mxu0 %v2960
    %2977 = vmatpush1.msra.mxu0 %v2957
    %2978 = vmatprep.subr.mxu0 0.0
    %2979 = vmatpush1.msra.mxu0 0.0
    %2980 = vmatprep.subr.mxu0 0.0
    %2981 = vmatpush1.msra.mxu0 0.0
    %2982 = vmatprep.subr.mxu0 0.0
    %2983 = vmatpush1.msra.mxu0 0.0
    %2984 = vmatprep.subr.mxu0 0.0
    %2985 = vmatpush1.msra.mxu0 0.0
    %2986 = vmatprep.subr.mxu0 0.0
    %2987 = vmatpush1.msra.mxu0 0.0
    %2988 = vmatprep.subr.mxu0 0.0
    %2989 = vmatpush1.msra.mxu0 0.0
    %2990 = vmatprep.subr.mxu0 0.0
    %2991 = vmatpush1.msra.mxu0 0.0
    %2992 = vmatprep.subr.mxu0 0.0
    %2993 = vmatpush1.msra.mxu0 0.0
    %2994 = vmatprep.subr.mxu0 0.0
    %2995 = vmatpush1.msra.mxu0 0.0
    %2996 = vmatprep.subr.mxu0 0.0
    %2997 = vmatpush1.msra.mxu0 0.0
    %2998 = vmatprep.subr.mxu0 0.0
    %2999 = vmatpush1.msra.mxu0 0.0
    %3000 = vmatprep.subr.mxu0 0.0
    %3001 = vmatpush1.msra.mxu0 0.0
    %3002 = vmatprep.subr.mxu0 0.0
    %3003 = vmatpush1.msra.mxu0 0.0
    %3004 = vmatprep.subr.mxu0 0.0
    %3005 = vmatpush1.msra.mxu0 0.0
    %3006 = vmatprep.subr.mxu0 0.0
    %3007 = vmatpush1.msra.mxu0 0.0
    %3008 = vmatprep.subr.mxu0 0.0
    %3009 = vmatpush1.msra.mxu0 0.0
    %3010 = vmatprep.subr.mxu0 0.0
    %3011 = vmatpush1.msra.mxu0 0.0
    %3012 = vmatprep.subr.mxu0 0.0
    %3013 = vmatpush1.msra.mxu0 0.0
    %3014 = vmatprep.subr.mxu0 0.0
    %3015 = vmatpush1.msra.mxu0 0.0
    %3016 = vmatprep.subr.mxu0 0.0
    %3017 = vmatpush1.msra.mxu0 0.0
    %3018 = vmatprep.subr.mxu0 0.0
    %3019 = vmatpush1.msra.mxu0 0.0
    %3020 = vmatprep.subr.mxu0 0.0
    %3021 = vmatpush1.msra.mxu0 0.0
    %3022 = vmatprep.subr.mxu0 0.0
    %3023 = vmatpush1.msra.mxu0 0.0
    %3024 = vmatprep.subr.mxu0 0.0
    %3025 = vmatpush1.msra.mxu0 0.0
    %3026 = vmatprep.subr.mxu0 0.0
    %3027 = vmatpush1.msra.mxu0 0.0
    %3028 = vmatprep.subr.mxu0 0.0
    %3029 = vmatpush1.msra.mxu0 0.0
    %3030 = vmatprep.subr.mxu0 0.0
    %3031 = vmatpush1.msra.mxu0 0.0
    %3032 = vmatprep.subr.mxu0 0.0
    %3033 = vmatpush1.msra.mxu0 0.0
    %3034 = vmatprep.subr.mxu0 0.0
    %3035 = vmatpush1.msra.mxu0 0.0
    %3036 = vmatprep.subr.mxu0 0.0
    %3037 = vmatpush1.msra.mxu0 0.0
    %3038 = vmatprep.mubr.f32.mxu0 0.0
    %3039 = vmatmul.mubr.f32.gmra.mrb[0].mxu0 %v2945
    %v3040 = vpop.f32.mrb[0].mxu0
    %v3041 = vadd.f32 %v2927, %v3040
    %v3042 = vpop.f32.mrb[0].mxu0
    %v3043 = vadd.f32 %v2927, %v3042
    %3044 = vmatprep.mubr.f32.mxu0 0.0
    %3045 = vmatmul.mubr.f32.gmra.mrb[0].mxu0 %v2948
    %v3046 = vpop.f32.mrb[0].mxu0
    %v3047 = vadd.f32 %v2932, %v3046
    %v3048 = vpop.f32.mrb[0].mxu0
    %v3049 = vadd.f32 %v2932, %v3048
    %3050 = vmatprep.mubr.f32.mxu0 0.0
    %3051 = vmatmul.mubr.f32.gmra.mrb[0].mxu0 %v2951
    %v3052 = vpop.f32.mrb[0].mxu0
    %v3053 = vadd.f32 %v2937, %v3052
    %v3054 = vpop.f32.mrb[0].mxu0
    %v3055 = vadd.f32 %v2937, %v3054
    %3056 = vmatprep.mubr.f32.mxu0 0.0
    %3057 = vmatmul.mubr.f32.gmra.mrb[0].mxu0 %v2954
    %v3058 = vpop.f32.mrb[0].mxu0
    %v3059 = vadd.f32 %v2942, %v3058
    %v3060 = vpop.f32.mrb[0].mxu0
    %v3061 = vadd.f32 %v2942, %v3060
    %3062 = vdwg.mxu0
    %3063 = vmatprep.subr.mxu0 %v2911
    %3064 = vmatpush1.msra.mxu0 %v2910
    %3065 = vmatprep.subr.mxu0 %v2966
    %3066 = vmatpush1.msra.mxu0 %v2963
    %3067 = vmatprep.subr.mxu0 0.0
    %3068 = vmatpush1.msra.mxu0 0.0
    %3069 = vmatprep.subr.mxu0 0.0
    %3070 = vmatpush1.msra.mxu0 0.0
    %3071 = vmatprep.subr.mxu0 0.0
    %3072 = vmatpush1.msra.mxu0 0.0
    %3073 = vmatprep.subr.mxu0 0.0
    %3074 = vmatpush1.msra.mxu0 0.0
    %3075 = vmatprep.subr.mxu0 0.0
    %3076 = vmatpush1.msra.mxu0 0.0
    %3077 = vmatprep.subr.mxu0 0.0
    %3078 = vmatpush1.msra.mxu0 0.0
    %3079 = vmatprep.subr.mxu0 0.0
    %3080 = vmatpush1.msra.mxu0 0.0
    %3081 = vmatprep.subr.mxu0 0.0
    %3082 = vmatpush1.msra.mxu0 0.0
    %3083 = vmatprep.subr.mxu0 0.0
    %3084 = vmatpush1.msra.mxu0 0.0
    %3085 = vmatprep.subr.mxu0 0.0
    %3086 = vmatpush1.msra.mxu0 0.0
    %3087 = vmatprep.subr.mxu0 0.0
    %3088 = vmatpush1.msra.mxu0 0.0
    %3089 = vmatprep.subr.mxu0 0.0
    %3090 = vmatpush1.msra.mxu0 0.0
    %3091 = vmatprep.subr.mxu0 0.0
    %3092 = vmatpush1.msra.mxu0 0.0
    %3093 = vmatprep.subr.mxu0 0.0
    %3094 = vmatpush1.msra.mxu0 0.0
    %3095 = vmatprep.subr.mxu0 0.0
    %3096 = vmatpush1.msra.mxu0 0.0
    %3097 = vmatprep.subr.mxu0 0.0
    %3098 = vmatpush1.msra.mxu0 0.0
    %3099 = vmatprep.subr.mxu0 0.0
    %3100 = vmatpush1.msra.mxu0 0.0
    %3101 = vmatprep.subr.mxu0 0.0
    %3102 = vmatpush1.msra.mxu0 0.0
    %3103 = vmatprep.subr.mxu0 0.0
    %3104 = vmatpush1.msra.mxu0 0.0
    %3105 = vmatprep.subr.mxu0 0.0
    %3106 = vmatpush1.msra.mxu0 0.0
    %3107 = vmatprep.subr.mxu0 0.0
    %3108 = vmatpush1.msra.mxu0 0.0
    %3109 = vmatprep.subr.mxu0 0.0
    %3110 = vmatpush1.msra.mxu0 0.0
    %3111 = vmatprep.subr.mxu0 0.0
    %3112 = vmatpush1.msra.mxu0 0.0
    %3113 = vmatprep.subr.mxu0 0.0
    %3114 = vmatpush1.msra.mxu0 0.0
    %3115 = vmatprep.subr.mxu0 0.0
    %3116 = vmatpush1.msra.mxu0 0.0
    %3117 = vmatprep.subr.mxu0 0.0
    %3118 = vmatpush1.msra.mxu0 0.0
    %3119 = vmatprep.subr.mxu0 0.0
    %3120 = vmatpush1.msra.mxu0 0.0
    %3121 = vmatprep.subr.mxu0 0.0
    %3122 = vmatpush1.msra.mxu0 0.0
    %3123 = vmatprep.subr.mxu0 0.0
    %3124 = vmatpush1.msra.mxu0 0.0
    %3125 = vmatprep.subr.mxu0 0.0
    %3126 = vmatpush1.msra.mxu0 0.0
    %3127 = vmatprep.mubr.f32.mxu0 0.0
    %3128 = vmatmul.mubr.f32.gmra.mrb[0].mxu0 %v2945
    %v3129 = vpop.f32.mrb[0].mxu0
    %v3130 = vadd.f32 %v2927, %v3129
    %v3131 = vpop.f32.mrb[0].mxu0
    %v3132 = vadd.f32 %v2927, %v3131
    %3133 = vmatprep.mubr.f32.mxu0 0.0
    %3134 = vmatmul.mubr.f32.gmra.mrb[0].mxu0 %v2948
    %v3135 = vpop.f32.mrb[0].mxu0
    %v3136 = vadd.f32 %v2932, %v3135
    %v3137 = vpop.f32.mrb[0].mxu0
    %v3138 = vadd.f32 %v2932, %v3137
    %3139 = vmatprep.mubr.f32.mxu0 0.0
    %3140 = vmatmul.mubr.f32.gmra.mrb[0].mxu0 %v2951
    %v3141 = vpop.f32.mrb[0].mxu0
    %v3142 = vadd.f32 %v2937, %v3141
    %v3143 = vpop.f32.mrb[0].mxu0
    %v3144 = vadd.f32 %v2937, %v3143
    %3145 = vmatprep.mubr.f32.mxu0 0.0
    %3146 = vmatmul.mubr.f32.gmra.mrb[0].mxu0 %v2954
    %v3147 = vpop.f32.mrb[0].mxu0
    %v3148 = vadd.f32 %v2942, %v3147
    %v3149 = vpop.f32.mrb[0].mxu0
    %v3150 = vadd.f32 %v2942, %v3149
    %3151 = vdwg.mxu0
    %3152 = vmatprep.subr.mxu0 %v2913
    %3153 = vmatpush1.msra.mxu0 %v2912
    %3154 = vmatprep.subr.mxu0 %v2972
    %3155 = vmatpush1.msra.mxu0 %v2969
    %3156 = vmatprep.subr.mxu0 0.0
    %3157 = vmatpush1.msra.mxu0 0.0
    %3158 = vmatprep.subr.mxu0 0.0
    %3159 = vmatpush1.msra.mxu0 0.0
    %3160 = vmatprep.subr.mxu0 0.0
    %3161 = vmatpush1.msra.mxu0 0.0
    %3162 = vmatprep.subr.mxu0 0.0
    %3163 = vmatpush1.msra.mxu0 0.0
    %3164 = vmatprep.subr.mxu0 0.0
    %3165 = vmatpush1.msra.mxu0 0.0
    %3166 = vmatprep.subr.mxu0 0.0
    %3167 = vmatpush1.msra.mxu0 0.0
    %3168 = vmatprep.subr.mxu0 0.0
    %3169 = vmatpush1.msra.mxu0 0.0
    %3170 = vmatprep.subr.mxu0 0.0
    %3171 = vmatpush1.msra.mxu0 0.0
    %3172 = vmatprep.subr.mxu0 0.0
    %3173 = vmatpush1.msra.mxu0 0.0
    %3174 = vmatprep.subr.mxu0 0.0
    %3175 = vmatpush1.msra.mxu0 0.0
    %3176 = vmatprep.subr.mxu0 0.0
    %3177 = vmatpush1.msra.mxu0 0.0
    %3178 = vmatprep.subr.mxu0 0.0
    %3179 = vmatpush1.msra.mxu0 0.0
    %3180 = vmatprep.subr.mxu0 0.0
    %3181 = vmatpush1.msra.mxu0 0.0
    %3182 = vmatprep.subr.mxu0 0.0
    %3183 = vmatpush1.msra.mxu0 0.0
    %3184 = vmatprep.subr.mxu0 0.0
    %3185 = vmatpush1.msra.mxu0 0.0
    %3186 = vmatprep.subr.mxu0 0.0
    %3187 = vmatpush1.msra.mxu0 0.0
    %3188 = vmatprep.subr.mxu0 0.0
    %3189 = vmatpush1.msra.mxu0 0.0
    %3190 = vmatprep.subr.mxu0 0.0
    %3191 = vmatpush1.msra.mxu0 0.0
    %3192 = vmatprep.subr.mxu0 0.0
    %3193 = vmatpush1.msra.mxu0 0.0
    %3194 = vmatprep.subr.mxu0 0.0
    %3195 = vmatpush1.msra.mxu0 0.0
    %3196 = vmatprep.subr.mxu0 0.0
    %3197 = vmatpush1.msra.mxu0 0.0
    %3198 = vmatprep.subr.mxu0 0.0
    %3199 = vmatpush1.msra.mxu0 0.0
    %3200 = vmatprep.subr.mxu0 0.0
    %3201 = vmatpush1.msra.mxu0 0.0
    %3202 = vmatprep.subr.mxu0 0.0
    %3203 = vmatpush1.msra.mxu0 0.0
    %3204 = vmatprep.subr.mxu0 0.0
    %3205 = vmatpush1.msra.mxu0 0.0
    %3206 = vmatprep.subr.mxu0 0.0
    %3207 = vmatpush1.msra.mxu0 0.0
    %3208 = vmatprep.subr.mxu0 0.0
    %3209 = vmatpush1.msra.mxu0 0.0
    %3210 = vmatprep.subr.mxu0 0.0
    %3211 = vmatpush1.msra.mxu0 0.0
    %3212 = vmatprep.subr.mxu0 0.0
    %3213 = vmatpush1.msra.mxu0 0.0
    %3214 = vmatprep.subr.mxu0 0.0
    %3215 = vmatpush1.msra.mxu0 0.0
    %3216 = vmatprep.mubr.f32.mxu0 0.0
    %3217 = vmatmul.mubr.f32.gmra.mrb[0].mxu0 %v2945
    %v3218 = vpop.f32.mrb[0].mxu0
    %v3219 = vadd.f32 %v2927, %v3218
    %v3220 = vpop.f32.mrb[0].mxu0
    %v3221 = vadd.f32 %v2927, %v3220
    %3222 = vmatprep.mubr.f32.mxu0 0.0
    %3223 = vmatmul.mubr.f32.gmra.mrb[0].mxu0 %v2948
    %v3224 = vpop.f32.mrb[0].mxu0
    %v3225 = vadd.f32 %v2932, %v3224
    %v3226 = vpop.f32.mrb[0].mxu0
    %v3227 = vadd.f32 %v2932, %v3226
    %3228 = vmatprep.mubr.f32.mxu0 0.0
    %3229 = vmatmul.mubr.f32.gmra.mrb[0].mxu0 %v2951
    %v3230 = vpop.f32.mrb[0].mxu0
    %v3231 = vadd.f32 %v2937, %v3230
    %v3232 = vpop.f32.mrb[0].mxu0
    %v3233 = vadd.f32 %v2937, %v3232
    %3234 = vmatprep.mubr.f32.mxu0 0.0
    %3235 = vmatmul.mubr.f32.gmra.mrb[0].mxu0 %v2954
    %v3236 = vpop.f32.mrb[0].mxu0
    %v3237 = vadd.f32 %v2942, %v3236
    %v3238 = vpop.f32.mrb[0].mxu0
    %v3239 = vadd.f32 %v2942, %v3238
    %3240 = vdwg.mxu0
    %v3241 = vmax.f32 %v3041, 0.0
    %v3242 = vmax.f32 %v3043, 0.0
    %v3243 = vmax.f32 %v3130, 0.0
    %v3244 = vmax.f32 %v3132, 0.0
    %v3245 = vmax.f32 %v3219, 0.0
    %v3246 = vmax.f32 %v3221, 0.0
    %v3247 = vmax.f32 %v3047, 0.0
    %v3248 = vmax.f32 %v3049, 0.0
    %v3249 = vmax.f32 %v3136, 0.0
    %v3250 = vmax.f32 %v3138, 0.0
    %v3251 = vmax.f32 %v3225, 0.0
    %v3252 = vmax.f32 %v3227, 0.0
    %v3253 = vmax.f32 %v3053, 0.0
    %v3254 = vmax.f32 %v3055, 0.0
    %v3255 = vmax.f32 %v3142, 0.0
    %v3256 = vmax.f32 %v3144, 0.0
    %v3257 = vmax.f32 %v3231, 0.0
    %v3258 = vmax.f32 %v3233, 0.0
    %v3259 = vmax.f32 %v3059, 0.0
    %v3260 = vmax.f32 %v3061, 0.0
    %v3261 = vmax.f32 %v3148, 0.0
    %v3262 = vmax.f32 %v3150, 0.0
    %v3263 = vmax.f32 %v3237, 0.0
    %v3264 = vmax.f32 %v3239, 0.0
    %v3265 = vpack.c.bf16 %v3247, %v3241
    %v3266 = vpack.c.bf16 %v3248, %v3242
    %v3267 = vpack.c.bf16 %v3249, %v3243
    %v3268 = vpack.c.bf16 %v3250, %v3244
    %v3269 = vpack.c.bf16 %v3251, %v3245
    %v3270 = vpack.c.bf16 %v3252, %v3246
    %v3271 = vpack.c.bf16 %v3259, %v3253
    %v3272 = vpack.c.bf16 %v3260, %v3254
    %v3273 = vpack.c.bf16 %v3261, %v3255
    %v3274 = vpack.c.bf16 %v3262, %v3256
    %v3275 = vpack.c.bf16 %v3263, %v3257
    %v3276 = vpack.c.bf16 %v3264, %v3258
    %3277 = vst [vmem:[#allocation3] sm:$0xff] %v3265
    %3278 = vst [vmem:[#allocation3 + $0x8] sm:$0xff] %v3266
    %3279 = vst [vmem:[#allocation3 + $0x10] sm:$0xff] %v3267
    %3280 = vst [vmem:[#allocation3 + $0x18] sm:$0xff] %v3268
    %3281 = vst [vmem:[#allocation3 + $0x20] sm:$0xff] %v3269
    %3282 = vst.msk [vmem:[#allocation3 + $0x28] sm:$0xff] %vm498, %v3270
    %3283 = vst [vmem:[#allocation3 + $0x30] sm:$0xff] %v3271
    %3284 = vst [vmem:[#allocation3 + $0x38] sm:$0xff] %v3272
    %3285 = vst [vmem:[#allocation3 + $0x40] sm:$0xff] %v3273
    %3286 = vst [vmem:[#allocation3 + $0x48] sm:$0xff] %v3274
    %3287 = vst [vmem:[#allocation3 + $0x50] sm:$0xff] %v3275
    %3288 = vst.msk [vmem:[#allocation3 + $0x58] sm:$0xff] %vm498, %v3276
    %3301 = vrot.lane.b32.xlu0 %v3265, 127
    %v3302 = vpop.permute.xlu0 %3301
    %3303 = vrot.lane.b32.xlu0 %v3266, 127
    %v3304 = vpop.permute.xlu0 %3303
    %3305 = vrot.lane.b32.xlu0 %v3267, 127
    %v3306 = vpop.permute.xlu0 %3305
    %3307 = vrot.lane.b32.xlu0 %v3268, 127
    %v3308 = vpop.permute.xlu0 %3307
    %3309 = vrot.lane.b32.xlu0 %v3269, 127
    %v3310 = vpop.permute.xlu0 %3309
    %3311 = vrot.lane.b32.xlu0 %v3270, 127
    %v3312 = vpop.permute.xlu0 %3311
    %3313 = vrot.lane.b32.xlu0 %v3271, 127
    %v3314 = vpop.permute.xlu0 %3313
    %3315 = vrot.lane.b32.xlu0 %v3272, 127
    %v3316 = vpop.permute.xlu0 %3315
    %3317 = vrot.lane.b32.xlu0 %v3273, 127
    %v3318 = vpop.permute.xlu0 %3317
    %3319 = vrot.lane.b32.xlu0 %v3274, 127
    %v3320 = vpop.permute.xlu0 %3319
    %3321 = vrot.lane.b32.xlu0 %v3275, 127
    %v3322 = vpop.permute.xlu0 %3321
    %3323 = vrot.lane.b32.xlu0 %v3276, 127
    %v3324 = vpop.permute.xlu0 %3323
    %v3325 = vsel %vm542, %v3302, %v3304
    %v3326 = vsel %vm542, %v3304, %v3306
    %v3327 = vsel %vm542, %v3306, %v3308
    %v3328 = vsel %vm542, %v3308, %v3310
    %v3329 = vsel %vm542, %v3310, %v3312
    %v3330 = vsel %vm542, %v3314, %v3316
    %v3331 = vsel %vm542, %v3316, %v3318
    %v3332 = vsel %vm542, %v3318, %v3320
    %v3333 = vsel %vm542, %v3320, %v3322
    %v3334 = vsel %vm542, %v3322, %v3324
    %3347 = vst [vmem:[#allocation3 + $0x60] sm:$0xff] %v3325
    %3348 = vst [vmem:[#allocation3 + $0x68] sm:$0xff] %v3326
    %3349 = vst [vmem:[#allocation3 + $0x70] sm:$0xff] %v3327
    %3350 = vst [vmem:[#allocation3 + $0x78] sm:$0xff] %v3328
    %3351 = vst [vmem:[#allocation3 + $0x80] sm:$0xff] %v3329
    %3352 = vst.msk [vmem:[#allocation3 + $0x88] sm:$0xff] %vm498, %v3312
    %3353 = vst [vmem:[#allocation3 + $0x90] sm:$0xff] %v3330
    %3354 = vst [vmem:[#allocation3 + $0x98] sm:$0xff] %v3331
    %3355 = vst [vmem:[#allocation3 + $0xa0] sm:$0xff] %v3332
    %3356 = vst [vmem:[#allocation3 + $0xa8] sm:$0xff] %v3333
    %3357 = vst [vmem:[#allocation3 + $0xb0] sm:$0xff] %v3334
    %3358 = vst.msk [vmem:[#allocation3 + $0xb8] sm:$0xff] %vm498, %v3324
    %3359 = vrot.lane.b32.xlu0 %v3265, 126
    %v3360 = vpop.permute.xlu0 %3359
    %3361 = vrot.lane.b32.xlu0 %v3266, 126
    %v3362 = vpop.permute.xlu0 %3361
    %3363 = vrot.lane.b32.xlu0 %v3267, 126
    %v3364 = vpop.permute.xlu0 %3363
    %3365 = vrot.lane.b32.xlu0 %v3268, 126
    %v3366 = vpop.permute.xlu0 %3365
    %3367 = vrot.lane.b32.xlu0 %v3269, 126
    %v3368 = vpop.permute.xlu0 %3367
    %3369 = vrot.lane.b32.xlu0 %v3270, 126
    %v3370 = vpop.permute.xlu0 %3369
    %3371 = vrot.lane.b32.xlu0 %v3271, 126
    %v3372 = vpop.permute.xlu0 %3371
    %3373 = vrot.lane.b32.xlu0 %v3272, 126
    %v3374 = vpop.permute.xlu0 %3373
    %3375 = vrot.lane.b32.xlu0 %v3273, 126
    %v3376 = vpop.permute.xlu0 %3375
    %3377 = vrot.lane.b32.xlu0 %v3274, 126
    %v3378 = vpop.permute.xlu0 %3377
    %3379 = vrot.lane.b32.xlu0 %v3275, 126
    %v3380 = vpop.permute.xlu0 %3379
    %3381 = vrot.lane.b32.xlu0 %v3276, 126
    %v3382 = vpop.permute.xlu0 %3381
    %v3383 = vsel %vm601, %v3360, %v3362
    %v3384 = vsel %vm601, %v3362, %v3364
    %v3385 = vsel %vm601, %v3364, %v3366
    %v3386 = vsel %vm601, %v3366, %v3368
    %v3387 = vsel %vm601, %v3368, %v3370
    %v3388 = vsel %vm601, %v3372, %v3374
    %v3389 = vsel %vm601, %v3374, %v3376
    %v3390 = vsel %vm601, %v3376, %v3378
    %v3391 = vsel %vm601, %v3378, %v3380
    %v3392 = vsel %vm601, %v3380, %v3382
    %3405 = vst [vmem:[#allocation3 + $0xc0] sm:$0xff] %v3383
    %3406 = vst [vmem:[#allocation3 + $0xc8] sm:$0xff] %v3384
    %3407 = vst [vmem:[#allocation3 + $0xd0] sm:$0xff] %v3385
    %3408 = vst [vmem:[#allocation3 + $0xd8] sm:$0xff] %v3386
    %3409 = vst [vmem:[#allocation3 + $0xe0] sm:$0xff] %v3387
    %3410 = vst.msk [vmem:[#allocation3 + $0xe8] sm:$0xff] %vm498, %v3370
    %3411 = vst [vmem:[#allocation3 + $0xf0] sm:$0xff] %v3388
    %3412 = vst [vmem:[#allocation3 + $0xf8] sm:$0xff] %v3389
    %3413 = vst [vmem:[#allocation3 + $0x100] sm:$0xff] %v3390
    %3414 = vst [vmem:[#allocation3 + $0x108] sm:$0xff] %v3391
    %3415 = vst [vmem:[#allocation3 + $0x110] sm:$0xff] %v3392
    %3416 = vst.msk [vmem:[#allocation3 + $0x118] sm:$0xff] %vm498, %v3382
    %3417 = vrot.lane.b32.xlu0 %v3265, 100
    %v3418 = vpop.permute.xlu0 %3417
    %3419 = vrot.lane.b32.xlu0 %v3266, 100
    %v3420 = vpop.permute.xlu0 %3419
    %3421 = vrot.lane.b32.xlu0 %v3267, 100
    %v3422 = vpop.permute.xlu0 %3421
    %3423 = vrot.lane.b32.xlu0 %v3268, 100
    %v3424 = vpop.permute.xlu0 %3423
    %3425 = vrot.lane.b32.xlu0 %v3269, 100
    %v3426 = vpop.permute.xlu0 %3425
    %3427 = vrot.lane.b32.xlu0 %v3270, 100
    %v3428 = vpop.permute.xlu0 %3427
    %3429 = vrot.lane.b32.xlu0 %v3271, 100
    %v3430 = vpop.permute.xlu0 %3429
    %3431 = vrot.lane.b32.xlu0 %v3272, 100
    %v3432 = vpop.permute.xlu0 %3431
    %3433 = vrot.lane.b32.xlu0 %v3273, 100
    %v3434 = vpop.permute.xlu0 %3433
    %3435 = vrot.lane.b32.xlu0 %v3274, 100
    %v3436 = vpop.permute.xlu0 %3435
    %3437 = vrot.lane.b32.xlu0 %v3275, 100
    %v3438 = vpop.permute.xlu0 %3437
    %3439 = vrot.lane.b32.xlu0 %v3276, 100
    %v3440 = vpop.permute.xlu0 %3439
    %v3441 = vsel %vm660, %v3418, %v3420
    %v3442 = vsel %vm660, %v3420, %v3422
    %v3443 = vsel %vm660, %v3422, %v3424
    %v3444 = vsel %vm660, %v3424, %v3426
    %v3445 = vsel %vm660, %v3426, %v3428
    %v3446 = vsel %vm660, %v3430, %v3432
    %v3447 = vsel %vm660, %v3432, %v3434
    %v3448 = vsel %vm660, %v3434, %v3436
    %v3449 = vsel %vm660, %v3436, %v3438
    %v3450 = vsel %vm660, %v3438, %v3440
    %3463 = vst [vmem:[#allocation3 + $0x120] sm:$0xff] %v3441
    %3464 = vst [vmem:[#allocation3 + $0x128] sm:$0xff] %v3442
    %3465 = vst [vmem:[#allocation3 + $0x130] sm:$0xff] %v3443
    %3466 = vst [vmem:[#allocation3 + $0x138] sm:$0xff] %v3444
    %3467 = vst [vmem:[#allocation3 + $0x140] sm:$0xff] %v3445
    %3468 = vst.msk [vmem:[#allocation3 + $0x148] sm:$0xff] %vm498, %v3428
    %3469 = vst [vmem:[#allocation3 + $0x150] sm:$0xff] %v3446
    %3470 = vst [vmem:[#allocation3 + $0x158] sm:$0xff] %v3447
    %3471 = vst [vmem:[#allocation3 + $0x160] sm:$0xff] %v3448
    %3472 = vst [vmem:[#allocation3 + $0x168] sm:$0xff] %v3449
    %3473 = vst [vmem:[#allocation3 + $0x170] sm:$0xff] %v3450
    %3474 = vst.msk [vmem:[#allocation3 + $0x178] sm:$0xff] %vm498, %v3440
    %3475 = vrot.lane.b32.xlu0 %v3265, 99
    %v3476 = vpop.permute.xlu0 %3475
    %3477 = vrot.lane.b32.xlu0 %v3266, 99
    %v3478 = vpop.permute.xlu0 %3477
    %3479 = vrot.lane.b32.xlu0 %v3267, 99
    %v3480 = vpop.permute.xlu0 %3479
    %3481 = vrot.lane.b32.xlu0 %v3268, 99
    %v3482 = vpop.permute.xlu0 %3481
    %3483 = vrot.lane.b32.xlu0 %v3269, 99
    %v3484 = vpop.permute.xlu0 %3483
    %3485 = vrot.lane.b32.xlu0 %v3270, 99
    %v3486 = vpop.permute.xlu0 %3485
    %3487 = vrot.lane.b32.xlu0 %v3271, 99
    %v3488 = vpop.permute.xlu0 %3487
    %3489 = vrot.lane.b32.xlu0 %v3272, 99
    %v3490 = vpop.permute.xlu0 %3489
    %3491 = vrot.lane.b32.xlu0 %v3273, 99
    %v3492 = vpop.permute.xlu0 %3491
    %3493 = vrot.lane.b32.xlu0 %v3274, 99
    %v3494 = vpop.permute.xlu0 %3493
    %3495 = vrot.lane.b32.xlu0 %v3275, 99
    %v3496 = vpop.permute.xlu0 %3495
    %3497 = vrot.lane.b32.xlu0 %v3276, 99
    %v3498 = vpop.permute.xlu0 %3497
    %v3499 = vsel %vm719, %v3476, %v3478
    %v3500 = vsel %vm719, %v3478, %v3480
    %v3501 = vsel %vm719, %v3480, %v3482
    %v3502 = vsel %vm719, %v3482, %v3484
    %v3503 = vsel %vm719, %v3484, %v3486
    %v3504 = vsel %vm719, %v3488, %v3490
    %v3505 = vsel %vm719, %v3490, %v3492
    %v3506 = vsel %vm719, %v3492, %v3494
    %v3507 = vsel %vm719, %v3494, %v3496
    %v3508 = vsel %vm719, %v3496, %v3498
    %3521 = vst [vmem:[#allocation3 + $0x180] sm:$0xff] %v3499
    %3522 = vst [vmem:[#allocation3 + $0x188] sm:$0xff] %v3500
    %3523 = vst [vmem:[#allocation3 + $0x190] sm:$0xff] %v3501
    %3524 = vst [vmem:[#allocation3 + $0x198] sm:$0xff] %v3502
    %3525 = vst [vmem:[#allocation3 + $0x1a0] sm:$0xff] %v3503
    %3526 = vst.msk [vmem:[#allocation3 + $0x1a8] sm:$0xff] %vm498, %v3486
    %3527 = vst [vmem:[#allocation3 + $0x1b0] sm:$0xff] %v3504
    %3528 = vst [vmem:[#allocation3 + $0x1b8] sm:$0xff] %v3505
    %3529 = vst [vmem:[#allocation3 + $0x1c0] sm:$0xff] %v3506
    %3530 = vst [vmem:[#allocation3 + $0x1c8] sm:$0xff] %v3507
    %3531 = vst [vmem:[#allocation3 + $0x1d0] sm:$0xff] %v3508
    %3532 = vst.msk [vmem:[#allocation3 + $0x1d8] sm:$0xff] %vm498, %v3498
    %3533 = vrot.lane.b32.xlu0 %v3265, 98
    %v3534 = vpop.permute.xlu0 %3533
    %3535 = vrot.lane.b32.xlu0 %v3266, 98
    %v3536 = vpop.permute.xlu0 %3535
    %3537 = vrot.lane.b32.xlu0 %v3267, 98
    %v3538 = vpop.permute.xlu0 %3537
    %3539 = vrot.lane.b32.xlu0 %v3268, 98
    %v3540 = vpop.permute.xlu0 %3539
    %3541 = vrot.lane.b32.xlu0 %v3269, 98
    %v3542 = vpop.permute.xlu0 %3541
    %3543 = vrot.lane.b32.xlu0 %v3270, 98
    %v3544 = vpop.permute.xlu0 %3543
    %3545 = vrot.lane.b32.xlu0 %v3271, 98
    %v3546 = vpop.permute.xlu0 %3545
    %3547 = vrot.lane.b32.xlu0 %v3272, 98
    %v3548 = vpop.permute.xlu0 %3547
    %3549 = vrot.lane.b32.xlu0 %v3273, 98
    %v3550 = vpop.permute.xlu0 %3549
    %3551 = vrot.lane.b32.xlu0 %v3274, 98
    %v3552 = vpop.permute.xlu0 %3551
    %3553 = vrot.lane.b32.xlu0 %v3275, 98
    %v3554 = vpop.permute.xlu0 %3553
    %3555 = vrot.lane.b32.xlu0 %v3276, 98
    %v3556 = vpop.permute.xlu0 %3555
    %v3557 = vsel %vm778, %v3534, %v3536
    %v3558 = vsel %vm778, %v3536, %v3538
    %v3559 = vsel %vm778, %v3538, %v3540
    %v3560 = vsel %vm778, %v3540, %v3542
    %v3561 = vsel %vm778, %v3542, %v3544
    %v3562 = vsel %vm778, %v3546, %v3548
    %v3563 = vsel %vm778, %v3548, %v3550
    %v3564 = vsel %vm778, %v3550, %v3552
    %v3565 = vsel %vm778, %v3552, %v3554
    %v3566 = vsel %vm778, %v3554, %v3556
    %3579 = vst [vmem:[#allocation3 + $0x1e0] sm:$0xff] %v3557
    %3580 = vst [vmem:[#allocation3 + $0x1e8] sm:$0xff] %v3558
    %3581 = vst [vmem:[#allocation3 + $0x1f0] sm:$0xff] %v3559
    %3582 = vst [vmem:[#allocation3 + $0x1f8] sm:$0xff] %v3560
    %3583 = vst [vmem:[#allocation3 + $0x200] sm:$0xff] %v3561
    %3584 = vst.msk [vmem:[#allocation3 + $0x208] sm:$0xff] %vm498, %v3544
    %3585 = vst [vmem:[#allocation3 + $0x210] sm:$0xff] %v3562
    %3586 = vst [vmem:[#allocation3 + $0x218] sm:$0xff] %v3563
    %3587 = vst [vmem:[#allocation3 + $0x220] sm:$0xff] %v3564
    %3588 = vst [vmem:[#allocation3 + $0x228] sm:$0xff] %v3565
    %3589 = vst [vmem:[#allocation3 + $0x230] sm:$0xff] %v3566
    %3590 = vst.msk [vmem:[#allocation3 + $0x238] sm:$0xff] %vm498, %v3556
    %3591 = vrot.lane.b32.xlu0 %v3265, 72
    %v3592 = vpop.permute.xlu0 %3591
    %3593 = vrot.lane.b32.xlu0 %v3266, 72
    %v3594 = vpop.permute.xlu0 %3593
    %3595 = vrot.lane.b32.xlu0 %v3267, 72
    %v3596 = vpop.permute.xlu0 %3595
    %3597 = vrot.lane.b32.xlu0 %v3268, 72
    %v3598 = vpop.permute.xlu0 %3597
    %3599 = vrot.lane.b32.xlu0 %v3269, 72
    %v3600 = vpop.permute.xlu0 %3599
    %3601 = vrot.lane.b32.xlu0 %v3270, 72
    %v3602 = vpop.permute.xlu0 %3601
    %3603 = vrot.lane.b32.xlu0 %v3271, 72
    %v3604 = vpop.permute.xlu0 %3603
    %3605 = vrot.lane.b32.xlu0 %v3272, 72
    %v3606 = vpop.permute.xlu0 %3605
    %3607 = vrot.lane.b32.xlu0 %v3273, 72
    %v3608 = vpop.permute.xlu0 %3607
    %3609 = vrot.lane.b32.xlu0 %v3274, 72
    %v3610 = vpop.permute.xlu0 %3609
    %3611 = vrot.lane.b32.xlu0 %v3275, 72
    %v3612 = vpop.permute.xlu0 %3611
    %3613 = vrot.lane.b32.xlu0 %v3276, 72
    %v3614 = vpop.permute.xlu0 %3613
    %v3615 = vsel %vm837, %v3592, %v3594
    %v3616 = vsel %vm837, %v3594, %v3596
    %v3617 = vsel %vm837, %v3596, %v3598
    %v3618 = vsel %vm837, %v3598, %v3600
    %v3619 = vsel %vm837, %v3600, %v3602
    %v3620 = vsel %vm837, %v3604, %v3606
    %v3621 = vsel %vm837, %v3606, %v3608
    %v3622 = vsel %vm837, %v3608, %v3610
    %v3623 = vsel %vm837, %v3610, %v3612
    %v3624 = vsel %vm837, %v3612, %v3614
    %3637 = vst [vmem:[#allocation3 + $0x240] sm:$0xff] %v3615
    %3638 = vst [vmem:[#allocation3 + $0x248] sm:$0xff] %v3616
    %3639 = vst [vmem:[#allocation3 + $0x250] sm:$0xff] %v3617
    %3640 = vst [vmem:[#allocation3 + $0x258] sm:$0xff] %v3618
    %3641 = vst [vmem:[#allocation3 + $0x260] sm:$0xff] %v3619
    %3642 = vst.msk [vmem:[#allocation3 + $0x268] sm:$0xff] %vm498, %v3602
    %3643 = vst [vmem:[#allocation3 + $0x270] sm:$0xff] %v3620
    %3644 = vst [vmem:[#allocation3 + $0x278] sm:$0xff] %v3621
    %3645 = vst [vmem:[#allocation3 + $0x280] sm:$0xff] %v3622
    %3646 = vst [vmem:[#allocation3 + $0x288] sm:$0xff] %v3623
    %3647 = vst [vmem:[#allocation3 + $0x290] sm:$0xff] %v3624
    %3648 = vst.msk [vmem:[#allocation3 + $0x298] sm:$0xff] %vm498, %v3614
    %3649 = vrot.lane.b32.xlu0 %v3265, 71
    %v3650 = vpop.permute.xlu0 %3649
    %3651 = vrot.lane.b32.xlu0 %v3266, 71
    %v3652 = vpop.permute.xlu0 %3651
    %3653 = vrot.lane.b32.xlu0 %v3267, 71
    %v3654 = vpop.permute.xlu0 %3653
    %3655 = vrot.lane.b32.xlu0 %v3268, 71
    %v3656 = vpop.permute.xlu0 %3655
    %3657 = vrot.lane.b32.xlu0 %v3269, 71
    %v3658 = vpop.permute.xlu0 %3657
    %3659 = vrot.lane.b32.xlu0 %v3270, 71
    %v3660 = vpop.permute.xlu0 %3659
    %3661 = vrot.lane.b32.xlu0 %v3271, 71
    %v3662 = vpop.permute.xlu0 %3661
    %3663 = vrot.lane.b32.xlu0 %v3272, 71
    %v3664 = vpop.permute.xlu0 %3663
    %3665 = vrot.lane.b32.xlu0 %v3273, 71
    %v3666 = vpop.permute.xlu0 %3665
    %3667 = vrot.lane.b32.xlu0 %v3274, 71
    %v3668 = vpop.permute.xlu0 %3667
    %3669 = vrot.lane.b32.xlu0 %v3275, 71
    %v3670 = vpop.permute.xlu0 %3669
    %3671 = vrot.lane.b32.xlu0 %v3276, 71
    %v3672 = vpop.permute.xlu0 %3671
    %v3673 = vsel %vm896, %v3650, %v3652
    %v3674 = vsel %vm896, %v3652, %v3654
    %v3675 = vsel %vm896, %v3654, %v3656
    %v3676 = vsel %vm896, %v3656, %v3658
    %v3677 = vsel %vm896, %v3658, %v3660
    %v3678 = vsel %vm896, %v3662, %v3664
    %v3679 = vsel %vm896, %v3664, %v3666
    %v3680 = vsel %vm896, %v3666, %v3668
    %v3681 = vsel %vm896, %v3668, %v3670
    %v3682 = vsel %vm896, %v3670, %v3672
    %3695 = vst [vmem:[#allocation3 + $0x2a0] sm:$0xff] %v3673
    %3696 = vst [vmem:[#allocation3 + $0x2a8] sm:$0xff] %v3674
    %3697 = vst [vmem:[#allocation3 + $0x2b0] sm:$0xff] %v3675
    %3698 = vst [vmem:[#allocation3 + $0x2b8] sm:$0xff] %v3676
    %3699 = vst [vmem:[#allocation3 + $0x2c0] sm:$0xff] %v3677
    %3700 = vst.msk [vmem:[#allocation3 + $0x2c8] sm:$0xff] %vm498, %v3660
    %3701 = vst [vmem:[#allocation3 + $0x2d0] sm:$0xff] %v3678
    %3702 = vst [vmem:[#allocation3 + $0x2d8] sm:$0xff] %v3679
    %3703 = vst [vmem:[#allocation3 + $0x2e0] sm:$0xff] %v3680
    %3704 = vst [vmem:[#allocation3 + $0x2e8] sm:$0xff] %v3681
    %3705 = vst [vmem:[#allocation3 + $0x2f0] sm:$0xff] %v3682
    %3706 = vst.msk [vmem:[#allocation3 + $0x2f8] sm:$0xff] %vm498, %v3672
    %3707 = vrot.lane.b32.xlu0 %v3265, 70
    %v3708 = vpop.permute.xlu0 %3707
    %3709 = vrot.lane.b32.xlu0 %v3266, 70
    %v3710 = vpop.permute.xlu0 %3709
    %3711 = vrot.lane.b32.xlu0 %v3267, 70
    %v3712 = vpop.permute.xlu0 %3711
    %3713 = vrot.lane.b32.xlu0 %v3268, 70
    %v3714 = vpop.permute.xlu0 %3713
    %3715 = vrot.lane.b32.xlu0 %v3269, 70
    %v3716 = vpop.permute.xlu0 %3715
    %3717 = vrot.lane.b32.xlu0 %v3270, 70
    %v3718 = vpop.permute.xlu0 %3717
    %3719 = vrot.lane.b32.xlu0 %v3271, 70
    %v3720 = vpop.permute.xlu0 %3719
    %3721 = vrot.lane.b32.xlu0 %v3272, 70
    %v3722 = vpop.permute.xlu0 %3721
    %3723 = vrot.lane.b32.xlu0 %v3273, 70
    %v3724 = vpop.permute.xlu0 %3723
    %3725 = vrot.lane.b32.xlu0 %v3274, 70
    %v3726 = vpop.permute.xlu0 %3725
    %3727 = vrot.lane.b32.xlu0 %v3275, 70
    %v3728 = vpop.permute.xlu0 %3727
    %3729 = vrot.lane.b32.xlu0 %v3276, 70
    %v3730 = vpop.permute.xlu0 %3729
    %v3731 = vsel %vm955, %v3708, %v3710
    %v3732 = vsel %vm955, %v3710, %v3712
    %v3733 = vsel %vm955, %v3712, %v3714
    %v3734 = vsel %vm955, %v3714, %v3716
    %v3735 = vsel %vm955, %v3716, %v3718
    %v3736 = vsel %vm955, %v3720, %v3722
    %v3737 = vsel %vm955, %v3722, %v3724
    %v3738 = vsel %vm955, %v3724, %v3726
    %v3739 = vsel %vm955, %v3726, %v3728
    %v3740 = vsel %vm955, %v3728, %v3730
    %3753 = vst [vmem:[#allocation3 + $0x300] sm:$0xff] %v3731
    %3754 = vst [vmem:[#allocation3 + $0x308] sm:$0xff] %v3732
    %3755 = vst [vmem:[#allocation3 + $0x310] sm:$0xff] %v3733
    %3756 = vst [vmem:[#allocation3 + $0x318] sm:$0xff] %v3734
    %3757 = vst [vmem:[#allocation3 + $0x320] sm:$0xff] %v3735
    %3758 = vst.msk [vmem:[#allocation3 + $0x328] sm:$0xff] %vm498, %v3718
    %3759 = vst [vmem:[#allocation3 + $0x330] sm:$0xff] %v3736
    %3760 = vst [vmem:[#allocation3 + $0x338] sm:$0xff] %v3737
    %3761 = vst [vmem:[#allocation3 + $0x340] sm:$0xff] %v3738
    %3762 = vst [vmem:[#allocation3 + $0x348] sm:$0xff] %v3739
    %3763 = vst [vmem:[#allocation3 + $0x350] sm:$0xff] %v3740
    %3764 = vst.msk [vmem:[#allocation3 + $0x358] sm:$0xff] %vm498, %v3730
    %v3765 = vld [vmem:[#allocation5] sm:$0xff]
    %v3766 = vld [vmem:[#allocation5 + $0x8] sm:$0xf]
    %v3767 = vld [vmem:[#allocation5 + $0xc] sm:$0xff]
    %v3768 = vld [vmem:[#allocation5 + $0x14] sm:$0xf]
    %v3769 = vld [vmem:[#allocation5 + $0x18] sm:$0xff]
    %v3770 = vld [vmem:[#allocation5 + $0x20] sm:$0xf]
    %v3771 = vld [vmem:[#allocation5 + $0x24] sm:$0xff]
    %v3772 = vld [vmem:[#allocation5 + $0x2c] sm:$0xf]
    %v3773 = vld [vmem:[#allocation5 + $0x30] sm:$0xff]
    %v3774 = vld [vmem:[#allocation5 + $0x38] sm:$0xf]
    %v3775 = vld [vmem:[#allocation5 + $0x3c] sm:$0xff]
    %v3776 = vld [vmem:[#allocation5 + $0x44] sm:$0xf]
    %v3777 = vld [vmem:[#allocation5 + $0x48] sm:$0xff]
    %v3778 = vld [vmem:[#allocation5 + $0x50] sm:$0xf]
    %v3779 = vld [vmem:[#allocation5 + $0x54] sm:$0xff]
    %v3780 = vld [vmem:[#allocation5 + $0x5c] sm:$0xf]
    %v3781 = vld [vmem:[#allocation3] sm:$0xff]
    %v3782 = vld [vmem:[#allocation3 + $0x8] sm:$0xff]
    %v3783 = vld [vmem:[#allocation3 + $0x10] sm:$0xff]
    %v3784 = vld [vmem:[#allocation3 + $0x18] sm:$0xff]
    %v3785 = vld [vmem:[#allocation3 + $0x20] sm:$0xff]
    %v3786 = vld [vmem:[#allocation3 + $0x28] sm:$0xff]
    %v3787 = vld [vmem:[#allocation3 + $0x30] sm:$0xff]
    %v3788 = vld [vmem:[#allocation3 + $0x38] sm:$0xff]
    %v3789 = vld [vmem:[#allocation3 + $0x40] sm:$0xff]
    %v3790 = vld [vmem:[#allocation3 + $0x48] sm:$0xff]
    %v3791 = vld [vmem:[#allocation3 + $0x50] sm:$0xff]
    %v3792 = vld [vmem:[#allocation3 + $0x58] sm:$0xff]
    %v3793 = vld [vmem:[#allocation3 + $0x60] sm:$0xff]
    %v3794 = vld [vmem:[#allocation3 + $0x68] sm:$0xff]
    %v3795 = vld [vmem:[#allocation3 + $0x70] sm:$0xff]
    %v3796 = vld [vmem:[#allocation3 + $0x78] sm:$0xff]
    %v3797 = vld [vmem:[#allocation3 + $0x80] sm:$0xff]
    %v3798 = vld [vmem:[#allocation3 + $0x88] sm:$0xff]
    %v3799 = vld [vmem:[#allocation3 + $0x90] sm:$0xff]
    %v3800 = vld [vmem:[#allocation3 + $0x98] sm:$0xff]
    %v3801 = vld [vmem:[#allocation3 + $0xa0] sm:$0xff]
    %v3802 = vld [vmem:[#allocation3 + $0xa8] sm:$0xff]
    %v3803 = vld [vmem:[#allocation3 + $0xb0] sm:$0xff]
    %v3804 = vld [vmem:[#allocation3 + $0xb8] sm:$0xff]
    %v3805 = vld [vmem:[#allocation3 + $0xc0] sm:$0xff]
    %v3806 = vld [vmem:[#allocation3 + $0xc8] sm:$0xff]
    %v3807 = vld [vmem:[#allocation3 + $0xd0] sm:$0xff]
    %v3808 = vld [vmem:[#allocation3 + $0xd8] sm:$0xff]
    %v3809 = vld [vmem:[#allocation3 + $0xe0] sm:$0xff]
    %v3810 = vld [vmem:[#allocation3 + $0xe8] sm:$0xff]
    %v3811 = vld [vmem:[#allocation3 + $0xf0] sm:$0xff]
    %v3812 = vld [vmem:[#allocation3 + $0xf8] sm:$0xff]
    %v3813 = vld [vmem:[#allocation3 + $0x100] sm:$0xff]
    %v3814 = vld [vmem:[#allocation3 + $0x108] sm:$0xff]
    %v3815 = vld [vmem:[#allocation3 + $0x110] sm:$0xff]
    %v3816 = vld [vmem:[#allocation3 + $0x118] sm:$0xff]
    %v3817 = vld [vmem:[#allocation3 + $0x120] sm:$0xff]
    %v3818 = vld [vmem:[#allocation3 + $0x128] sm:$0xff]
    %v3819 = vld [vmem:[#allocation3 + $0x130] sm:$0xff]
    %v3820 = vld [vmem:[#allocation3 + $0x138] sm:$0xff]
    %v3821 = vld [vmem:[#allocation3 + $0x140] sm:$0xff]
    %v3822 = vld [vmem:[#allocation3 + $0x148] sm:$0xff]
    %v3823 = vld [vmem:[#allocation3 + $0x150] sm:$0xff]
    %v3824 = vld [vmem:[#allocation3 + $0x158] sm:$0xff]
    %v3825 = vld [vmem:[#allocation3 + $0x160] sm:$0xff]
    %v3826 = vld [vmem:[#allocation3 + $0x168] sm:$0xff]
    %v3827 = vld [vmem:[#allocation3 + $0x170] sm:$0xff]
    %v3828 = vld [vmem:[#allocation3 + $0x178] sm:$0xff]
    %v3829 = vld [vmem:[#allocation3 + $0x180] sm:$0xff]
    %v3830 = vld [vmem:[#allocation3 + $0x188] sm:$0xff]
    %v3831 = vld [vmem:[#allocation3 + $0x190] sm:$0xff]
    %v3832 = vld [vmem:[#allocation3 + $0x198] sm:$0xff]
    %v3833 = vld [vmem:[#allocation3 + $0x1a0] sm:$0xff]
    %v3834 = vld [vmem:[#allocation3 + $0x1a8] sm:$0xff]
    %v3835 = vld [vmem:[#allocation3 + $0x1b0] sm:$0xff]
    %v3836 = vld [vmem:[#allocation3 + $0x1b8] sm:$0xff]
    %v3837 = vld [vmem:[#allocation3 + $0x1c0] sm:$0xff]
    %v3838 = vld [vmem:[#allocation3 + $0x1c8] sm:$0xff]
    %v3839 = vld [vmem:[#allocation3 + $0x1d0] sm:$0xff]
    %v3840 = vld [vmem:[#allocation3 + $0x1d8] sm:$0xff]
    %v3841 = vld [vmem:[#allocation3 + $0x1e0] sm:$0xff]
    %v3842 = vld [vmem:[#allocation3 + $0x1e8] sm:$0xff]
    %v3843 = vld [vmem:[#allocation3 + $0x1f0] sm:$0xff]
    %v3844 = vld [vmem:[#allocation3 + $0x1f8] sm:$0xff]
    %v3845 = vld [vmem:[#allocation3 + $0x200] sm:$0xff]
    %v3846 = vld [vmem:[#allocation3 + $0x208] sm:$0xff]
    %v3847 = vld [vmem:[#allocation3 + $0x210] sm:$0xff]
    %v3848 = vld [vmem:[#allocation3 + $0x218] sm:$0xff]
    %v3849 = vld [vmem:[#allocation3 + $0x220] sm:$0xff]
    %v3850 = vld [vmem:[#allocation3 + $0x228] sm:$0xff]
    %v3851 = vld [vmem:[#allocation3 + $0x230] sm:$0xff]
    %v3852 = vld [vmem:[#allocation3 + $0x238] sm:$0xff]
    %v3853 = vld [vmem:[#allocation3 + $0x240] sm:$0xff]
    %v3854 = vld [vmem:[#allocation3 + $0x248] sm:$0xff]
    %v3855 = vld [vmem:[#allocation3 + $0x250] sm:$0xff]
    %v3856 = vld [vmem:[#allocation3 + $0x258] sm:$0xff]
    %v3857 = vld [vmem:[#allocation3 + $0x260] sm:$0xff]
    %v3858 = vld [vmem:[#allocation3 + $0x268] sm:$0xff]
    %v3859 = vld [vmem:[#allocation3 + $0x270] sm:$0xff]
    %v3860 = vld [vmem:[#allocation3 + $0x278] sm:$0xff]
    %v3861 = vld [vmem:[#allocation3 + $0x280] sm:$0xff]
    %v3862 = vld [vmem:[#allocation3 + $0x288] sm:$0xff]
    %v3863 = vld [vmem:[#allocation3 + $0x290] sm:$0xff]
    %v3864 = vld [vmem:[#allocation3 + $0x298] sm:$0xff]
    %v3865 = vld [vmem:[#allocation3 + $0x2a0] sm:$0xff]
    %v3866 = vld [vmem:[#allocation3 + $0x2a8] sm:$0xff]
    %v3867 = vld [vmem:[#allocation3 + $0x2b0] sm:$0xff]
    %v3868 = vld [vmem:[#allocation3 + $0x2b8] sm:$0xff]
    %v3869 = vld [vmem:[#allocation3 + $0x2c0] sm:$0xff]
    %v3870 = vld [vmem:[#allocation3 + $0x2c8] sm:$0xff]
    %v3871 = vld [vmem:[#allocation3 + $0x2d0] sm:$0xff]
    %v3872 = vld [vmem:[#allocation3 + $0x2d8] sm:$0xff]
    %v3873 = vld [vmem:[#allocation3 + $0x2e0] sm:$0xff]
    %v3874 = vld [vmem:[#allocation3 + $0x2e8] sm:$0xff]
    %v3875 = vld [vmem:[#allocation3 + $0x2f0] sm:$0xff]
    %v3876 = vld [vmem:[#allocation3 + $0x2f8] sm:$0xff]
    %v3877 = vld [vmem:[#allocation3 + $0x300] sm:$0xff]
    %v3878 = vld [vmem:[#allocation3 + $0x308] sm:$0xff]
    %v3879 = vld [vmem:[#allocation3 + $0x310] sm:$0xff]
    %v3880 = vld [vmem:[#allocation3 + $0x318] sm:$0xff]
    %v3881 = vld [vmem:[#allocation3 + $0x320] sm:$0xff]
    %v3882 = vld [vmem:[#allocation3 + $0x328] sm:$0xff]
    %v3883 = vld [vmem:[#allocation3 + $0x330] sm:$0xff]
    %v3884 = vld [vmem:[#allocation3 + $0x338] sm:$0xff]
    %v3885 = vld [vmem:[#allocation3 + $0x340] sm:$0xff]
    %v3886 = vld [vmem:[#allocation3 + $0x348] sm:$0xff]
    %v3887 = vld [vmem:[#allocation3 + $0x350] sm:$0xff]
    %v3888 = vld [vmem:[#allocation3 + $0x358] sm:$0xff]
    %v3889 = vld [vmem:[%s4] sm:$0xff]
    %v3890 = vld [vmem:[%s4 + $0x8] sm:$0xff]
    %v3891 = vld [vmem:[%s4 + $0x10] sm:$0xff]
    %v3892 = vld [vmem:[%s4 + $0x18] sm:$0xff]
    %v3893 = vld [vmem:[%s4 + $0x20] sm:$0xff]
    %v3894 = vld [vmem:[%s4 + $0x28] sm:$0xff]
    %v3895 = vld [vmem:[%s4 + $0x30] sm:$0xff]
    %v3896 = vld [vmem:[%s4 + $0x38] sm:$0xff]
    %3898 = vset.pattern.permute.xlu0 0
    %3899 = vperm.xlu0 %3898, %v3889
    %v3900 = vpop.permute.xlu0 %3899
    %3903 = vset.pattern.permute.xlu0 0
    %3904 = vperm.xlu0 %3903, %v3890
    %v3905 = vpop.permute.xlu0 %3904
    %3908 = vset.pattern.permute.xlu0 0
    %3909 = vperm.xlu0 %3908, %v3891
    %v3910 = vpop.permute.xlu0 %3909
    %3913 = vset.pattern.permute.xlu0 0
    %3914 = vperm.xlu0 %3913, %v3892
    %v3915 = vpop.permute.xlu0 %3914
    %3918 = vset.pattern.permute.xlu0 0
    %3919 = vperm.xlu0 %3918, %v3893
    %v3920 = vpop.permute.xlu0 %3919
    %3923 = vset.pattern.permute.xlu0 0
    %3924 = vperm.xlu0 %3923, %v3894
    %v3925 = vpop.permute.xlu0 %3924
    %3928 = vset.pattern.permute.xlu0 0
    %3929 = vperm.xlu0 %3928, %v3895
    %v3930 = vpop.permute.xlu0 %3929
    %3933 = vset.pattern.permute.xlu0 0
    %3934 = vperm.xlu0 %3933, %v3896
    %v3935 = vpop.permute.xlu0 %3934
    %v3953 = vunpack.c.l.b16 %v3765
    %v3954 = vunpack.c.h.b16 %v3765
    %v3955 = vunpack.c.l.b16 %v3766
    %v3956 = vunpack.c.l.b16 %v3767
    %v3957 = vunpack.c.h.b16 %v3767
    %v3958 = vunpack.c.l.b16 %v3768
    %v3959 = vunpack.c.l.b16 %v3769
    %v3960 = vunpack.c.h.b16 %v3769
    %v3961 = vunpack.c.l.b16 %v3770
    %v3962 = vunpack.c.l.b16 %v3771
    %v3963 = vunpack.c.h.b16 %v3771
    %v3964 = vunpack.c.l.b16 %v3772
    %v3965 = vunpack.c.l.b16 %v3773
    %v3966 = vunpack.c.h.b16 %v3773
    %v3967 = vunpack.c.l.b16 %v3774
    %v3968 = vunpack.c.l.b16 %v3775
    %v3969 = vunpack.c.h.b16 %v3775
    %v3970 = vunpack.c.l.b16 %v3776
    %v3971 = vunpack.c.l.b16 %v3777
    %v3972 = vunpack.c.h.b16 %v3777
    %v3973 = vunpack.c.l.b16 %v3778
    %v3974 = vunpack.c.l.b16 %v3779
    %v3975 = vunpack.c.h.b16 %v3779
    %v3976 = vunpack.c.l.b16 %v3780
    %v3977 = vpack.c.b16 %v3956, %v3953
    %v3978 = vpack.c.b16 %v3957, %v3954
    %v3979 = vpack.c.b16 %v3958, %v3955
    %v3980 = vpack.c.b16 %v3962, %v3959
    %v3981 = vpack.c.b16 %v3963, %v3960
    %v3982 = vpack.c.b16 %v3964, %v3961
    %v3983 = vpack.c.b16 %v3968, %v3965
    %v3984 = vpack.c.b16 %v3969, %v3966
    %v3985 = vpack.c.b16 %v3970, %v3967
    %v3986 = vpack.c.b16 %v3974, %v3971
    %v3987 = vpack.c.b16 %v3975, %v3972
    %v3988 = vpack.c.b16 %v3976, %v3973
    %v3998 = vsel %vm1222, %v3979, 0
    %v4001 = vsel %vm1222, %v3982, 0
    %v4004 = vsel %vm1222, %v3985, 0
    %v4007 = vsel %vm1222, %v3988, 0
    %4009 = vmatprep.subr.bf16.mxu0 %v3782
    %4010 = vmatpush1.bf16.msra.mxu0 %v3781
    %4011 = vmatprep.subr.bf16.mxu0 %v3788
    %4012 = vmatpush1.bf16.msra.mxu0 %v3787
    %4013 = vmatprep.subr.bf16.mxu0 %v3794
    %4014 = vmatpush1.bf16.msra.mxu0 %v3793
    %4015 = vmatprep.subr.bf16.mxu0 %v3800
    %4016 = vmatpush1.bf16.msra.mxu0 %v3799
    %4017 = vmatprep.subr.bf16.mxu0 %v3806
    %4018 = vmatpush1.bf16.msra.mxu0 %v3805
    %4019 = vmatprep.subr.bf16.mxu0 %v3812
    %4020 = vmatpush1.bf16.msra.mxu0 %v3811
    %4021 = vmatprep.subr.bf16.mxu0 %v3818
    %4022 = vmatpush1.bf16.msra.mxu0 %v3817
    %4023 = vmatprep.subr.bf16.mxu0 %v3824
    %4024 = vmatpush1.bf16.msra.mxu0 %v3823
    %4025 = vmatprep.subr.bf16.mxu0 %v3830
    %4026 = vmatpush1.bf16.msra.mxu0 %v3829
    %4027 = vmatprep.subr.bf16.mxu0 %v3836
    %4028 = vmatpush1.bf16.msra.mxu0 %v3835
    %4029 = vmatprep.subr.bf16.mxu0 %v3842
    %4030 = vmatpush1.bf16.msra.mxu0 %v3841
    %4031 = vmatprep.subr.bf16.mxu0 %v3848
    %4032 = vmatpush1.bf16.msra.mxu0 %v3847
    %4033 = vmatprep.subr.bf16.mxu0 %v3854
    %4034 = vmatpush1.bf16.msra.mxu0 %v3853
    %4035 = vmatprep.subr.bf16.mxu0 %v3860
    %4036 = vmatpush1.bf16.msra.mxu0 %v3859
    %4037 = vmatprep.subr.bf16.mxu0 %v3866
    %4038 = vmatpush1.bf16.msra.mxu0 %v3865
    %4039 = vmatprep.subr.bf16.mxu0 %v3872
    %4040 = vmatpush1.bf16.msra.mxu0 %v3871
    %4041 = vmatprep.mubr.bf16.mxu0 %v3978
    %4042 = vmatmul.mubr.bf16.gmra.mrb[0].mxu0 %v3977
    %v4043 = vpop.f32.mrb[0].mxu0
    %v4044 = vadd.f32 %v3900, %v4043
    %v4045 = vpop.f32.mrb[0].mxu0
    %v4046 = vadd.f32 %v3900, %v4045
    %v4047 = vpop.f32.mrb[0].mxu0
    %v4048 = vadd.f32 %v3905, %v4047
    %v4049 = vpop.f32.mrb[0].mxu0
    %v4050 = vadd.f32 %v3905, %v4049
    %4051 = vmatprep.mubr.bf16.mxu0 %v3981
    %4052 = vmatmul.mubr.bf16.gmra.mrb[0].mxu0 %v3980
    %v4053 = vpop.f32.mrb[0].mxu0
    %v4054 = vadd.f32 %v3910, %v4053
    %v4055 = vpop.f32.mrb[0].mxu0
    %v4056 = vadd.f32 %v3910, %v4055
    %v4057 = vpop.f32.mrb[0].mxu0
    %v4058 = vadd.f32 %v3915, %v4057
    %v4059 = vpop.f32.mrb[0].mxu0
    %v4060 = vadd.f32 %v3915, %v4059
    %4061 = vmatprep.mubr.bf16.mxu0 %v3984
    %4062 = vmatmul.mubr.bf16.gmra.mrb[0].mxu0 %v3983
    %v4063 = vpop.f32.mrb[0].mxu0
    %v4064 = vadd.f32 %v3920, %v4063
    %v4065 = vpop.f32.mrb[0].mxu0
    %v4066 = vadd.f32 %v3920, %v4065
    %v4067 = vpop.f32.mrb[0].mxu0
    %v4068 = vadd.f32 %v3925, %v4067
    %v4069 = vpop.f32.mrb[0].mxu0
    %v4070 = vadd.f32 %v3925, %v4069
    %4071 = vmatprep.mubr.bf16.mxu0 %v3987
    %4072 = vmatmul.mubr.bf16.gmra.mrb[0].mxu0 %v3986
    %v4073 = vpop.f32.mrb[0].mxu0
    %v4074 = vadd.f32 %v3930, %v4073
    %v4075 = vpop.f32.mrb[0].mxu0
    %v4076 = vadd.f32 %v3930, %v4075
    %v4077 = vpop.f32.mrb[0].mxu0
    %v4078 = vadd.f32 %v3935, %v4077
    %v4079 = vpop.f32.mrb[0].mxu0
    %v4080 = vadd.f32 %v3935, %v4079
    %4081 = vdwg.mxu0
    %4082 = vmatprep.subr.bf16.mxu0 %v3878
    %4083 = vmatpush1.bf16.msra.mxu0 %v3877
    %4084 = vmatprep.subr.bf16.mxu0 %v3884
    %4085 = vmatpush1.bf16.msra.mxu0 %v3883
    %4086 = vmatprep.subr.bf16.mxu0 0
    %4087 = vmatpush1.bf16.msra.mxu0 0
    %4088 = vmatprep.subr.bf16.mxu0 0
    %4089 = vmatpush1.bf16.msra.mxu0 0
    %4090 = vmatprep.subr.bf16.mxu0 0
    %4091 = vmatpush1.bf16.msra.mxu0 0
    %4092 = vmatprep.subr.bf16.mxu0 0
    %4093 = vmatpush1.bf16.msra.mxu0 0
    %4094 = vmatprep.subr.bf16.mxu0 0
    %4095 = vmatpush1.bf16.msra.mxu0 0
    %4096 = vmatprep.subr.bf16.mxu0 0
    %4097 = vmatpush1.bf16.msra.mxu0 0
    %4098 = vmatprep.subr.bf16.mxu0 0
    %4099 = vmatpush1.bf16.msra.mxu0 0
    %4100 = vmatprep.subr.bf16.mxu0 0
    %4101 = vmatpush1.bf16.msra.mxu0 0
    %4102 = vmatprep.subr.bf16.mxu0 0
    %4103 = vmatpush1.bf16.msra.mxu0 0
    %4104 = vmatprep.subr.bf16.mxu0 0
    %4105 = vmatpush1.bf16.msra.mxu0 0
    %4106 = vmatprep.subr.bf16.mxu0 0
    %4107 = vmatpush1.bf16.msra.mxu0 0
    %4108 = vmatprep.subr.bf16.mxu0 0
    %4109 = vmatpush1.bf16.msra.mxu0 0
    %4110 = vmatprep.subr.bf16.mxu0 0
    %4111 = vmatpush1.bf16.msra.mxu0 0
    %4112 = vmatprep.subr.bf16.mxu0 0
    %4113 = vmatpush1.bf16.msra.mxu0 0
    %4114 = vmatprep.mubr.bf16.mxu0 0
    %4115 = vmatmul.mubr.bf16.gmra.mrb[0].mxu0 %v3998
    %v4116 = vpop.f32.mrb[0].mxu0
    %v4117 = vadd.f32 %v4044, %v4116
    %v4118 = vpop.f32.mrb[0].mxu0
    %v4119 = vadd.f32 %v4046, %v4118
    %v4120 = vpop.f32.mrb[0].mxu0
    %v4121 = vadd.f32 %v4048, %v4120
    %v4122 = vpop.f32.mrb[0].mxu0
    %v4123 = vadd.f32 %v4050, %v4122
    %4124 = vmatprep.mubr.bf16.mxu0 0
    %4125 = vmatmul.mubr.bf16.gmra.mrb[0].mxu0 %v4001
    %v4126 = vpop.f32.mrb[0].mxu0
    %v4127 = vadd.f32 %v4054, %v4126
    %v4128 = vpop.f32.mrb[0].mxu0
    %v4129 = vadd.f32 %v4056, %v4128
    %v4130 = vpop.f32.mrb[0].mxu0
    %v4131 = vadd.f32 %v4058, %v4130
    %v4132 = vpop.f32.mrb[0].mxu0
    %v4133 = vadd.f32 %v4060, %v4132
    %4134 = vmatprep.mubr.bf16.mxu0 0
    %4135 = vmatmul.mubr.bf16.gmra.mrb[0].mxu0 %v4004
    %v4136 = vpop.f32.mrb[0].mxu0
    %v4137 = vadd.f32 %v4064, %v4136
    %v4138 = vpop.f32.mrb[0].mxu0
    %v4139 = vadd.f32 %v4066, %v4138
    %v4140 = vpop.f32.mrb[0].mxu0
    %v4141 = vadd.f32 %v4068, %v4140
    %v4142 = vpop.f32.mrb[0].mxu0
    %v4143 = vadd.f32 %v4070, %v4142
    %4144 = vmatprep.mubr.bf16.mxu0 0
    %4145 = vmatmul.mubr.bf16.gmra.mrb[0].mxu0 %v4007
    %v4146 = vpop.f32.mrb[0].mxu0
    %v4147 = vadd.f32 %v4074, %v4146
    %v4148 = vpop.f32.mrb[0].mxu0
    %v4149 = vadd.f32 %v4076, %v4148
    %v4150 = vpop.f32.mrb[0].mxu0
    %v4151 = vadd.f32 %v4078, %v4150
    %v4152 = vpop.f32.mrb[0].mxu0
    %v4153 = vadd.f32 %v4080, %v4152
    %4154 = vdwg.mxu0
    %4155 = vmatprep.subr.bf16.mxu0 %v3784
    %4156 = vmatpush1.bf16.msra.mxu0 %v3783
    %4157 = vmatprep.subr.bf16.mxu0 %v3790
    %4158 = vmatpush1.bf16.msra.mxu0 %v3789
    %4159 = vmatprep.subr.bf16.mxu0 %v3796
    %4160 = vmatpush1.bf16.msra.mxu0 %v3795
    %4161 = vmatprep.subr.bf16.mxu0 %v3802
    %4162 = vmatpush1.bf16.msra.mxu0 %v3801
    %4163 = vmatprep.subr.bf16.mxu0 %v3808
    %4164 = vmatpush1.bf16.msra.mxu0 %v3807
    %4165 = vmatprep.subr.bf16.mxu0 %v3814
    %4166 = vmatpush1.bf16.msra.mxu0 %v3813
    %4167 = vmatprep.subr.bf16.mxu0 %v3820
    %4168 = vmatpush1.bf16.msra.mxu0 %v3819
    %4169 = vmatprep.subr.bf16.mxu0 %v3826
    %4170 = vmatpush1.bf16.msra.mxu0 %v3825
    %4171 = vmatprep.subr.bf16.mxu0 %v3832
    %4172 = vmatpush1.bf16.msra.mxu0 %v3831
    %4173 = vmatprep.subr.bf16.mxu0 %v3838
    %4174 = vmatpush1.bf16.msra.mxu0 %v3837
    %4175 = vmatprep.subr.bf16.mxu0 %v3844
    %4176 = vmatpush1.bf16.msra.mxu0 %v3843
    %4177 = vmatprep.subr.bf16.mxu0 %v3850
    %4178 = vmatpush1.bf16.msra.mxu0 %v3849
    %4179 = vmatprep.subr.bf16.mxu0 %v3856
    %4180 = vmatpush1.bf16.msra.mxu0 %v3855
    %4181 = vmatprep.subr.bf16.mxu0 %v3862
    %4182 = vmatpush1.bf16.msra.mxu0 %v3861
    %4183 = vmatprep.subr.bf16.mxu0 %v3868
    %4184 = vmatpush1.bf16.msra.mxu0 %v3867
    %4185 = vmatprep.subr.bf16.mxu0 %v3874
    %4186 = vmatpush1.bf16.msra.mxu0 %v3873
    %4187 = vmatprep.mubr.bf16.mxu0 %v3978
    %4188 = vmatmul.mubr.bf16.gmra.mrb[0].mxu0 %v3977
    %v4189 = vpop.f32.mrb[0].mxu0
    %v4190 = vadd.f32 %v3900, %v4189
    %v4191 = vpop.f32.mrb[0].mxu0
    %v4192 = vadd.f32 %v3900, %v4191
    %v4193 = vpop.f32.mrb[0].mxu0
    %v4194 = vadd.f32 %v3905, %v4193
    %v4195 = vpop.f32.mrb[0].mxu0
    %v4196 = vadd.f32 %v3905, %v4195
    %4197 = vmatprep.mubr.bf16.mxu0 %v3981
    %4198 = vmatmul.mubr.bf16.gmra.mrb[0].mxu0 %v3980
    %v4199 = vpop.f32.mrb[0].mxu0
    %v4200 = vadd.f32 %v3910, %v4199
    %v4201 = vpop.f32.mrb[0].mxu0
    %v4202 = vadd.f32 %v3910, %v4201
    %v4203 = vpop.f32.mrb[0].mxu0
    %v4204 = vadd.f32 %v3915, %v4203
    %v4205 = vpop.f32.mrb[0].mxu0
    %v4206 = vadd.f32 %v3915, %v4205
    %4207 = vmatprep.mubr.bf16.mxu0 %v3984
    %4208 = vmatmul.mubr.bf16.gmra.mrb[0].mxu0 %v3983
    %v4209 = vpop.f32.mrb[0].mxu0
    %v4210 = vadd.f32 %v3920, %v4209
    %v4211 = vpop.f32.mrb[0].mxu0
    %v4212 = vadd.f32 %v3920, %v4211
    %v4213 = vpop.f32.mrb[0].mxu0
    %v4214 = vadd.f32 %v3925, %v4213
    %v4215 = vpop.f32.mrb[0].mxu0
    %v4216 = vadd.f32 %v3925, %v4215
    %4217 = vmatprep.mubr.bf16.mxu0 %v3987
    %4218 = vmatmul.mubr.bf16.gmra.mrb[0].mxu0 %v3986
    %v4219 = vpop.f32.mrb[0].mxu0
    %v4220 = vadd.f32 %v3930, %v4219
    %v4221 = vpop.f32.mrb[0].mxu0
    %v4222 = vadd.f32 %v3930, %v4221
    %v4223 = vpop.f32.mrb[0].mxu0
    %v4224 = vadd.f32 %v3935, %v4223
    %v4225 = vpop.f32.mrb[0].mxu0
    %v4226 = vadd.f32 %v3935, %v4225
    %4227 = vdwg.mxu0
    %4228 = vmatprep.subr.bf16.mxu0 %v3880
    %4229 = vmatpush1.bf16.msra.mxu0 %v3879
    %4230 = vmatprep.subr.bf16.mxu0 %v3886
    %4231 = vmatpush1.bf16.msra.mxu0 %v3885
    %4232 = vmatprep.subr.bf16.mxu0 0
    %4233 = vmatpush1.bf16.msra.mxu0 0
    %4234 = vmatprep.subr.bf16.mxu0 0
    %4235 = vmatpush1.bf16.msra.mxu0 0
    %4236 = vmatprep.subr.bf16.mxu0 0
    %4237 = vmatpush1.bf16.msra.mxu0 0
    %4238 = vmatprep.subr.bf16.mxu0 0
    %4239 = vmatpush1.bf16.msra.mxu0 0
    %4240 = vmatprep.subr.bf16.mxu0 0
    %4241 = vmatpush1.bf16.msra.mxu0 0
    %4242 = vmatprep.subr.bf16.mxu0 0
    %4243 = vmatpush1.bf16.msra.mxu0 0
    %4244 = vmatprep.subr.bf16.mxu0 0
    %4245 = vmatpush1.bf16.msra.mxu0 0
    %4246 = vmatprep.subr.bf16.mxu0 0
    %4247 = vmatpush1.bf16.msra.mxu0 0
    %4248 = vmatprep.subr.bf16.mxu0 0
    %4249 = vmatpush1.bf16.msra.mxu0 0
    %4250 = vmatprep.subr.bf16.mxu0 0
    %4251 = vmatpush1.bf16.msra.mxu0 0
    %4252 = vmatprep.subr.bf16.mxu0 0
    %4253 = vmatpush1.bf16.msra.mxu0 0
    %4254 = vmatprep.subr.bf16.mxu0 0
    %4255 = vmatpush1.bf16.msra.mxu0 0
    %4256 = vmatprep.subr.bf16.mxu0 0
    %4257 = vmatpush1.bf16.msra.mxu0 0
    %4258 = vmatprep.subr.bf16.mxu0 0
    %4259 = vmatpush1.bf16.msra.mxu0 0
    %4260 = vmatprep.mubr.bf16.mxu0 0
    %4261 = vmatmul.mubr.bf16.gmra.mrb[0].mxu0 %v3998
    %v4262 = vpop.f32.mrb[0].mxu0
    %v4263 = vadd.f32 %v4190, %v4262
    %v4264 = vpop.f32.mrb[0].mxu0
    %v4265 = vadd.f32 %v4192, %v4264
    %v4266 = vpop.f32.mrb[0].mxu0
    %v4267 = vadd.f32 %v4194, %v4266
    %v4268 = vpop.f32.mrb[0].mxu0
    %v4269 = vadd.f32 %v4196, %v4268
    %4270 = vmatprep.mubr.bf16.mxu0 0
    %4271 = vmatmul.mubr.bf16.gmra.mrb[0].mxu0 %v4001
    %v4272 = vpop.f32.mrb[0].mxu0
    %v4273 = vadd.f32 %v4200, %v4272
    %v4274 = vpop.f32.mrb[0].mxu0
    %v4275 = vadd.f32 %v4202, %v4274
    %v4276 = vpop.f32.mrb[0].mxu0
    %v4277 = vadd.f32 %v4204, %v4276
    %v4278 = vpop.f32.mrb[0].mxu0
    %v4279 = vadd.f32 %v4206, %v4278
    %4280 = vmatprep.mubr.bf16.mxu0 0
    %4281 = vmatmul.mubr.bf16.gmra.mrb[0].mxu0 %v4004
    %v4282 = vpop.f32.mrb[0].mxu0
    %v4283 = vadd.f32 %v4210, %v4282
    %v4284 = vpop.f32.mrb[0].mxu0
    %v4285 = vadd.f32 %v4212, %v4284
    %v4286 = vpop.f32.mrb[0].mxu0
    %v4287 = vadd.f32 %v4214, %v4286
    %v4288 = vpop.f32.mrb[0].mxu0
    %v4289 = vadd.f32 %v4216, %v4288
    %4290 = vmatprep.mubr.bf16.mxu0 0
    %4291 = vmatmul.mubr.bf16.gmra.mrb[0].mxu0 %v4007
    %v4292 = vpop.f32.mrb[0].mxu0
    %v4293 = vadd.f32 %v4220, %v4292
    %v4294 = vpop.f32.mrb[0].mxu0
    %v4295 = vadd.f32 %v4222, %v4294
    %v4296 = vpop.f32.mrb[0].mxu0
    %v4297 = vadd.f32 %v4224, %v4296
    %v4298 = vpop.f32.mrb[0].mxu0
    %v4299 = vadd.f32 %v4226, %v4298
    %4300 = vdwg.mxu0
    %4301 = vmatprep.subr.bf16.mxu0 %v3786
    %4302 = vmatpush1.bf16.msra.mxu0 %v3785
    %4303 = vmatprep.subr.bf16.mxu0 %v3792
    %4304 = vmatpush1.bf16.msra.mxu0 %v3791
    %4305 = vmatprep.subr.bf16.mxu0 %v3798
    %4306 = vmatpush1.bf16.msra.mxu0 %v3797
    %4307 = vmatprep.subr.bf16.mxu0 %v3804
    %4308 = vmatpush1.bf16.msra.mxu0 %v3803
    %4309 = vmatprep.subr.bf16.mxu0 %v3810
    %4310 = vmatpush1.bf16.msra.mxu0 %v3809
    %4311 = vmatprep.subr.bf16.mxu0 %v3816
    %4312 = vmatpush1.bf16.msra.mxu0 %v3815
    %4313 = vmatprep.subr.bf16.mxu0 %v3822
    %4314 = vmatpush1.bf16.msra.mxu0 %v3821
    %4315 = vmatprep.subr.bf16.mxu0 %v3828
    %4316 = vmatpush1.bf16.msra.mxu0 %v3827
    %4317 = vmatprep.subr.bf16.mxu0 %v3834
    %4318 = vmatpush1.bf16.msra.mxu0 %v3833
    %4319 = vmatprep.subr.bf16.mxu0 %v3840
    %4320 = vmatpush1.bf16.msra.mxu0 %v3839
    %4321 = vmatprep.subr.bf16.mxu0 %v3846
    %4322 = vmatpush1.bf16.msra.mxu0 %v3845
    %4323 = vmatprep.subr.bf16.mxu0 %v3852
    %4324 = vmatpush1.bf16.msra.mxu0 %v3851
    %4325 = vmatprep.subr.bf16.mxu0 %v3858
    %4326 = vmatpush1.bf16.msra.mxu0 %v3857
    %4327 = vmatprep.subr.bf16.mxu0 %v3864
    %4328 = vmatpush1.bf16.msra.mxu0 %v3863
    %4329 = vmatprep.subr.bf16.mxu0 %v3870
    %4330 = vmatpush1.bf16.msra.mxu0 %v3869
    %4331 = vmatprep.subr.bf16.mxu0 %v3876
    %4332 = vmatpush1.bf16.msra.mxu0 %v3875
    %4333 = vmatprep.mubr.bf16.mxu0 %v3978
    %4334 = vmatmul.mubr.bf16.gmra.mrb[0].mxu0 %v3977
    %v4335 = vpop.f32.mrb[0].mxu0
    %v4336 = vadd.f32 %v3900, %v4335
    %v4337 = vpop.f32.mrb[0].mxu0
    %v4338 = vadd.f32 %v3900, %v4337
    %v4339 = vpop.f32.mrb[0].mxu0
    %v4340 = vadd.f32 %v3905, %v4339
    %v4341 = vpop.f32.mrb[0].mxu0
    %v4342 = vadd.f32 %v3905, %v4341
    %4343 = vmatprep.mubr.bf16.mxu0 %v3981
    %4344 = vmatmul.mubr.bf16.gmra.mrb[0].mxu0 %v3980
    %v4345 = vpop.f32.mrb[0].mxu0
    %v4346 = vadd.f32 %v3910, %v4345
    %v4347 = vpop.f32.mrb[0].mxu0
    %v4348 = vadd.f32 %v3910, %v4347
    %v4349 = vpop.f32.mrb[0].mxu0
    %v4350 = vadd.f32 %v3915, %v4349
    %v4351 = vpop.f32.mrb[0].mxu0
    %v4352 = vadd.f32 %v3915, %v4351
    %4353 = vmatprep.mubr.bf16.mxu0 %v3984
    %4354 = vmatmul.mubr.bf16.gmra.mrb[0].mxu0 %v3983
    %v4355 = vpop.f32.mrb[0].mxu0
    %v4356 = vadd.f32 %v3920, %v4355
    %v4357 = vpop.f32.mrb[0].mxu0
    %v4358 = vadd.f32 %v3920, %v4357
    %v4359 = vpop.f32.mrb[0].mxu0
    %v4360 = vadd.f32 %v3925, %v4359
    %v4361 = vpop.f32.mrb[0].mxu0
    %v4362 = vadd.f32 %v3925, %v4361
    %4363 = vmatprep.mubr.bf16.mxu0 %v3987
    %4364 = vmatmul.mubr.bf16.gmra.mrb[0].mxu0 %v3986
    %v4365 = vpop.f32.mrb[0].mxu0
    %v4366 = vadd.f32 %v3930, %v4365
    %v4367 = vpop.f32.mrb[0].mxu0
    %v4368 = vadd.f32 %v3930, %v4367
    %v4369 = vpop.f32.mrb[0].mxu0
    %v4370 = vadd.f32 %v3935, %v4369
    %v4371 = vpop.f32.mrb[0].mxu0
    %v4372 = vadd.f32 %v3935, %v4371
    %4373 = vdwg.mxu0
    %4374 = vmatprep.subr.bf16.mxu0 %v3882
    %4375 = vmatpush1.bf16.msra.mxu0 %v3881
    %4376 = vmatprep.subr.bf16.mxu0 %v3888
    %4377 = vmatpush1.bf16.msra.mxu0 %v3887
    %4378 = vmatprep.subr.bf16.mxu0 0
    %4379 = vmatpush1.bf16.msra.mxu0 0
    %4380 = vmatprep.subr.bf16.mxu0 0
    %4381 = vmatpush1.bf16.msra.mxu0 0
    %4382 = vmatprep.subr.bf16.mxu0 0
    %4383 = vmatpush1.bf16.msra.mxu0 0
    %4384 = vmatprep.subr.bf16.mxu0 0
    %4385 = vmatpush1.bf16.msra.mxu0 0
    %4386 = vmatprep.subr.bf16.mxu0 0
    %4387 = vmatpush1.bf16.msra.mxu0 0
    %4388 = vmatprep.subr.bf16.mxu0 0
    %4389 = vmatpush1.bf16.msra.mxu0 0
    %4390 = vmatprep.subr.bf16.mxu0 0
    %4391 = vmatpush1.bf16.msra.mxu0 0
    %4392 = vmatprep.subr.bf16.mxu0 0
    %4393 = vmatpush1.bf16.msra.mxu0 0
    %4394 = vmatprep.subr.bf16.mxu0 0
    %4395 = vmatpush1.bf16.msra.mxu0 0
    %4396 = vmatprep.subr.bf16.mxu0 0
    %4397 = vmatpush1.bf16.msra.mxu0 0
    %4398 = vmatprep.subr.bf16.mxu0 0
    %4399 = vmatpush1.bf16.msra.mxu0 0
    %4400 = vmatprep.subr.bf16.mxu0 0
    %4401 = vmatpush1.bf16.msra.mxu0 0
    %4402 = vmatprep.subr.bf16.mxu0 0
    %4403 = vmatpush1.bf16.msra.mxu0 0
    %4404 = vmatprep.subr.bf16.mxu0 0
    %4405 = vmatpush1.bf16.msra.mxu0 0
    %4406 = vmatprep.mubr.bf16.mxu0 0
    %4407 = vmatmul.mubr.bf16.gmra.mrb[0].mxu0 %v3998
    %v4408 = vpop.f32.mrb[0].mxu0
    %v4409 = vadd.f32 %v4336, %v4408
    %v4410 = vpop.f32.mrb[0].mxu0
    %v4411 = vadd.f32 %v4338, %v4410
    %v4412 = vpop.f32.mrb[0].mxu0
    %v4413 = vadd.f32 %v4340, %v4412
    %v4414 = vpop.f32.mrb[0].mxu0
    %v4415 = vadd.f32 %v4342, %v4414
    %4416 = vmatprep.mubr.bf16.mxu0 0
    %4417 = vmatmul.mubr.bf16.gmra.mrb[0].mxu0 %v4001
    %v4418 = vpop.f32.mrb[0].mxu0
    %v4419 = vadd.f32 %v4346, %v4418
    %v4420 = vpop.f32.mrb[0].mxu0
    %v4421 = vadd.f32 %v4348, %v4420
    %v4422 = vpop.f32.mrb[0].mxu0
    %v4423 = vadd.f32 %v4350, %v4422
    %v4424 = vpop.f32.mrb[0].mxu0
    %v4425 = vadd.f32 %v4352, %v4424
    %4426 = vmatprep.mubr.bf16.mxu0 0
    %4427 = vmatmul.mubr.bf16.gmra.mrb[0].mxu0 %v4004
    %v4428 = vpop.f32.mrb[0].mxu0
    %v4429 = vadd.f32 %v4356, %v4428
    %v4430 = vpop.f32.mrb[0].mxu0
    %v4431 = vadd.f32 %v4358, %v4430
    %v4432 = vpop.f32.mrb[0].mxu0
    %v4433 = vadd.f32 %v4360, %v4432
    %v4434 = vpop.f32.mrb[0].mxu0
    %v4435 = vadd.f32 %v4362, %v4434
    %4436 = vmatprep.mubr.bf16.mxu0 0
    %4437 = vmatmul.mubr.bf16.gmra.mrb[0].mxu0 %v4007
    %v4438 = vpop.f32.mrb[0].mxu0
    %v4439 = vadd.f32 %v4366, %v4438
    %v4440 = vpop.f32.mrb[0].mxu0
    %v4441 = vadd.f32 %v4368, %v4440
    %v4442 = vpop.f32.mrb[0].mxu0
    %v4443 = vadd.f32 %v4370, %v4442
    %v4444 = vpop.f32.mrb[0].mxu0
    %v4445 = vadd.f32 %v4372, %v4444
    %4446 = vdwg.mxu0
    %v4447 = vmax.f32 %v4117, 0.0
    %v4448 = vmax.f32 %v4119, 0.0
    %v4449 = vmax.f32 %v4263, 0.0
    %v4450 = vmax.f32 %v4265, 0.0
    %v4451 = vmax.f32 %v4409, 0.0
    %v4452 = vmax.f32 %v4411, 0.0
    %v4453 = vmax.f32 %v4121, 0.0
    %v4454 = vmax.f32 %v4123, 0.0
    %v4455 = vmax.f32 %v4267, 0.0
    %v4456 = vmax.f32 %v4269, 0.0
    %v4457 = vmax.f32 %v4413, 0.0
    %v4458 = vmax.f32 %v4415, 0.0
    %v4459 = vmax.f32 %v4127, 0.0
    %v4460 = vmax.f32 %v4129, 0.0
    %v4461 = vmax.f32 %v4273, 0.0
    %v4462 = vmax.f32 %v4275, 0.0
    %v4463 = vmax.f32 %v4419, 0.0
    %v4464 = vmax.f32 %v4421, 0.0
    %v4465 = vmax.f32 %v4131, 0.0
    %v4466 = vmax.f32 %v4133, 0.0
    %v4467 = vmax.f32 %v4277, 0.0
    %v4468 = vmax.f32 %v4279, 0.0
    %v4469 = vmax.f32 %v4423, 0.0
    %v4470 = vmax.f32 %v4425, 0.0
    %v4471 = vmax.f32 %v4137, 0.0
    %v4472 = vmax.f32 %v4139, 0.0
    %v4473 = vmax.f32 %v4283, 0.0
    %v4474 = vmax.f32 %v4285, 0.0
    %v4475 = vmax.f32 %v4429, 0.0
    %v4476 = vmax.f32 %v4431, 0.0
    %v4477 = vmax.f32 %v4141, 0.0
    %v4478 = vmax.f32 %v4143, 0.0
    %v4479 = vmax.f32 %v4287, 0.0
    %v4480 = vmax.f32 %v4289, 0.0
    %v4481 = vmax.f32 %v4433, 0.0
    %v4482 = vmax.f32 %v4435, 0.0
    %v4483 = vmax.f32 %v4147, 0.0
    %v4484 = vmax.f32 %v4149, 0.0
    %v4485 = vmax.f32 %v4293, 0.0
    %v4486 = vmax.f32 %v4295, 0.0
    %v4487 = vmax.f32 %v4439, 0.0
    %v4488 = vmax.f32 %v4441, 0.0
    %v4489 = vmax.f32 %v4151, 0.0
    %v4490 = vmax.f32 %v4153, 0.0
    %v4491 = vmax.f32 %v4297, 0.0
    %v4492 = vmax.f32 %v4299, 0.0
    %v4493 = vmax.f32 %v4443, 0.0
    %v4494 = vmax.f32 %v4445, 0.0
    %v4495 = vpack.c.bf16 %v4453, %v4447
    %v4496 = vpack.c.bf16 %v4454, %v4448
    %v4497 = vpack.c.bf16 %v4455, %v4449
    %v4498 = vpack.c.bf16 %v4456, %v4450
    %v4499 = vpack.c.bf16 %v4457, %v4451
    %v4500 = vpack.c.bf16 %v4458, %v4452
    %v4501 = vpack.c.bf16 %v4465, %v4459
    %v4502 = vpack.c.bf16 %v4466, %v4460
    %v4503 = vpack.c.bf16 %v4467, %v4461
    %v4504 = vpack.c.bf16 %v4468, %v4462
    %v4505 = vpack.c.bf16 %v4469, %v4463
    %v4506 = vpack.c.bf16 %v4470, %v4464
    %v4507 = vpack.c.bf16 %v4477, %v4471
    %v4508 = vpack.c.bf16 %v4478, %v4472
    %v4509 = vpack.c.bf16 %v4479, %v4473
    %v4510 = vpack.c.bf16 %v4480, %v4474
    %v4511 = vpack.c.bf16 %v4481, %v4475
    %v4512 = vpack.c.bf16 %v4482, %v4476
    %v4513 = vpack.c.bf16 %v4489, %v4483
    %v4514 = vpack.c.bf16 %v4490, %v4484
    %v4515 = vpack.c.bf16 %v4491, %v4485
    %v4516 = vpack.c.bf16 %v4492, %v4486
    %v4517 = vpack.c.bf16 %v4493, %v4487
    %v4518 = vpack.c.bf16 %v4494, %v4488
    %4519 = vst [vmem:[#allocation4] sm:$0xff] %v4495
    %4520 = vst [vmem:[#allocation4 + $0x8] sm:$0xff] %v4496
    %4521 = vst [vmem:[#allocation4 + $0x10] sm:$0xff] %v4497
    %4522 = vst [vmem:[#allocation4 + $0x18] sm:$0xff] %v4498
    %4523 = vst [vmem:[#allocation4 + $0x20] sm:$0xff] %v4499
    %4524 = vst.msk [vmem:[#allocation4 + $0x28] sm:$0xff] %vm498, %v4500
    %4525 = vst [vmem:[#allocation4 + $0x30] sm:$0xff] %v4501
    %4526 = vst [vmem:[#allocation4 + $0x38] sm:$0xff] %v4502
    %4527 = vst [vmem:[#allocation4 + $0x40] sm:$0xff] %v4503
    %4528 = vst [vmem:[#allocation4 + $0x48] sm:$0xff] %v4504
    %4529 = vst [vmem:[#allocation4 + $0x50] sm:$0xff] %v4505
    %4530 = vst.msk [vmem:[#allocation4 + $0x58] sm:$0xff] %vm498, %v4506
    %4531 = vst [vmem:[#allocation4 + $0x60] sm:$0xff] %v4507
    %4532 = vst [vmem:[#allocation4 + $0x68] sm:$0xff] %v4508
    %4533 = vst [vmem:[#allocation4 + $0x70] sm:$0xff] %v4509
    %4534 = vst [vmem:[#allocation4 + $0x78] sm:$0xff] %v4510
    %4535 = vst [vmem:[#allocation4 + $0x80] sm:$0xff] %v4511
    %4536 = vst.msk [vmem:[#allocation4 + $0x88] sm:$0xff] %vm498, %v4512
    %4537 = vst [vmem:[#allocation4 + $0x90] sm:$0xff] %v4513
    %4538 = vst [vmem:[#allocation4 + $0x98] sm:$0xff] %v4514
    %4539 = vst [vmem:[#allocation4 + $0xa0] sm:$0xff] %v4515
    %4540 = vst [vmem:[#allocation4 + $0xa8] sm:$0xff] %v4516
    %4541 = vst [vmem:[#allocation4 + $0xb0] sm:$0xff] %v4517
    %4542 = vst.msk [vmem:[#allocation4 + $0xb8] sm:$0xff] %vm498, %v4518
    %v4543 = vld [vmem:[#allocation4] sm:$0xff]
    %v4544 = vld [vmem:[#allocation4 + $0x8] sm:$0xff]
    %v4545 = vld [vmem:[#allocation4 + $0x10] sm:$0xff]
    %v4546 = vld [vmem:[#allocation4 + $0x18] sm:$0xff]
    %v4547 = vld [vmem:[#allocation4 + $0x20] sm:$0xff]
    %v4548 = vld [vmem:[#allocation4 + $0x28] sm:$0xff]
    %v4549 = vld [vmem:[#allocation4 + $0x30] sm:$0xff]
    %v4550 = vld [vmem:[#allocation4 + $0x38] sm:$0xff]
    %v4551 = vld [vmem:[#allocation4 + $0x40] sm:$0xff]
    %v4552 = vld [vmem:[#allocation4 + $0x48] sm:$0xff]
    %v4553 = vld [vmem:[#allocation4 + $0x50] sm:$0xff]
    %v4554 = vld [vmem:[#allocation4 + $0x58] sm:$0xff]
    %v4555 = vld [vmem:[#allocation4 + $0x60] sm:$0xff]
    %v4556 = vld [vmem:[#allocation4 + $0x68] sm:$0xff]
    %v4557 = vld [vmem:[#allocation4 + $0x70] sm:$0xff]
    %v4558 = vld [vmem:[#allocation4 + $0x78] sm:$0xff]
    %v4559 = vld [vmem:[#allocation4 + $0x80] sm:$0xff]
    %v4560 = vld [vmem:[#allocation4 + $0x88] sm:$0xff]
    %v4561 = vld [vmem:[#allocation4 + $0x90] sm:$0xff]
    %v4562 = vld [vmem:[#allocation4 + $0x98] sm:$0xff]
    %v4563 = vld [vmem:[#allocation4 + $0xa0] sm:$0xff]
    %v4564 = vld [vmem:[#allocation4 + $0xa8] sm:$0xff]
    %v4565 = vld [vmem:[#allocation4 + $0xb0] sm:$0xff]
    %v4566 = vld [vmem:[#allocation4 + $0xb8] sm:$0xff]
    %4591 = vrot.lane.b32.xlu0 %v4543, 127
    %v4592 = vpop.permute.xlu0 %4591
    %4593 = vrot.lane.b32.xlu0 %v4544, 127
    %v4594 = vpop.permute.xlu0 %4593
    %4595 = vrot.lane.b32.xlu0 %v4545, 127
    %v4596 = vpop.permute.xlu0 %4595
    %4597 = vrot.lane.b32.xlu0 %v4546, 127
    %v4598 = vpop.permute.xlu0 %4597
    %4599 = vrot.lane.b32.xlu0 %v4547, 127
    %v4600 = vpop.permute.xlu0 %4599
    %4601 = vrot.lane.b32.xlu0 %v4548, 127
    %v4602 = vpop.permute.xlu0 %4601
    %4603 = vrot.lane.b32.xlu0 %v4549, 127
    %v4604 = vpop.permute.xlu0 %4603
    %4605 = vrot.lane.b32.xlu0 %v4550, 127
    %v4606 = vpop.permute.xlu0 %4605
    %4607 = vrot.lane.b32.xlu0 %v4551, 127
    %v4608 = vpop.permute.xlu0 %4607
    %4609 = vrot.lane.b32.xlu0 %v4552, 127
    %v4610 = vpop.permute.xlu0 %4609
    %4611 = vrot.lane.b32.xlu0 %v4553, 127
    %v4612 = vpop.permute.xlu0 %4611
    %4613 = vrot.lane.b32.xlu0 %v4554, 127
    %v4614 = vpop.permute.xlu0 %4613
    %4615 = vrot.lane.b32.xlu0 %v4555, 127
    %v4616 = vpop.permute.xlu0 %4615
    %4617 = vrot.lane.b32.xlu0 %v4556, 127
    %v4618 = vpop.permute.xlu0 %4617
    %4619 = vrot.lane.b32.xlu0 %v4557, 127
    %v4620 = vpop.permute.xlu0 %4619
    %4621 = vrot.lane.b32.xlu0 %v4558, 127
    %v4622 = vpop.permute.xlu0 %4621
    %4623 = vrot.lane.b32.xlu0 %v4559, 127
    %v4624 = vpop.permute.xlu0 %4623
    %4625 = vrot.lane.b32.xlu0 %v4560, 127
    %v4626 = vpop.permute.xlu0 %4625
    %4627 = vrot.lane.b32.xlu0 %v4561, 127
    %v4628 = vpop.permute.xlu0 %4627
    %4629 = vrot.lane.b32.xlu0 %v4562, 127
    %v4630 = vpop.permute.xlu0 %4629
    %4631 = vrot.lane.b32.xlu0 %v4563, 127
    %v4632 = vpop.permute.xlu0 %4631
    %4633 = vrot.lane.b32.xlu0 %v4564, 127
    %v4634 = vpop.permute.xlu0 %4633
    %4635 = vrot.lane.b32.xlu0 %v4565, 127
    %v4636 = vpop.permute.xlu0 %4635
    %4637 = vrot.lane.b32.xlu0 %v4566, 127
    %v4638 = vpop.permute.xlu0 %4637
    %v4639 = vsel %vm542, %v4592, %v4594
    %v4640 = vsel %vm542, %v4594, %v4596
    %v4641 = vsel %vm542, %v4596, %v4598
    %v4642 = vsel %vm542, %v4598, %v4600
    %v4643 = vsel %vm542, %v4600, %v4602
    %v4644 = vsel %vm542, %v4604, %v4606
    %v4645 = vsel %vm542, %v4606, %v4608
    %v4646 = vsel %vm542, %v4608, %v4610
    %v4647 = vsel %vm542, %v4610, %v4612
    %v4648 = vsel %vm542, %v4612, %v4614
    %v4649 = vsel %vm542, %v4616, %v4618
    %v4650 = vsel %vm542, %v4618, %v4620
    %v4651 = vsel %vm542, %v4620, %v4622
    %v4652 = vsel %vm542, %v4622, %v4624
    %v4653 = vsel %vm542, %v4624, %v4626
    %v4654 = vsel %vm542, %v4628, %v4630
    %v4655 = vsel %vm542, %v4630, %v4632
    %v4656 = vsel %vm542, %v4632, %v4634
    %v4657 = vsel %vm542, %v4634, %v4636
    %v4658 = vsel %vm542, %v4636, %v4638
    %v4683 = vmax.bf16 %v4543, %v4639
    %v4684 = vmax.bf16 %v4544, %v4640
    %v4685 = vmax.bf16 %v4545, %v4641
    %v4686 = vmax.bf16 %v4546, %v4642
    %v4687 = vmax.bf16 %v4547, %v4643
    %v4688 = vmax.bf16 %v4548, %v4602
    %v4689 = vmax.bf16 %v4549, %v4644
    %v4690 = vmax.bf16 %v4550, %v4645
    %v4691 = vmax.bf16 %v4551, %v4646
    %v4692 = vmax.bf16 %v4552, %v4647
    %v4693 = vmax.bf16 %v4553, %v4648
    %v4694 = vmax.bf16 %v4554, %v4614
    %v4695 = vmax.bf16 %v4555, %v4649
    %v4696 = vmax.bf16 %v4556, %v4650
    %v4697 = vmax.bf16 %v4557, %v4651
    %v4698 = vmax.bf16 %v4558, %v4652
    %v4699 = vmax.bf16 %v4559, %v4653
    %v4700 = vmax.bf16 %v4560, %v4626
    %v4701 = vmax.bf16 %v4561, %v4654
    %v4702 = vmax.bf16 %v4562, %v4655
    %v4703 = vmax.bf16 %v4563, %v4656
    %v4704 = vmax.bf16 %v4564, %v4657
    %v4705 = vmax.bf16 %v4565, %v4658
    %v4706 = vmax.bf16 %v4566, %v4638
    %4731 = vrot.lane.b32.xlu0 %v4683, 100
    %v4732 = vpop.permute.xlu0 %4731
    %4733 = vrot.lane.b32.xlu0 %v4684, 100
    %v4734 = vpop.permute.xlu0 %4733
    %4735 = vrot.lane.b32.xlu0 %v4685, 100
    %v4736 = vpop.permute.xlu0 %4735
    %4737 = vrot.lane.b32.xlu0 %v4686, 100
    %v4738 = vpop.permute.xlu0 %4737
    %4739 = vrot.lane.b32.xlu0 %v4687, 100
    %v4740 = vpop.permute.xlu0 %4739
    %4741 = vrot.lane.b32.xlu0 %v4688, 100
    %v4742 = vpop.permute.xlu0 %4741
    %4743 = vrot.lane.b32.xlu0 %v4689, 100
    %v4744 = vpop.permute.xlu0 %4743
    %4745 = vrot.lane.b32.xlu0 %v4690, 100
    %v4746 = vpop.permute.xlu0 %4745
    %4747 = vrot.lane.b32.xlu0 %v4691, 100
    %v4748 = vpop.permute.xlu0 %4747
    %4749 = vrot.lane.b32.xlu0 %v4692, 100
    %v4750 = vpop.permute.xlu0 %4749
    %4751 = vrot.lane.b32.xlu0 %v4693, 100
    %v4752 = vpop.permute.xlu0 %4751
    %4753 = vrot.lane.b32.xlu0 %v4694, 100
    %v4754 = vpop.permute.xlu0 %4753
    %4755 = vrot.lane.b32.xlu0 %v4695, 100
    %v4756 = vpop.permute.xlu0 %4755
    %4757 = vrot.lane.b32.xlu0 %v4696, 100
    %v4758 = vpop.permute.xlu0 %4757
    %4759 = vrot.lane.b32.xlu0 %v4697, 100
    %v4760 = vpop.permute.xlu0 %4759
    %4761 = vrot.lane.b32.xlu0 %v4698, 100
    %v4762 = vpop.permute.xlu0 %4761
    %4763 = vrot.lane.b32.xlu0 %v4699, 100
    %v4764 = vpop.permute.xlu0 %4763
    %4765 = vrot.lane.b32.xlu0 %v4700, 100
    %v4766 = vpop.permute.xlu0 %4765
    %4767 = vrot.lane.b32.xlu0 %v4701, 100
    %v4768 = vpop.permute.xlu0 %4767
    %4769 = vrot.lane.b32.xlu0 %v4702, 100
    %v4770 = vpop.permute.xlu0 %4769
    %4771 = vrot.lane.b32.xlu0 %v4703, 100
    %v4772 = vpop.permute.xlu0 %4771
    %4773 = vrot.lane.b32.xlu0 %v4704, 100
    %v4774 = vpop.permute.xlu0 %4773
    %4775 = vrot.lane.b32.xlu0 %v4705, 100
    %v4776 = vpop.permute.xlu0 %4775
    %4777 = vrot.lane.b32.xlu0 %v4706, 100
    %v4778 = vpop.permute.xlu0 %4777
    %v4779 = vsel %vm660, %v4732, %v4734
    %v4780 = vsel %vm660, %v4734, %v4736
    %v4781 = vsel %vm660, %v4736, %v4738
    %v4782 = vsel %vm660, %v4738, %v4740
    %v4783 = vsel %vm660, %v4740, %v4742
    %v4784 = vsel %vm660, %v4744, %v4746
    %v4785 = vsel %vm660, %v4746, %v4748
    %v4786 = vsel %vm660, %v4748, %v4750
    %v4787 = vsel %vm660, %v4750, %v4752
    %v4788 = vsel %vm660, %v4752, %v4754
    %v4789 = vsel %vm660, %v4756, %v4758
    %v4790 = vsel %vm660, %v4758, %v4760
    %v4791 = vsel %vm660, %v4760, %v4762
    %v4792 = vsel %vm660, %v4762, %v4764
    %v4793 = vsel %vm660, %v4764, %v4766
    %v4794 = vsel %vm660, %v4768, %v4770
    %v4795 = vsel %vm660, %v4770, %v4772
    %v4796 = vsel %vm660, %v4772, %v4774
    %v4797 = vsel %vm660, %v4774, %v4776
    %v4798 = vsel %vm660, %v4776, %v4778
    %v4819 = vmax.bf16 %v4683, %v4779
    %v4820 = vmax.bf16 %v4684, %v4780
    %v4821 = vmax.bf16 %v4685, %v4781
    %v4822 = vmax.bf16 %v4686, %v4782
    %v4823 = vmax.bf16 %v4687, %v4783
    %v4824 = vmax.bf16 %v4689, %v4784
    %v4825 = vmax.bf16 %v4690, %v4785
    %v4826 = vmax.bf16 %v4691, %v4786
    %v4827 = vmax.bf16 %v4692, %v4787
    %v4828 = vmax.bf16 %v4693, %v4788
    %v4829 = vmax.bf16 %v4695, %v4789
    %v4830 = vmax.bf16 %v4696, %v4790
    %v4831 = vmax.bf16 %v4697, %v4791
    %v4832 = vmax.bf16 %v4698, %v4792
    %v4833 = vmax.bf16 %v4699, %v4793
    %v4834 = vmax.bf16 %v4701, %v4794
    %v4835 = vmax.bf16 %v4702, %v4795
    %v4836 = vmax.bf16 %v4703, %v4796
    %v4837 = vmax.bf16 %v4704, %v4797
    %v4838 = vmax.bf16 %v4705, %v4798
    %v4839 = vld [vmem:[%s5] sm:$0xff]
    %v4840 = vld [vmem:[%s5 + $0x8] sm:$0xff]
    %v4841 = vld [vmem:[%s5 + $0x10] sm:$0xff]
    %v4842 = vld [vmem:[%s5 + $0x18] sm:$0xff]
    %v4843 = vld [vmem:[%s5 + $0x20] sm:$0xff]
    %v4844 = vld [vmem:[%s5 + $0x28] sm:$0xff]
    %v4845 = vld [vmem:[%s5 + $0x30] sm:$0xff]
    %v4846 = vld [vmem:[%s5 + $0x38] sm:$0xff]
    %v4847 = vld [vmem:[%s5 + $0x40] sm:$0xff]
    %v4848 = vld [vmem:[%s5 + $0x48] sm:$0xff]
    %v4849 = vld [vmem:[%s5 + $0x50] sm:$0xff]
    %v4850 = vld [vmem:[%s5 + $0x58] sm:$0xff]
    %v4851 = vld [vmem:[%s5 + $0x60] sm:$0xff]
    %v4852 = vld [vmem:[%s5 + $0x68] sm:$0xff]
    %v4853 = vld [vmem:[%s5 + $0x70] sm:$0xff]
    %v4854 = vld [vmem:[%s5 + $0x78] sm:$0xff]
    %v4855 = vld [vmem:[%s5 + $0x80] sm:$0xff]
    %v4856 = vld [vmem:[%s5 + $0x88] sm:$0xff]
    %v4857 = vld [vmem:[%s5 + $0x90] sm:$0xff]
    %v4858 = vld [vmem:[%s5 + $0x98] sm:$0xff]
    %v4859 = vld [vmem:[%s5 + $0xa0] sm:$0xff]
    %v4860 = vld [vmem:[%s5 + $0xa8] sm:$0xff]
    %v4861 = vld [vmem:[%s5 + $0xb0] sm:$0xff]
    %v4862 = vld [vmem:[%s5 + $0xb8] sm:$0xff]
    %v4863 = vld [vmem:[%s5 + $0xc0] sm:$0xff]
    %v4864 = vld [vmem:[%s5 + $0xc8] sm:$0xff]
    %v4865 = vld [vmem:[%s5 + $0xd0] sm:$0xff]
    %v4866 = vld [vmem:[%s5 + $0xd8] sm:$0xff]
    %v4867 = vld [vmem:[%s5 + $0xe0] sm:$0xff]
    %v4868 = vld [vmem:[%s5 + $0xe8] sm:$0xff]
    %v4869 = vld [vmem:[%s5 + $0xf0] sm:$0xff]
    %v4870 = vld [vmem:[%s5 + $0xf8] sm:$0xff]
    %v4871 = vld [vmem:[%s5 + $0x100] sm:$0xff]
    %v4872 = vld [vmem:[%s5 + $0x108] sm:$0xff]
    %v4873 = vld [vmem:[%s5 + $0x110] sm:$0xff]
    %v4874 = vld [vmem:[%s5 + $0x118] sm:$0xff]
    %v4875 = vld [vmem:[%s5 + $0x120] sm:$0xff]
    %v4876 = vld [vmem:[%s5 + $0x128] sm:$0xff]
    %v4877 = vld [vmem:[%s5 + $0x130] sm:$0xff]
    %v4878 = vld [vmem:[%s5 + $0x138] sm:$0xff]
    %v4879 = vld [vmem:[%s5 + $0x140] sm:$0xff]
    %v4880 = vld [vmem:[%s5 + $0x148] sm:$0xff]
    %v4881 = vld [vmem:[%s5 + $0x150] sm:$0xff]
    %v4882 = vld [vmem:[%s5 + $0x158] sm:$0xff]
    %v4883 = vld [vmem:[%s5 + $0x160] sm:$0xff]
    %v4884 = vld [vmem:[%s5 + $0x168] sm:$0xff]
    %v4885 = vld [vmem:[%s5 + $0x170] sm:$0xff]
    %v4886 = vld [vmem:[%s5 + $0x178] sm:$0xff]
    %v4887 = vld [vmem:[%s5 + $0x180] sm:$0xff]
    %v4888 = vld [vmem:[%s5 + $0x188] sm:$0xff]
    %v4889 = vld [vmem:[%s5 + $0x190] sm:$0xff]
    %v4890 = vld [vmem:[%s5 + $0x198] sm:$0xff]
    %v4891 = vld [vmem:[%s5 + $0x1a0] sm:$0xff]
    %v4892 = vld [vmem:[%s5 + $0x1a8] sm:$0xff]
    %v4893 = vld [vmem:[%s5 + $0x1b0] sm:$0xff]
    %v4894 = vld [vmem:[%s5 + $0x1b8] sm:$0xff]
    %v4895 = vld [vmem:[%s5 + $0x1c0] sm:$0xff]
    %v4896 = vld [vmem:[%s5 + $0x1c8] sm:$0xff]
    %v4897 = vld [vmem:[%s5 + $0x1d0] sm:$0xff]
    %v4898 = vld [vmem:[%s5 + $0x1d8] sm:$0xff]
    %v4899 = vld [vmem:[%s5 + $0x1e0] sm:$0xff]
    %v4900 = vld [vmem:[%s5 + $0x1e8] sm:$0xff]
    %v4901 = vld [vmem:[%s5 + $0x1f0] sm:$0xff]
    %v4902 = vld [vmem:[%s5 + $0x1f8] sm:$0xff]
    %v4903 = vld [vmem:[%s5 + $0x200] sm:$0xff]
    %v4904 = vld [vmem:[%s5 + $0x208] sm:$0xff]
    %v4905 = vld [vmem:[%s5 + $0x210] sm:$0xff]
    %v4906 = vld [vmem:[%s5 + $0x218] sm:$0xff]
    %v4907 = vld [vmem:[%s5 + $0x220] sm:$0xff]
    %v4908 = vld [vmem:[%s5 + $0x228] sm:$0xff]
    %v4909 = vld [vmem:[%s5 + $0x230] sm:$0xff]
    %v4910 = vld [vmem:[%s5 + $0x238] sm:$0xff]
    %v4911 = vld [vmem:[%s5 + $0x240] sm:$0xff]
    %v4912 = vld [vmem:[%s5 + $0x248] sm:$0xff]
    %v4913 = vld [vmem:[%s5 + $0x250] sm:$0xff]
    %v4914 = vld [vmem:[%s5 + $0x258] sm:$0xff]
    %v4915 = vld [vmem:[%s5 + $0x260] sm:$0xff]
    %v4916 = vld [vmem:[%s5 + $0x268] sm:$0xff]
    %v4917 = vld [vmem:[%s5 + $0x270] sm:$0xff]
    %v4918 = vld [vmem:[%s5 + $0x278] sm:$0xff]
    %v4999 = vunpack.c.l.b16 %v4839
    %v5000 = vunpack.c.h.b16 %v4839
    %v5001 = vunpack.c.l.b16 %v4840
    %v5002 = vunpack.c.h.b16 %v4840
    %v5003 = vunpack.c.l.b16 %v4841
    %v5004 = vunpack.c.h.b16 %v4841
    %v5005 = vunpack.c.l.b16 %v4842
    %v5006 = vunpack.c.h.b16 %v4842
    %v5007 = vunpack.c.l.b16 %v4843
    %v5008 = vunpack.c.h.b16 %v4843
    %v5009 = vunpack.c.l.b16 %v4844
    %v5010 = vunpack.c.h.b16 %v4844
    %v5011 = vunpack.c.l.b16 %v4845
    %v5012 = vunpack.c.h.b16 %v4845
    %v5013 = vunpack.c.l.b16 %v4846
    %v5014 = vunpack.c.h.b16 %v4846
    %v5015 = vunpack.c.l.b16 %v4847
    %v5016 = vunpack.c.h.b16 %v4847
    %v5017 = vunpack.c.l.b16 %v4848
    %v5018 = vunpack.c.h.b16 %v4848
    %v5019 = vunpack.c.l.b16 %v4849
    %v5020 = vunpack.c.h.b16 %v4849
    %v5021 = vunpack.c.l.b16 %v4850
    %v5022 = vunpack.c.h.b16 %v4850
    %v5023 = vunpack.c.l.b16 %v4851
    %v5024 = vunpack.c.h.b16 %v4851
    %v5025 = vunpack.c.l.b16 %v4852
    %v5026 = vunpack.c.h.b16 %v4852
    %v5027 = vunpack.c.l.b16 %v4853
    %v5028 = vunpack.c.h.b16 %v4853
    %v5029 = vunpack.c.l.b16 %v4854
    %v5030 = vunpack.c.h.b16 %v4854
    %v5031 = vunpack.c.l.b16 %v4855
    %v5032 = vunpack.c.h.b16 %v4855
    %v5033 = vunpack.c.l.b16 %v4856
    %v5034 = vunpack.c.h.b16 %v4856
    %v5035 = vunpack.c.l.b16 %v4857
    %v5036 = vunpack.c.h.b16 %v4857
    %v5037 = vunpack.c.l.b16 %v4858
    %v5038 = vunpack.c.h.b16 %v4858
    %v5039 = vunpack.c.l.b16 %v4859
    %v5040 = vunpack.c.h.b16 %v4859
    %v5041 = vunpack.c.l.b16 %v4860
    %v5042 = vunpack.c.h.b16 %v4860
    %v5043 = vunpack.c.l.b16 %v4861
    %v5044 = vunpack.c.h.b16 %v4861
    %v5045 = vunpack.c.l.b16 %v4862
    %v5046 = vunpack.c.h.b16 %v4862
    %v5047 = vunpack.c.l.b16 %v4863
    %v5048 = vunpack.c.h.b16 %v4863
    %v5049 = vunpack.c.l.b16 %v4864
    %v5050 = vunpack.c.h.b16 %v4864
    %v5051 = vunpack.c.l.b16 %v4865
    %v5052 = vunpack.c.h.b16 %v4865
    %v5053 = vunpack.c.l.b16 %v4866
    %v5054 = vunpack.c.h.b16 %v4866
    %v5055 = vunpack.c.l.b16 %v4867
    %v5056 = vunpack.c.h.b16 %v4867
    %v5057 = vunpack.c.l.b16 %v4868
    %v5058 = vunpack.c.h.b16 %v4868
    %v5059 = vunpack.c.l.b16 %v4869
    %v5060 = vunpack.c.h.b16 %v4869
    %v5061 = vunpack.c.l.b16 %v4870
    %v5062 = vunpack.c.h.b16 %v4870
    %v5063 = vunpack.c.l.b16 %v4871
    %v5064 = vunpack.c.h.b16 %v4871
    %v5065 = vunpack.c.l.b16 %v4872
    %v5066 = vunpack.c.h.b16 %v4872
    %v5067 = vunpack.c.l.b16 %v4873
    %v5068 = vunpack.c.h.b16 %v4873
    %v5069 = vunpack.c.l.b16 %v4874
    %v5070 = vunpack.c.h.b16 %v4874
    %v5071 = vunpack.c.l.b16 %v4875
    %v5072 = vunpack.c.h.b16 %v4875
    %v5073 = vunpack.c.l.b16 %v4876
    %v5074 = vunpack.c.h.b16 %v4876
    %v5075 = vunpack.c.l.b16 %v4877
    %v5076 = vunpack.c.h.b16 %v4877
    %v5077 = vunpack.c.l.b16 %v4878
    %v5078 = vunpack.c.h.b16 %v4878
    %v5079 = vunpack.c.l.b16 %v4879
    %v5080 = vunpack.c.h.b16 %v4879
    %v5081 = vunpack.c.l.b16 %v4880
    %v5082 = vunpack.c.h.b16 %v4880
    %v5083 = vunpack.c.l.b16 %v4881
    %v5084 = vunpack.c.h.b16 %v4881
    %v5085 = vunpack.c.l.b16 %v4882
    %v5086 = vunpack.c.h.b16 %v4882
    %v5087 = vunpack.c.l.b16 %v4883
    %v5088 = vunpack.c.h.b16 %v4883
    %v5089 = vunpack.c.l.b16 %v4884
    %v5090 = vunpack.c.h.b16 %v4884
    %v5091 = vunpack.c.l.b16 %v4885
    %v5092 = vunpack.c.h.b16 %v4885
    %v5093 = vunpack.c.l.b16 %v4886
    %v5094 = vunpack.c.h.b16 %v4886
    %v5095 = vunpack.c.l.b16 %v4887
    %v5096 = vunpack.c.h.b16 %v4887
    %v5097 = vunpack.c.l.b16 %v4888
    %v5098 = vunpack.c.h.b16 %v4888
    %v5099 = vunpack.c.l.b16 %v4889
    %v5100 = vunpack.c.h.b16 %v4889
    %v5101 = vunpack.c.l.b16 %v4890
    %v5102 = vunpack.c.h.b16 %v4890
    %v5103 = vunpack.c.l.b16 %v4891
    %v5104 = vunpack.c.h.b16 %v4891
    %v5105 = vunpack.c.l.b16 %v4892
    %v5106 = vunpack.c.h.b16 %v4892
    %v5107 = vunpack.c.l.b16 %v4893
    %v5108 = vunpack.c.h.b16 %v4893
    %v5109 = vunpack.c.l.b16 %v4894
    %v5110 = vunpack.c.h.b16 %v4894
    %v5111 = vunpack.c.l.b16 %v4895
    %v5112 = vunpack.c.h.b16 %v4895
    %v5113 = vunpack.c.l.b16 %v4896
    %v5114 = vunpack.c.h.b16 %v4896
    %v5115 = vunpack.c.l.b16 %v4897
    %v5116 = vunpack.c.h.b16 %v4897
    %v5117 = vunpack.c.l.b16 %v4898
    %v5118 = vunpack.c.h.b16 %v4898
    %v5119 = vunpack.c.l.b16 %v4899
    %v5120 = vunpack.c.h.b16 %v4899
    %v5121 = vunpack.c.l.b16 %v4900
    %v5122 = vunpack.c.h.b16 %v4900
    %v5123 = vunpack.c.l.b16 %v4901
    %v5124 = vunpack.c.h.b16 %v4901
    %v5125 = vunpack.c.l.b16 %v4902
    %v5126 = vunpack.c.h.b16 %v4902
    %v5127 = vunpack.c.l.b16 %v4903
    %v5128 = vunpack.c.h.b16 %v4903
    %v5129 = vunpack.c.l.b16 %v4904
    %v5130 = vunpack.c.h.b16 %v4904
    %v5131 = vunpack.c.l.b16 %v4905
    %v5132 = vunpack.c.h.b16 %v4905
    %v5133 = vunpack.c.l.b16 %v4906
    %v5134 = vunpack.c.h.b16 %v4906
    %v5135 = vunpack.c.l.b16 %v4907
    %v5136 = vunpack.c.h.b16 %v4907
    %v5137 = vunpack.c.l.b16 %v4908
    %v5138 = vunpack.c.h.b16 %v4908
    %v5139 = vunpack.c.l.b16 %v4909
    %v5140 = vunpack.c.h.b16 %v4909
    %v5141 = vunpack.c.l.b16 %v4910
    %v5142 = vunpack.c.h.b16 %v4910
    %v5143 = vunpack.c.l.b16 %v4911
    %v5144 = vunpack.c.h.b16 %v4911
    %v5145 = vunpack.c.l.b16 %v4912
    %v5146 = vunpack.c.h.b16 %v4912
    %v5147 = vunpack.c.l.b16 %v4913
    %v5148 = vunpack.c.h.b16 %v4913
    %v5149 = vunpack.c.l.b16 %v4914
    %v5150 = vunpack.c.h.b16 %v4914
    %v5151 = vunpack.c.l.b16 %v4915
    %v5152 = vunpack.c.h.b16 %v4915
    %v5153 = vunpack.c.l.b16 %v4916
    %v5154 = vunpack.c.h.b16 %v4916
    %v5155 = vunpack.c.l.b16 %v4917
    %v5156 = vunpack.c.h.b16 %v4917
    %v5157 = vunpack.c.l.b16 %v4918
    %v5158 = vunpack.c.h.b16 %v4918
    %v5159 = vpack.c.b16 %v5001, %v4999
    %v5160 = vpack.c.b16 %v5002, %v5000
    %v5161 = vpack.c.b16 %v5005, %v5003
    %v5162 = vpack.c.b16 %v5006, %v5004
    %v5163 = vpack.c.b16 %v5009, %v5007
    %v5164 = vpack.c.b16 %v5010, %v5008
    %v5165 = vpack.c.b16 %v5013, %v5011
    %v5166 = vpack.c.b16 %v5014, %v5012
    %v5167 = vpack.c.b16 %v5017, %v5015
    %v5168 = vpack.c.b16 %v5018, %v5016
    %v5169 = vpack.c.b16 %v5021, %v5019
    %v5170 = vpack.c.b16 %v5022, %v5020
    %v5171 = vpack.c.b16 %v5025, %v5023
    %v5172 = vpack.c.b16 %v5026, %v5024
    %v5173 = vpack.c.b16 %v5029, %v5027
    %v5174 = vpack.c.b16 %v5030, %v5028
    %v5175 = vpack.c.b16 %v5033, %v5031
    %v5176 = vpack.c.b16 %v5034, %v5032
    %v5177 = vpack.c.b16 %v5037, %v5035
    %v5178 = vpack.c.b16 %v5038, %v5036
    %v5179 = vpack.c.b16 %v5041, %v5039
    %v5180 = vpack.c.b16 %v5042, %v5040
    %v5181 = vpack.c.b16 %v5045, %v5043
    %v5182 = vpack.c.b16 %v5046, %v5044
    %v5183 = vpack.c.b16 %v5049, %v5047
    %v5184 = vpack.c.b16 %v5050, %v5048
    %v5185 = vpack.c.b16 %v5053, %v5051
    %v5186 = vpack.c.b16 %v5054, %v5052
    %v5187 = vpack.c.b16 %v5057, %v5055
    %v5188 = vpack.c.b16 %v5058, %v5056
    %v5189 = vpack.c.b16 %v5061, %v5059
    %v5190 = vpack.c.b16 %v5062, %v5060
    %v5191 = vpack.c.b16 %v5065, %v5063
    %v5192 = vpack.c.b16 %v5066, %v5064
    %v5193 = vpack.c.b16 %v5069, %v5067
    %v5194 = vpack.c.b16 %v5070, %v5068
    %v5195 = vpack.c.b16 %v5073, %v5071
    %v5196 = vpack.c.b16 %v5074, %v5072
    %v5197 = vpack.c.b16 %v5077, %v5075
    %v5198 = vpack.c.b16 %v5078, %v5076
    %v5199 = vpack.c.b16 %v5081, %v5079
    %v5200 = vpack.c.b16 %v5082, %v5080
    %v5201 = vpack.c.b16 %v5085, %v5083
    %v5202 = vpack.c.b16 %v5086, %v5084
    %v5203 = vpack.c.b16 %v5089, %v5087
    %v5204 = vpack.c.b16 %v5090, %v5088
    %v5205 = vpack.c.b16 %v5093, %v5091
    %v5206 = vpack.c.b16 %v5094, %v5092
    %v5207 = vpack.c.b16 %v5097, %v5095
    %v5208 = vpack.c.b16 %v5098, %v5096
    %v5209 = vpack.c.b16 %v5101, %v5099
    %v5210 = vpack.c.b16 %v5102, %v5100
    %v5211 = vpack.c.b16 %v5105, %v5103
    %v5212 = vpack.c.b16 %v5106, %v5104
    %v5213 = vpack.c.b16 %v5109, %v5107
    %v5214 = vpack.c.b16 %v5110, %v5108
    %v5215 = vpack.c.b16 %v5113, %v5111
    %v5216 = vpack.c.b16 %v5114, %v5112
    %v5217 = vpack.c.b16 %v5117, %v5115
    %v5218 = vpack.c.b16 %v5118, %v5116
    %v5219 = vpack.c.b16 %v5121, %v5119
    %v5220 = vpack.c.b16 %v5122, %v5120
    %v5221 = vpack.c.b16 %v5125, %v5123
    %v5222 = vpack.c.b16 %v5126, %v5124
    %v5223 = vpack.c.b16 %v5129, %v5127
    %v5224 = vpack.c.b16 %v5130, %v5128
    %v5225 = vpack.c.b16 %v5133, %v5131
    %v5226 = vpack.c.b16 %v5134, %v5132
    %v5227 = vpack.c.b16 %v5137, %v5135
    %v5228 = vpack.c.b16 %v5138, %v5136
    %v5229 = vpack.c.b16 %v5141, %v5139
    %v5230 = vpack.c.b16 %v5142, %v5140
    %v5231 = vpack.c.b16 %v5145, %v5143
    %v5232 = vpack.c.b16 %v5146, %v5144
    %v5233 = vpack.c.b16 %v5149, %v5147
    %v5234 = vpack.c.b16 %v5150, %v5148
    %v5235 = vpack.c.b16 %v5153, %v5151
    %v5236 = vpack.c.b16 %v5154, %v5152
    %v5237 = vpack.c.b16 %v5157, %v5155
    %v5238 = vpack.c.b16 %v5158, %v5156
    %v5318 = vsel %vm49, %v4823, 0
    %v5321 = vsel %vm49, %v4828, 0
    %v5324 = vsel %vm49, %v4833, 0
    %v5327 = vsel %vm49, %v4838, 0
    %v5330 = vand.u32 %v5237, %v2558
    %v5333 = vand.u32 %v5238, %v2558
    %5335 = vmatprep.subr.bf16.mxu0 %v5160
    %5336 = vmatpush1.bf16.msra.mxu0 %v5159
    %5337 = vmatprep.subr.bf16.mxu0 %v5162
    %5338 = vmatpush1.bf16.msra.mxu0 %v5161
    %5339 = vmatprep.subr.bf16.mxu0 %v5164
    %5340 = vmatpush1.bf16.msra.mxu0 %v5163
    %5341 = vmatprep.subr.bf16.mxu0 %v5166
    %5342 = vmatpush1.bf16.msra.mxu0 %v5165
    %5343 = vmatprep.subr.bf16.mxu0 %v5168
    %5344 = vmatpush1.bf16.msra.mxu0 %v5167
    %5345 = vmatprep.subr.bf16.mxu0 %v5170
    %5346 = vmatpush1.bf16.msra.mxu0 %v5169
    %5347 = vmatprep.subr.bf16.mxu0 %v5172
    %5348 = vmatpush1.bf16.msra.mxu0 %v5171
    %5349 = vmatprep.subr.bf16.mxu0 %v5174
    %5350 = vmatpush1.bf16.msra.mxu0 %v5173
    %5351 = vmatprep.subr.bf16.mxu0 %v5176
    %5352 = vmatpush1.bf16.msra.mxu0 %v5175
    %5353 = vmatprep.subr.bf16.mxu0 %v5178
    %5354 = vmatpush1.bf16.msra.mxu0 %v5177
    %5355 = vmatprep.subr.bf16.mxu0 %v5180
    %5356 = vmatpush1.bf16.msra.mxu0 %v5179
    %5357 = vmatprep.subr.bf16.mxu0 %v5182
    %5358 = vmatpush1.bf16.msra.mxu0 %v5181
    %5359 = vmatprep.subr.bf16.mxu0 %v5184
    %5360 = vmatpush1.bf16.msra.mxu0 %v5183
    %5361 = vmatprep.subr.bf16.mxu0 %v5186
    %5362 = vmatpush1.bf16.msra.mxu0 %v5185
    %5363 = vmatprep.subr.bf16.mxu0 %v5188
    %5364 = vmatpush1.bf16.msra.mxu0 %v5187
    %5365 = vmatprep.subr.bf16.mxu0 %v5190
    %5366 = vmatpush1.bf16.msra.mxu0 %v5189
    %5367 = vmatprep.mubr.bf16.mxu0 %v4820
    %5368 = vmatmul.mubr.bf16.gmra.mrb[0].mxu0 %v4819
    %v5369 = vpop.f32.mrb[0].mxu0
    %v5370 = vadd.f32 0.0, %v5369
    %v5371 = vpop.f32.mrb[0].mxu0
    %v5372 = vadd.f32 0.0, %v5371
    %v5373 = vpop.f32.mrb[0].mxu0
    %v5374 = vadd.f32 0.0, %v5373
    %v5375 = vpop.f32.mrb[0].mxu0
    %v5376 = vadd.f32 0.0, %v5375
    %5377 = vmatprep.mubr.bf16.mxu0 %v4825
    %5378 = vmatmul.mubr.bf16.gmra.mrb[0].mxu0 %v4824
    %v5379 = vpop.f32.mrb[0].mxu0
    %v5380 = vadd.f32 0.0, %v5379
    %v5381 = vpop.f32.mrb[0].mxu0
    %v5382 = vadd.f32 0.0, %v5381
    %v5383 = vpop.f32.mrb[0].mxu0
    %v5384 = vadd.f32 0.0, %v5383
    %v5385 = vpop.f32.mrb[0].mxu0
    %v5386 = vadd.f32 0.0, %v5385
    %5387 = vmatprep.mubr.bf16.mxu0 %v4830
    %5388 = vmatmul.mubr.bf16.gmra.mrb[0].mxu0 %v4829
    %v5389 = vpop.f32.mrb[0].mxu0
    %v5390 = vadd.f32 0.0, %v5389
    %v5391 = vpop.f32.mrb[0].mxu0
    %v5392 = vadd.f32 0.0, %v5391
    %v5393 = vpop.f32.mrb[0].mxu0
    %v5394 = vadd.f32 0.0, %v5393
    %v5395 = vpop.f32.mrb[0].mxu0
    %v5396 = vadd.f32 0.0, %v5395
    %5397 = vmatprep.mubr.bf16.mxu0 %v4835
    %5398 = vmatmul.mubr.bf16.gmra.mrb[0].mxu0 %v4834
    %v5399 = vpop.f32.mrb[0].mxu0
    %v5400 = vadd.f32 0.0, %v5399
    %v5401 = vpop.f32.mrb[0].mxu0
    %v5402 = vadd.f32 0.0, %v5401
    %v5403 = vpop.f32.mrb[0].mxu0
    %v5404 = vadd.f32 0.0, %v5403
    %v5405 = vpop.f32.mrb[0].mxu0
    %v5406 = vadd.f32 0.0, %v5405
    %5407 = vdwg.mxu0
    %5408 = vmatprep.subr.bf16.mxu0 %v5192
    %5409 = vmatpush1.bf16.msra.mxu0 %v5191
    %5410 = vmatprep.subr.bf16.mxu0 %v5194
    %5411 = vmatpush1.bf16.msra.mxu0 %v5193
    %5412 = vmatprep.subr.bf16.mxu0 %v5196
    %5413 = vmatpush1.bf16.msra.mxu0 %v5195
    %5414 = vmatprep.subr.bf16.mxu0 %v5198
    %5415 = vmatpush1.bf16.msra.mxu0 %v5197
    %5416 = vmatprep.subr.bf16.mxu0 %v5200
    %5417 = vmatpush1.bf16.msra.mxu0 %v5199
    %5418 = vmatprep.subr.bf16.mxu0 %v5202
    %5419 = vmatpush1.bf16.msra.mxu0 %v5201
    %5420 = vmatprep.subr.bf16.mxu0 %v5204
    %5421 = vmatpush1.bf16.msra.mxu0 %v5203
    %5422 = vmatprep.subr.bf16.mxu0 %v5206
    %5423 = vmatpush1.bf16.msra.mxu0 %v5205
    %5424 = vmatprep.subr.bf16.mxu0 %v5208
    %5425 = vmatpush1.bf16.msra.mxu0 %v5207
    %5426 = vmatprep.subr.bf16.mxu0 %v5210
    %5427 = vmatpush1.bf16.msra.mxu0 %v5209
    %5428 = vmatprep.subr.bf16.mxu0 %v5212
    %5429 = vmatpush1.bf16.msra.mxu0 %v5211
    %5430 = vmatprep.subr.bf16.mxu0 %v5214
    %5431 = vmatpush1.bf16.msra.mxu0 %v5213
    %5432 = vmatprep.subr.bf16.mxu0 %v5216
    %5433 = vmatpush1.bf16.msra.mxu0 %v5215
    %5434 = vmatprep.subr.bf16.mxu0 %v5218
    %5435 = vmatpush1.bf16.msra.mxu0 %v5217
    %5436 = vmatprep.subr.bf16.mxu0 %v5220
    %5437 = vmatpush1.bf16.msra.mxu0 %v5219
    %5438 = vmatprep.subr.bf16.mxu0 %v5222
    %5439 = vmatpush1.bf16.msra.mxu0 %v5221
    %5440 = vmatprep.mubr.bf16.mxu0 %v4822
    %5441 = vmatmul.mubr.bf16.gmra.mrb[0].mxu0 %v4821
    %v5442 = vpop.f32.mrb[0].mxu0
    %v5443 = vadd.f32 %v5370, %v5442
    %v5444 = vpop.f32.mrb[0].mxu0
    %v5445 = vadd.f32 %v5372, %v5444
    %v5446 = vpop.f32.mrb[0].mxu0
    %v5447 = vadd.f32 %v5374, %v5446
    %v5448 = vpop.f32.mrb[0].mxu0
    %v5449 = vadd.f32 %v5376, %v5448
    %5450 = vmatprep.mubr.bf16.mxu0 %v4827
    %5451 = vmatmul.mubr.bf16.gmra.mrb[0].mxu0 %v4826
    %v5452 = vpop.f32.mrb[0].mxu0
    %v5453 = vadd.f32 %v5380, %v5452
    %v5454 = vpop.f32.mrb[0].mxu0
    %v5455 = vadd.f32 %v5382, %v5454
    %v5456 = vpop.f32.mrb[0].mxu0
    %v5457 = vadd.f32 %v5384, %v5456
    %v5458 = vpop.f32.mrb[0].mxu0
    %v5459 = vadd.f32 %v5386, %v5458
    %5460 = vmatprep.mubr.bf16.mxu0 %v4832
    %5461 = vmatmul.mubr.bf16.gmra.mrb[0].mxu0 %v4831
    %v5462 = vpop.f32.mrb[0].mxu0
    %v5463 = vadd.f32 %v5390, %v5462
    %v5464 = vpop.f32.mrb[0].mxu0
    %v5465 = vadd.f32 %v5392, %v5464
    %v5466 = vpop.f32.mrb[0].mxu0
    %v5467 = vadd.f32 %v5394, %v5466
    %v5468 = vpop.f32.mrb[0].mxu0
    %v5469 = vadd.f32 %v5396, %v5468
    %5470 = vmatprep.mubr.bf16.mxu0 %v4837
    %5471 = vmatmul.mubr.bf16.gmra.mrb[0].mxu0 %v4836
    %v5472 = vpop.f32.mrb[0].mxu0
    %v5473 = vadd.f32 %v5400, %v5472
    %v5474 = vpop.f32.mrb[0].mxu0
    %v5475 = vadd.f32 %v5402, %v5474
    %v5476 = vpop.f32.mrb[0].mxu0
    %v5477 = vadd.f32 %v5404, %v5476
    %v5478 = vpop.f32.mrb[0].mxu0
    %v5479 = vadd.f32 %v5406, %v5478
    %5480 = vdwg.mxu0
    %5481 = vmatprep.subr.bf16.mxu0 %v5224
    %5482 = vmatpush1.bf16.msra.mxu0 %v5223
    %5483 = vmatprep.subr.bf16.mxu0 %v5226
    %5484 = vmatpush1.bf16.msra.mxu0 %v5225
    %5485 = vmatprep.subr.bf16.mxu0 %v5228
    %5486 = vmatpush1.bf16.msra.mxu0 %v5227
    %5487 = vmatprep.subr.bf16.mxu0 %v5230
    %5488 = vmatpush1.bf16.msra.mxu0 %v5229
    %5489 = vmatprep.subr.bf16.mxu0 %v5232
    %5490 = vmatpush1.bf16.msra.mxu0 %v5231
    %5491 = vmatprep.subr.bf16.mxu0 %v5234
    %5492 = vmatpush1.bf16.msra.mxu0 %v5233
    %5493 = vmatprep.subr.bf16.mxu0 %v5236
    %5494 = vmatpush1.bf16.msra.mxu0 %v5235
    %5495 = vmatprep.subr.bf16.mxu0 %v5333
    %5496 = vmatpush1.bf16.msra.mxu0 %v5330
    %5497 = vmatprep.subr.bf16.mxu0 0
    %5498 = vmatpush1.bf16.msra.mxu0 0
    %5499 = vmatprep.subr.bf16.mxu0 0
    %5500 = vmatpush1.bf16.msra.mxu0 0
    %5501 = vmatprep.subr.bf16.mxu0 0
    %5502 = vmatpush1.bf16.msra.mxu0 0
    %5503 = vmatprep.subr.bf16.mxu0 0
    %5504 = vmatpush1.bf16.msra.mxu0 0
    %5505 = vmatprep.subr.bf16.mxu0 0
    %5506 = vmatpush1.bf16.msra.mxu0 0
    %5507 = vmatprep.subr.bf16.mxu0 0
    %5508 = vmatpush1.bf16.msra.mxu0 0
    %5509 = vmatprep.subr.bf16.mxu0 0
    %5510 = vmatpush1.bf16.msra.mxu0 0
    %5511 = vmatprep.subr.bf16.mxu0 0
    %5512 = vmatpush1.bf16.msra.mxu0 0
    %5513 = vmatprep.mubr.bf16.mxu0 0
    %5514 = vmatmul.mubr.bf16.gmra.mrb[0].mxu0 %v5318
    %v5515 = vpop.f32.mrb[0].mxu0
    %v5516 = vadd.f32 %v5443, %v5515
    %v5517 = vpop.f32.mrb[0].mxu0
    %v5518 = vadd.f32 %v5445, %v5517
    %v5519 = vpop.f32.mrb[0].mxu0
    %v5520 = vadd.f32 %v5447, %v5519
    %v5521 = vpop.f32.mrb[0].mxu0
    %v5522 = vadd.f32 %v5449, %v5521
    %5523 = vmatprep.mubr.bf16.mxu0 0
    %5524 = vmatmul.mubr.bf16.gmra.mrb[0].mxu0 %v5321
    %v5525 = vpop.f32.mrb[0].mxu0
    %v5526 = vadd.f32 %v5453, %v5525
    %v5527 = vpop.f32.mrb[0].mxu0
    %v5528 = vadd.f32 %v5455, %v5527
    %v5529 = vpop.f32.mrb[0].mxu0
    %v5530 = vadd.f32 %v5457, %v5529
    %v5531 = vpop.f32.mrb[0].mxu0
    %v5532 = vadd.f32 %v5459, %v5531
    %5533 = vmatprep.mubr.bf16.mxu0 0
    %5534 = vmatmul.mubr.bf16.gmra.mrb[0].mxu0 %v5324
    %v5535 = vpop.f32.mrb[0].mxu0
    %v5536 = vadd.f32 %v5463, %v5535
    %v5537 = vpop.f32.mrb[0].mxu0
    %v5538 = vadd.f32 %v5465, %v5537
    %v5539 = vpop.f32.mrb[0].mxu0
    %v5540 = vadd.f32 %v5467, %v5539
    %v5541 = vpop.f32.mrb[0].mxu0
    %v5542 = vadd.f32 %v5469, %v5541
    %5543 = vmatprep.mubr.bf16.mxu0 0
    %5544 = vmatmul.mubr.bf16.gmra.mrb[0].mxu0 %v5327
    %v5545 = vpop.f32.mrb[0].mxu0
    %v5546 = vadd.f32 %v5473, %v5545
    %v5547 = vpop.f32.mrb[0].mxu0
    %v5548 = vadd.f32 %v5475, %v5547
    %v5549 = vpop.f32.mrb[0].mxu0
    %v5550 = vadd.f32 %v5477, %v5549
    %v5551 = vpop.f32.mrb[0].mxu0
    %v5552 = vadd.f32 %v5479, %v5551
    %5553 = vdwg.mxu0
    %v5554 = vpack.c.bf16 %v5520, %v5516
    %v5555 = vpack.c.bf16 %v5522, %v5518
    %v5556 = vpack.c.bf16 %v5530, %v5526
    %v5557 = vpack.c.bf16 %v5532, %v5528
    %v5558 = vpack.c.bf16 %v5540, %v5536
    %v5559 = vpack.c.bf16 %v5542, %v5538
    %v5560 = vpack.c.bf16 %v5550, %v5546
    %v5561 = vpack.c.bf16 %v5552, %v5548
    %v5570 = vunpack.c.l.b16 %v5554
    %v5571 = vunpack.c.l.b16 %v5555
    %v5572 = vunpack.c.h.b16 %v5554
    %v5573 = vunpack.c.h.b16 %v5555
    %v5574 = vunpack.c.l.b16 %v5556
    %v5575 = vunpack.c.l.b16 %v5557
    %v5576 = vunpack.c.h.b16 %v5556
    %v5577 = vunpack.c.h.b16 %v5557
    %v5578 = vunpack.c.l.b16 %v5558
    %v5579 = vunpack.c.l.b16 %v5559
    %v5580 = vunpack.c.h.b16 %v5558
    %v5581 = vunpack.c.h.b16 %v5559
    %v5582 = vunpack.c.l.b16 %v5560
    %v5583 = vunpack.c.l.b16 %v5561
    %v5584 = vunpack.c.h.b16 %v5560
    %v5585 = vunpack.c.h.b16 %v5561
    %v5586 = vpack.c.b16 %v5571, %v5570
    %v5587 = vpack.c.b16 %v5573, %v5572
    %v5588 = vpack.c.b16 %v5575, %v5574
    %v5589 = vpack.c.b16 %v5577, %v5576
    %v5590 = vpack.c.b16 %v5579, %v5578
    %v5591 = vpack.c.b16 %v5581, %v5580
    %v5592 = vpack.c.b16 %v5583, %v5582
    %v5593 = vpack.c.b16 %v5585, %v5584
    %s5602 = scalar_lea.vmem %s6, 64
    %5603 = vst.msk [vmem:[%s5602] sm:$0xff] %vm2834, %v5586
    %5604 = vst.msk [vmem:[%s5602 + $0x8] sm:$0xff] %vm2834, %v5587
    %5605 = vst.msk [vmem:[%s5602 + $0x10] sm:$0xff] %vm2834, %v5588
    %5606 = vst.msk [vmem:[%s5602 + $0x18] sm:$0xff] %vm2834, %v5589
    %5607 = vst.msk [vmem:[%s5602 + $0x20] sm:$0xff] %vm2834, %v5590
    %5608 = vst.msk [vmem:[%s5602 + $0x28] sm:$0xff] %vm2834, %v5591
    %5609 = vst.msk [vmem:[%s5602 + $0x30] sm:$0xff] %vm2834, %v5592
    %5610 = vst.msk [vmem:[%s5602 + $0x38] sm:$0xff] %vm2834, %v5593
    // Predicated region
    $region30: #{net_forward.2} parent=1 // pred_check
      _
    $region31: #{net_forward.2} parent=1 // pred_check_branch
      %5612 = sbr.rel (0) target = $region33
    $region32: #{net_forward.2} parent=1 // pred_region
      _
    $region33: #{net_forward.2} parent=1 // pred_fallthru
      _
    // Predicated region
    $region34: #{net_forward.2} parent=1 // pred_check
      _
    $region35: #{net_forward.2} parent=1 // pred_check_branch
      %5614 = sbr.rel (0) target = $region37
    $region36: #{net_forward.2} parent=1 // pred_region
      _
    $region37: #{net_forward.2} parent=1 // pred_fallthru
      _
    %5615 = vsyncpa [#allocation6], 1

</llo_original>
